<compile_context>
chip_gen: v5e
topology: v5e:2x2
jax: 0.10.0
libtpu: 0.0.40
codegen_flags: <defaults>
</compile_context>

<pallas_src>
import math

import jax
import jax.numpy as jnp
import numpy as np
from jax.experimental import pallas as pl
from jax.experimental.pallas import tpu as pltpu


# ----------------------------- activations ---------------------------------

def silu(x):
    return x * jax.nn.sigmoid(x)


def leaky_relu(x):
    return jnp.where(x >= 0, x, 0.01 * x)      # PyTorch default negative_slope


# ----------------------------- fused kernel --------------------------------

def make_fused_kernel(cfg):
    """Whole SimpleModel.forward as one kernel, gridded over the 4 big
    (1024x1024) target_mlp hidden layers so their weights stream through VMEM."""
    time_hid, time_out = cfg["time_hid"], cfg["time_out"]
    lat_hid, lat_out = cfg["lat_hid"], cfg["lat_out"]
    tgt_hid, tgt_out = cfg["tgt_hid"], cfg["tgt_out"]
    fc1_hid, fc1_out = cfg["fc1_hid"], cfg["fc1_out"]
    n_fc1_hidden = cfg["n_fc1_hidden"]
    R = cfg["rows"]

    def mm(a, w):   # bf16 x bf16 MXU matmul, f32 accumulation
        return jnp.dot(a.astype(jnp.bfloat16), w,
                       preferred_element_type=jnp.float32)

    def kernel(t_ref, x_ref, y_ref,
               wt0_ref, wtout_ref,
               wl0_ref, wlout_ref,
               wy0_ref, wyhid_ref, byhid_ref, wyout_ref,
               wf0x_ref, wf0y_ref, wf0t_ref, wfhid_ref, wfout_ref,
               bias_ref,
               out_ref,
               hy_ref):
        l = pl.program_id(0)
        last = pl.num_programs(0) - 1

        def b(row, width):                      # (1, width) static bias slice
            return bias_ref[row:row + 1, :width]

        # --- target_mlp first layer (grid step 0 only) ----------------------
        @pl.when(l == 0)
        def _():
            hy_ref[...] = leaky_relu(mm(y_ref[...], wy0_ref[...])
                                     + b(R["y0"], tgt_hid))

        # --- target_mlp hidden layer `l`: its 1024x1024 weight (and bias row)
        #     are the only inputs whose block changes with the grid -> streamed
        #     / double-buffered while the activation is carried in VMEM scratch.
        hy_ref[...] = leaky_relu(mm(hy_ref[...], wyhid_ref[0]) + byhid_ref[0])

        # --- everything else is tiny: run once, on the last grid step -------
        @pl.when(l == last)
        def _():
            # target_mlp output (eval BatchNorm folded into weight/bias)
            y_emb = mm(hy_ref[...], wyout_ref[...]) + b(R["y_out"], tgt_out)

            # time_mlp (SiLU)
            # TODO(synk): nn.Dropout is train-mode only (stochastic mask); identity in eval.
            ht = silu(mm(t_ref[...], wt0_ref[...]) + b(R["t0"], time_hid))
            t_emb = mm(ht, wtout_ref[...]) + b(R["t_out"], time_out)

            # latent_mlp (LeakyReLU)
            hl = leaky_relu(mm(x_ref[...], wl0_ref[...]) + b(R["l0"], lat_hid))
            x_emb = mm(hl, wlout_ref[...]) + b(R["l_out"], lat_out)

            # fc1: torch.cat([x_emb, y_emb, t_emb], -1) @ W0 == sum of 3 partial matmuls
            h = leaky_relu(mm(x_emb, wf0x_ref[...]) + mm(y_emb, wf0y_ref[...])
                           + mm(t_emb, wf0t_ref[...]) + b(R["f0"], fc1_hid))
            for i in range(n_fc1_hidden):
                h = leaky_relu(mm(h, wfhid_ref[i]) + b(R["f_hid"] + i, fc1_hid))
            out_ref[...] = mm(h, wfout_ref[...]) + b(R["f_out"], fc1_out)

    return kernel


WEIGHT_NAMES = ("Wt0", "Wt_out", "Wl0", "Wl_out",
                "Wy0", "Wy_hid", "by_hid", "Wy_out",
                "Wf0_x", "Wf0_y", "Wf0_t", "Wf_hid", "Wf_out",
                "bias_pack")


def build_forward(prep):
    cfg = prep["cfg"]
    kernel = make_fused_kernel(cfg)

    @jax.jit
    def _forward(x, y, t, pe, *weights):
        B = x.shape[0]
        # TODO(synk): sinusoidal-table gather kept as (tiny) XLA glue; could move in-kernel
        # via scalar prefetch or in-kernel sin/cos if needed.
        t_emb = jnp.take(pe, t, axis=0)

        in_specs = []
        for name, a in zip(("t_emb", "x", "y") + WEIGHT_NAMES,
                           (t_emb, x, y) + weights):
            if name == "Wy_hid":          # streamed: one (1024,1024) layer per grid step
                in_specs.append(pl.BlockSpec((1,) + a.shape[1:],
                                             lambda l: (l, 0, 0)))
            elif name == "by_hid":        # matching bias row streamed with it
                in_specs.append(pl.BlockSpec((1, 1, a.shape[2]),
                                             lambda l: (l, 0, 0)))
            elif a.ndim == 3:             # resident (constant block index)
                in_specs.append(pl.BlockSpec(a.shape, lambda l: (0, 0, 0)))
            else:
                in_specs.append(pl.BlockSpec(a.shape, lambda l: (0, 0)))

        return pl.pallas_call(
            kernel,
            out_shape=jax.ShapeDtypeStruct((B, cfg["fc1_out"]), jnp.float32),
            grid=(cfg["n_tgt_hidden"],),
            in_specs=in_specs,
            out_specs=pl.BlockSpec((B, cfg["fc1_out"]), lambda l: (0, 0)),
            scratch_shapes=[pltpu.VMEM((B, cfg["tgt_hid"]), jnp.float32)],
            compiler_params=pltpu.CompilerParams(
                dimension_semantics=("arbitrary",),
                vmem_limit_bytes=24 * 1024 * 1024),
        )(t_emb, x, y, *weights)

    weights = tuple(prep[n] for n in WEIGHT_NAMES)
    pe = prep["pe"]

    def forward(x, y, t):
        return _forward(x, y, t, pe, *weights)

    return forward


# ----------------------------- parameter init ------------------------------

def xavier_uniform(key, fan_in, fan_out):
    bound = math.sqrt(6.0 / (fan_in + fan_out))
    return jax.random.uniform(key, (fan_in, fan_out), jnp.float32, -bound, bound)


def init_mlp(key, in_dim, hidden_dim, out_dim, nhidden):
    """Raw parameters of the PyTorch `MLP` block (weights stored (in, out))."""
    keys = jax.random.split(key, nhidden + 1)
    Ws, d = [], in_dim
    for i in range(nhidden):
        Ws.append(xavier_uniform(keys[i], d, hidden_dim))
        d = hidden_dim
    return dict(
        W=Ws,
        b=[jnp.zeros((hidden_dim,), jnp.float32) for _ in range(nhidden)],
        gamma=jnp.ones((hidden_dim,), jnp.float32),
        beta=jnp.zeros((hidden_dim,), jnp.float32),
        mean=jnp.zeros((hidden_dim,), jnp.float32),
        var=jnp.ones((hidden_dim,), jnp.float32),
        W_out=xavier_uniform(keys[-1], hidden_dim, out_dim),
        b_out=jnp.zeros((out_dim,), jnp.float32),
    )


def sinusoidal_pe_table(max_len, d_model):
    position = jnp.arange(max_len, dtype=jnp.float32)[:, None]
    div_term = jnp.exp(jnp.arange(0, d_model, 2, dtype=jnp.float32)
                       * -(math.log(10000.0) / d_model))
    pe = jnp.zeros((max_len, d_model), jnp.float32)
    pe = pe.at[:, 0::2].set(jnp.sin(position * div_term))
    pe = pe.at[:, 1::2].set(jnp.cos(position * div_term))
    return pe


def init_simple_model(key, latent_dim, hidden_dim, nhidden=5,
                      timesteps=1000, time_embedding_dim=64):
    target_embedding_dim = 512
    k_t, k_y, k_x, k_f = jax.random.split(key, 4)
    return dict(
        pe=sinusoidal_pe_table(timesteps, time_embedding_dim),
        time_mlp=init_mlp(k_t, time_embedding_dim, 2 * time_embedding_dim,
                          time_embedding_dim, nhidden=1),
        target_mlp=init_mlp(k_y, target_embedding_dim, 2 * target_embedding_dim,
                            target_embedding_dim, nhidden=5),
        latent_mlp=init_mlp(k_x, latent_dim, 2 * latent_dim, latent_dim, nhidden=1),
        fc1=init_mlp(k_f, latent_dim + target_embedding_dim + time_embedding_dim,
                     hidden_dim, latent_dim, nhidden=nhidden),
        dims=dict(latent=latent_dim, hidden=hidden_dim, time=time_embedding_dim,
                  target=target_embedding_dim),
    )


def fold_bn(mlp, eps=1e-5):
    """Fold eval-mode BatchNorm1d (running stats) into the following Linear."""
    s = mlp["gamma"] * jax.lax.rsqrt(mlp["var"] + eps)
    W_f = mlp["W_out"] * s[:, None]
    b_f = mlp["b_out"] + (mlp["beta"] - mlp["mean"] * s) @ mlp["W_out"]
    return W_f, b_f


def prepare_params(raw):
    """BN-fold, bf16-cast, split fc1's first weight, pack biases."""
    d = raw["dims"]
    lat, tgt, tim, hid = d["latent"], d["target"], d["time"], d["hidden"]
    t_mlp, y_mlp, x_mlp, f_mlp = (raw["time_mlp"], raw["target_mlp"],
                                  raw["latent_mlp"], raw["fc1"])
    n_y_hidden = len(y_mlp["W"]) - 1
    n_f_hidden = len(f_mlp["W"]) - 1

    Wt_out, bt_out = fold_bn(t_mlp)
    Wy_out, by_out = fold_bn(y_mlp)
    Wl_out, bl_out = fold_bn(x_mlp)
    Wf_out, bf_out = fold_bn(f_mlp)

    # fc1 first layer: row blocks ordered like torch.cat([x_emb, y_emb, t_emb], -1)
    Wf0 = f_mlp["W"][0]
    Wf0_x, Wf0_y, Wf0_t = Wf0[:lat], Wf0[lat:lat + tgt], Wf0[lat + tgt:]

    # one row per (non-streamed) bias vector, lane-padded to the widest (2*tgt = 1024)
    rows = dict(t0=0, t_out=1, l0=2, l_out=3, y0=4, y_out=5,
                f0=6, f_hid=7, f_out=7 + n_f_hidden)
    n_rows = 8 + n_f_hidden
    pack = jnp.zeros((n_rows, 2 * tgt), jnp.float32)

    def put(p, r, v):
        return p.at[r, :v.shape[0]].set(v)

    pack = put(pack, rows["t0"], t_mlp["b"][0])
    pack = put(pack, rows["t_out"], bt_out)
    pack = put(pack, rows["l0"], x_mlp["b"][0])
    pack = put(pack, rows["l_out"], bl_out)
    pack = put(pack, rows["y0"], y_mlp["b"][0])
    pack = put(pack, rows["y_out"], by_out)
    pack = put(pack, rows["f0"], f_mlp["b"][0])
    for i in range(n_f_hidden):
        pack = put(pack, rows["f_hid"] + i, f_mlp["b"][1 + i])
    pack = put(pack, rows["f_out"], bf_out)

    bf16 = jnp.bfloat16
    cfg = dict(time_hid=2 * tim, time_out=tim,
               lat_hid=2 * lat, lat_out=lat,
               tgt_hid=2 * tgt, tgt_out=tgt,
               fc1_hid=hid, fc1_out=lat,
               n_tgt_hidden=n_y_hidden, n_fc1_hidden=n_f_hidden,
               rows=rows)
    return dict(
        cfg=cfg, pe=raw["pe"],
        Wt0=t_mlp["W"][0].astype(bf16), Wt_out=Wt_out.astype(bf16),
        Wl0=x_mlp["W"][0].astype(bf16), Wl_out=Wl_out.astype(bf16),
        Wy0=y_mlp["W"][0].astype(bf16),
        Wy_hid=jnp.stack(y_mlp["W"][1:]).astype(bf16),            # (4, 1024, 1024)
        by_hid=jnp.stack(y_mlp["b"][1:])[:, None, :],             # (4, 1, 1024) f32
        Wy_out=Wy_out.astype(bf16),
        Wf0_x=Wf0_x.astype(bf16), Wf0_y=Wf0_y.astype(bf16), Wf0_t=Wf0_t.astype(bf16),
        Wf_hid=jnp.stack(f_mlp["W"][1:]).astype(bf16),            # (4, 64, 64)
        Wf_out=Wf_out.astype(bf16),
        bias_pack=pack,
    )


# ----------------------------- pure-JAX reference --------------------------

def reference_forward(prep, x, y, t):
    """Same math / same dtype discipline as the kernel, in plain JAX ops."""
    cfg = prep["cfg"]
    R = cfg["rows"]
    bias = prep["bias_pack"]

    def mm(a, w):
        return jnp.dot(a.astype(jnp.bfloat16), w, preferred_element_type=jnp.float32)

    def b(r, width):
        return bias[r:r + 1, :width]

    t_emb = jnp.take(prep["pe"], t, axis=0)
    ht = silu(mm(t_emb, prep["Wt0"]) + b(R["t0"], cfg["time_hid"]))
    t_out = mm(ht, prep["Wt_out"]) + b(R["t_out"], cfg["time_out"])

    hl = leaky_relu(mm(x, prep["Wl0"]) + b(R["l0"], cfg["lat_hid"]))
    x_out = mm(hl, prep["Wl_out"]) + b(R["l_out"], cfg["lat_out"])

    hy = leaky_relu(mm(y, prep["Wy0"]) + b(R["y0"], cfg["tgt_hid"]))
    for i in range(cfg["n_tgt_hidden"]):
        hy = leaky_relu(mm(hy, prep["Wy_hid"][i]) + prep["by_hid"][i])
    y_out = mm(hy, prep["Wy_out"]) + b(R["y_out"], cfg["tgt_out"])

    h = leaky_relu(mm(x_out, prep["Wf0_x"]) + mm(y_out, prep["Wf0_y"])
                   + mm(t_out, prep["Wf0_t"]) + b(R["f0"], cfg["fc1_hid"]))
    for i in range(cfg["n_fc1_hidden"]):
        h = leaky_relu(mm(h, prep["Wf_hid"][i]) + b(R["f_hid"] + i, cfg["fc1_hid"]))
    return mm(h, prep["Wf_out"]) + b(R["f_out"], cfg["fc1_out"])


# ----------------------------- main -----------------------------------------

if __name__ == "__main__":
    B = 8
    latent_dim, hidden_dim = 32, 64
    time_embedding_dim, target_embedding_dim, timesteps = 64, 512, 1000

    key = jax.random.PRNGKey(0)
    k_x, k_y, k_t, k_p = jax.random.split(key, 4)
    x = jax.random.normal(k_x, (B, latent_dim), jnp.float32)
    y = jax.random.normal(k_y, (B, target_embedding_dim), jnp.float32)
    t = jax.random.randint(k_t, (B,), 0, timesteps, dtype=jnp.int32)

    raw = init_simple_model(k_p, latent_dim, hidden_dim, nhidden=5,
                            timesteps=timesteps,
                            time_embedding_dim=time_embedding_dim)
    prep = prepare_params(raw)
    forward = build_forward(prep)

    out = jax.block_until_ready(forward(x, y, t))
    assert out.shape == (B, latent_dim), out.shape
    assert out.dtype == jnp.float32

    ref = jax.block_until_ready(reference_forward(prep, x, y, t))
    np.testing.assert_allclose(np.asarray(out), np.asarray(ref), rtol=2e-2, atol=2e-2)
    print("KERNEL_OK")
</pallas_src>

<mosaic_0001>
module attributes {stable_mosaic.version = 11 : i64} {
  func.func @kernel(%arg0: i32, %arg1: memref<8x64xf32, #tpu.memory_space<vmem>>, %arg2: memref<8x32xf32, #tpu.memory_space<vmem>>, %arg3: memref<8x512xf32, #tpu.memory_space<vmem>>, %arg4: memref<64x128xbf16, #tpu.memory_space<vmem>>, %arg5: memref<128x64xbf16, #tpu.memory_space<vmem>>, %arg6: memref<32x64xbf16, #tpu.memory_space<vmem>>, %arg7: memref<64x32xbf16, #tpu.memory_space<vmem>>, %arg8: memref<512x1024xbf16, #tpu.memory_space<vmem>>, %arg9: memref<1x1024x1024xbf16, #tpu.memory_space<vmem>>, %arg10: memref<1x1x1024xf32, #tpu.memory_space<vmem>>, %arg11: memref<1024x512xbf16, #tpu.memory_space<vmem>>, %arg12: memref<32x64xbf16, #tpu.memory_space<vmem>>, %arg13: memref<512x64xbf16, #tpu.memory_space<vmem>>, %arg14: memref<64x64xbf16, #tpu.memory_space<vmem>>, %arg15: memref<4x64x64xbf16, #tpu.memory_space<vmem>>, %arg16: memref<64x32xbf16, #tpu.memory_space<vmem>>, %arg17: memref<12x1024xf32, #tpu.memory_space<vmem>>, %arg18: memref<8x32xf32, #tpu.memory_space<vmem>>, %arg19: memref<8x1024xf32, #tpu.memory_space<vmem>>) attributes {dimension_semantics = [#tpu.dimension_semantics<arbitrary>], iteration_bounds = array<i64: 4>, scalar_prefetch = 0 : i64, scratch_operands = 1 : i64, tpu.core_type = #tpu.core_type<tc>, window_params = [{pipeline_mode = #tpu.pipeline_mode<synchronous>, transform_indices = @transform_0, window_bounds = array<i64: 8, 64>}, {pipeline_mode = #tpu.pipeline_mode<synchronous>, transform_indices = @transform_1, window_bounds = array<i64: 8, 32>}, {pipeline_mode = #tpu.pipeline_mode<synchronous>, transform_indices = @transform_2, window_bounds = array<i64: 8, 512>}, {pipeline_mode = #tpu.pipeline_mode<synchronous>, transform_indices = @transform_3, window_bounds = array<i64: 64, 128>}, {pipeline_mode = #tpu.pipeline_mode<synchronous>, transform_indices = @transform_4, window_bounds = array<i64: 128, 64>}, {pipeline_mode = #tpu.pipeline_mode<synchronous>, transform_indices = @transform_5, window_bounds = array<i64: 32, 64>}, {pipeline_mode = #tpu.pipeline_mode<synchronous>, transform_indices = @transform_6, window_bounds = array<i64: 64, 32>}, {pipeline_mode = #tpu.pipeline_mode<synchronous>, transform_indices = @transform_7, window_bounds = array<i64: 512, 1024>}, {transform_indices = @transform_8, window_bounds = array<i64: 1, 1024, 1024>}, {transform_indices = @transform_9, window_bounds = array<i64: 1, 1, 1024>}, {pipeline_mode = #tpu.pipeline_mode<synchronous>, transform_indices = @transform_10, window_bounds = array<i64: 1024, 512>}, {pipeline_mode = #tpu.pipeline_mode<synchronous>, transform_indices = @transform_11, window_bounds = array<i64: 32, 64>}, {pipeline_mode = #tpu.pipeline_mode<synchronous>, transform_indices = @transform_12, window_bounds = array<i64: 512, 64>}, {pipeline_mode = #tpu.pipeline_mode<synchronous>, transform_indices = @transform_13, window_bounds = array<i64: 64, 64>}, {pipeline_mode = #tpu.pipeline_mode<synchronous>, transform_indices = @transform_14, window_bounds = array<i64: 4, 64, 64>}, {pipeline_mode = #tpu.pipeline_mode<synchronous>, transform_indices = @transform_15, window_bounds = array<i64: 64, 32>}, {pipeline_mode = #tpu.pipeline_mode<synchronous>, transform_indices = @transform_16, window_bounds = array<i64: 12, 1024>}, {pipeline_mode = #tpu.pipeline_mode<synchronous>, transform_indices = @transform_17, window_bounds = array<i64: 8, 32>}]} {
    %c0_i32 = arith.constant 0 : i32
    %0 = arith.cmpi eq, %arg0, %c0_i32 : i32
    %1 = arith.extui %0 : i1 to i32
    %c0_i32_0 = arith.constant 0 : i32
    %2 = arith.cmpi ne, %1, %c0_i32_0 : i32
    scf.if %2 {
      %c0_13 = arith.constant 0 : index
      %c0_14 = arith.constant 0 : index
      %21 = vector.load %arg3[%c0_13, %c0_14] : memref<8x512xf32, #tpu.memory_space<vmem>>, vector<8x512xf32>
      %c0_15 = arith.constant 0 : index
      %c0_16 = arith.constant 0 : index
      %22 = vector.load %arg8[%c0_15, %c0_16] : memref<512x1024xbf16, #tpu.memory_space<vmem>>, vector<512x1024xbf16>
      %23 = arith.truncf %21 : vector<8x512xf32> to vector<8x512xbf16>
      %cst_17 = arith.constant dense<0.000000e+00> : vector<8x1024xf32>
      %24 = tpu.matmul %23, %22, %cst_17 {dimension_numbers = #tpu.dot_dimension_numbers<[1], [0], [0], [1], [0, 0, 1, 1], [], []>} : vector<8x512xbf16>, vector<512x1024xbf16>, vector<8x1024xf32> -> vector<8x1024xf32>
      %c4 = arith.constant 4 : index
      %c0_18 = arith.constant 0 : index
      %25 = vector.load %arg17[%c4, %c0_18] : memref<12x1024xf32, #tpu.memory_space<vmem>>, vector<1x1024xf32>
      %26 = vector.broadcast %25 : vector<1x1024xf32> to vector<8x1024xf32>
      %27 = arith.addf %24, %26 : vector<8x1024xf32>
      %cst_19 = arith.constant 0.000000e+00 : f32
      %28 = vector.broadcast %cst_19 : f32 to vector<8x1024xf32>
      %29 = arith.cmpf oge, %27, %28 : vector<8x1024xf32>
      %cst_20 = arith.constant 0.00999999977 : f32
      %30 = vector.broadcast %cst_20 : f32 to vector<8x1024xf32>
      %31 = arith.mulf %30, %27 : vector<8x1024xf32>
      %32 = arith.select %29, %27, %31 : vector<8x1024xi1>, vector<8x1024xf32>
      %c0_21 = arith.constant 0 : index
      %c0_22 = arith.constant 0 : index
      %33 = vector.load %arg19[%c0_21, %c0_22] : memref<8x1024xf32, #tpu.memory_space<vmem>>, vector<8x1024xf32>
      tpu.vector_store %arg19[%c0_21, %c0_22], %32 {strides = array<i32>} : memref<8x1024xf32, #tpu.memory_space<vmem>>, vector<8x1024xf32>,
    } else {
    }
    %c0 = arith.constant 0 : index
    %c0_1 = arith.constant 0 : index
    %3 = vector.load %arg19[%c0, %c0_1] : memref<8x1024xf32, #tpu.memory_space<vmem>>, vector<8x1024xf32>
    %c0_2 = arith.constant 0 : index
    %c0_3 = arith.constant 0 : index
    %c0_4 = arith.constant 0 : index
    %4 = vector.load %arg9[%c0_2, %c0_3, %c0_4] : memref<1x1024x1024xbf16, #tpu.memory_space<vmem>>, vector<1x1024x1024xbf16>
    %5 = vector.shape_cast %4 : vector<1x1024x1024xbf16> to vector<1024x1024xbf16>
    %6 = arith.truncf %3 : vector<8x1024xf32> to vector<8x1024xbf16>
    %cst = arith.constant dense<0.000000e+00> : vector<8x1024xf32>
    %7 = tpu.matmul %6, %5, %cst {dimension_numbers = #tpu.dot_dimension_numbers<[1], [0], [0], [1], [0, 0, 1, 1], [], []>} : vector<8x1024xbf16>, vector<1024x1024xbf16>, vector<8x1024xf32> -> vector<8x1024xf32>
    %c0_5 = arith.constant 0 : index
    %c0_6 = arith.constant 0 : index
    %c0_7 = arith.constant 0 : index
    %8 = vector.load %arg10[%c0_5, %c0_6, %c0_7] : memref<1x1x1024xf32, #tpu.memory_space<vmem>>, vector<1x1x1024xf32>
    %9 = vector.shape_cast %8 : vector<1x1x1024xf32> to vector<1x1024xf32>
    %10 = vector.broadcast %9 : vector<1x1024xf32> to vector<8x1024xf32>
    %11 = arith.addf %7, %10 : vector<8x1024xf32>
    %cst_8 = arith.constant 0.000000e+00 : f32
    %12 = vector.broadcast %cst_8 : f32 to vector<8x1024xf32>
    %13 = arith.cmpf oge, %11, %12 : vector<8x1024xf32>
    %cst_9 = arith.constant 0.00999999977 : f32
    %14 = vector.broadcast %cst_9 : f32 to vector<8x1024xf32>
    %15 = arith.mulf %14, %11 : vector<8x1024xf32>
    %16 = arith.select %13, %11, %15 : vector<8x1024xi1>, vector<8x1024xf32>
    %c0_10 = arith.constant 0 : index
    %c0_11 = arith.constant 0 : index
    %17 = vector.load %arg19[%c0_10, %c0_11] : memref<8x1024xf32, #tpu.memory_space<vmem>>, vector<8x1024xf32>
    tpu.vector_store %arg19[%c0_10, %c0_11], %16 {strides = array<i32>} : memref<8x1024xf32, #tpu.memory_space<vmem>>, vector<8x1024xf32>,
    %c3_i32 = arith.constant 3 : i32
    %18 = arith.cmpi eq, %arg0, %c3_i32 : i32
    %19 = arith.extui %18 : i1 to i32
    %c0_i32_12 = arith.constant 0 : i32
    %20 = arith.cmpi ne, %19, %c0_i32_12 : i32
    scf.if %20 {
      %c0_13 = arith.constant 0 : index
      %c0_14 = arith.constant 0 : index
      %21 = vector.load %arg19[%c0_13, %c0_14] : memref<8x1024xf32, #tpu.memory_space<vmem>>, vector<8x1024xf32>
      %c0_15 = arith.constant 0 : index
      %c0_16 = arith.constant 0 : index
      %22 = vector.load %arg11[%c0_15, %c0_16] : memref<1024x512xbf16, #tpu.memory_space<vmem>>, vector<1024x512xbf16>
      %23 = arith.truncf %21 : vector<8x1024xf32> to vector<8x1024xbf16>
      %cst_17 = arith.constant dense<0.000000e+00> : vector<8x512xf32>
      %24 = tpu.matmul %23, %22, %cst_17 {dimension_numbers = #tpu.dot_dimension_numbers<[1], [0], [0], [1], [0, 0, 1, 1], [], []>} : vector<8x1024xbf16>, vector<1024x512xbf16>, vector<8x512xf32> -> vector<8x512xf32>
      %c5 = arith.constant 5 : index
      %c0_18 = arith.constant 0 : index
      %25 = vector.load %arg17[%c5, %c0_18] : memref<12x1024xf32, #tpu.memory_space<vmem>>, vector<1x512xf32>
      %26 = vector.broadcast %25 : vector<1x512xf32> to vector<8x512xf32>
      %27 = arith.addf %24, %26 : vector<8x512xf32>
      %c0_19 = arith.constant 0 : index
      %c0_20 = arith.constant 0 : index
      %28 = vector.load %arg1[%c0_19, %c0_20] : memref<8x64xf32, #tpu.memory_space<vmem>>, vector<8x64xf32>
      %c0_21 = arith.constant 0 : index
      %c0_22 = arith.constant 0 : index
      %29 = vector.load %arg4[%c0_21, %c0_22] : memref<64x128xbf16, #tpu.memory_space<vmem>>, vector<64x128xbf16>
      %30 = arith.truncf %28 : vector<8x64xf32> to vector<8x64xbf16>
      %cst_23 = arith.constant dense<0.000000e+00> : vector<8x128xf32>
      %31 = tpu.matmul %30, %29, %cst_23 {dimension_numbers = #tpu.dot_dimension_numbers<[1], [0], [0], [1], [0, 0, 1, 1], [], []>} : vector<8x64xbf16>, vector<64x128xbf16>, vector<8x128xf32> -> vector<8x128xf32>
      %c0_24 = arith.constant 0 : index
      %c0_25 = arith.constant 0 : index
      %32 = vector.load %arg17[%c0_24, %c0_25] : memref<12x1024xf32, #tpu.memory_space<vmem>>, vector<1x128xf32>
      %33 = vector.broadcast %32 : vector<1x128xf32> to vector<8x128xf32>
      %34 = arith.addf %31, %33 : vector<8x128xf32>
      %35 = arith.negf %34 : vector<8x128xf32>
      %36 = math.exp %35 : vector<8x128xf32>
      %cst_26 = arith.constant 1.000000e+00 : f32
      %37 = vector.broadcast %cst_26 : f32 to vector<8x128xf32>
      %38 = arith.addf %37, %36 : vector<8x128xf32>
      %39 = arith.divf %37, %38 : vector<8x128xf32>
      %40 = arith.mulf %34, %39 : vector<8x128xf32>
      %c0_27 = arith.constant 0 : index
      %c0_28 = arith.constant 0 : index
      %41 = vector.load %arg5[%c0_27, %c0_28] : memref<128x64xbf16, #tpu.memory_space<vmem>>, vector<128x64xbf16>
      %42 = arith.truncf %40 : vector<8x128xf32> to vector<8x128xbf16>
      %cst_29 = arith.constant dense<0.000000e+00> : vector<8x64xf32>
      %43 = tpu.matmul %42, %41, %cst_29 {dimension_numbers = #tpu.dot_dimension_numbers<[1], [0], [0], [1], [0, 0, 1, 1], [], []>} : vector<8x128xbf16>, vector<128x64xbf16>, vector<8x64xf32> -> vector<8x64xf32>
      %c1 = arith.constant 1 : index
      %c0_30 = arith.constant 0 : index
      %44 = vector.load %arg17[%c1, %c0_30] : memref<12x1024xf32, #tpu.memory_space<vmem>>, vector<1x64xf32>
      %45 = vector.broadcast %44 : vector<1x64xf32> to vector<8x64xf32>
      %46 = arith.addf %43, %45 : vector<8x64xf32>
      %c0_31 = arith.constant 0 : index
      %c0_32 = arith.constant 0 : index
      %47 = vector.load %arg2[%c0_31, %c0_32] : memref<8x32xf32, #tpu.memory_space<vmem>>, vector<8x32xf32>
      %c0_33 = arith.constant 0 : index
      %c0_34 = arith.constant 0 : index
      %48 = vector.load %arg6[%c0_33, %c0_34] : memref<32x64xbf16, #tpu.memory_space<vmem>>, vector<32x64xbf16>
      %49 = arith.truncf %47 : vector<8x32xf32> to vector<8x32xbf16>
      %cst_35 = arith.constant dense<0.000000e+00> : vector<8x64xf32>
      %50 = tpu.matmul %49, %48, %cst_35 {dimension_numbers = #tpu.dot_dimension_numbers<[1], [0], [0], [1], [0, 0, 1, 1], [], []>} : vector<8x32xbf16>, vector<32x64xbf16>, vector<8x64xf32> -> vector<8x64xf32>
      %c2 = arith.constant 2 : index
      %c0_36 = arith.constant 0 : index
      %51 = vector.load %arg17[%c2, %c0_36] : memref<12x1024xf32, #tpu.memory_space<vmem>>, vector<1x64xf32>
      %52 = vector.broadcast %51 : vector<1x64xf32> to vector<8x64xf32>
      %53 = arith.addf %50, %52 : vector<8x64xf32>
      %cst_37 = arith.constant 0.000000e+00 : f32
      %54 = vector.broadcast %cst_37 : f32 to vector<8x64xf32>
      %55 = arith.cmpf oge, %53, %54 : vector<8x64xf32>
      %cst_38 = arith.constant 0.00999999977 : f32
      %56 = vector.broadcast %cst_38 : f32 to vector<8x64xf32>
      %57 = arith.mulf %56, %53 : vector<8x64xf32>
      %58 = arith.select %55, %53, %57 : vector<8x64xi1>, vector<8x64xf32>
      %c0_39 = arith.constant 0 : index
      %c0_40 = arith.constant 0 : index
      %59 = vector.load %arg7[%c0_39, %c0_40] : memref<64x32xbf16, #tpu.memory_space<vmem>>, vector<64x32xbf16>
      %60 = arith.truncf %58 : vector<8x64xf32> to vector<8x64xbf16>
      %cst_41 = arith.constant dense<0.000000e+00> : vector<8x32xf32>
      %61 = tpu.matmul %60, %59, %cst_41 {dimension_numbers = #tpu.dot_dimension_numbers<[1], [0], [0], [1], [0, 0, 1, 1], [], []>} : vector<8x64xbf16>, vector<64x32xbf16>, vector<8x32xf32> -> vector<8x32xf32>
      %c3 = arith.constant 3 : index
      %c0_42 = arith.constant 0 : index
      %62 = vector.load %arg17[%c3, %c0_42] : memref<12x1024xf32, #tpu.memory_space<vmem>>, vector<1x32xf32>
      %63 = vector.broadcast %62 : vector<1x32xf32> to vector<8x32xf32>
      %64 = arith.addf %61, %63 : vector<8x32xf32>
      %c0_43 = arith.constant 0 : index
      %c0_44 = arith.constant 0 : index
      %65 = vector.load %arg12[%c0_43, %c0_44] : memref<32x64xbf16, #tpu.memory_space<vmem>>, vector<32x64xbf16>
      %66 = arith.truncf %64 : vector<8x32xf32> to vector<8x32xbf16>
      %cst_45 = arith.constant dense<0.000000e+00> : vector<8x64xf32>
      %67 = tpu.matmul %66, %65, %cst_45 {dimension_numbers = #tpu.dot_dimension_numbers<[1], [0], [0], [1], [0, 0, 1, 1], [], []>} : vector<8x32xbf16>, vector<32x64xbf16>, vector<8x64xf32> -> vector<8x64xf32>
      %c0_46 = arith.constant 0 : index
      %c0_47 = arith.constant 0 : index
      %68 = vector.load %arg13[%c0_46, %c0_47] : memref<512x64xbf16, #tpu.memory_space<vmem>>, vector<512x64xbf16>
      %69 = arith.truncf %27 : vector<8x512xf32> to vector<8x512xbf16>
      %cst_48 = arith.constant dense<0.000000e+00> : vector<8x64xf32>
      %70 = tpu.matmul %69, %68, %cst_48 {dimension_numbers = #tpu.dot_dimension_numbers<[1], [0], [0], [1], [0, 0, 1, 1], [], []>} : vector<8x512xbf16>, vector<512x64xbf16>, vector<8x64xf32> -> vector<8x64xf32>
      %71 = arith.addf %67, %70 : vector<8x64xf32>
      %c0_49 = arith.constant 0 : index
      %c0_50 = arith.constant 0 : index
      %72 = vector.load %arg14[%c0_49, %c0_50] : memref<64x64xbf16, #tpu.memory_space<vmem>>, vector<64x64xbf16>
      %73 = arith.truncf %46 : vector<8x64xf32> to vector<8x64xbf16>
      %cst_51 = arith.constant dense<0.000000e+00> : vector<8x64xf32>
      %74 = tpu.matmul %73, %72, %cst_51 {dimension_numbers = #tpu.dot_dimension_numbers<[1], [0], [0], [1], [0, 0, 1, 1], [], []>} : vector<8x64xbf16>, vector<64x64xbf16>, vector<8x64xf32> -> vector<8x64xf32>
      %75 = arith.addf %71, %74 : vector<8x64xf32>
      %c6 = arith.constant 6 : index
      %c0_52 = arith.constant 0 : index
      %76 = vector.load %arg17[%c6, %c0_52] : memref<12x1024xf32, #tpu.memory_space<vmem>>, vector<1x64xf32>
      %77 = vector.broadcast %76 : vector<1x64xf32> to vector<8x64xf32>
      %78 = arith.addf %75, %77 : vector<8x64xf32>
      %cst_53 = arith.constant 0.000000e+00 : f32
      %79 = vector.broadcast %cst_53 : f32 to vector<8x64xf32>
      %80 = arith.cmpf oge, %78, %79 : vector<8x64xf32>
      %cst_54 = arith.constant 0.00999999977 : f32
      %81 = vector.broadcast %cst_54 : f32 to vector<8x64xf32>
      %82 = arith.mulf %81, %78 : vector<8x64xf32>
      %83 = arith.select %80, %78, %82 : vector<8x64xi1>, vector<8x64xf32>
      %c0_55 = arith.constant 0 : index
      %c0_56 = arith.constant 0 : index
      %c0_57 = arith.constant 0 : index
      %84 = vector.load %arg15[%c0_55, %c0_56, %c0_57] : memref<4x64x64xbf16, #tpu.memory_space<vmem>>, vector<1x64x64xbf16>
      %85 = vector.shape_cast %84 : vector<1x64x64xbf16> to vector<64x64xbf16>
      %86 = arith.truncf %83 : vector<8x64xf32> to vector<8x64xbf16>
      %cst_58 = arith.constant dense<0.000000e+00> : vector<8x64xf32>
      %87 = tpu.matmul %86, %85, %cst_58 {dimension_numbers = #tpu.dot_dimension_numbers<[1], [0], [0], [1], [0, 0, 1, 1], [], []>} : vector<8x64xbf16>, vector<64x64xbf16>, vector<8x64xf32> -> vector<8x64xf32>
      %c7 = arith.constant 7 : index
      %c0_59 = arith.constant 0 : index
      %88 = vector.load %arg17[%c7, %c0_59] : memref<12x1024xf32, #tpu.memory_space<vmem>>, vector<1x64xf32>
      %89 = vector.broadcast %88 : vector<1x64xf32> to vector<8x64xf32>
      %90 = arith.addf %87, %89 : vector<8x64xf32>
      %cst_60 = arith.constant 0.000000e+00 : f32
      %91 = vector.broadcast %cst_60 : f32 to vector<8x64xf32>
      %92 = arith.cmpf oge, %90, %91 : vector<8x64xf32>
      %cst_61 = arith.constant 0.00999999977 : f32
      %93 = vector.broadcast %cst_61 : f32 to vector<8x64xf32>
      %94 = arith.mulf %93, %90 : vector<8x64xf32>
      %95 = arith.select %92, %90, %94 : vector<8x64xi1>, vector<8x64xf32>
      %c1_62 = arith.constant 1 : index
      %c0_63 = arith.constant 0 : index
      %c0_64 = arith.constant 0 : index
      %96 = vector.load %arg15[%c1_62, %c0_63, %c0_64] : memref<4x64x64xbf16, #tpu.memory_space<vmem>>, vector<1x64x64xbf16>
      %97 = vector.shape_cast %96 : vector<1x64x64xbf16> to vector<64x64xbf16>
      %98 = arith.truncf %95 : vector<8x64xf32> to vector<8x64xbf16>
      %cst_65 = arith.constant dense<0.000000e+00> : vector<8x64xf32>
      %99 = tpu.matmul %98, %97, %cst_65 {dimension_numbers = #tpu.dot_dimension_numbers<[1], [0], [0], [1], [0, 0, 1, 1], [], []>} : vector<8x64xbf16>, vector<64x64xbf16>, vector<8x64xf32> -> vector<8x64xf32>
      %c8 = arith.constant 8 : index
      %c0_66 = arith.constant 0 : index
      %100 = vector.load %arg17[%c8, %c0_66] : memref<12x1024xf32, #tpu.memory_space<vmem>>, vector<1x64xf32>
      %101 = vector.broadcast %100 : vector<1x64xf32> to vector<8x64xf32>
      %102 = arith.addf %99, %101 : vector<8x64xf32>
      %cst_67 = arith.constant 0.000000e+00 : f32
      %103 = vector.broadcast %cst_67 : f32 to vector<8x64xf32>
      %104 = arith.cmpf oge, %102, %103 : vector<8x64xf32>
      %cst_68 = arith.constant 0.00999999977 : f32
      %105 = vector.broadcast %cst_68 : f32 to vector<8x64xf32>
      %106 = arith.mulf %105, %102 : vector<8x64xf32>
      %107 = arith.select %104, %102, %106 : vector<8x64xi1>, vector<8x64xf32>
      %c2_69 = arith.constant 2 : index
      %c0_70 = arith.constant 0 : index
      %c0_71 = arith.constant 0 : index
      %108 = vector.load %arg15[%c2_69, %c0_70, %c0_71] : memref<4x64x64xbf16, #tpu.memory_space<vmem>>, vector<1x64x64xbf16>
      %109 = vector.shape_cast %108 : vector<1x64x64xbf16> to vector<64x64xbf16>
      %110 = arith.truncf %107 : vector<8x64xf32> to vector<8x64xbf16>
      %cst_72 = arith.constant dense<0.000000e+00> : vector<8x64xf32>
      %111 = tpu.matmul %110, %109, %cst_72 {dimension_numbers = #tpu.dot_dimension_numbers<[1], [0], [0], [1], [0, 0, 1, 1], [], []>} : vector<8x64xbf16>, vector<64x64xbf16>, vector<8x64xf32> -> vector<8x64xf32>
      %c9 = arith.constant 9 : index
      %c0_73 = arith.constant 0 : index
      %112 = vector.load %arg17[%c9, %c0_73] : memref<12x1024xf32, #tpu.memory_space<vmem>>, vector<1x64xf32>
      %113 = vector.broadcast %112 : vector<1x64xf32> to vector<8x64xf32>
      %114 = arith.addf %111, %113 : vector<8x64xf32>
      %cst_74 = arith.constant 0.000000e+00 : f32
      %115 = vector.broadcast %cst_74 : f32 to vector<8x64xf32>
      %116 = arith.cmpf oge, %114, %115 : vector<8x64xf32>
      %cst_75 = arith.constant 0.00999999977 : f32
      %117 = vector.broadcast %cst_75 : f32 to vector<8x64xf32>
      %118 = arith.mulf %117, %114 : vector<8x64xf32>
      %119 = arith.select %116, %114, %118 : vector<8x64xi1>, vector<8x64xf32>
      %c3_76 = arith.constant 3 : index
      %c0_77 = arith.constant 0 : index
      %c0_78 = arith.constant 0 : index
      %120 = vector.load %arg15[%c3_76, %c0_77, %c0_78] : memref<4x64x64xbf16, #tpu.memory_space<vmem>>, vector<1x64x64xbf16>
      %121 = vector.shape_cast %120 : vector<1x64x64xbf16> to vector<64x64xbf16>
      %122 = arith.truncf %119 : vector<8x64xf32> to vector<8x64xbf16>
      %cst_79 = arith.constant dense<0.000000e+00> : vector<8x64xf32>
      %123 = tpu.matmul %122, %121, %cst_79 {dimension_numbers = #tpu.dot_dimension_numbers<[1], [0], [0], [1], [0, 0, 1, 1], [], []>} : vector<8x64xbf16>, vector<64x64xbf16>, vector<8x64xf32> -> vector<8x64xf32>
      %c10 = arith.constant 10 : index
      %c0_80 = arith.constant 0 : index
      %124 = vector.load %arg17[%c10, %c0_80] : memref<12x1024xf32, #tpu.memory_space<vmem>>, vector<1x64xf32>
      %125 = vector.broadcast %124 : vector<1x64xf32> to vector<8x64xf32>
      %126 = arith.addf %123, %125 : vector<8x64xf32>
      %cst_81 = arith.constant 0.000000e+00 : f32
      %127 = vector.broadcast %cst_81 : f32 to vector<8x64xf32>
      %128 = arith.cmpf oge, %126, %127 : vector<8x64xf32>
      %cst_82 = arith.constant 0.00999999977 : f32
      %129 = vector.broadcast %cst_82 : f32 to vector<8x64xf32>
      %130 = arith.mulf %129, %126 : vector<8x64xf32>
      %131 = arith.select %128, %126, %130 : vector<8x64xi1>, vector<8x64xf32>
      %c0_83 = arith.constant 0 : index
      %c0_84 = arith.constant 0 : index
      %132 = vector.load %arg16[%c0_83, %c0_84] : memref<64x32xbf16, #tpu.memory_space<vmem>>, vector<64x32xbf16>
      %133 = arith.truncf %131 : vector<8x64xf32> to vector<8x64xbf16>
      %cst_85 = arith.constant dense<0.000000e+00> : vector<8x32xf32>
      %134 = tpu.matmul %133, %132, %cst_85 {dimension_numbers = #tpu.dot_dimension_numbers<[1], [0], [0], [1], [0, 0, 1, 1], [], []>} : vector<8x64xbf16>, vector<64x32xbf16>, vector<8x32xf32> -> vector<8x32xf32>
      %c11 = arith.constant 11 : index
      %c0_86 = arith.constant 0 : index
      %135 = vector.load %arg17[%c11, %c0_86] : memref<12x1024xf32, #tpu.memory_space<vmem>>, vector<1x32xf32>
      %136 = vector.broadcast %135 : vector<1x32xf32> to vector<8x32xf32>
      %137 = arith.addf %134, %136 : vector<8x32xf32>
      %c0_87 = arith.constant 0 : index
      %c0_88 = arith.constant 0 : index
      %138 = vector.load %arg18[%c0_87, %c0_88] : memref<8x32xf32, #tpu.memory_space<vmem>>, vector<8x32xf32>
      tpu.vector_store %arg18[%c0_87, %c0_88], %137 {strides = array<i32>} : memref<8x32xf32, #tpu.memory_space<vmem>>, vector<8x32xf32>,
    } else {
    }
    return
  }
  func.func @transform_0(%arg0: i32) -> (i32, i32) {
    %c0_i32 = arith.constant 0 : i32
    %c0_i32_0 = arith.constant 0 : i32
    %c0_i32_1 = arith.constant 0 : i32
    return %c0_i32, %c0_i32_0 : i32, i32
  }
  func.func @transform_1(%arg0: i32) -> (i32, i32) {
    %c0_i32 = arith.constant 0 : i32
    %c0_i32_0 = arith.constant 0 : i32
    %c0_i32_1 = arith.constant 0 : i32
    return %c0_i32, %c0_i32_0 : i32, i32
  }
  func.func @transform_2(%arg0: i32) -> (i32, i32) {
    %c0_i32 = arith.constant 0 : i32
    %c0_i32_0 = arith.constant 0 : i32
    %c0_i32_1 = arith.constant 0 : i32
    return %c0_i32, %c0_i32_0 : i32, i32
  }
  func.func @transform_3(%arg0: i32) -> (i32, i32) {
    %c0_i32 = arith.constant 0 : i32
    %c0_i32_0 = arith.constant 0 : i32
    %c0_i32_1 = arith.constant 0 : i32
    return %c0_i32, %c0_i32_0 : i32, i32
  }
  func.func @transform_4(%arg0: i32) -> (i32, i32) {
    %c0_i32 = arith.constant 0 : i32
    %c0_i32_0 = arith.constant 0 : i32
    %c0_i32_1 = arith.constant 0 : i32
    return %c0_i32, %c0_i32_0 : i32, i32
  }
  func.func @transform_5(%arg0: i32) -> (i32, i32) {
    %c0_i32 = arith.constant 0 : i32
    %c0_i32_0 = arith.constant 0 : i32
    %c0_i32_1 = arith.constant 0 : i32
    return %c0_i32, %c0_i32_0 : i32, i32
  }
  func.func @transform_6(%arg0: i32) -> (i32, i32) {
    %c0_i32 = arith.constant 0 : i32
    %c0_i32_0 = arith.constant 0 : i32
    %c0_i32_1 = arith.constant 0 : i32
    return %c0_i32, %c0_i32_0 : i32, i32
  }
  func.func @transform_7(%arg0: i32) -> (i32, i32) {
    %c0_i32 = arith.constant 0 : i32
    %c0_i32_0 = arith.constant 0 : i32
    %c0_i32_1 = arith.constant 0 : i32
    return %c0_i32, %c0_i32_0 : i32, i32
  }
  func.func @transform_8(%arg0: i32) -> (i32, i32, i32) {
    %c0_i32 = arith.constant 0 : i32
    %c0_i32_0 = arith.constant 0 : i32
    %c0_i32_1 = arith.constant 0 : i32
    return %arg0, %c0_i32, %c0_i32_0 : i32, i32, i32
  }
  func.func @transform_9(%arg0: i32) -> (i32, i32, i32) {
    %c0_i32 = arith.constant 0 : i32
    %c0_i32_0 = arith.constant 0 : i32
    %c0_i32_1 = arith.constant 0 : i32
    return %arg0, %c0_i32, %c0_i32_0 : i32, i32, i32
  }
  func.func @transform_10(%arg0: i32) -> (i32, i32) {
    %c0_i32 = arith.constant 0 : i32
    %c0_i32_0 = arith.constant 0 : i32
    %c0_i32_1 = arith.constant 0 : i32
    return %c0_i32, %c0_i32_0 : i32, i32
  }
  func.func @transform_11(%arg0: i32) -> (i32, i32) {
    %c0_i32 = arith.constant 0 : i32
    %c0_i32_0 = arith.constant 0 : i32
    %c0_i32_1 = arith.constant 0 : i32
    return %c0_i32, %c0_i32_0 : i32, i32
  }
  func.func @transform_12(%arg0: i32) -> (i32, i32) {
    %c0_i32 = arith.constant 0 : i32
    %c0_i32_0 = arith.constant 0 : i32
    %c0_i32_1 = arith.constant 0 : i32
    return %c0_i32, %c0_i32_0 : i32, i32
  }
  func.func @transform_13(%arg0: i32) -> (i32, i32) {
    %c0_i32 = arith.constant 0 : i32
    %c0_i32_0 = arith.constant 0 : i32
    %c0_i32_1 = arith.constant 0 : i32
    return %c0_i32, %c0_i32_0 : i32, i32
  }
  func.func @transform_14(%arg0: i32) -> (i32, i32, i32) {
    %c0_i32 = arith.constant 0 : i32
    %c0_i32_0 = arith.constant 0 : i32
    %c0_i32_1 = arith.constant 0 : i32
    %c0_i32_2 = arith.constant 0 : i32
    return %c0_i32, %c0_i32_0, %c0_i32_1 : i32, i32, i32
  }
  func.func @transform_15(%arg0: i32) -> (i32, i32) {
    %c0_i32 = arith.constant 0 : i32
    %c0_i32_0 = arith.constant 0 : i32
    %c0_i32_1 = arith.constant 0 : i32
    return %c0_i32, %c0_i32_0 : i32, i32
  }
  func.func @transform_16(%arg0: i32) -> (i32, i32) {
    %c0_i32 = arith.constant 0 : i32
    %c0_i32_0 = arith.constant 0 : i32
    %c0_i32_1 = arith.constant 0 : i32
    return %c0_i32, %c0_i32_0 : i32, i32
  }
  func.func @transform_17(%arg0: i32) -> (i32, i32) {
    %c0_i32 = arith.constant 0 : i32
    %c0_i32_0 = arith.constant 0 : i32
    %c0_i32_1 = arith.constant 0 : i32
    return %c0_i32, %c0_i32_0 : i32, i32
  }
}

</mosaic_0001>

<llo_original>
// kernel: _forward.1
$region0: #{_forward.1}
  #allocation0 [shape = 'u32[]', space=smem, size = 0x4, offset = 0x4, fixed_abs, tag = 'smem constant byte address 0x4 - core index']
  #allocation1 [shape = 'u32[72,128]{1,0:T(1,128)}', space=vmem, size = 0x9000, scoped, tag = 'internal scratch']
  #allocation2 [shape = 'f32[8,1024]{1,0:T(8,128)}', space=vmem, size = 0x8000, scoped, tag = 'scratch operand']
  %s0 = inlined_call_operand.vmem [shape: f32[8,64], index: 0, kind: input, shape index: {}]
  %s1 = inlined_call_operand.hbm [shape: f32[8,32], index: 1, kind: input, shape index: {}]
  %s2 = inlined_call_operand.hbm [shape: f32[8,512], index: 2, kind: input, shape index: {}]
  %s3 = inlined_call_operand.hbm [shape: bf16[64,128], index: 3, kind: input, shape index: {}]
  %s4 = inlined_call_operand.vmem [shape: bf16[128,64], index: 4, kind: input, shape index: {}]
  %s5 = inlined_call_operand.hbm [shape: bf16[32,64], index: 5, kind: input, shape index: {}]
  %s6 = inlined_call_operand.vmem [shape: bf16[64,32], index: 6, kind: input, shape index: {}]
  %s7 = inlined_call_operand.hbm [shape: bf16[512,1024], index: 7, kind: input, shape index: {}]
  %s8 = inlined_call_operand.hbm [shape: bf16[4,1024,1024], index: 8, kind: input, shape index: {}]
  %s9 = inlined_call_operand.hbm [shape: f32[4,1,1024], index: 9, kind: input, shape index: {}]
  %s10 = inlined_call_operand.hbm [shape: bf16[1024,512], index: 10, kind: input, shape index: {}]
  %s11 = inlined_call_operand.hbm [shape: bf16[32,64], index: 11, kind: input, shape index: {}]
  %s12 = inlined_call_operand.vmem [shape: bf16[512,64], index: 12, kind: input, shape index: {}]
  %s13 = inlined_call_operand.hbm [shape: bf16[64,64], index: 13, kind: input, shape index: {}]
  %s14 = inlined_call_operand.hbm [shape: bf16[4,64,64], index: 14, kind: input, shape index: {}]
  %s15 = inlined_call_operand.vmem [shape: bf16[64,32], index: 15, kind: input, shape index: {}]
  %s16 = inlined_call_operand.hbm [shape: f32[12,1024], index: 16, kind: input, shape index: {}]
  %s17 = inlined_call_operand.hbm [shape: f32[8,32], index: 17, kind: output, shape index: {}]
  %s18 = sld [smem:[#allocation0]]
  $region157: #{_forward.1} parent=0
    _
  %s20 = ssub.s32 1, %s18
  %s21 = scalar_select 0, %s20, %s18
  $region1: #{_forward.1} parent=0
    #allocation3 [shape = 'u8[4096]{0}', space=vmem, size = 0x1000, scoped, tag = 'input window, operand 1, single buffered']
    #allocation4 [shape = 's32[2]{0}', space=sflag, size = 0x8, scoped, tag = 'scoped memory for _forward.1']
    #allocation5 [shape = 's32[2]{0}', space=sflag, size = 0x8, scoped, tag = 'scoped memory for _forward.1']
    #allocation6 [shape = 'u8[16384]{0}', space=vmem, size = 0x4000, scoped, tag = 'input window, operand 2, single buffered']
    #allocation7 [shape = 's32[1]{0}', space=sflag, size = 0x4, scoped, tag = 'scoped memory for _forward.1']
    #allocation8 [shape = 'u8[16384]{0}', space=vmem, size = 0x4000, scoped, tag = 'input window, operand 3, single buffered']
    #allocation9 [shape = 'u8[8192]{0}', space=vmem, size = 0x2000, scoped, tag = 'input window, operand 5, single buffered']
    #allocation10 [shape = 's32[1]{0}', space=sflag, size = 0x4, scoped, tag = 'scoped memory for _forward.1']
    #allocation11 [shape = 'u8[1048576]{0}', space=vmem, size = 0x100000, scoped, tag = 'input window, operand 7, single buffered']
    #allocation12 [shape = 'u8[4194304]{0}', space=vmem, size = 0x400000, scoped, tag = 'input window, operand 8']
    #allocation13 [shape = 's32[2]{0}', space=sflag, size = 0x8, scoped, tag = 'scoped memory for _forward.1']
    #allocation14 [shape = 'u8[8192]{0}', space=vmem, size = 0x2000, scoped, tag = 'input window, operand 9']
    #allocation15 [shape = 'u8[1048576]{0}', space=vmem, size = 0x100000, scoped, tag = 'input window, operand 10, single buffered']
    #allocation16 [shape = 's32[1]{0}', space=sflag, size = 0x4, scoped, tag = 'scoped memory for _forward.1']
    #allocation17 [shape = 'u8[8192]{0}', space=vmem, size = 0x2000, scoped, tag = 'input window, operand 11, single buffered']
    #allocation18 [shape = 'u8[16384]{0}', space=vmem, size = 0x4000, scoped, tag = 'input window, operand 13, single buffered']
    #allocation19 [shape = 's32[1]{0}', space=sflag, size = 0x4, scoped, tag = 'scoped memory for _forward.1']
    #allocation20 [shape = 'u8[65536]{0}', space=vmem, size = 0x10000, scoped, tag = 'input window, operand 14, single buffered']
    #allocation21 [shape = 'u8[65536]{0}', space=vmem, size = 0x10000, scoped, tag = 'input window, operand 16, single buffered']
    #allocation22 [shape = 's32[1]{0}', space=sflag, size = 0x4, scoped, tag = 'scoped memory for _forward.1']
    #allocation23 [shape = 'u8[4096]{0}', space=vmem, size = 0x1000, scoped, tag = 'output window, operand 0, single buffered']
    %22 = vsyncpa [#allocation4], 0
    %23 = vsyncpa [#allocation7], 0
    %24 = vsyncpa [#allocation10], 0
    %25 = vsyncpa [#allocation13], 0
    %s26 = scalar_lea.sflag [#allocation13], 1
    %27 = vsyncpa %s26, 0
    %28 = vsyncpa [#allocation16], 0
    %29 = vsyncpa [#allocation19], 0
    %30 = vsyncpa [#allocation22], 0
    %31 = vsyncpa [#allocation5], 0
    loop: start=0, step=1, limit=6
    $region2: #{_forward.1} parent=1 // loop_pre_header
      _
    $region3: #{_forward.1} parent=1 // loop_header
      %s33 = sphi 0, %s37
      %p34 = scmp.ge.s32.totalorder %s33, 6
      %s41 = sphi 0, %s41
      %s43 = sphi 0, %s41
      %s44 = sphi 0, %s43
      %s58 = sphi 0, %s44
      %s62 = sphi 0, %s62
      %s64 = sphi 0, %s62
      %s65 = sphi 0, %s64
      %s79 = sphi 0, %s65
      %s83 = sphi 0, %s83
      %s85 = sphi 0, %s83
      %s86 = sphi 0, %s85
      %s100 = sphi 0, %s86
      %s104 = sphi 0, %s104
      %s106 = sphi 0, %s104
      %s107 = sphi 0, %s106
      %s121 = sphi 0, %s107
      %s125 = sphi 0, %s125
      %s127 = sphi 0, %s125
      %s128 = sphi 0, %s127
      %s142 = sphi 0, %s128
      %s146 = sphi 0, %s146
      %s148 = sphi 0, %s146
      %s149 = sphi 0, %s148
      %s163 = sphi 0, %s149
      %s167 = sphi 0, %s167
      %s169 = sphi 0, %s167
      %s170 = sphi 0, %s169
      %s184 = sphi 0, %s170
      %s188 = sphi 0, %s188
      %s190 = sphi 0, %s188
      %s191 = sphi 0, %s190
      %s205 = sphi 0, %s191
      %s211 = sphi 0, %s213
      %s214 = sphi 0, %s211
      %s215 = sphi 0, %s214
      %s231 = sphi 0, %s215
      %s237 = sphi 0, %s239
      %s240 = sphi 0, %s237
      %s241 = sphi 0, %s240
      %s257 = sphi 0, %s241
      %s261 = sphi 0, %s261
      %s263 = sphi 0, %s261
      %s264 = sphi 0, %s263
      %s278 = sphi 0, %s264
      %s282 = sphi 0, %s282
      %s284 = sphi 0, %s282
      %s285 = sphi 0, %s284
      %s299 = sphi 0, %s285
      %s303 = sphi 0, %s303
      %s305 = sphi 0, %s303
      %s306 = sphi 0, %s305
      %s320 = sphi 0, %s306
      %s324 = sphi 0, %s324
      %s326 = sphi 0, %s324
      %s327 = sphi 0, %s326
      %s341 = sphi 0, %s327
      %s345 = sphi 0, %s345
      %s347 = sphi 0, %s345
      %s348 = sphi 0, %s347
      %s362 = sphi 0, %s348
      %s366 = sphi 0, %s366
      %s368 = sphi 0, %s366
      %s369 = sphi 0, %s368
      %s383 = sphi 0, %s369
      %s387 = sphi 0, %s387
      %s389 = sphi 0, %s387
      %s390 = sphi 0, %s389
      %s404 = sphi 0, %s390
      %s408 = sphi 0, %s408
      %s410 = sphi 0, %s408
      %s411 = sphi 0, %s410
      %s425 = sphi 0, %s411
    $region4: #{_forward.1} parent=1 // loop_header_branch
      %36 = sbr.rel (%p34) target = $region8
    $region5: #{_forward.1} parent=1 // loop_body
      %s38 = ssub.s32 %s33, 1
      %s39 = ssub.s32 %s33, 2
      %s40 = sadd.s32 %s33, 1
      %s42 = sadd.s32 %s41, 1
      %p45 = scmp.eq.s32.totalorder %s33, 3
      %p46 = scmp.ne.s32.totalorder %s41, %s43
      %p47 = scmp.eq.s32.totalorder %s33, 0
      %p48 = por %p46, %p47
      %p49 = scmp.ne.s32.totalorder %s41, %s43
      %p50 = scmp.eq.s32.totalorder %s38, 3
      %p51 = por %p49, %p50
      %p52 = scmp.ne.s32.totalorder %s43, %s44
      %p53 = scmp.eq.s32.totalorder %s38, 0
      %p54 = por %p52, %p53
      %p55 = scmp.ne.s32.totalorder %s43, %s44
      %p56 = scmp.eq.s32.totalorder %s39, 3
      %p57 = por %p55, %p56
      %p59 = scmp.ne.s32.totalorder %s44, %s58
      %p60 = scmp.eq.s32.totalorder %s39, 0
      %p61 = por %p59, %p60
      %s63 = sadd.s32 %s62, 1
      %p66 = scmp.eq.s32.totalorder %s33, 3
      %p67 = scmp.ne.s32.totalorder %s62, %s64
      %p68 = scmp.eq.s32.totalorder %s33, 0
      %p69 = por %p67, %p68
      %p70 = scmp.ne.s32.totalorder %s62, %s64
      %p71 = scmp.eq.s32.totalorder %s38, 3
      %p72 = por %p70, %p71
      %p73 = scmp.ne.s32.totalorder %s64, %s65
      %p74 = scmp.eq.s32.totalorder %s38, 0
      %p75 = por %p73, %p74
      %p76 = scmp.ne.s32.totalorder %s64, %s65
      %p77 = scmp.eq.s32.totalorder %s39, 3
      %p78 = por %p76, %p77
      %p80 = scmp.ne.s32.totalorder %s65, %s79
      %p81 = scmp.eq.s32.totalorder %s39, 0
      %p82 = por %p80, %p81
      %s84 = sadd.s32 %s83, 1
      %p87 = scmp.eq.s32.totalorder %s33, 3
      %p88 = scmp.ne.s32.totalorder %s83, %s85
      %p89 = scmp.eq.s32.totalorder %s33, 0
      %p90 = por %p88, %p89
      %p91 = scmp.ne.s32.totalorder %s83, %s85
      %p92 = scmp.eq.s32.totalorder %s38, 3
      %p93 = por %p91, %p92
      %p94 = scmp.ne.s32.totalorder %s85, %s86
      %p95 = scmp.eq.s32.totalorder %s38, 0
      %p96 = por %p94, %p95
      %p97 = scmp.ne.s32.totalorder %s85, %s86
      %p98 = scmp.eq.s32.totalorder %s39, 3
      %p99 = por %p97, %p98
      %p101 = scmp.ne.s32.totalorder %s86, %s100
      %p102 = scmp.eq.s32.totalorder %s39, 0
      %p103 = por %p101, %p102
      %s105 = sadd.s32 %s104, 1
      %p108 = scmp.eq.s32.totalorder %s33, 3
      %p109 = scmp.ne.s32.totalorder %s104, %s106
      %p110 = scmp.eq.s32.totalorder %s33, 0
      %p111 = por %p109, %p110
      %p112 = scmp.ne.s32.totalorder %s104, %s106
      %p113 = scmp.eq.s32.totalorder %s38, 3
      %p114 = por %p112, %p113
      %p115 = scmp.ne.s32.totalorder %s106, %s107
      %p116 = scmp.eq.s32.totalorder %s38, 0
      %p117 = por %p115, %p116
      %p118 = scmp.ne.s32.totalorder %s106, %s107
      %p119 = scmp.eq.s32.totalorder %s39, 3
      %p120 = por %p118, %p119
      %p122 = scmp.ne.s32.totalorder %s107, %s121
      %p123 = scmp.eq.s32.totalorder %s39, 0
      %p124 = por %p122, %p123
      %s126 = sadd.s32 %s125, 1
      %p129 = scmp.eq.s32.totalorder %s33, 3
      %p130 = scmp.ne.s32.totalorder %s125, %s127
      %p131 = scmp.eq.s32.totalorder %s33, 0
      %p132 = por %p130, %p131
      %p133 = scmp.ne.s32.totalorder %s125, %s127
      %p134 = scmp.eq.s32.totalorder %s38, 3
      %p135 = por %p133, %p134
      %p136 = scmp.ne.s32.totalorder %s127, %s128
      %p137 = scmp.eq.s32.totalorder %s38, 0
      %p138 = por %p136, %p137
      %p139 = scmp.ne.s32.totalorder %s127, %s128
      %p140 = scmp.eq.s32.totalorder %s39, 3
      %p141 = por %p139, %p140
      %p143 = scmp.ne.s32.totalorder %s128, %s142
      %p144 = scmp.eq.s32.totalorder %s39, 0
      %p145 = por %p143, %p144
      %s147 = sadd.s32 %s146, 1
      %p150 = scmp.eq.s32.totalorder %s33, 3
      %p151 = scmp.ne.s32.totalorder %s146, %s148
      %p152 = scmp.eq.s32.totalorder %s33, 0
      %p153 = por %p151, %p152
      %p154 = scmp.ne.s32.totalorder %s146, %s148
      %p155 = scmp.eq.s32.totalorder %s38, 3
      %p156 = por %p154, %p155
      %p157 = scmp.ne.s32.totalorder %s148, %s149
      %p158 = scmp.eq.s32.totalorder %s38, 0
      %p159 = por %p157, %p158
      %p160 = scmp.ne.s32.totalorder %s148, %s149
      %p161 = scmp.eq.s32.totalorder %s39, 3
      %p162 = por %p160, %p161
      %p164 = scmp.ne.s32.totalorder %s149, %s163
      %p165 = scmp.eq.s32.totalorder %s39, 0
      %p166 = por %p164, %p165
      %s168 = sadd.s32 %s167, 1
      %p171 = scmp.eq.s32.totalorder %s33, 3
      %p172 = scmp.ne.s32.totalorder %s167, %s169
      %p173 = scmp.eq.s32.totalorder %s33, 0
      %p174 = por %p172, %p173
      %p175 = scmp.ne.s32.totalorder %s167, %s169
      %p176 = scmp.eq.s32.totalorder %s38, 3
      %p177 = por %p175, %p176
      %p178 = scmp.ne.s32.totalorder %s169, %s170
      %p179 = scmp.eq.s32.totalorder %s38, 0
      %p180 = por %p178, %p179
      %p181 = scmp.ne.s32.totalorder %s169, %s170
      %p182 = scmp.eq.s32.totalorder %s39, 3
      %p183 = por %p181, %p182
      %p185 = scmp.ne.s32.totalorder %s170, %s184
      %p186 = scmp.eq.s32.totalorder %s39, 0
      %p187 = por %p185, %p186
      %s189 = sadd.s32 %s188, 1
      %p192 = scmp.eq.s32.totalorder %s33, 3
      %p193 = scmp.ne.s32.totalorder %s188, %s190
      %p194 = scmp.eq.s32.totalorder %s33, 0
      %p195 = por %p193, %p194
      %p196 = scmp.ne.s32.totalorder %s188, %s190
      %p197 = scmp.eq.s32.totalorder %s38, 3
      %p198 = por %p196, %p197
      %p199 = scmp.ne.s32.totalorder %s190, %s191
      %p200 = scmp.eq.s32.totalorder %s38, 0
      %p201 = por %p199, %p200
      %p202 = scmp.ne.s32.totalorder %s190, %s191
      %p203 = scmp.eq.s32.totalorder %s39, 3
      %p204 = por %p202, %p203
      %p206 = scmp.ne.s32.totalorder %s191, %s205
      %p207 = scmp.eq.s32.totalorder %s39, 0
      %p208 = por %p206, %p207
      %s209 = ssub.s32 %s33, %s40
      %p210 = scmp.eq.s32.totalorder %s209, 0
      %s212 = sadd.s32 %s211, 1
      %s213 = scalar_select %p210, %s211, %s212
      %p216 = pneg %p210
      %p217 = scmp.eq.s32.totalorder %s33, 3
      %p218 = por %p216, %p217
      %p219 = scmp.ne.s32.totalorder %s211, %s214
      %p220 = scmp.eq.s32.totalorder %s33, 0
      %p221 = por %p219, %p220
      %p222 = scmp.ne.s32.totalorder %s211, %s214
      %p223 = scmp.eq.s32.totalorder %s38, 3
      %p224 = por %p222, %p223
      %p225 = scmp.ne.s32.totalorder %s214, %s215
      %p226 = scmp.eq.s32.totalorder %s38, 0
      %p227 = por %p225, %p226
      %p228 = scmp.ne.s32.totalorder %s214, %s215
      %p229 = scmp.eq.s32.totalorder %s39, 3
      %p230 = por %p228, %p229
      %p232 = scmp.ne.s32.totalorder %s215, %s231
      %p233 = scmp.eq.s32.totalorder %s39, 0
      %p234 = por %p232, %p233
      %s235 = ssub.s32 %s33, %s40
      %p236 = scmp.eq.s32.totalorder %s235, 0
      %s238 = sadd.s32 %s237, 1
      %s239 = scalar_select %p236, %s237, %s238
      %p242 = pneg %p236
      %p243 = scmp.eq.s32.totalorder %s33, 3
      %p244 = por %p242, %p243
      %p245 = scmp.ne.s32.totalorder %s237, %s240
      %p246 = scmp.eq.s32.totalorder %s33, 0
      %p247 = por %p245, %p246
      %p248 = scmp.ne.s32.totalorder %s237, %s240
      %p249 = scmp.eq.s32.totalorder %s38, 3
      %p250 = por %p248, %p249
      %p251 = scmp.ne.s32.totalorder %s240, %s241
      %p252 = scmp.eq.s32.totalorder %s38, 0
      %p253 = por %p251, %p252
      %p254 = scmp.ne.s32.totalorder %s240, %s241
      %p255 = scmp.eq.s32.totalorder %s39, 3
      %p256 = por %p254, %p255
      %p258 = scmp.ne.s32.totalorder %s241, %s257
      %p259 = scmp.eq.s32.totalorder %s39, 0
      %p260 = por %p258, %p259
      %s262 = sadd.s32 %s261, 1
      %p265 = scmp.eq.s32.totalorder %s33, 3
      %p266 = scmp.ne.s32.totalorder %s261, %s263
      %p267 = scmp.eq.s32.totalorder %s33, 0
      %p268 = por %p266, %p267
      %p269 = scmp.ne.s32.totalorder %s261, %s263
      %p270 = scmp.eq.s32.totalorder %s38, 3
      %p271 = por %p269, %p270
      %p272 = scmp.ne.s32.totalorder %s263, %s264
      %p273 = scmp.eq.s32.totalorder %s38, 0
      %p274 = por %p272, %p273
      %p275 = scmp.ne.s32.totalorder %s263, %s264
      %p276 = scmp.eq.s32.totalorder %s39, 3
      %p277 = por %p275, %p276
      %p279 = scmp.ne.s32.totalorder %s264, %s278
      %p280 = scmp.eq.s32.totalorder %s39, 0
      %p281 = por %p279, %p280
      %s283 = sadd.s32 %s282, 1
      %p286 = scmp.eq.s32.totalorder %s33, 3
      %p287 = scmp.ne.s32.totalorder %s282, %s284
      %p288 = scmp.eq.s32.totalorder %s33, 0
      %p289 = por %p287, %p288
      %p290 = scmp.ne.s32.totalorder %s282, %s284
      %p291 = scmp.eq.s32.totalorder %s38, 3
      %p292 = por %p290, %p291
      %p293 = scmp.ne.s32.totalorder %s284, %s285
      %p294 = scmp.eq.s32.totalorder %s38, 0
      %p295 = por %p293, %p294
      %p296 = scmp.ne.s32.totalorder %s284, %s285
      %p297 = scmp.eq.s32.totalorder %s39, 3
      %p298 = por %p296, %p297
      %p300 = scmp.ne.s32.totalorder %s285, %s299
      %p301 = scmp.eq.s32.totalorder %s39, 0
      %p302 = por %p300, %p301
      %s304 = sadd.s32 %s303, 1
      %p307 = scmp.eq.s32.totalorder %s33, 3
      %p308 = scmp.ne.s32.totalorder %s303, %s305
      %p309 = scmp.eq.s32.totalorder %s33, 0
      %p310 = por %p308, %p309
      %p311 = scmp.ne.s32.totalorder %s303, %s305
      %p312 = scmp.eq.s32.totalorder %s38, 3
      %p313 = por %p311, %p312
      %p314 = scmp.ne.s32.totalorder %s305, %s306
      %p315 = scmp.eq.s32.totalorder %s38, 0
      %p316 = por %p314, %p315
      %p317 = scmp.ne.s32.totalorder %s305, %s306
      %p318 = scmp.eq.s32.totalorder %s39, 3
      %p319 = por %p317, %p318
      %p321 = scmp.ne.s32.totalorder %s306, %s320
      %p322 = scmp.eq.s32.totalorder %s39, 0
      %p323 = por %p321, %p322
      %s325 = sadd.s32 %s324, 1
      %p328 = scmp.eq.s32.totalorder %s33, 3
      %p329 = scmp.ne.s32.totalorder %s324, %s326
      %p330 = scmp.eq.s32.totalorder %s33, 0
      %p331 = por %p329, %p330
      %p332 = scmp.ne.s32.totalorder %s324, %s326
      %p333 = scmp.eq.s32.totalorder %s38, 3
      %p334 = por %p332, %p333
      %p335 = scmp.ne.s32.totalorder %s326, %s327
      %p336 = scmp.eq.s32.totalorder %s38, 0
      %p337 = por %p335, %p336
      %p338 = scmp.ne.s32.totalorder %s326, %s327
      %p339 = scmp.eq.s32.totalorder %s39, 3
      %p340 = por %p338, %p339
      %p342 = scmp.ne.s32.totalorder %s327, %s341
      %p343 = scmp.eq.s32.totalorder %s39, 0
      %p344 = por %p342, %p343
      %s346 = sadd.s32 %s345, 1
      %p349 = scmp.eq.s32.totalorder %s33, 3
      %p350 = scmp.ne.s32.totalorder %s345, %s347
      %p351 = scmp.eq.s32.totalorder %s33, 0
      %p352 = por %p350, %p351
      %p353 = scmp.ne.s32.totalorder %s345, %s347
      %p354 = scmp.eq.s32.totalorder %s38, 3
      %p355 = por %p353, %p354
      %p356 = scmp.ne.s32.totalorder %s347, %s348
      %p357 = scmp.eq.s32.totalorder %s38, 0
      %p358 = por %p356, %p357
      %p359 = scmp.ne.s32.totalorder %s347, %s348
      %p360 = scmp.eq.s32.totalorder %s39, 3
      %p361 = por %p359, %p360
      %p363 = scmp.ne.s32.totalorder %s348, %s362
      %p364 = scmp.eq.s32.totalorder %s39, 0
      %p365 = por %p363, %p364
      %s367 = sadd.s32 %s366, 1
      %p370 = scmp.eq.s32.totalorder %s33, 3
      %p371 = scmp.ne.s32.totalorder %s366, %s368
      %p372 = scmp.eq.s32.totalorder %s33, 0
      %p373 = por %p371, %p372
      %p374 = scmp.ne.s32.totalorder %s366, %s368
      %p375 = scmp.eq.s32.totalorder %s38, 3
      %p376 = por %p374, %p375
      %p377 = scmp.ne.s32.totalorder %s368, %s369
      %p378 = scmp.eq.s32.totalorder %s38, 0
      %p379 = por %p377, %p378
      %p380 = scmp.ne.s32.totalorder %s368, %s369
      %p381 = scmp.eq.s32.totalorder %s39, 3
      %p382 = por %p380, %p381
      %p384 = scmp.ne.s32.totalorder %s369, %s383
      %p385 = scmp.eq.s32.totalorder %s39, 0
      %p386 = por %p384, %p385
      %s388 = sadd.s32 %s387, 1
      %p391 = scmp.eq.s32.totalorder %s33, 3
      %p392 = scmp.ne.s32.totalorder %s387, %s389
      %p393 = scmp.eq.s32.totalorder %s33, 0
      %p394 = por %p392, %p393
      %p395 = scmp.ne.s32.totalorder %s387, %s389
      %p396 = scmp.eq.s32.totalorder %s38, 3
      %p397 = por %p395, %p396
      %p398 = scmp.ne.s32.totalorder %s389, %s390
      %p399 = scmp.eq.s32.totalorder %s38, 0
      %p400 = por %p398, %p399
      %p401 = scmp.ne.s32.totalorder %s389, %s390
      %p402 = scmp.eq.s32.totalorder %s39, 3
      %p403 = por %p401, %p402
      %p405 = scmp.ne.s32.totalorder %s390, %s404
      %p406 = scmp.eq.s32.totalorder %s39, 0
      %p407 = por %p405, %p406
      %s409 = sadd.s32 %s408, 1
      %p412 = scmp.eq.s32.totalorder %s33, 3
      %p413 = scmp.ne.s32.totalorder %s408, %s410
      %p414 = scmp.eq.s32.totalorder %s33, 0
      %p415 = por %p413, %p414
      %p416 = scmp.ne.s32.totalorder %s408, %s410
      %p417 = scmp.eq.s32.totalorder %s38, 3
      %p418 = por %p416, %p417
      %p419 = scmp.ne.s32.totalorder %s410, %s411
      %p420 = scmp.eq.s32.totalorder %s38, 0
      %p421 = por %p419, %p420
      %p422 = scmp.ne.s32.totalorder %s410, %s411
      %p423 = scmp.eq.s32.totalorder %s39, 3
      %p424 = por %p422, %p423
      %p426 = scmp.ne.s32.totalorder %s411, %s425
      %p427 = scmp.eq.s32.totalorder %s39, 0
      %p428 = por %p426, %p427
      %p429 = scmp.le.s32.totalorder 1, %s33
      %p430 = scmp.lt.s32.totalorder %s33, 5
      %p431 = pnand %p429, %p430
      %p432 = pneg %p431
      // Predicated region
      $region9: #{_forward.1} parent=5 // pred_check
        _
      $region10: #{_forward.1} parent=5 // pred_check_branch
        %434 = sbr.rel (%p431) target = $region12
      $region11: #{_forward.1} parent=5 // pred_region
        %s435 = ssub.s32 %s33, 1
        // Predicated region
        $region13: #{_forward.1} parent=11 // pred_check
          %p436 = pneg %p54
        $region14: #{_forward.1} parent=11 // pred_check_branch
          %438 = sbr.rel (%p436) target = $region16
        $region15: #{_forward.1} parent=11 // pred_region
          _
        $region16: #{_forward.1} parent=11 // pred_fallthru
          _
        // Predicated region
        $region17: #{_forward.1} parent=11 // pred_check
          %p439 = pneg %p75
        $region18: #{_forward.1} parent=11 // pred_check_branch
          %441 = sbr.rel (%p439) target = $region20
        $region19: #{_forward.1} parent=11 // pred_region
          %443 = vsyncadd [#allocation4], 0
          %s445 = sshll.u32 %s1, 4
          %s446 = int_to_ptr.hbm [resolvable:$true] %s445
          %s447 = sshll.u32 [#allocation3], 4
          %s448 = int_to_ptr.vmem [resolvable:$true] %s447
          %450 = dma.hbm_to_vmem [thread:$0]  %s446, 128, %s448, [#allocation4]
        $region20: #{_forward.1} parent=11 // pred_fallthru
          _
        // Predicated region
        $region21: #{_forward.1} parent=11 // pred_check
          %p451 = pneg %p96
        $region22: #{_forward.1} parent=11 // pred_check_branch
          %453 = sbr.rel (%p451) target = $region24
        $region23: #{_forward.1} parent=11 // pred_region
          %455 = vsyncadd [#allocation7], 0
          %s457 = sshll.u32 %s2, 4
          %s458 = int_to_ptr.hbm [resolvable:$true] %s457
          %s459 = sshll.u32 [#allocation6], 4
          %s460 = int_to_ptr.vmem [resolvable:$true] %s459
          %462 = dma.hbm_to_vmem [thread:$0]  %s458, 512, %s460, [#allocation7]
        $region24: #{_forward.1} parent=11 // pred_fallthru
          _
        // Predicated region
        $region25: #{_forward.1} parent=11 // pred_check
          %p463 = pneg %p117
        $region26: #{_forward.1} parent=11 // pred_check_branch
          %465 = sbr.rel (%p463) target = $region28
        $region27: #{_forward.1} parent=11 // pred_region
          %467 = vsyncadd [#allocation7], 0
          %s468 = sshll.u32 %s3, 4
          %s469 = int_to_ptr.hbm [resolvable:$true] %s468
          %s470 = sshll.u32 [#allocation8], 4
          %s471 = int_to_ptr.vmem [resolvable:$true] %s470
          %476 = dma.hbm_to_vmem [thread:$0]  %s469, 512, %s471, [#allocation7], 64, 64, 4
        $region28: #{_forward.1} parent=11 // pred_fallthru
          _
        // Predicated region
        $region29: #{_forward.1} parent=11 // pred_check
          %p477 = pneg %p138
        $region30: #{_forward.1} parent=11 // pred_check_branch
          %479 = sbr.rel (%p477) target = $region32
        $region31: #{_forward.1} parent=11 // pred_region
          _
        $region32: #{_forward.1} parent=11 // pred_fallthru
          _
        // Predicated region
        $region33: #{_forward.1} parent=11 // pred_check
          %p480 = pneg %p159
        $region34: #{_forward.1} parent=11 // pred_check_branch
          %482 = sbr.rel (%p480) target = $region36
        $region35: #{_forward.1} parent=11 // pred_region
          %484 = vsyncadd [#allocation10], 0
          %s485 = sshll.u32 %s5, 4
          %s486 = int_to_ptr.hbm [resolvable:$true] %s485
          %s487 = sshll.u32 [#allocation9], 4
          %s488 = int_to_ptr.vmem [resolvable:$true] %s487
          %493 = dma.hbm_to_vmem [thread:$0]  %s486, 256, %s488, [#allocation10], 64, 64, 4
        $region36: #{_forward.1} parent=11 // pred_fallthru
          _
        // Predicated region
        $region37: #{_forward.1} parent=11 // pred_check
          %p494 = pneg %p180
        $region38: #{_forward.1} parent=11 // pred_check_branch
          %496 = sbr.rel (%p494) target = $region40
        $region39: #{_forward.1} parent=11 // pred_region
          _
        $region40: #{_forward.1} parent=11 // pred_fallthru
          _
        // Predicated region
        $region41: #{_forward.1} parent=11 // pred_check
          %p497 = pneg %p201
        $region42: #{_forward.1} parent=11 // pred_check_branch
          %499 = sbr.rel (%p497) target = $region44
        $region43: #{_forward.1} parent=11 // pred_region
          %501 = vsyncadd [#allocation10], 0
          %s502 = sshll.u32 %s7, 4
          %s503 = int_to_ptr.hbm [resolvable:$true] %s502
          %s504 = sshll.u32 [#allocation11], 4
          %s505 = int_to_ptr.vmem [resolvable:$true] %s504
          %510 = dma.hbm_to_vmem [thread:$0]  %s503, 32768, %s505, [#allocation10], 512, 512, 32
        $region44: #{_forward.1} parent=11 // pred_fallthru
          _
        // Predicated region
        $region45: #{_forward.1} parent=11 // pred_check
          %p511 = pneg %p274
        $region46: #{_forward.1} parent=11 // pred_check_branch
          %513 = sbr.rel (%p511) target = $region48
        $region47: #{_forward.1} parent=11 // pred_region
          %515 = vsyncadd [#allocation16], 0
          %s516 = sshll.u32 %s10, 4
          %s517 = int_to_ptr.hbm [resolvable:$true] %s516
          %s518 = sshll.u32 [#allocation15], 4
          %s519 = int_to_ptr.vmem [resolvable:$true] %s518
          %524 = dma.hbm_to_vmem [thread:$0]  %s517, 32768, %s519, [#allocation16], 256, 256, 16
        $region48: #{_forward.1} parent=11 // pred_fallthru
          _
        // Predicated region
        $region49: #{_forward.1} parent=11 // pred_check
          %p525 = pneg %p295
        $region50: #{_forward.1} parent=11 // pred_check_branch
          %527 = sbr.rel (%p525) target = $region52
        $region51: #{_forward.1} parent=11 // pred_region
          %529 = vsyncadd [#allocation16], 0
          %s530 = sshll.u32 %s11, 4
          %s531 = int_to_ptr.hbm [resolvable:$true] %s530
          %s532 = sshll.u32 [#allocation17], 4
          %s533 = int_to_ptr.vmem [resolvable:$true] %s532
          %538 = dma.hbm_to_vmem [thread:$0]  %s531, 256, %s533, [#allocation16], 64, 64, 4
        $region52: #{_forward.1} parent=11 // pred_fallthru
          _
        // Predicated region
        $region53: #{_forward.1} parent=11 // pred_check
          %p539 = pneg %p316
        $region54: #{_forward.1} parent=11 // pred_check_branch
          %541 = sbr.rel (%p539) target = $region56
        $region55: #{_forward.1} parent=11 // pred_region
          _
        $region56: #{_forward.1} parent=11 // pred_fallthru
          _
        // Predicated region
        $region57: #{_forward.1} parent=11 // pred_check
          %p542 = pneg %p337
        $region58: #{_forward.1} parent=11 // pred_check_branch
          %544 = sbr.rel (%p542) target = $region60
        $region59: #{_forward.1} parent=11 // pred_region
          %546 = vsyncadd [#allocation19], 0
          %s547 = sshll.u32 %s13, 4
          %s548 = int_to_ptr.hbm [resolvable:$true] %s547
          %s549 = sshll.u32 [#allocation18], 4
          %s550 = int_to_ptr.vmem [resolvable:$true] %s549
          %555 = dma.hbm_to_vmem [thread:$0]  %s548, 512, %s550, [#allocation19], 64, 64, 4
        $region60: #{_forward.1} parent=11 // pred_fallthru
          _
        // Predicated region
        $region61: #{_forward.1} parent=11 // pred_check
          %p556 = pneg %p358
        $region62: #{_forward.1} parent=11 // pred_check_branch
          %558 = sbr.rel (%p556) target = $region64
        $region63: #{_forward.1} parent=11 // pred_region
          %560 = vsyncadd [#allocation19], 0
          %s561 = sshll.u32 %s14, 4
          %s562 = int_to_ptr.hbm [resolvable:$true] %s561
          %s563 = sshll.u32 [#allocation20], 4
          %s564 = int_to_ptr.vmem [resolvable:$true] %s563
          %569 = dma.hbm_to_vmem [thread:$0]  %s562, 2048, %s564, [#allocation19], 64, 64, 4
        $region64: #{_forward.1} parent=11 // pred_fallthru
          _
        // Predicated region
        $region65: #{_forward.1} parent=11 // pred_check
          %p570 = pneg %p379
        $region66: #{_forward.1} parent=11 // pred_check_branch
          %572 = sbr.rel (%p570) target = $region68
        $region67: #{_forward.1} parent=11 // pred_region
          _
        $region68: #{_forward.1} parent=11 // pred_fallthru
          _
        // Predicated region
        $region69: #{_forward.1} parent=11 // pred_check
          %p573 = pneg %p400
        $region70: #{_forward.1} parent=11 // pred_check_branch
          %575 = sbr.rel (%p573) target = $region72
        $region71: #{_forward.1} parent=11 // pred_region
          %577 = vsyncadd [#allocation22], 0
          %s578 = sshll.u32 %s16, 4
          %s579 = int_to_ptr.hbm [resolvable:$true] %s578
          %s580 = sshll.u32 [#allocation21], 4
          %s581 = int_to_ptr.vmem [resolvable:$true] %s580
          %586 = dma.hbm_to_vmem [thread:$0]  %s579, 2048, %s581, [#allocation22], 1024, 1024, 64
        $region72: #{_forward.1} parent=11 // pred_fallthru
          _
      $region12: #{_forward.1} parent=5 // pred_fallthru
        _
      %p587 = scmp.lt.s32.totalorder %s33, 4
      // Predicated region
      $region73: #{_forward.1} parent=5 // pred_check
        %p588 = pneg %p587
      $region74: #{_forward.1} parent=5 // pred_check_branch
        %590 = sbr.rel (%p588) target = $region76
      $region75: #{_forward.1} parent=5 // pred_region
        // Predicated region
        $region77: #{_forward.1} parent=75 // pred_check
          %p591 = pneg %p221
        $region78: #{_forward.1} parent=75 // pred_check_branch
          %593 = sbr.rel (%p591) target = $region80
        $region79: #{_forward.1} parent=75 // pred_region
          %s594 = sand.u32 %s33, 1
          %s595 = scalar_lea.sflag [#allocation13], %s594
          %s596 = sand.u32 %s211, 1
          %s597 = smul.addr %s596, 4096
          %s598 = scalar_lea.vmem [#allocation12], %s597
          %600 = vsyncadd %s595, 0
          %s601 = smul.addr %s33, 1024
          %s602 = smul.addr %s601, 4
          %s603 = scalar_lea.hbm %s8, %s602
          %s604 = sshll.u32 %s603, 4
          %s605 = int_to_ptr.hbm [resolvable:$true] %s604
          %s606 = sshll.u32 %s598, 4
          %s607 = int_to_ptr.vmem [resolvable:$true] %s606
          %612 = dma.hbm_to_vmem [thread:$0]  %s605, 65536, %s607, %s595, 512, 512, 32
        $region80: #{_forward.1} parent=75 // pred_fallthru
          _
        // Predicated region
        $region81: #{_forward.1} parent=75 // pred_check
          %p613 = pneg %p247
        $region82: #{_forward.1} parent=75 // pred_check_branch
          %615 = sbr.rel (%p613) target = $region84
        $region83: #{_forward.1} parent=75 // pred_region
          %s616 = sand.u32 %s33, 1
          %s617 = scalar_lea.sflag [#allocation13], %s616
          %s618 = sand.u32 %s237, 1
          %s619 = smul.addr %s618, 8
          %s620 = scalar_lea.vmem [#allocation14], %s619
          %622 = vsyncadd %s617, 0
          %s623 = smul.addr %s33, 8
          %s624 = scalar_lea.hbm %s9, %s623
          %s626 = sshll.u32 %s624, 4
          %s627 = int_to_ptr.hbm [resolvable:$true] %s626
          %s628 = sshll.u32 %s620, 4
          %s629 = int_to_ptr.vmem [resolvable:$true] %s628
          %631 = dma.hbm_to_vmem [thread:$0]  %s627, 128, %s629, %s617
        $region84: #{_forward.1} parent=75 // pred_fallthru
          _
      $region76: #{_forward.1} parent=5 // pred_fallthru
        _
      %p632 = scmp.le.s32.totalorder 1, %s33
      %p633 = scmp.lt.s32.totalorder %s33, 5
      %p634 = pnand %p632, %p633
      %p635 = pneg %p634
      // Predicated region
      $region85: #{_forward.1} parent=5 // pred_check
        _
      $region86: #{_forward.1} parent=5 // pred_check_branch
        %637 = sbr.rel (%p634) target = $region88
      $region87: #{_forward.1} parent=5 // pred_region
        %s638 = ssub.s32 %s33, 1
        // Predicated region
        $region89: #{_forward.1} parent=87 // pred_check
          %p639 = pneg %p75
        $region90: #{_forward.1} parent=87 // pred_check_branch
          %641 = sbr.rel (%p639) target = $region92
        $region91: #{_forward.1} parent=87 // pred_region
          %643 = dma.done [#allocation4], 128
        $region92: #{_forward.1} parent=87 // pred_fallthru
          _
        // Predicated region
        $region93: #{_forward.1} parent=87 // pred_check
          %p644 = pneg %p96
        $region94: #{_forward.1} parent=87 // pred_check_branch
          %646 = sbr.rel (%p644) target = $region96
        $region95: #{_forward.1} parent=87 // pred_region
          %648 = dma.done [#allocation7], 512
        $region96: #{_forward.1} parent=87 // pred_fallthru
          _
        // Predicated region
        $region97: #{_forward.1} parent=87 // pred_check
          %p649 = pneg %p117
        $region98: #{_forward.1} parent=87 // pred_check_branch
          %651 = sbr.rel (%p649) target = $region100
        $region99: #{_forward.1} parent=87 // pred_region
          %653 = dma.done [#allocation7], 512
        $region100: #{_forward.1} parent=87 // pred_fallthru
          _
        // Predicated region
        $region101: #{_forward.1} parent=87 // pred_check
          %p654 = pneg %p159
        $region102: #{_forward.1} parent=87 // pred_check_branch
          %656 = sbr.rel (%p654) target = $region104
        $region103: #{_forward.1} parent=87 // pred_region
          %658 = dma.done [#allocation10], 256
        $region104: #{_forward.1} parent=87 // pred_fallthru
          _
        // Predicated region
        $region105: #{_forward.1} parent=87 // pred_check
          %p659 = pneg %p201
        $region106: #{_forward.1} parent=87 // pred_check_branch
          %661 = sbr.rel (%p659) target = $region108
        $region107: #{_forward.1} parent=87 // pred_region
          %663 = dma.done [#allocation10], 32768
        $region108: #{_forward.1} parent=87 // pred_fallthru
          _
        %s664 = sand.u32 %s38, 1
        %s665 = scalar_lea.sflag [#allocation13], %s664
        %s666 = sand.u32 %s214, 1
        %s667 = smul.addr %s666, 4096
        %s668 = scalar_lea.vmem [#allocation12], %s667
        // Predicated region
        $region109: #{_forward.1} parent=87 // pred_check
          %p669 = pneg %p227
        $region110: #{_forward.1} parent=87 // pred_check_branch
          %671 = sbr.rel (%p669) target = $region112
        $region111: #{_forward.1} parent=87 // pred_region
          %673 = dma.done %s665, 65536
        $region112: #{_forward.1} parent=87 // pred_fallthru
          _
        %s674 = sand.u32 %s38, 1
        %s675 = scalar_lea.sflag [#allocation13], %s674
        %s676 = sand.u32 %s240, 1
        %s677 = smul.addr %s676, 8
        %s678 = scalar_lea.vmem [#allocation14], %s677
        // Predicated region
        $region113: #{_forward.1} parent=87 // pred_check
          %p679 = pneg %p253
        $region114: #{_forward.1} parent=87 // pred_check_branch
          %681 = sbr.rel (%p679) target = $region116
        $region115: #{_forward.1} parent=87 // pred_region
          %683 = dma.done %s675, 128
        $region116: #{_forward.1} parent=87 // pred_fallthru
          _
        // Predicated region
        $region117: #{_forward.1} parent=87 // pred_check
          %p684 = pneg %p274
        $region118: #{_forward.1} parent=87 // pred_check_branch
          %686 = sbr.rel (%p684) target = $region120
        $region119: #{_forward.1} parent=87 // pred_region
          %688 = dma.done [#allocation16], 32768
        $region120: #{_forward.1} parent=87 // pred_fallthru
          _
        // Predicated region
        $region121: #{_forward.1} parent=87 // pred_check
          %p689 = pneg %p295
        $region122: #{_forward.1} parent=87 // pred_check_branch
          %691 = sbr.rel (%p689) target = $region124
        $region123: #{_forward.1} parent=87 // pred_region
          %693 = dma.done [#allocation16], 256
        $region124: #{_forward.1} parent=87 // pred_fallthru
          _
        // Predicated region
        $region125: #{_forward.1} parent=87 // pred_check
          %p694 = pneg %p337
        $region126: #{_forward.1} parent=87 // pred_check_branch
          %696 = sbr.rel (%p694) target = $region128
        $region127: #{_forward.1} parent=87 // pred_region
          %698 = dma.done [#allocation19], 512
        $region128: #{_forward.1} parent=87 // pred_fallthru
          _
        // Predicated region
        $region129: #{_forward.1} parent=87 // pred_check
          %p699 = pneg %p358
        $region130: #{_forward.1} parent=87 // pred_check_branch
          %701 = sbr.rel (%p699) target = $region132
        $region131: #{_forward.1} parent=87 // pred_region
          %703 = dma.done [#allocation19], 2048
        $region132: #{_forward.1} parent=87 // pred_fallthru
          _
        // Predicated region
        $region133: #{_forward.1} parent=87 // pred_check
          %p704 = pneg %p400
        $region134: #{_forward.1} parent=87 // pred_check_branch
          %706 = sbr.rel (%p704) target = $region136
        $region135: #{_forward.1} parent=87 // pred_region
          %708 = dma.done [#allocation22], 2048
        $region136: #{_forward.1} parent=87 // pred_fallthru
          _
        %p709 = pneg %p54
        %p710 = pneg %p51
        %p711 = pneg %p75
        %p712 = pneg %p72
        %p713 = pneg %p96
        %p714 = pneg %p93
        %p715 = pneg %p117
        %p716 = pneg %p114
        %p717 = pneg %p138
        %p718 = pneg %p135
        %p719 = pneg %p159
        %p720 = pneg %p156
        %p721 = pneg %p180
        %p722 = pneg %p177
        %p723 = pneg %p201
        %p724 = pneg %p198
        %s725 = sand.u32 %s38, 1
        %s726 = scalar_lea.sflag [#allocation13], %s725
        %s727 = sand.u32 %s214, 1
        %s728 = smul.addr %s727, 4096
        %s729 = scalar_lea.vmem [#allocation12], %s728
        %p730 = pneg %p227
        %p731 = pneg %p224
        %s732 = sand.u32 %s38, 1
        %s733 = scalar_lea.sflag [#allocation13], %s732
        %s734 = sand.u32 %s240, 1
        %s735 = smul.addr %s734, 8
        %s736 = scalar_lea.vmem [#allocation14], %s735
        %p737 = pneg %p253
        %p738 = pneg %p250
        %p739 = pneg %p274
        %p740 = pneg %p271
        %p741 = pneg %p295
        %p742 = pneg %p292
        %p743 = pneg %p316
        %p744 = pneg %p313
        %p745 = pneg %p337
        %p746 = pneg %p334
        %p747 = pneg %p358
        %p748 = pneg %p355
        %p749 = pneg %p379
        %p750 = pneg %p376
        %p751 = pneg %p400
        %p752 = pneg %p397
        %p753 = pneg %p421
        %p754 = pneg %p418
        %p756 = scmp.eq.s32.totalorder %s38, 0
        // Predicated region
        $region137: #{_forward.1} parent=87 // pred_check
          %p757 = pneg %p756
        $region138: #{_forward.1} parent=87 // pred_check_branch
          %759 = sbr.rel (%p757) target = $region140
        $region139: #{_forward.1} parent=87 // pred_region
          %v760 = vld [vmem:[#allocation6] sm:$0xff]
          %v761 = vld [vmem:[#allocation6 + $0x8] sm:$0xff]
          %v762 = vld [vmem:[#allocation6 + $0x10] sm:$0xff]
          %v763 = vld [vmem:[#allocation6 + $0x18] sm:$0xff]
          %v764 = vld [vmem:[#allocation11] sm:$0xff]
          %v765 = vld [vmem:[#allocation11 + $0x8] sm:$0xff]
          %v766 = vld [vmem:[#allocation11 + $0x10] sm:$0xff]
          %v767 = vld [vmem:[#allocation11 + $0x18] sm:$0xff]
          %v768 = vld [vmem:[#allocation11 + $0x20] sm:$0xff]
          %v769 = vld [vmem:[#allocation11 + $0x28] sm:$0xff]
          %v770 = vld [vmem:[#allocation11 + $0x30] sm:$0xff]
          %v771 = vld [vmem:[#allocation11 + $0x38] sm:$0xff]
          %v772 = vld [vmem:[#allocation11 + $0x40] sm:$0xff]
          %v773 = vld [vmem:[#allocation11 + $0x48] sm:$0xff]
          %v774 = vld [vmem:[#allocation11 + $0x50] sm:$0xff]
          %v775 = vld [vmem:[#allocation11 + $0x58] sm:$0xff]
          %v776 = vld [vmem:[#allocation11 + $0x60] sm:$0xff]
          %v777 = vld [vmem:[#allocation11 + $0x68] sm:$0xff]
          %v778 = vld [vmem:[#allocation11 + $0x70] sm:$0xff]
          %v779 = vld [vmem:[#allocation11 + $0x78] sm:$0xff]
          %v780 = vld [vmem:[#allocation11 + $0x80] sm:$0xff]
          %v781 = vld [vmem:[#allocation11 + $0x88] sm:$0xff]
          %v782 = vld [vmem:[#allocation11 + $0x90] sm:$0xff]
          %v783 = vld [vmem:[#allocation11 + $0x98] sm:$0xff]
          %v784 = vld [vmem:[#allocation11 + $0xa0] sm:$0xff]
          %v785 = vld [vmem:[#allocation11 + $0xa8] sm:$0xff]
          %v786 = vld [vmem:[#allocation11 + $0xb0] sm:$0xff]
          %v787 = vld [vmem:[#allocation11 + $0xb8] sm:$0xff]
          %v788 = vld [vmem:[#allocation11 + $0xc0] sm:$0xff]
          %v789 = vld [vmem:[#allocation11 + $0xc8] sm:$0xff]
          %v790 = vld [vmem:[#allocation11 + $0xd0] sm:$0xff]
          %v791 = vld [vmem:[#allocation11 + $0xd8] sm:$0xff]
          %v792 = vld [vmem:[#allocation11 + $0xe0] sm:$0xff]
          %v793 = vld [vmem:[#allocation11 + $0xe8] sm:$0xff]
          %v794 = vld [vmem:[#allocation11 + $0xf0] sm:$0xff]
          %v795 = vld [vmem:[#allocation11 + $0xf8] sm:$0xff]
          %v796 = vld [vmem:[#allocation11 + $0x100] sm:$0xff]
          %v797 = vld [vmem:[#allocation11 + $0x108] sm:$0xff]
          %v798 = vld [vmem:[#allocation11 + $0x110] sm:$0xff]
          %v799 = vld [vmem:[#allocation11 + $0x118] sm:$0xff]
          %v800 = vld [vmem:[#allocation11 + $0x120] sm:$0xff]
          %v801 = vld [vmem:[#allocation11 + $0x128] sm:$0xff]
          %v802 = vld [vmem:[#allocation11 + $0x130] sm:$0xff]
          %v803 = vld [vmem:[#allocation11 + $0x138] sm:$0xff]
          %v804 = vld [vmem:[#allocation11 + $0x140] sm:$0xff]
          %v805 = vld [vmem:[#allocation11 + $0x148] sm:$0xff]
          %v806 = vld [vmem:[#allocation11 + $0x150] sm:$0xff]
          %v807 = vld [vmem:[#allocation11 + $0x158] sm:$0xff]
          %v808 = vld [vmem:[#allocation11 + $0x160] sm:$0xff]
          %v809 = vld [vmem:[#allocation11 + $0x168] sm:$0xff]
          %v810 = vld [vmem:[#allocation11 + $0x170] sm:$0xff]
          %v811 = vld [vmem:[#allocation11 + $0x178] sm:$0xff]
          %v812 = vld [vmem:[#allocation11 + $0x180] sm:$0xff]
          %v813 = vld [vmem:[#allocation11 + $0x188] sm:$0xff]
          %v814 = vld [vmem:[#allocation11 + $0x190] sm:$0xff]
          %v815 = vld [vmem:[#allocation11 + $0x198] sm:$0xff]
          %v816 = vld [vmem:[#allocation11 + $0x1a0] sm:$0xff]
          %v817 = vld [vmem:[#allocation11 + $0x1a8] sm:$0xff]
          %v818 = vld [vmem:[#allocation11 + $0x1b0] sm:$0xff]
          %v819 = vld [vmem:[#allocation11 + $0x1b8] sm:$0xff]
          %v820 = vld [vmem:[#allocation11 + $0x1c0] sm:$0xff]
          %v821 = vld [vmem:[#allocation11 + $0x1c8] sm:$0xff]
          %v822 = vld [vmem:[#allocation11 + $0x1d0] sm:$0xff]
          %v823 = vld [vmem:[#allocation11 + $0x1d8] sm:$0xff]
          %v824 = vld [vmem:[#allocation11 + $0x1e0] sm:$0xff]
          %v825 = vld [vmem:[#allocation11 + $0x1e8] sm:$0xff]
          %v826 = vld [vmem:[#allocation11 + $0x1f0] sm:$0xff]
          %v827 = vld [vmem:[#allocation11 + $0x1f8] sm:$0xff]
          %v828 = vld [vmem:[#allocation11 + $0x200] sm:$0xff]
          %v829 = vld [vmem:[#allocation11 + $0x208] sm:$0xff]
          %v830 = vld [vmem:[#allocation11 + $0x210] sm:$0xff]
          %v831 = vld [vmem:[#allocation11 + $0x218] sm:$0xff]
          %v832 = vld [vmem:[#allocation11 + $0x220] sm:$0xff]
          %v833 = vld [vmem:[#allocation11 + $0x228] sm:$0xff]
          %v834 = vld [vmem:[#allocation11 + $0x230] sm:$0xff]
          %v835 = vld [vmem:[#allocation11 + $0x238] sm:$0xff]
          %v836 = vld [vmem:[#allocation11 + $0x240] sm:$0xff]
          %v837 = vld [vmem:[#allocation11 + $0x248] sm:$0xff]
          %v838 = vld [vmem:[#allocation11 + $0x250] sm:$0xff]
          %v839 = vld [vmem:[#allocation11 + $0x258] sm:$0xff]
          %v840 = vld [vmem:[#allocation11 + $0x260] sm:$0xff]
          %v841 = vld [vmem:[#allocation11 + $0x268] sm:$0xff]
          %v842 = vld [vmem:[#allocation11 + $0x270] sm:$0xff]
          %v843 = vld [vmem:[#allocation11 + $0x278] sm:$0xff]
          %v844 = vld [vmem:[#allocation11 + $0x280] sm:$0xff]
          %v845 = vld [vmem:[#allocation11 + $0x288] sm:$0xff]
          %v846 = vld [vmem:[#allocation11 + $0x290] sm:$0xff]
          %v847 = vld [vmem:[#allocation11 + $0x298] sm:$0xff]
          %v848 = vld [vmem:[#allocation11 + $0x2a0] sm:$0xff]
          %v849 = vld [vmem:[#allocation11 + $0x2a8] sm:$0xff]
          %v850 = vld [vmem:[#allocation11 + $0x2b0] sm:$0xff]
          %v851 = vld [vmem:[#allocation11 + $0x2b8] sm:$0xff]
          %v852 = vld [vmem:[#allocation11 + $0x2c0] sm:$0xff]
          %v853 = vld [vmem:[#allocation11 + $0x2c8] sm:$0xff]
          %v854 = vld [vmem:[#allocation11 + $0x2d0] sm:$0xff]
          %v855 = vld [vmem:[#allocation11 + $0x2d8] sm:$0xff]
          %v856 = vld [vmem:[#allocation11 + $0x2e0] sm:$0xff]
          %v857 = vld [vmem:[#allocation11 + $0x2e8] sm:$0xff]
          %v858 = vld [vmem:[#allocation11 + $0x2f0] sm:$0xff]
          %v859 = vld [vmem:[#allocation11 + $0x2f8] sm:$0xff]
          %v860 = vld [vmem:[#allocation11 + $0x300] sm:$0xff]
          %v861 = vld [vmem:[#allocation11 + $0x308] sm:$0xff]
          %v862 = vld [vmem:[#allocation11 + $0x310] sm:$0xff]
          %v863 = vld [vmem:[#allocation11 + $0x318] sm:$0xff]
          %v864 = vld [vmem:[#allocation11 + $0x320] sm:$0xff]
          %v865 = vld [vmem:[#allocation11 + $0x328] sm:$0xff]
          %v866 = vld [vmem:[#allocation11 + $0x330] sm:$0xff]
          %v867 = vld [vmem:[#allocation11 + $0x338] sm:$0xff]
          %v868 = vld [vmem:[#allocation11 + $0x340] sm:$0xff]
          %v869 = vld [vmem:[#allocation11 + $0x348] sm:$0xff]
          %v870 = vld [vmem:[#allocation11 + $0x350] sm:$0xff]
          %v871 = vld [vmem:[#allocation11 + $0x358] sm:$0xff]
          %v872 = vld [vmem:[#allocation11 + $0x360] sm:$0xff]
          %v873 = vld [vmem:[#allocation11 + $0x368] sm:$0xff]
          %v874 = vld [vmem:[#allocation11 + $0x370] sm:$0xff]
          %v875 = vld [vmem:[#allocation11 + $0x378] sm:$0xff]
          %v876 = vld [vmem:[#allocation11 + $0x380] sm:$0xff]
          %v877 = vld [vmem:[#allocation11 + $0x388] sm:$0xff]
          %v878 = vld [vmem:[#allocation11 + $0x390] sm:$0xff]
          %v879 = vld [vmem:[#allocation11 + $0x398] sm:$0xff]
          %v880 = vld [vmem:[#allocation11 + $0x3a0] sm:$0xff]
          %v881 = vld [vmem:[#allocation11 + $0x3a8] sm:$0xff]
          %v882 = vld [vmem:[#allocation11 + $0x3b0] sm:$0xff]
          %v883 = vld [vmem:[#allocation11 + $0x3b8] sm:$0xff]
          %v884 = vld [vmem:[#allocation11 + $0x3c0] sm:$0xff]
          %v885 = vld [vmem:[#allocation11 + $0x3c8] sm:$0xff]
          %v886 = vld [vmem:[#allocation11 + $0x3d0] sm:$0xff]
          %v887 = vld [vmem:[#allocation11 + $0x3d8] sm:$0xff]
          %v888 = vld [vmem:[#allocation11 + $0x3e0] sm:$0xff]
          %v889 = vld [vmem:[#allocation11 + $0x3e8] sm:$0xff]
          %v890 = vld [vmem:[#allocation11 + $0x3f0] sm:$0xff]
          %v891 = vld [vmem:[#allocation11 + $0x3f8] sm:$0xff]
          %v892 = vld [vmem:[#allocation11 + $0x400] sm:$0xff]
          %v893 = vld [vmem:[#allocation11 + $0x408] sm:$0xff]
          %v894 = vld [vmem:[#allocation11 + $0x410] sm:$0xff]
          %v895 = vld [vmem:[#allocation11 + $0x418] sm:$0xff]
          %v896 = vld [vmem:[#allocation11 + $0x420] sm:$0xff]
          %v897 = vld [vmem:[#allocation11 + $0x428] sm:$0xff]
          %v898 = vld [vmem:[#allocation11 + $0x430] sm:$0xff]
          %v899 = vld [vmem:[#allocation11 + $0x438] sm:$0xff]
          %v900 = vld [vmem:[#allocation11 + $0x440] sm:$0xff]
          %v901 = vld [vmem:[#allocation11 + $0x448] sm:$0xff]
          %v902 = vld [vmem:[#allocation11 + $0x450] sm:$0xff]
          %v903 = vld [vmem:[#allocation11 + $0x458] sm:$0xff]
          %v904 = vld [vmem:[#allocation11 + $0x460] sm:$0xff]
          %v905 = vld [vmem:[#allocation11 + $0x468] sm:$0xff]
          %v906 = vld [vmem:[#allocation11 + $0x470] sm:$0xff]
          %v907 = vld [vmem:[#allocation11 + $0x478] sm:$0xff]
          %v908 = vld [vmem:[#allocation11 + $0x480] sm:$0xff]
          %v909 = vld [vmem:[#allocation11 + $0x488] sm:$0xff]
          %v910 = vld [vmem:[#allocation11 + $0x490] sm:$0xff]
          %v911 = vld [vmem:[#allocation11 + $0x498] sm:$0xff]
          %v912 = vld [vmem:[#allocation11 + $0x4a0] sm:$0xff]
          %v913 = vld [vmem:[#allocation11 + $0x4a8] sm:$0xff]
          %v914 = vld [vmem:[#allocation11 + $0x4b0] sm:$0xff]
          %v915 = vld [vmem:[#allocation11 + $0x4b8] sm:$0xff]
          %v916 = vld [vmem:[#allocation11 + $0x4c0] sm:$0xff]
          %v917 = vld [vmem:[#allocation11 + $0x4c8] sm:$0xff]
          %v918 = vld [vmem:[#allocation11 + $0x4d0] sm:$0xff]
          %v919 = vld [vmem:[#allocation11 + $0x4d8] sm:$0xff]
          %v920 = vld [vmem:[#allocation11 + $0x4e0] sm:$0xff]
          %v921 = vld [vmem:[#allocation11 + $0x4e8] sm:$0xff]
          %v922 = vld [vmem:[#allocation11 + $0x4f0] sm:$0xff]
          %v923 = vld [vmem:[#allocation11 + $0x4f8] sm:$0xff]
          %v924 = vld [vmem:[#allocation11 + $0x500] sm:$0xff]
          %v925 = vld [vmem:[#allocation11 + $0x508] sm:$0xff]
          %v926 = vld [vmem:[#allocation11 + $0x510] sm:$0xff]
          %v927 = vld [vmem:[#allocation11 + $0x518] sm:$0xff]
          %v928 = vld [vmem:[#allocation11 + $0x520] sm:$0xff]
          %v929 = vld [vmem:[#allocation11 + $0x528] sm:$0xff]
          %v930 = vld [vmem:[#allocation11 + $0x530] sm:$0xff]
          %v931 = vld [vmem:[#allocation11 + $0x538] sm:$0xff]
          %v932 = vld [vmem:[#allocation11 + $0x540] sm:$0xff]
          %v933 = vld [vmem:[#allocation11 + $0x548] sm:$0xff]
          %v934 = vld [vmem:[#allocation11 + $0x550] sm:$0xff]
          %v935 = vld [vmem:[#allocation11 + $0x558] sm:$0xff]
          %v936 = vld [vmem:[#allocation11 + $0x560] sm:$0xff]
          %v937 = vld [vmem:[#allocation11 + $0x568] sm:$0xff]
          %v938 = vld [vmem:[#allocation11 + $0x570] sm:$0xff]
          %v939 = vld [vmem:[#allocation11 + $0x578] sm:$0xff]
          %v940 = vld [vmem:[#allocation11 + $0x580] sm:$0xff]
          %v941 = vld [vmem:[#allocation11 + $0x588] sm:$0xff]
          %v942 = vld [vmem:[#allocation11 + $0x590] sm:$0xff]
          %v943 = vld [vmem:[#allocation11 + $0x598] sm:$0xff]
          %v944 = vld [vmem:[#allocation11 + $0x5a0] sm:$0xff]
          %v945 = vld [vmem:[#allocation11 + $0x5a8] sm:$0xff]
          %v946 = vld [vmem:[#allocation11 + $0x5b0] sm:$0xff]
          %v947 = vld [vmem:[#allocation11 + $0x5b8] sm:$0xff]
          %v948 = vld [vmem:[#allocation11 + $0x5c0] sm:$0xff]
          %v949 = vld [vmem:[#allocation11 + $0x5c8] sm:$0xff]
          %v950 = vld [vmem:[#allocation11 + $0x5d0] sm:$0xff]
          %v951 = vld [vmem:[#allocation11 + $0x5d8] sm:$0xff]
          %v952 = vld [vmem:[#allocation11 + $0x5e0] sm:$0xff]
          %v953 = vld [vmem:[#allocation11 + $0x5e8] sm:$0xff]
          %v954 = vld [vmem:[#allocation11 + $0x5f0] sm:$0xff]
          %v955 = vld [vmem:[#allocation11 + $0x5f8] sm:$0xff]
          %v956 = vld [vmem:[#allocation11 + $0x600] sm:$0xff]
          %v957 = vld [vmem:[#allocation11 + $0x608] sm:$0xff]
          %v958 = vld [vmem:[#allocation11 + $0x610] sm:$0xff]
          %v959 = vld [vmem:[#allocation11 + $0x618] sm:$0xff]
          %v960 = vld [vmem:[#allocation11 + $0x620] sm:$0xff]
          %v961 = vld [vmem:[#allocation11 + $0x628] sm:$0xff]
          %v962 = vld [vmem:[#allocation11 + $0x630] sm:$0xff]
          %v963 = vld [vmem:[#allocation11 + $0x638] sm:$0xff]
          %v964 = vld [vmem:[#allocation11 + $0x640] sm:$0xff]
          %v965 = vld [vmem:[#allocation11 + $0x648] sm:$0xff]
          %v966 = vld [vmem:[#allocation11 + $0x650] sm:$0xff]
          %v967 = vld [vmem:[#allocation11 + $0x658] sm:$0xff]
          %v968 = vld [vmem:[#allocation11 + $0x660] sm:$0xff]
          %v969 = vld [vmem:[#allocation11 + $0x668] sm:$0xff]
          %v970 = vld [vmem:[#allocation11 + $0x670] sm:$0xff]
          %v971 = vld [vmem:[#allocation11 + $0x678] sm:$0xff]
          %v972 = vld [vmem:[#allocation11 + $0x680] sm:$0xff]
          %v973 = vld [vmem:[#allocation11 + $0x688] sm:$0xff]
          %v974 = vld [vmem:[#allocation11 + $0x690] sm:$0xff]
          %v975 = vld [vmem:[#allocation11 + $0x698] sm:$0xff]
          %v976 = vld [vmem:[#allocation11 + $0x6a0] sm:$0xff]
          %v977 = vld [vmem:[#allocation11 + $0x6a8] sm:$0xff]
          %v978 = vld [vmem:[#allocation11 + $0x6b0] sm:$0xff]
          %v979 = vld [vmem:[#allocation11 + $0x6b8] sm:$0xff]
          %v980 = vld [vmem:[#allocation11 + $0x6c0] sm:$0xff]
          %v981 = vld [vmem:[#allocation11 + $0x6c8] sm:$0xff]
          %v982 = vld [vmem:[#allocation11 + $0x6d0] sm:$0xff]
          %v983 = vld [vmem:[#allocation11 + $0x6d8] sm:$0xff]
          %v984 = vld [vmem:[#allocation11 + $0x6e0] sm:$0xff]
          %v985 = vld [vmem:[#allocation11 + $0x6e8] sm:$0xff]
          %v986 = vld [vmem:[#allocation11 + $0x6f0] sm:$0xff]
          %v987 = vld [vmem:[#allocation11 + $0x6f8] sm:$0xff]
          %v988 = vld [vmem:[#allocation11 + $0x700] sm:$0xff]
          %v989 = vld [vmem:[#allocation11 + $0x708] sm:$0xff]
          %v990 = vld [vmem:[#allocation11 + $0x710] sm:$0xff]
          %v991 = vld [vmem:[#allocation11 + $0x718] sm:$0xff]
          %v992 = vld [vmem:[#allocation11 + $0x720] sm:$0xff]
          %v993 = vld [vmem:[#allocation11 + $0x728] sm:$0xff]
          %v994 = vld [vmem:[#allocation11 + $0x730] sm:$0xff]
          %v995 = vld [vmem:[#allocation11 + $0x738] sm:$0xff]
          %v996 = vld [vmem:[#allocation11 + $0x740] sm:$0xff]
          %v997 = vld [vmem:[#allocation11 + $0x748] sm:$0xff]
          %v998 = vld [vmem:[#allocation11 + $0x750] sm:$0xff]
          %v999 = vld [vmem:[#allocation11 + $0x758] sm:$0xff]
          %v1000 = vld [vmem:[#allocation11 + $0x760] sm:$0xff]
          %v1001 = vld [vmem:[#allocation11 + $0x768] sm:$0xff]
          %v1002 = vld [vmem:[#allocation11 + $0x770] sm:$0xff]
          %v1003 = vld [vmem:[#allocation11 + $0x778] sm:$0xff]
          %v1004 = vld [vmem:[#allocation11 + $0x780] sm:$0xff]
          %v1005 = vld [vmem:[#allocation11 + $0x788] sm:$0xff]
          %v1006 = vld [vmem:[#allocation11 + $0x790] sm:$0xff]
          %v1007 = vld [vmem:[#allocation11 + $0x798] sm:$0xff]
          %v1008 = vld [vmem:[#allocation11 + $0x7a0] sm:$0xff]
          %v1009 = vld [vmem:[#allocation11 + $0x7a8] sm:$0xff]
          %v1010 = vld [vmem:[#allocation11 + $0x7b0] sm:$0xff]
          %v1011 = vld [vmem:[#allocation11 + $0x7b8] sm:$0xff]
          %v1012 = vld [vmem:[#allocation11 + $0x7c0] sm:$0xff]
          %v1013 = vld [vmem:[#allocation11 + $0x7c8] sm:$0xff]
          %v1014 = vld [vmem:[#allocation11 + $0x7d0] sm:$0xff]
          %v1015 = vld [vmem:[#allocation11 + $0x7d8] sm:$0xff]
          %v1016 = vld [vmem:[#allocation11 + $0x7e0] sm:$0xff]
          %v1017 = vld [vmem:[#allocation11 + $0x7e8] sm:$0xff]
          %v1018 = vld [vmem:[#allocation11 + $0x7f0] sm:$0xff]
          %v1019 = vld [vmem:[#allocation11 + $0x7f8] sm:$0xff]
          %v1020 = vpack.c.bf16 %v760, %v760
          %v1021 = vpack.c.bf16 %v761, %v761
          %v1022 = vpack.c.bf16 %v762, %v762
          %v1023 = vpack.c.bf16 %v763, %v763
          %s1024 = scalar_lea.vmem [#allocation21], 4
          %v1025 = vld [vmem:[%s1024] ss:$8 sm:$0xf]
          %v1026 = vld [vmem:[%s1024] ss:$8 sm:$0xf0]
          %v1027 = vor.u32 %v1025, %v1026
          %v1029 = vperm.slane %v1027, 0
          %v1030 = vperm.slane %v1027, 1
          %v1031 = vperm.slane %v1027, 2
          %v1032 = vperm.slane %v1027, 3
          %v1033 = vperm.slane %v1027, 4
          %v1034 = vperm.slane %v1027, 5
          %v1035 = vperm.slane %v1027, 6
          %v1036 = vperm.slane %v1027, 7
          %v1301 = vunpack.c.l.b16 %v764
          %v1302 = vunpack.c.h.b16 %v764
          %v1303 = vunpack.c.l.b16 %v765
          %v1304 = vunpack.c.h.b16 %v765
          %v1305 = vunpack.c.l.b16 %v766
          %v1306 = vunpack.c.h.b16 %v766
          %v1307 = vunpack.c.l.b16 %v767
          %v1308 = vunpack.c.h.b16 %v767
          %v1309 = vunpack.c.l.b16 %v768
          %v1310 = vunpack.c.h.b16 %v768
          %v1311 = vunpack.c.l.b16 %v769
          %v1312 = vunpack.c.h.b16 %v769
          %v1313 = vunpack.c.l.b16 %v770
          %v1314 = vunpack.c.h.b16 %v770
          %v1315 = vunpack.c.l.b16 %v771
          %v1316 = vunpack.c.h.b16 %v771
          %v1317 = vunpack.c.l.b16 %v772
          %v1318 = vunpack.c.h.b16 %v772
          %v1319 = vunpack.c.l.b16 %v773
          %v1320 = vunpack.c.h.b16 %v773
          %v1321 = vunpack.c.l.b16 %v774
          %v1322 = vunpack.c.h.b16 %v774
          %v1323 = vunpack.c.l.b16 %v775
          %v1324 = vunpack.c.h.b16 %v775
          %v1325 = vunpack.c.l.b16 %v776
          %v1326 = vunpack.c.h.b16 %v776
          %v1327 = vunpack.c.l.b16 %v777
          %v1328 = vunpack.c.h.b16 %v777
          %v1329 = vunpack.c.l.b16 %v778
          %v1330 = vunpack.c.h.b16 %v778
          %v1331 = vunpack.c.l.b16 %v779
          %v1332 = vunpack.c.h.b16 %v779
          %v1333 = vunpack.c.l.b16 %v780
          %v1334 = vunpack.c.h.b16 %v780
          %v1335 = vunpack.c.l.b16 %v781
          %v1336 = vunpack.c.h.b16 %v781
          %v1337 = vunpack.c.l.b16 %v782
          %v1338 = vunpack.c.h.b16 %v782
          %v1339 = vunpack.c.l.b16 %v783
          %v1340 = vunpack.c.h.b16 %v783
          %v1341 = vunpack.c.l.b16 %v784
          %v1342 = vunpack.c.h.b16 %v784
          %v1343 = vunpack.c.l.b16 %v785
          %v1344 = vunpack.c.h.b16 %v785
          %v1345 = vunpack.c.l.b16 %v786
          %v1346 = vunpack.c.h.b16 %v786
          %v1347 = vunpack.c.l.b16 %v787
          %v1348 = vunpack.c.h.b16 %v787
          %v1349 = vunpack.c.l.b16 %v788
          %v1350 = vunpack.c.h.b16 %v788
          %v1351 = vunpack.c.l.b16 %v789
          %v1352 = vunpack.c.h.b16 %v789
          %v1353 = vunpack.c.l.b16 %v790
          %v1354 = vunpack.c.h.b16 %v790
          %v1355 = vunpack.c.l.b16 %v791
          %v1356 = vunpack.c.h.b16 %v791
          %v1357 = vunpack.c.l.b16 %v792
          %v1358 = vunpack.c.h.b16 %v792
          %v1359 = vunpack.c.l.b16 %v793
          %v1360 = vunpack.c.h.b16 %v793
          %v1361 = vunpack.c.l.b16 %v794
          %v1362 = vunpack.c.h.b16 %v794
          %v1363 = vunpack.c.l.b16 %v795
          %v1364 = vunpack.c.h.b16 %v795
          %v1365 = vunpack.c.l.b16 %v796
          %v1366 = vunpack.c.h.b16 %v796
          %v1367 = vunpack.c.l.b16 %v797
          %v1368 = vunpack.c.h.b16 %v797
          %v1369 = vunpack.c.l.b16 %v798
          %v1370 = vunpack.c.h.b16 %v798
          %v1371 = vunpack.c.l.b16 %v799
          %v1372 = vunpack.c.h.b16 %v799
          %v1373 = vunpack.c.l.b16 %v800
          %v1374 = vunpack.c.h.b16 %v800
          %v1375 = vunpack.c.l.b16 %v801
          %v1376 = vunpack.c.h.b16 %v801
          %v1377 = vunpack.c.l.b16 %v802
          %v1378 = vunpack.c.h.b16 %v802
          %v1379 = vunpack.c.l.b16 %v803
          %v1380 = vunpack.c.h.b16 %v803
          %v1381 = vunpack.c.l.b16 %v804
          %v1382 = vunpack.c.h.b16 %v804
          %v1383 = vunpack.c.l.b16 %v805
          %v1384 = vunpack.c.h.b16 %v805
          %v1385 = vunpack.c.l.b16 %v806
          %v1386 = vunpack.c.h.b16 %v806
          %v1387 = vunpack.c.l.b16 %v807
          %v1388 = vunpack.c.h.b16 %v807
          %v1389 = vunpack.c.l.b16 %v808
          %v1390 = vunpack.c.h.b16 %v808
          %v1391 = vunpack.c.l.b16 %v809
          %v1392 = vunpack.c.h.b16 %v809
          %v1393 = vunpack.c.l.b16 %v810
          %v1394 = vunpack.c.h.b16 %v810
          %v1395 = vunpack.c.l.b16 %v811
          %v1396 = vunpack.c.h.b16 %v811
          %v1397 = vunpack.c.l.b16 %v812
          %v1398 = vunpack.c.h.b16 %v812
          %v1399 = vunpack.c.l.b16 %v813
          %v1400 = vunpack.c.h.b16 %v813
          %v1401 = vunpack.c.l.b16 %v814
          %v1402 = vunpack.c.h.b16 %v814
          %v1403 = vunpack.c.l.b16 %v815
          %v1404 = vunpack.c.h.b16 %v815
          %v1405 = vunpack.c.l.b16 %v816
          %v1406 = vunpack.c.h.b16 %v816
          %v1407 = vunpack.c.l.b16 %v817
          %v1408 = vunpack.c.h.b16 %v817
          %v1409 = vunpack.c.l.b16 %v818
          %v1410 = vunpack.c.h.b16 %v818
          %v1411 = vunpack.c.l.b16 %v819
          %v1412 = vunpack.c.h.b16 %v819
          %v1413 = vunpack.c.l.b16 %v820
          %v1414 = vunpack.c.h.b16 %v820
          %v1415 = vunpack.c.l.b16 %v821
          %v1416 = vunpack.c.h.b16 %v821
          %v1417 = vunpack.c.l.b16 %v822
          %v1418 = vunpack.c.h.b16 %v822
          %v1419 = vunpack.c.l.b16 %v823
          %v1420 = vunpack.c.h.b16 %v823
          %v1421 = vunpack.c.l.b16 %v824
          %v1422 = vunpack.c.h.b16 %v824
          %v1423 = vunpack.c.l.b16 %v825
          %v1424 = vunpack.c.h.b16 %v825
          %v1425 = vunpack.c.l.b16 %v826
          %v1426 = vunpack.c.h.b16 %v826
          %v1427 = vunpack.c.l.b16 %v827
          %v1428 = vunpack.c.h.b16 %v827
          %v1429 = vunpack.c.l.b16 %v828
          %v1430 = vunpack.c.h.b16 %v828
          %v1431 = vunpack.c.l.b16 %v829
          %v1432 = vunpack.c.h.b16 %v829
          %v1433 = vunpack.c.l.b16 %v830
          %v1434 = vunpack.c.h.b16 %v830
          %v1435 = vunpack.c.l.b16 %v831
          %v1436 = vunpack.c.h.b16 %v831
          %v1437 = vunpack.c.l.b16 %v832
          %v1438 = vunpack.c.h.b16 %v832
          %v1439 = vunpack.c.l.b16 %v833
          %v1440 = vunpack.c.h.b16 %v833
          %v1441 = vunpack.c.l.b16 %v834
          %v1442 = vunpack.c.h.b16 %v834
          %v1443 = vunpack.c.l.b16 %v835
          %v1444 = vunpack.c.h.b16 %v835
          %v1445 = vunpack.c.l.b16 %v836
          %v1446 = vunpack.c.h.b16 %v836
          %v1447 = vunpack.c.l.b16 %v837
          %v1448 = vunpack.c.h.b16 %v837
          %v1449 = vunpack.c.l.b16 %v838
          %v1450 = vunpack.c.h.b16 %v838
          %v1451 = vunpack.c.l.b16 %v839
          %v1452 = vunpack.c.h.b16 %v839
          %v1453 = vunpack.c.l.b16 %v840
          %v1454 = vunpack.c.h.b16 %v840
          %v1455 = vunpack.c.l.b16 %v841
          %v1456 = vunpack.c.h.b16 %v841
          %v1457 = vunpack.c.l.b16 %v842
          %v1458 = vunpack.c.h.b16 %v842
          %v1459 = vunpack.c.l.b16 %v843
          %v1460 = vunpack.c.h.b16 %v843
          %v1461 = vunpack.c.l.b16 %v844
          %v1462 = vunpack.c.h.b16 %v844
          %v1463 = vunpack.c.l.b16 %v845
          %v1464 = vunpack.c.h.b16 %v845
          %v1465 = vunpack.c.l.b16 %v846
          %v1466 = vunpack.c.h.b16 %v846
          %v1467 = vunpack.c.l.b16 %v847
          %v1468 = vunpack.c.h.b16 %v847
          %v1469 = vunpack.c.l.b16 %v848
          %v1470 = vunpack.c.h.b16 %v848
          %v1471 = vunpack.c.l.b16 %v849
          %v1472 = vunpack.c.h.b16 %v849
          %v1473 = vunpack.c.l.b16 %v850
          %v1474 = vunpack.c.h.b16 %v850
          %v1475 = vunpack.c.l.b16 %v851
          %v1476 = vunpack.c.h.b16 %v851
          %v1477 = vunpack.c.l.b16 %v852
          %v1478 = vunpack.c.h.b16 %v852
          %v1479 = vunpack.c.l.b16 %v853
          %v1480 = vunpack.c.h.b16 %v853
          %v1481 = vunpack.c.l.b16 %v854
          %v1482 = vunpack.c.h.b16 %v854
          %v1483 = vunpack.c.l.b16 %v855
          %v1484 = vunpack.c.h.b16 %v855
          %v1485 = vunpack.c.l.b16 %v856
          %v1486 = vunpack.c.h.b16 %v856
          %v1487 = vunpack.c.l.b16 %v857
          %v1488 = vunpack.c.h.b16 %v857
          %v1489 = vunpack.c.l.b16 %v858
          %v1490 = vunpack.c.h.b16 %v858
          %v1491 = vunpack.c.l.b16 %v859
          %v1492 = vunpack.c.h.b16 %v859
          %v1493 = vunpack.c.l.b16 %v860
          %v1494 = vunpack.c.h.b16 %v860
          %v1495 = vunpack.c.l.b16 %v861
          %v1496 = vunpack.c.h.b16 %v861
          %v1497 = vunpack.c.l.b16 %v862
          %v1498 = vunpack.c.h.b16 %v862
          %v1499 = vunpack.c.l.b16 %v863
          %v1500 = vunpack.c.h.b16 %v863
          %v1501 = vunpack.c.l.b16 %v864
          %v1502 = vunpack.c.h.b16 %v864
          %v1503 = vunpack.c.l.b16 %v865
          %v1504 = vunpack.c.h.b16 %v865
          %v1505 = vunpack.c.l.b16 %v866
          %v1506 = vunpack.c.h.b16 %v866
          %v1507 = vunpack.c.l.b16 %v867
          %v1508 = vunpack.c.h.b16 %v867
          %v1509 = vunpack.c.l.b16 %v868
          %v1510 = vunpack.c.h.b16 %v868
          %v1511 = vunpack.c.l.b16 %v869
          %v1512 = vunpack.c.h.b16 %v869
          %v1513 = vunpack.c.l.b16 %v870
          %v1514 = vunpack.c.h.b16 %v870
          %v1515 = vunpack.c.l.b16 %v871
          %v1516 = vunpack.c.h.b16 %v871
          %v1517 = vunpack.c.l.b16 %v872
          %v1518 = vunpack.c.h.b16 %v872
          %v1519 = vunpack.c.l.b16 %v873
          %v1520 = vunpack.c.h.b16 %v873
          %v1521 = vunpack.c.l.b16 %v874
          %v1522 = vunpack.c.h.b16 %v874
          %v1523 = vunpack.c.l.b16 %v875
          %v1524 = vunpack.c.h.b16 %v875
          %v1525 = vunpack.c.l.b16 %v876
          %v1526 = vunpack.c.h.b16 %v876
          %v1527 = vunpack.c.l.b16 %v877
          %v1528 = vunpack.c.h.b16 %v877
          %v1529 = vunpack.c.l.b16 %v878
          %v1530 = vunpack.c.h.b16 %v878
          %v1531 = vunpack.c.l.b16 %v879
          %v1532 = vunpack.c.h.b16 %v879
          %v1533 = vunpack.c.l.b16 %v880
          %v1534 = vunpack.c.h.b16 %v880
          %v1535 = vunpack.c.l.b16 %v881
          %v1536 = vunpack.c.h.b16 %v881
          %v1537 = vunpack.c.l.b16 %v882
          %v1538 = vunpack.c.h.b16 %v882
          %v1539 = vunpack.c.l.b16 %v883
          %v1540 = vunpack.c.h.b16 %v883
          %v1541 = vunpack.c.l.b16 %v884
          %v1542 = vunpack.c.h.b16 %v884
          %v1543 = vunpack.c.l.b16 %v885
          %v1544 = vunpack.c.h.b16 %v885
          %v1545 = vunpack.c.l.b16 %v886
          %v1546 = vunpack.c.h.b16 %v886
          %v1547 = vunpack.c.l.b16 %v887
          %v1548 = vunpack.c.h.b16 %v887
          %v1549 = vunpack.c.l.b16 %v888
          %v1550 = vunpack.c.h.b16 %v888
          %v1551 = vunpack.c.l.b16 %v889
          %v1552 = vunpack.c.h.b16 %v889
          %v1553 = vunpack.c.l.b16 %v890
          %v1554 = vunpack.c.h.b16 %v890
          %v1555 = vunpack.c.l.b16 %v891
          %v1556 = vunpack.c.h.b16 %v891
          %v1557 = vunpack.c.l.b16 %v892
          %v1558 = vunpack.c.h.b16 %v892
          %v1559 = vunpack.c.l.b16 %v893
          %v1560 = vunpack.c.h.b16 %v893
          %v1561 = vunpack.c.l.b16 %v894
          %v1562 = vunpack.c.h.b16 %v894
          %v1563 = vunpack.c.l.b16 %v895
          %v1564 = vunpack.c.h.b16 %v895
          %v1565 = vunpack.c.l.b16 %v896
          %v1566 = vunpack.c.h.b16 %v896
          %v1567 = vunpack.c.l.b16 %v897
          %v1568 = vunpack.c.h.b16 %v897
          %v1569 = vunpack.c.l.b16 %v898
          %v1570 = vunpack.c.h.b16 %v898
          %v1571 = vunpack.c.l.b16 %v899
          %v1572 = vunpack.c.h.b16 %v899
          %v1573 = vunpack.c.l.b16 %v900
          %v1574 = vunpack.c.h.b16 %v900
          %v1575 = vunpack.c.l.b16 %v901
          %v1576 = vunpack.c.h.b16 %v901
          %v1577 = vunpack.c.l.b16 %v902
          %v1578 = vunpack.c.h.b16 %v902
          %v1579 = vunpack.c.l.b16 %v903
          %v1580 = vunpack.c.h.b16 %v903
          %v1581 = vunpack.c.l.b16 %v904
          %v1582 = vunpack.c.h.b16 %v904
          %v1583 = vunpack.c.l.b16 %v905
          %v1584 = vunpack.c.h.b16 %v905
          %v1585 = vunpack.c.l.b16 %v906
          %v1586 = vunpack.c.h.b16 %v906
          %v1587 = vunpack.c.l.b16 %v907
          %v1588 = vunpack.c.h.b16 %v907
          %v1589 = vunpack.c.l.b16 %v908
          %v1590 = vunpack.c.h.b16 %v908
          %v1591 = vunpack.c.l.b16 %v909
          %v1592 = vunpack.c.h.b16 %v909
          %v1593 = vunpack.c.l.b16 %v910
          %v1594 = vunpack.c.h.b16 %v910
          %v1595 = vunpack.c.l.b16 %v911
          %v1596 = vunpack.c.h.b16 %v911
          %v1597 = vunpack.c.l.b16 %v912
          %v1598 = vunpack.c.h.b16 %v912
          %v1599 = vunpack.c.l.b16 %v913
          %v1600 = vunpack.c.h.b16 %v913
          %v1601 = vunpack.c.l.b16 %v914
          %v1602 = vunpack.c.h.b16 %v914
          %v1603 = vunpack.c.l.b16 %v915
          %v1604 = vunpack.c.h.b16 %v915
          %v1605 = vunpack.c.l.b16 %v916
          %v1606 = vunpack.c.h.b16 %v916
          %v1607 = vunpack.c.l.b16 %v917
          %v1608 = vunpack.c.h.b16 %v917
          %v1609 = vunpack.c.l.b16 %v918
          %v1610 = vunpack.c.h.b16 %v918
          %v1611 = vunpack.c.l.b16 %v919
          %v1612 = vunpack.c.h.b16 %v919
          %v1613 = vunpack.c.l.b16 %v920
          %v1614 = vunpack.c.h.b16 %v920
          %v1615 = vunpack.c.l.b16 %v921
          %v1616 = vunpack.c.h.b16 %v921
          %v1617 = vunpack.c.l.b16 %v922
          %v1618 = vunpack.c.h.b16 %v922
          %v1619 = vunpack.c.l.b16 %v923
          %v1620 = vunpack.c.h.b16 %v923
          %v1621 = vunpack.c.l.b16 %v924
          %v1622 = vunpack.c.h.b16 %v924
          %v1623 = vunpack.c.l.b16 %v925
          %v1624 = vunpack.c.h.b16 %v925
          %v1625 = vunpack.c.l.b16 %v926
          %v1626 = vunpack.c.h.b16 %v926
          %v1627 = vunpack.c.l.b16 %v927
          %v1628 = vunpack.c.h.b16 %v927
          %v1629 = vunpack.c.l.b16 %v928
          %v1630 = vunpack.c.h.b16 %v928
          %v1631 = vunpack.c.l.b16 %v929
          %v1632 = vunpack.c.h.b16 %v929
          %v1633 = vunpack.c.l.b16 %v930
          %v1634 = vunpack.c.h.b16 %v930
          %v1635 = vunpack.c.l.b16 %v931
          %v1636 = vunpack.c.h.b16 %v931
          %v1637 = vunpack.c.l.b16 %v932
          %v1638 = vunpack.c.h.b16 %v932
          %v1639 = vunpack.c.l.b16 %v933
          %v1640 = vunpack.c.h.b16 %v933
          %v1641 = vunpack.c.l.b16 %v934
          %v1642 = vunpack.c.h.b16 %v934
          %v1643 = vunpack.c.l.b16 %v935
          %v1644 = vunpack.c.h.b16 %v935
          %v1645 = vunpack.c.l.b16 %v936
          %v1646 = vunpack.c.h.b16 %v936
          %v1647 = vunpack.c.l.b16 %v937
          %v1648 = vunpack.c.h.b16 %v937
          %v1649 = vunpack.c.l.b16 %v938
          %v1650 = vunpack.c.h.b16 %v938
          %v1651 = vunpack.c.l.b16 %v939
          %v1652 = vunpack.c.h.b16 %v939
          %v1653 = vunpack.c.l.b16 %v940
          %v1654 = vunpack.c.h.b16 %v940
          %v1655 = vunpack.c.l.b16 %v941
          %v1656 = vunpack.c.h.b16 %v941
          %v1657 = vunpack.c.l.b16 %v942
          %v1658 = vunpack.c.h.b16 %v942
          %v1659 = vunpack.c.l.b16 %v943
          %v1660 = vunpack.c.h.b16 %v943
          %v1661 = vunpack.c.l.b16 %v944
          %v1662 = vunpack.c.h.b16 %v944
          %v1663 = vunpack.c.l.b16 %v945
          %v1664 = vunpack.c.h.b16 %v945
          %v1665 = vunpack.c.l.b16 %v946
          %v1666 = vunpack.c.h.b16 %v946
          %v1667 = vunpack.c.l.b16 %v947
          %v1668 = vunpack.c.h.b16 %v947
          %v1669 = vunpack.c.l.b16 %v948
          %v1670 = vunpack.c.h.b16 %v948
          %v1671 = vunpack.c.l.b16 %v949
          %v1672 = vunpack.c.h.b16 %v949
          %v1673 = vunpack.c.l.b16 %v950
          %v1674 = vunpack.c.h.b16 %v950
          %v1675 = vunpack.c.l.b16 %v951
          %v1676 = vunpack.c.h.b16 %v951
          %v1677 = vunpack.c.l.b16 %v952
          %v1678 = vunpack.c.h.b16 %v952
          %v1679 = vunpack.c.l.b16 %v953
          %v1680 = vunpack.c.h.b16 %v953
          %v1681 = vunpack.c.l.b16 %v954
          %v1682 = vunpack.c.h.b16 %v954
          %v1683 = vunpack.c.l.b16 %v955
          %v1684 = vunpack.c.h.b16 %v955
          %v1685 = vunpack.c.l.b16 %v956
          %v1686 = vunpack.c.h.b16 %v956
          %v1687 = vunpack.c.l.b16 %v957
          %v1688 = vunpack.c.h.b16 %v957
          %v1689 = vunpack.c.l.b16 %v958
          %v1690 = vunpack.c.h.b16 %v958
          %v1691 = vunpack.c.l.b16 %v959
          %v1692 = vunpack.c.h.b16 %v959
          %v1693 = vunpack.c.l.b16 %v960
          %v1694 = vunpack.c.h.b16 %v960
          %v1695 = vunpack.c.l.b16 %v961
          %v1696 = vunpack.c.h.b16 %v961
          %v1697 = vunpack.c.l.b16 %v962
          %v1698 = vunpack.c.h.b16 %v962
          %v1699 = vunpack.c.l.b16 %v963
          %v1700 = vunpack.c.h.b16 %v963
          %v1701 = vunpack.c.l.b16 %v964
          %v1702 = vunpack.c.h.b16 %v964
          %v1703 = vunpack.c.l.b16 %v965
          %v1704 = vunpack.c.h.b16 %v965
          %v1705 = vunpack.c.l.b16 %v966
          %v1706 = vunpack.c.h.b16 %v966
          %v1707 = vunpack.c.l.b16 %v967
          %v1708 = vunpack.c.h.b16 %v967
          %v1709 = vunpack.c.l.b16 %v968
          %v1710 = vunpack.c.h.b16 %v968
          %v1711 = vunpack.c.l.b16 %v969
          %v1712 = vunpack.c.h.b16 %v969
          %v1713 = vunpack.c.l.b16 %v970
          %v1714 = vunpack.c.h.b16 %v970
          %v1715 = vunpack.c.l.b16 %v971
          %v1716 = vunpack.c.h.b16 %v971
          %v1717 = vunpack.c.l.b16 %v972
          %v1718 = vunpack.c.h.b16 %v972
          %v1719 = vunpack.c.l.b16 %v973
          %v1720 = vunpack.c.h.b16 %v973
          %v1721 = vunpack.c.l.b16 %v974
          %v1722 = vunpack.c.h.b16 %v974
          %v1723 = vunpack.c.l.b16 %v975
          %v1724 = vunpack.c.h.b16 %v975
          %v1725 = vunpack.c.l.b16 %v976
          %v1726 = vunpack.c.h.b16 %v976
          %v1727 = vunpack.c.l.b16 %v977
          %v1728 = vunpack.c.h.b16 %v977
          %v1729 = vunpack.c.l.b16 %v978
          %v1730 = vunpack.c.h.b16 %v978
          %v1731 = vunpack.c.l.b16 %v979
          %v1732 = vunpack.c.h.b16 %v979
          %v1733 = vunpack.c.l.b16 %v980
          %v1734 = vunpack.c.h.b16 %v980
          %v1735 = vunpack.c.l.b16 %v981
          %v1736 = vunpack.c.h.b16 %v981
          %v1737 = vunpack.c.l.b16 %v982
          %v1738 = vunpack.c.h.b16 %v982
          %v1739 = vunpack.c.l.b16 %v983
          %v1740 = vunpack.c.h.b16 %v983
          %v1741 = vunpack.c.l.b16 %v984
          %v1742 = vunpack.c.h.b16 %v984
          %v1743 = vunpack.c.l.b16 %v985
          %v1744 = vunpack.c.h.b16 %v985
          %v1745 = vunpack.c.l.b16 %v986
          %v1746 = vunpack.c.h.b16 %v986
          %v1747 = vunpack.c.l.b16 %v987
          %v1748 = vunpack.c.h.b16 %v987
          %v1749 = vunpack.c.l.b16 %v988
          %v1750 = vunpack.c.h.b16 %v988
          %v1751 = vunpack.c.l.b16 %v989
          %v1752 = vunpack.c.h.b16 %v989
          %v1753 = vunpack.c.l.b16 %v990
          %v1754 = vunpack.c.h.b16 %v990
          %v1755 = vunpack.c.l.b16 %v991
          %v1756 = vunpack.c.h.b16 %v991
          %v1757 = vunpack.c.l.b16 %v992
          %v1758 = vunpack.c.h.b16 %v992
          %v1759 = vunpack.c.l.b16 %v993
          %v1760 = vunpack.c.h.b16 %v993
          %v1761 = vunpack.c.l.b16 %v994
          %v1762 = vunpack.c.h.b16 %v994
          %v1763 = vunpack.c.l.b16 %v995
          %v1764 = vunpack.c.h.b16 %v995
          %v1765 = vunpack.c.l.b16 %v996
          %v1766 = vunpack.c.h.b16 %v996
          %v1767 = vunpack.c.l.b16 %v997
          %v1768 = vunpack.c.h.b16 %v997
          %v1769 = vunpack.c.l.b16 %v998
          %v1770 = vunpack.c.h.b16 %v998
          %v1771 = vunpack.c.l.b16 %v999
          %v1772 = vunpack.c.h.b16 %v999
          %v1773 = vunpack.c.l.b16 %v1000
          %v1774 = vunpack.c.h.b16 %v1000
          %v1775 = vunpack.c.l.b16 %v1001
          %v1776 = vunpack.c.h.b16 %v1001
          %v1777 = vunpack.c.l.b16 %v1002
          %v1778 = vunpack.c.h.b16 %v1002
          %v1779 = vunpack.c.l.b16 %v1003
          %v1780 = vunpack.c.h.b16 %v1003
          %v1781 = vunpack.c.l.b16 %v1004
          %v1782 = vunpack.c.h.b16 %v1004
          %v1783 = vunpack.c.l.b16 %v1005
          %v1784 = vunpack.c.h.b16 %v1005
          %v1785 = vunpack.c.l.b16 %v1006
          %v1786 = vunpack.c.h.b16 %v1006
          %v1787 = vunpack.c.l.b16 %v1007
          %v1788 = vunpack.c.h.b16 %v1007
          %v1789 = vunpack.c.l.b16 %v1008
          %v1790 = vunpack.c.h.b16 %v1008
          %v1791 = vunpack.c.l.b16 %v1009
          %v1792 = vunpack.c.h.b16 %v1009
          %v1793 = vunpack.c.l.b16 %v1010
          %v1794 = vunpack.c.h.b16 %v1010
          %v1795 = vunpack.c.l.b16 %v1011
          %v1796 = vunpack.c.h.b16 %v1011
          %v1797 = vunpack.c.l.b16 %v1012
          %v1798 = vunpack.c.h.b16 %v1012
          %v1799 = vunpack.c.l.b16 %v1013
          %v1800 = vunpack.c.h.b16 %v1013
          %v1801 = vunpack.c.l.b16 %v1014
          %v1802 = vunpack.c.h.b16 %v1014
          %v1803 = vunpack.c.l.b16 %v1015
          %v1804 = vunpack.c.h.b16 %v1015
          %v1805 = vunpack.c.l.b16 %v1016
          %v1806 = vunpack.c.h.b16 %v1016
          %v1807 = vunpack.c.l.b16 %v1017
          %v1808 = vunpack.c.h.b16 %v1017
          %v1809 = vunpack.c.l.b16 %v1018
          %v1810 = vunpack.c.h.b16 %v1018
          %v1811 = vunpack.c.l.b16 %v1019
          %v1812 = vunpack.c.h.b16 %v1019
          %v1813 = vpack.c.b16 %v1309, %v1301
          %v1814 = vpack.c.b16 %v1310, %v1302
          %v1815 = vpack.c.b16 %v1311, %v1303
          %v1816 = vpack.c.b16 %v1312, %v1304
          %v1817 = vpack.c.b16 %v1313, %v1305
          %v1818 = vpack.c.b16 %v1314, %v1306
          %v1819 = vpack.c.b16 %v1315, %v1307
          %v1820 = vpack.c.b16 %v1316, %v1308
          %v1821 = vpack.c.b16 %v1325, %v1317
          %v1822 = vpack.c.b16 %v1326, %v1318
          %v1823 = vpack.c.b16 %v1327, %v1319
          %v1824 = vpack.c.b16 %v1328, %v1320
          %v1825 = vpack.c.b16 %v1329, %v1321
          %v1826 = vpack.c.b16 %v1330, %v1322
          %v1827 = vpack.c.b16 %v1331, %v1323
          %v1828 = vpack.c.b16 %v1332, %v1324
          %v1829 = vpack.c.b16 %v1341, %v1333
          %v1830 = vpack.c.b16 %v1342, %v1334
          %v1831 = vpack.c.b16 %v1343, %v1335
          %v1832 = vpack.c.b16 %v1344, %v1336
          %v1833 = vpack.c.b16 %v1345, %v1337
          %v1834 = vpack.c.b16 %v1346, %v1338
          %v1835 = vpack.c.b16 %v1347, %v1339
          %v1836 = vpack.c.b16 %v1348, %v1340
          %v1837 = vpack.c.b16 %v1357, %v1349
          %v1838 = vpack.c.b16 %v1358, %v1350
          %v1839 = vpack.c.b16 %v1359, %v1351
          %v1840 = vpack.c.b16 %v1360, %v1352
          %v1841 = vpack.c.b16 %v1361, %v1353
          %v1842 = vpack.c.b16 %v1362, %v1354
          %v1843 = vpack.c.b16 %v1363, %v1355
          %v1844 = vpack.c.b16 %v1364, %v1356
          %v1845 = vpack.c.b16 %v1373, %v1365
          %v1846 = vpack.c.b16 %v1374, %v1366
          %v1847 = vpack.c.b16 %v1375, %v1367
          %v1848 = vpack.c.b16 %v1376, %v1368
          %v1849 = vpack.c.b16 %v1377, %v1369
          %v1850 = vpack.c.b16 %v1378, %v1370
          %v1851 = vpack.c.b16 %v1379, %v1371
          %v1852 = vpack.c.b16 %v1380, %v1372
          %v1853 = vpack.c.b16 %v1389, %v1381
          %v1854 = vpack.c.b16 %v1390, %v1382
          %v1855 = vpack.c.b16 %v1391, %v1383
          %v1856 = vpack.c.b16 %v1392, %v1384
          %v1857 = vpack.c.b16 %v1393, %v1385
          %v1858 = vpack.c.b16 %v1394, %v1386
          %v1859 = vpack.c.b16 %v1395, %v1387
          %v1860 = vpack.c.b16 %v1396, %v1388
          %v1861 = vpack.c.b16 %v1405, %v1397
          %v1862 = vpack.c.b16 %v1406, %v1398
          %v1863 = vpack.c.b16 %v1407, %v1399
          %v1864 = vpack.c.b16 %v1408, %v1400
          %v1865 = vpack.c.b16 %v1409, %v1401
          %v1866 = vpack.c.b16 %v1410, %v1402
          %v1867 = vpack.c.b16 %v1411, %v1403
          %v1868 = vpack.c.b16 %v1412, %v1404
          %v1869 = vpack.c.b16 %v1421, %v1413
          %v1870 = vpack.c.b16 %v1422, %v1414
          %v1871 = vpack.c.b16 %v1423, %v1415
          %v1872 = vpack.c.b16 %v1424, %v1416
          %v1873 = vpack.c.b16 %v1425, %v1417
          %v1874 = vpack.c.b16 %v1426, %v1418
          %v1875 = vpack.c.b16 %v1427, %v1419
          %v1876 = vpack.c.b16 %v1428, %v1420
          %v1877 = vpack.c.b16 %v1437, %v1429
          %v1878 = vpack.c.b16 %v1438, %v1430
          %v1879 = vpack.c.b16 %v1439, %v1431
          %v1880 = vpack.c.b16 %v1440, %v1432
          %v1881 = vpack.c.b16 %v1441, %v1433
          %v1882 = vpack.c.b16 %v1442, %v1434
          %v1883 = vpack.c.b16 %v1443, %v1435
          %v1884 = vpack.c.b16 %v1444, %v1436
          %v1885 = vpack.c.b16 %v1453, %v1445
          %v1886 = vpack.c.b16 %v1454, %v1446
          %v1887 = vpack.c.b16 %v1455, %v1447
          %v1888 = vpack.c.b16 %v1456, %v1448
          %v1889 = vpack.c.b16 %v1457, %v1449
          %v1890 = vpack.c.b16 %v1458, %v1450
          %v1891 = vpack.c.b16 %v1459, %v1451
          %v1892 = vpack.c.b16 %v1460, %v1452
          %v1893 = vpack.c.b16 %v1469, %v1461
          %v1894 = vpack.c.b16 %v1470, %v1462
          %v1895 = vpack.c.b16 %v1471, %v1463
          %v1896 = vpack.c.b16 %v1472, %v1464
          %v1897 = vpack.c.b16 %v1473, %v1465
          %v1898 = vpack.c.b16 %v1474, %v1466
          %v1899 = vpack.c.b16 %v1475, %v1467
          %v1900 = vpack.c.b16 %v1476, %v1468
          %v1901 = vpack.c.b16 %v1485, %v1477
          %v1902 = vpack.c.b16 %v1486, %v1478
          %v1903 = vpack.c.b16 %v1487, %v1479
          %v1904 = vpack.c.b16 %v1488, %v1480
          %v1905 = vpack.c.b16 %v1489, %v1481
          %v1906 = vpack.c.b16 %v1490, %v1482
          %v1907 = vpack.c.b16 %v1491, %v1483
          %v1908 = vpack.c.b16 %v1492, %v1484
          %v1909 = vpack.c.b16 %v1501, %v1493
          %v1910 = vpack.c.b16 %v1502, %v1494
          %v1911 = vpack.c.b16 %v1503, %v1495
          %v1912 = vpack.c.b16 %v1504, %v1496
          %v1913 = vpack.c.b16 %v1505, %v1497
          %v1914 = vpack.c.b16 %v1506, %v1498
          %v1915 = vpack.c.b16 %v1507, %v1499
          %v1916 = vpack.c.b16 %v1508, %v1500
          %v1917 = vpack.c.b16 %v1517, %v1509
          %v1918 = vpack.c.b16 %v1518, %v1510
          %v1919 = vpack.c.b16 %v1519, %v1511
          %v1920 = vpack.c.b16 %v1520, %v1512
          %v1921 = vpack.c.b16 %v1521, %v1513
          %v1922 = vpack.c.b16 %v1522, %v1514
          %v1923 = vpack.c.b16 %v1523, %v1515
          %v1924 = vpack.c.b16 %v1524, %v1516
          %v1925 = vpack.c.b16 %v1533, %v1525
          %v1926 = vpack.c.b16 %v1534, %v1526
          %v1927 = vpack.c.b16 %v1535, %v1527
          %v1928 = vpack.c.b16 %v1536, %v1528
          %v1929 = vpack.c.b16 %v1537, %v1529
          %v1930 = vpack.c.b16 %v1538, %v1530
          %v1931 = vpack.c.b16 %v1539, %v1531
          %v1932 = vpack.c.b16 %v1540, %v1532
          %v1933 = vpack.c.b16 %v1549, %v1541
          %v1934 = vpack.c.b16 %v1550, %v1542
          %v1935 = vpack.c.b16 %v1551, %v1543
          %v1936 = vpack.c.b16 %v1552, %v1544
          %v1937 = vpack.c.b16 %v1553, %v1545
          %v1938 = vpack.c.b16 %v1554, %v1546
          %v1939 = vpack.c.b16 %v1555, %v1547
          %v1940 = vpack.c.b16 %v1556, %v1548
          %v1941 = vpack.c.b16 %v1565, %v1557
          %v1942 = vpack.c.b16 %v1566, %v1558
          %v1943 = vpack.c.b16 %v1567, %v1559
          %v1944 = vpack.c.b16 %v1568, %v1560
          %v1945 = vpack.c.b16 %v1569, %v1561
          %v1946 = vpack.c.b16 %v1570, %v1562
          %v1947 = vpack.c.b16 %v1571, %v1563
          %v1948 = vpack.c.b16 %v1572, %v1564
          %v1949 = vpack.c.b16 %v1581, %v1573
          %v1950 = vpack.c.b16 %v1582, %v1574
          %v1951 = vpack.c.b16 %v1583, %v1575
          %v1952 = vpack.c.b16 %v1584, %v1576
          %v1953 = vpack.c.b16 %v1585, %v1577
          %v1954 = vpack.c.b16 %v1586, %v1578
          %v1955 = vpack.c.b16 %v1587, %v1579
          %v1956 = vpack.c.b16 %v1588, %v1580
          %v1957 = vpack.c.b16 %v1597, %v1589
          %v1958 = vpack.c.b16 %v1598, %v1590
          %v1959 = vpack.c.b16 %v1599, %v1591
          %v1960 = vpack.c.b16 %v1600, %v1592
          %v1961 = vpack.c.b16 %v1601, %v1593
          %v1962 = vpack.c.b16 %v1602, %v1594
          %v1963 = vpack.c.b16 %v1603, %v1595
          %v1964 = vpack.c.b16 %v1604, %v1596
          %v1965 = vpack.c.b16 %v1613, %v1605
          %v1966 = vpack.c.b16 %v1614, %v1606
          %v1967 = vpack.c.b16 %v1615, %v1607
          %v1968 = vpack.c.b16 %v1616, %v1608
          %v1969 = vpack.c.b16 %v1617, %v1609
          %v1970 = vpack.c.b16 %v1618, %v1610
          %v1971 = vpack.c.b16 %v1619, %v1611
          %v1972 = vpack.c.b16 %v1620, %v1612
          %v1973 = vpack.c.b16 %v1629, %v1621
          %v1974 = vpack.c.b16 %v1630, %v1622
          %v1975 = vpack.c.b16 %v1631, %v1623
          %v1976 = vpack.c.b16 %v1632, %v1624
          %v1977 = vpack.c.b16 %v1633, %v1625
          %v1978 = vpack.c.b16 %v1634, %v1626
          %v1979 = vpack.c.b16 %v1635, %v1627
          %v1980 = vpack.c.b16 %v1636, %v1628
          %v1981 = vpack.c.b16 %v1645, %v1637
          %v1982 = vpack.c.b16 %v1646, %v1638
          %v1983 = vpack.c.b16 %v1647, %v1639
          %v1984 = vpack.c.b16 %v1648, %v1640
          %v1985 = vpack.c.b16 %v1649, %v1641
          %v1986 = vpack.c.b16 %v1650, %v1642
          %v1987 = vpack.c.b16 %v1651, %v1643
          %v1988 = vpack.c.b16 %v1652, %v1644
          %v1989 = vpack.c.b16 %v1661, %v1653
          %v1990 = vpack.c.b16 %v1662, %v1654
          %v1991 = vpack.c.b16 %v1663, %v1655
          %v1992 = vpack.c.b16 %v1664, %v1656
          %v1993 = vpack.c.b16 %v1665, %v1657
          %v1994 = vpack.c.b16 %v1666, %v1658
          %v1995 = vpack.c.b16 %v1667, %v1659
          %v1996 = vpack.c.b16 %v1668, %v1660
          %v1997 = vpack.c.b16 %v1677, %v1669
          %v1998 = vpack.c.b16 %v1678, %v1670
          %v1999 = vpack.c.b16 %v1679, %v1671
          %v2000 = vpack.c.b16 %v1680, %v1672
          %v2001 = vpack.c.b16 %v1681, %v1673
          %v2002 = vpack.c.b16 %v1682, %v1674
          %v2003 = vpack.c.b16 %v1683, %v1675
          %v2004 = vpack.c.b16 %v1684, %v1676
          %v2005 = vpack.c.b16 %v1693, %v1685
          %v2006 = vpack.c.b16 %v1694, %v1686
          %v2007 = vpack.c.b16 %v1695, %v1687
          %v2008 = vpack.c.b16 %v1696, %v1688
          %v2009 = vpack.c.b16 %v1697, %v1689
          %v2010 = vpack.c.b16 %v1698, %v1690
          %v2011 = vpack.c.b16 %v1699, %v1691
          %v2012 = vpack.c.b16 %v1700, %v1692
          %v2013 = vpack.c.b16 %v1709, %v1701
          %v2014 = vpack.c.b16 %v1710, %v1702
          %v2015 = vpack.c.b16 %v1711, %v1703
          %v2016 = vpack.c.b16 %v1712, %v1704
          %v2017 = vpack.c.b16 %v1713, %v1705
          %v2018 = vpack.c.b16 %v1714, %v1706
          %v2019 = vpack.c.b16 %v1715, %v1707
          %v2020 = vpack.c.b16 %v1716, %v1708
          %v2021 = vpack.c.b16 %v1725, %v1717
          %v2022 = vpack.c.b16 %v1726, %v1718
          %v2023 = vpack.c.b16 %v1727, %v1719
          %v2024 = vpack.c.b16 %v1728, %v1720
          %v2025 = vpack.c.b16 %v1729, %v1721
          %v2026 = vpack.c.b16 %v1730, %v1722
          %v2027 = vpack.c.b16 %v1731, %v1723
          %v2028 = vpack.c.b16 %v1732, %v1724
          %v2029 = vpack.c.b16 %v1741, %v1733
          %v2030 = vpack.c.b16 %v1742, %v1734
          %v2031 = vpack.c.b16 %v1743, %v1735
          %v2032 = vpack.c.b16 %v1744, %v1736
          %v2033 = vpack.c.b16 %v1745, %v1737
          %v2034 = vpack.c.b16 %v1746, %v1738
          %v2035 = vpack.c.b16 %v1747, %v1739
          %v2036 = vpack.c.b16 %v1748, %v1740
          %v2037 = vpack.c.b16 %v1757, %v1749
          %v2038 = vpack.c.b16 %v1758, %v1750
          %v2039 = vpack.c.b16 %v1759, %v1751
          %v2040 = vpack.c.b16 %v1760, %v1752
          %v2041 = vpack.c.b16 %v1761, %v1753
          %v2042 = vpack.c.b16 %v1762, %v1754
          %v2043 = vpack.c.b16 %v1763, %v1755
          %v2044 = vpack.c.b16 %v1764, %v1756
          %v2045 = vpack.c.b16 %v1773, %v1765
          %v2046 = vpack.c.b16 %v1774, %v1766
          %v2047 = vpack.c.b16 %v1775, %v1767
          %v2048 = vpack.c.b16 %v1776, %v1768
          %v2049 = vpack.c.b16 %v1777, %v1769
          %v2050 = vpack.c.b16 %v1778, %v1770
          %v2051 = vpack.c.b16 %v1779, %v1771
          %v2052 = vpack.c.b16 %v1780, %v1772
          %v2053 = vpack.c.b16 %v1789, %v1781
          %v2054 = vpack.c.b16 %v1790, %v1782
          %v2055 = vpack.c.b16 %v1791, %v1783
          %v2056 = vpack.c.b16 %v1792, %v1784
          %v2057 = vpack.c.b16 %v1793, %v1785
          %v2058 = vpack.c.b16 %v1794, %v1786
          %v2059 = vpack.c.b16 %v1795, %v1787
          %v2060 = vpack.c.b16 %v1796, %v1788
          %v2061 = vpack.c.b16 %v1805, %v1797
          %v2062 = vpack.c.b16 %v1806, %v1798
          %v2063 = vpack.c.b16 %v1807, %v1799
          %v2064 = vpack.c.b16 %v1808, %v1800
          %v2065 = vpack.c.b16 %v1809, %v1801
          %v2066 = vpack.c.b16 %v1810, %v1802
          %v2067 = vpack.c.b16 %v1811, %v1803
          %v2068 = vpack.c.b16 %v1812, %v1804
          %2325 = vmatpush.bf16.msra.mxu0 %v1869
          %2326 = vmatpush.bf16.msra.mxu0 %v1861
          %2327 = vmatpush.bf16.msra.mxu0 %v1853
          %2328 = vmatpush.bf16.msra.mxu0 %v1845
          %2329 = vmatpush.bf16.msra.mxu0 %v1837
          %2330 = vmatpush.bf16.msra.mxu0 %v1829
          %2331 = vmatpush.bf16.msra.mxu0 %v1821
          %2332 = vmatpush.bf16.msra.mxu0 %v1813
          %2333 = vmatmul.bf16.gmra.mxu0 %v1020
          %v2334 = vpop.f32.mrf.mxu0
          %v2335 = vadd.f32 %v1029, %v2334
          %v2336 = vpop.f32.mrf.mxu0
          %2337 = vdwg.mxu0
          %2338 = vmatpush.bf16.msra.mxu0 %v1933
          %2339 = vmatpush.bf16.msra.mxu0 %v1925
          %2340 = vmatpush.bf16.msra.mxu0 %v1917
          %2341 = vmatpush.bf16.msra.mxu0 %v1909
          %2342 = vmatpush.bf16.msra.mxu0 %v1901
          %2343 = vmatpush.bf16.msra.mxu0 %v1893
          %2344 = vmatpush.bf16.msra.mxu0 %v1885
          %2345 = vmatpush.bf16.msra.mxu0 %v1877
          %2346 = vmatmul.bf16.gmra.mxu0 %v1021
          %v2347 = vpop.f32.mrf.mxu0
          %v2348 = vadd.f32 %v2335, %v2347
          %v2349 = vpop.f32.mrf.mxu0
          %2350 = vdwg.mxu0
          %2351 = vmatpush.bf16.msra.mxu0 %v1997
          %2352 = vmatpush.bf16.msra.mxu0 %v1989
          %2353 = vmatpush.bf16.msra.mxu0 %v1981
          %2354 = vmatpush.bf16.msra.mxu0 %v1973
          %2355 = vmatpush.bf16.msra.mxu0 %v1965
          %2356 = vmatpush.bf16.msra.mxu0 %v1957
          %2357 = vmatpush.bf16.msra.mxu0 %v1949
          %2358 = vmatpush.bf16.msra.mxu0 %v1941
          %2359 = vmatmul.bf16.gmra.mxu0 %v1022
          %v2360 = vpop.f32.mrf.mxu0
          %v2361 = vadd.f32 %v2348, %v2360
          %v2362 = vpop.f32.mrf.mxu0
          %2363 = vdwg.mxu0
          %2364 = vmatpush.bf16.msra.mxu0 %v2061
          %2365 = vmatpush.bf16.msra.mxu0 %v2053
          %2366 = vmatpush.bf16.msra.mxu0 %v2045
          %2367 = vmatpush.bf16.msra.mxu0 %v2037
          %2368 = vmatpush.bf16.msra.mxu0 %v2029
          %2369 = vmatpush.bf16.msra.mxu0 %v2021
          %2370 = vmatpush.bf16.msra.mxu0 %v2013
          %2371 = vmatpush.bf16.msra.mxu0 %v2005
          %2372 = vmatmul.bf16.gmra.mxu0 %v1023
          %v2373 = vpop.f32.mrf.mxu0
          %v2374 = vadd.f32 %v2361, %v2373
          %v2375 = vpop.f32.mrf.mxu0
          %2376 = vdwg.mxu0
          %2377 = vmatpush.bf16.msra.mxu0 %v1870
          %2378 = vmatpush.bf16.msra.mxu0 %v1862
          %2379 = vmatpush.bf16.msra.mxu0 %v1854
          %2380 = vmatpush.bf16.msra.mxu0 %v1846
          %2381 = vmatpush.bf16.msra.mxu0 %v1838
          %2382 = vmatpush.bf16.msra.mxu0 %v1830
          %2383 = vmatpush.bf16.msra.mxu0 %v1822
          %2384 = vmatpush.bf16.msra.mxu0 %v1814
          %2385 = vmatmul.bf16.gmra.mxu0 %v1020
          %v2386 = vpop.f32.mrf.mxu0
          %v2387 = vadd.f32 %v1030, %v2386
          %v2388 = vpop.f32.mrf.mxu0
          %2389 = vdwg.mxu0
          %2390 = vmatpush.bf16.msra.mxu0 %v1934
          %2391 = vmatpush.bf16.msra.mxu0 %v1926
          %2392 = vmatpush.bf16.msra.mxu0 %v1918
          %2393 = vmatpush.bf16.msra.mxu0 %v1910
          %2394 = vmatpush.bf16.msra.mxu0 %v1902
          %2395 = vmatpush.bf16.msra.mxu0 %v1894
          %2396 = vmatpush.bf16.msra.mxu0 %v1886
          %2397 = vmatpush.bf16.msra.mxu0 %v1878
          %2398 = vmatmul.bf16.gmra.mxu0 %v1021
          %v2399 = vpop.f32.mrf.mxu0
          %v2400 = vadd.f32 %v2387, %v2399
          %v2401 = vpop.f32.mrf.mxu0
          %2402 = vdwg.mxu0
          %2403 = vmatpush.bf16.msra.mxu0 %v1998
          %2404 = vmatpush.bf16.msra.mxu0 %v1990
          %2405 = vmatpush.bf16.msra.mxu0 %v1982
          %2406 = vmatpush.bf16.msra.mxu0 %v1974
          %2407 = vmatpush.bf16.msra.mxu0 %v1966
          %2408 = vmatpush.bf16.msra.mxu0 %v1958
          %2409 = vmatpush.bf16.msra.mxu0 %v1950
          %2410 = vmatpush.bf16.msra.mxu0 %v1942
          %2411 = vmatmul.bf16.gmra.mxu0 %v1022
          %v2412 = vpop.f32.mrf.mxu0
          %v2413 = vadd.f32 %v2400, %v2412
          %v2414 = vpop.f32.mrf.mxu0
          %2415 = vdwg.mxu0
          %2416 = vmatpush.bf16.msra.mxu0 %v2062
          %2417 = vmatpush.bf16.msra.mxu0 %v2054
          %2418 = vmatpush.bf16.msra.mxu0 %v2046
          %2419 = vmatpush.bf16.msra.mxu0 %v2038
          %2420 = vmatpush.bf16.msra.mxu0 %v2030
          %2421 = vmatpush.bf16.msra.mxu0 %v2022
          %2422 = vmatpush.bf16.msra.mxu0 %v2014
          %2423 = vmatpush.bf16.msra.mxu0 %v2006
          %2424 = vmatmul.bf16.gmra.mxu0 %v1023
          %v2425 = vpop.f32.mrf.mxu0
          %v2426 = vadd.f32 %v2413, %v2425
          %v2427 = vpop.f32.mrf.mxu0
          %2428 = vdwg.mxu0
          %2429 = vmatpush.bf16.msra.mxu0 %v1871
          %2430 = vmatpush.bf16.msra.mxu0 %v1863
          %2431 = vmatpush.bf16.msra.mxu0 %v1855
          %2432 = vmatpush.bf16.msra.mxu0 %v1847
          %2433 = vmatpush.bf16.msra.mxu0 %v1839
          %2434 = vmatpush.bf16.msra.mxu0 %v1831
          %2435 = vmatpush.bf16.msra.mxu0 %v1823
          %2436 = vmatpush.bf16.msra.mxu0 %v1815
          %2437 = vmatmul.bf16.gmra.mxu0 %v1020
          %v2438 = vpop.f32.mrf.mxu0
          %v2439 = vadd.f32 %v1031, %v2438
          %v2440 = vpop.f32.mrf.mxu0
          %2441 = vdwg.mxu0
          %2442 = vmatpush.bf16.msra.mxu0 %v1935
          %2443 = vmatpush.bf16.msra.mxu0 %v1927
          %2444 = vmatpush.bf16.msra.mxu0 %v1919
          %2445 = vmatpush.bf16.msra.mxu0 %v1911
          %2446 = vmatpush.bf16.msra.mxu0 %v1903
          %2447 = vmatpush.bf16.msra.mxu0 %v1895
          %2448 = vmatpush.bf16.msra.mxu0 %v1887
          %2449 = vmatpush.bf16.msra.mxu0 %v1879
          %2450 = vmatmul.bf16.gmra.mxu0 %v1021
          %v2451 = vpop.f32.mrf.mxu0
          %v2452 = vadd.f32 %v2439, %v2451
          %v2453 = vpop.f32.mrf.mxu0
          %2454 = vdwg.mxu0
          %2455 = vmatpush.bf16.msra.mxu0 %v1999
          %2456 = vmatpush.bf16.msra.mxu0 %v1991
          %2457 = vmatpush.bf16.msra.mxu0 %v1983
          %2458 = vmatpush.bf16.msra.mxu0 %v1975
          %2459 = vmatpush.bf16.msra.mxu0 %v1967
          %2460 = vmatpush.bf16.msra.mxu0 %v1959
          %2461 = vmatpush.bf16.msra.mxu0 %v1951
          %2462 = vmatpush.bf16.msra.mxu0 %v1943
          %2463 = vmatmul.bf16.gmra.mxu0 %v1022
          %v2464 = vpop.f32.mrf.mxu0
          %v2465 = vadd.f32 %v2452, %v2464
          %v2466 = vpop.f32.mrf.mxu0
          %2467 = vdwg.mxu0
          %2468 = vmatpush.bf16.msra.mxu0 %v2063
          %2469 = vmatpush.bf16.msra.mxu0 %v2055
          %2470 = vmatpush.bf16.msra.mxu0 %v2047
          %2471 = vmatpush.bf16.msra.mxu0 %v2039
          %2472 = vmatpush.bf16.msra.mxu0 %v2031
          %2473 = vmatpush.bf16.msra.mxu0 %v2023
          %2474 = vmatpush.bf16.msra.mxu0 %v2015
          %2475 = vmatpush.bf16.msra.mxu0 %v2007
          %2476 = vmatmul.bf16.gmra.mxu0 %v1023
          %v2477 = vpop.f32.mrf.mxu0
          %v2478 = vadd.f32 %v2465, %v2477
          %v2479 = vpop.f32.mrf.mxu0
          %2480 = vdwg.mxu0
          %2481 = vmatpush.bf16.msra.mxu0 %v1872
          %2482 = vmatpush.bf16.msra.mxu0 %v1864
          %2483 = vmatpush.bf16.msra.mxu0 %v1856
          %2484 = vmatpush.bf16.msra.mxu0 %v1848
          %2485 = vmatpush.bf16.msra.mxu0 %v1840
          %2486 = vmatpush.bf16.msra.mxu0 %v1832
          %2487 = vmatpush.bf16.msra.mxu0 %v1824
          %2488 = vmatpush.bf16.msra.mxu0 %v1816
          %2489 = vmatmul.bf16.gmra.mxu0 %v1020
          %v2490 = vpop.f32.mrf.mxu0
          %v2491 = vadd.f32 %v1032, %v2490
          %v2492 = vpop.f32.mrf.mxu0
          %2493 = vdwg.mxu0
          %2494 = vmatpush.bf16.msra.mxu0 %v1936
          %2495 = vmatpush.bf16.msra.mxu0 %v1928
          %2496 = vmatpush.bf16.msra.mxu0 %v1920
          %2497 = vmatpush.bf16.msra.mxu0 %v1912
          %2498 = vmatpush.bf16.msra.mxu0 %v1904
          %2499 = vmatpush.bf16.msra.mxu0 %v1896
          %2500 = vmatpush.bf16.msra.mxu0 %v1888
          %2501 = vmatpush.bf16.msra.mxu0 %v1880
          %2502 = vmatmul.bf16.gmra.mxu0 %v1021
          %v2503 = vpop.f32.mrf.mxu0
          %v2504 = vadd.f32 %v2491, %v2503
          %v2505 = vpop.f32.mrf.mxu0
          %2506 = vdwg.mxu0
          %2507 = vmatpush.bf16.msra.mxu0 %v2000
          %2508 = vmatpush.bf16.msra.mxu0 %v1992
          %2509 = vmatpush.bf16.msra.mxu0 %v1984
          %2510 = vmatpush.bf16.msra.mxu0 %v1976
          %2511 = vmatpush.bf16.msra.mxu0 %v1968
          %2512 = vmatpush.bf16.msra.mxu0 %v1960
          %2513 = vmatpush.bf16.msra.mxu0 %v1952
          %2514 = vmatpush.bf16.msra.mxu0 %v1944
          %2515 = vmatmul.bf16.gmra.mxu0 %v1022
          %v2516 = vpop.f32.mrf.mxu0
          %v2517 = vadd.f32 %v2504, %v2516
          %v2518 = vpop.f32.mrf.mxu0
          %2519 = vdwg.mxu0
          %2520 = vmatpush.bf16.msra.mxu0 %v2064
          %2521 = vmatpush.bf16.msra.mxu0 %v2056
          %2522 = vmatpush.bf16.msra.mxu0 %v2048
          %2523 = vmatpush.bf16.msra.mxu0 %v2040
          %2524 = vmatpush.bf16.msra.mxu0 %v2032
          %2525 = vmatpush.bf16.msra.mxu0 %v2024
          %2526 = vmatpush.bf16.msra.mxu0 %v2016
          %2527 = vmatpush.bf16.msra.mxu0 %v2008
          %2528 = vmatmul.bf16.gmra.mxu0 %v1023
          %v2529 = vpop.f32.mrf.mxu0
          %v2530 = vadd.f32 %v2517, %v2529
          %v2531 = vpop.f32.mrf.mxu0
          %2532 = vdwg.mxu0
          %2533 = vmatpush.bf16.msra.mxu0 %v1873
          %2534 = vmatpush.bf16.msra.mxu0 %v1865
          %2535 = vmatpush.bf16.msra.mxu0 %v1857
          %2536 = vmatpush.bf16.msra.mxu0 %v1849
          %2537 = vmatpush.bf16.msra.mxu0 %v1841
          %2538 = vmatpush.bf16.msra.mxu0 %v1833
          %2539 = vmatpush.bf16.msra.mxu0 %v1825
          %2540 = vmatpush.bf16.msra.mxu0 %v1817
          %2541 = vmatmul.bf16.gmra.mxu0 %v1020
          %v2542 = vpop.f32.mrf.mxu0
          %v2543 = vadd.f32 %v1033, %v2542
          %v2544 = vpop.f32.mrf.mxu0
          %2545 = vdwg.mxu0
          %2546 = vmatpush.bf16.msra.mxu0 %v1937
          %2547 = vmatpush.bf16.msra.mxu0 %v1929
          %2548 = vmatpush.bf16.msra.mxu0 %v1921
          %2549 = vmatpush.bf16.msra.mxu0 %v1913
          %2550 = vmatpush.bf16.msra.mxu0 %v1905
          %2551 = vmatpush.bf16.msra.mxu0 %v1897
          %2552 = vmatpush.bf16.msra.mxu0 %v1889
          %2553 = vmatpush.bf16.msra.mxu0 %v1881
          %2554 = vmatmul.bf16.gmra.mxu0 %v1021
          %v2555 = vpop.f32.mrf.mxu0
          %v2556 = vadd.f32 %v2543, %v2555
          %v2557 = vpop.f32.mrf.mxu0
          %2558 = vdwg.mxu0
          %2559 = vmatpush.bf16.msra.mxu0 %v2001
          %2560 = vmatpush.bf16.msra.mxu0 %v1993
          %2561 = vmatpush.bf16.msra.mxu0 %v1985
          %2562 = vmatpush.bf16.msra.mxu0 %v1977
          %2563 = vmatpush.bf16.msra.mxu0 %v1969
          %2564 = vmatpush.bf16.msra.mxu0 %v1961
          %2565 = vmatpush.bf16.msra.mxu0 %v1953
          %2566 = vmatpush.bf16.msra.mxu0 %v1945
          %2567 = vmatmul.bf16.gmra.mxu0 %v1022
          %v2568 = vpop.f32.mrf.mxu0
          %v2569 = vadd.f32 %v2556, %v2568
          %v2570 = vpop.f32.mrf.mxu0
          %2571 = vdwg.mxu0
          %2572 = vmatpush.bf16.msra.mxu0 %v2065
          %2573 = vmatpush.bf16.msra.mxu0 %v2057
          %2574 = vmatpush.bf16.msra.mxu0 %v2049
          %2575 = vmatpush.bf16.msra.mxu0 %v2041
          %2576 = vmatpush.bf16.msra.mxu0 %v2033
          %2577 = vmatpush.bf16.msra.mxu0 %v2025
          %2578 = vmatpush.bf16.msra.mxu0 %v2017
          %2579 = vmatpush.bf16.msra.mxu0 %v2009
          %2580 = vmatmul.bf16.gmra.mxu0 %v1023
          %v2581 = vpop.f32.mrf.mxu0
          %v2582 = vadd.f32 %v2569, %v2581
          %v2583 = vpop.f32.mrf.mxu0
          %2584 = vdwg.mxu0
          %2585 = vmatpush.bf16.msra.mxu0 %v1874
          %2586 = vmatpush.bf16.msra.mxu0 %v1866
          %2587 = vmatpush.bf16.msra.mxu0 %v1858
          %2588 = vmatpush.bf16.msra.mxu0 %v1850
          %2589 = vmatpush.bf16.msra.mxu0 %v1842
          %2590 = vmatpush.bf16.msra.mxu0 %v1834
          %2591 = vmatpush.bf16.msra.mxu0 %v1826
          %2592 = vmatpush.bf16.msra.mxu0 %v1818
          %2593 = vmatmul.bf16.gmra.mxu0 %v1020
          %v2594 = vpop.f32.mrf.mxu0
          %v2595 = vadd.f32 %v1034, %v2594
          %v2596 = vpop.f32.mrf.mxu0
          %2597 = vdwg.mxu0
          %2598 = vmatpush.bf16.msra.mxu0 %v1938
          %2599 = vmatpush.bf16.msra.mxu0 %v1930
          %2600 = vmatpush.bf16.msra.mxu0 %v1922
          %2601 = vmatpush.bf16.msra.mxu0 %v1914
          %2602 = vmatpush.bf16.msra.mxu0 %v1906
          %2603 = vmatpush.bf16.msra.mxu0 %v1898
          %2604 = vmatpush.bf16.msra.mxu0 %v1890
          %2605 = vmatpush.bf16.msra.mxu0 %v1882
          %2606 = vmatmul.bf16.gmra.mxu0 %v1021
          %v2607 = vpop.f32.mrf.mxu0
          %v2608 = vadd.f32 %v2595, %v2607
          %v2609 = vpop.f32.mrf.mxu0
          %2610 = vdwg.mxu0
          %2611 = vmatpush.bf16.msra.mxu0 %v2002
          %2612 = vmatpush.bf16.msra.mxu0 %v1994
          %2613 = vmatpush.bf16.msra.mxu0 %v1986
          %2614 = vmatpush.bf16.msra.mxu0 %v1978
          %2615 = vmatpush.bf16.msra.mxu0 %v1970
          %2616 = vmatpush.bf16.msra.mxu0 %v1962
          %2617 = vmatpush.bf16.msra.mxu0 %v1954
          %2618 = vmatpush.bf16.msra.mxu0 %v1946
          %2619 = vmatmul.bf16.gmra.mxu0 %v1022
          %v2620 = vpop.f32.mrf.mxu0
          %v2621 = vadd.f32 %v2608, %v2620
          %v2622 = vpop.f32.mrf.mxu0
          %2623 = vdwg.mxu0
          %2624 = vmatpush.bf16.msra.mxu0 %v2066
          %2625 = vmatpush.bf16.msra.mxu0 %v2058
          %2626 = vmatpush.bf16.msra.mxu0 %v2050
          %2627 = vmatpush.bf16.msra.mxu0 %v2042
          %2628 = vmatpush.bf16.msra.mxu0 %v2034
          %2629 = vmatpush.bf16.msra.mxu0 %v2026
          %2630 = vmatpush.bf16.msra.mxu0 %v2018
          %2631 = vmatpush.bf16.msra.mxu0 %v2010
          %2632 = vmatmul.bf16.gmra.mxu0 %v1023
          %v2633 = vpop.f32.mrf.mxu0
          %v2634 = vadd.f32 %v2621, %v2633
          %v2635 = vpop.f32.mrf.mxu0
          %2636 = vdwg.mxu0
          %2637 = vmatpush.bf16.msra.mxu0 %v1875
          %2638 = vmatpush.bf16.msra.mxu0 %v1867
          %2639 = vmatpush.bf16.msra.mxu0 %v1859
          %2640 = vmatpush.bf16.msra.mxu0 %v1851
          %2641 = vmatpush.bf16.msra.mxu0 %v1843
          %2642 = vmatpush.bf16.msra.mxu0 %v1835
          %2643 = vmatpush.bf16.msra.mxu0 %v1827
          %2644 = vmatpush.bf16.msra.mxu0 %v1819
          %2645 = vmatmul.bf16.gmra.mxu0 %v1020
          %v2646 = vpop.f32.mrf.mxu0
          %v2647 = vadd.f32 %v1035, %v2646
          %v2648 = vpop.f32.mrf.mxu0
          %2649 = vdwg.mxu0
          %2650 = vmatpush.bf16.msra.mxu0 %v1939
          %2651 = vmatpush.bf16.msra.mxu0 %v1931
          %2652 = vmatpush.bf16.msra.mxu0 %v1923
          %2653 = vmatpush.bf16.msra.mxu0 %v1915
          %2654 = vmatpush.bf16.msra.mxu0 %v1907
          %2655 = vmatpush.bf16.msra.mxu0 %v1899
          %2656 = vmatpush.bf16.msra.mxu0 %v1891
          %2657 = vmatpush.bf16.msra.mxu0 %v1883
          %2658 = vmatmul.bf16.gmra.mxu0 %v1021
          %v2659 = vpop.f32.mrf.mxu0
          %v2660 = vadd.f32 %v2647, %v2659
          %v2661 = vpop.f32.mrf.mxu0
          %2662 = vdwg.mxu0
          %2663 = vmatpush.bf16.msra.mxu0 %v2003
          %2664 = vmatpush.bf16.msra.mxu0 %v1995
          %2665 = vmatpush.bf16.msra.mxu0 %v1987
          %2666 = vmatpush.bf16.msra.mxu0 %v1979
          %2667 = vmatpush.bf16.msra.mxu0 %v1971
          %2668 = vmatpush.bf16.msra.mxu0 %v1963
          %2669 = vmatpush.bf16.msra.mxu0 %v1955
          %2670 = vmatpush.bf16.msra.mxu0 %v1947
          %2671 = vmatmul.bf16.gmra.mxu0 %v1022
          %v2672 = vpop.f32.mrf.mxu0
          %v2673 = vadd.f32 %v2660, %v2672
          %v2674 = vpop.f32.mrf.mxu0
          %2675 = vdwg.mxu0
          %2676 = vmatpush.bf16.msra.mxu0 %v2067
          %2677 = vmatpush.bf16.msra.mxu0 %v2059
          %2678 = vmatpush.bf16.msra.mxu0 %v2051
          %2679 = vmatpush.bf16.msra.mxu0 %v2043
          %2680 = vmatpush.bf16.msra.mxu0 %v2035
          %2681 = vmatpush.bf16.msra.mxu0 %v2027
          %2682 = vmatpush.bf16.msra.mxu0 %v2019
          %2683 = vmatpush.bf16.msra.mxu0 %v2011
          %2684 = vmatmul.bf16.gmra.mxu0 %v1023
          %v2685 = vpop.f32.mrf.mxu0
          %v2686 = vadd.f32 %v2673, %v2685
          %v2687 = vpop.f32.mrf.mxu0
          %2688 = vdwg.mxu0
          %2689 = vmatpush.bf16.msra.mxu0 %v1876
          %2690 = vmatpush.bf16.msra.mxu0 %v1868
          %2691 = vmatpush.bf16.msra.mxu0 %v1860
          %2692 = vmatpush.bf16.msra.mxu0 %v1852
          %2693 = vmatpush.bf16.msra.mxu0 %v1844
          %2694 = vmatpush.bf16.msra.mxu0 %v1836
          %2695 = vmatpush.bf16.msra.mxu0 %v1828
          %2696 = vmatpush.bf16.msra.mxu0 %v1820
          %2697 = vmatmul.bf16.gmra.mxu0 %v1020
          %v2698 = vpop.f32.mrf.mxu0
          %v2699 = vadd.f32 %v1036, %v2698
          %v2700 = vpop.f32.mrf.mxu0
          %2701 = vdwg.mxu0
          %2702 = vmatpush.bf16.msra.mxu0 %v1940
          %2703 = vmatpush.bf16.msra.mxu0 %v1932
          %2704 = vmatpush.bf16.msra.mxu0 %v1924
          %2705 = vmatpush.bf16.msra.mxu0 %v1916
          %2706 = vmatpush.bf16.msra.mxu0 %v1908
          %2707 = vmatpush.bf16.msra.mxu0 %v1900
          %2708 = vmatpush.bf16.msra.mxu0 %v1892
          %2709 = vmatpush.bf16.msra.mxu0 %v1884
          %2710 = vmatmul.bf16.gmra.mxu0 %v1021
          %v2711 = vpop.f32.mrf.mxu0
          %v2712 = vadd.f32 %v2699, %v2711
          %v2713 = vpop.f32.mrf.mxu0
          %2714 = vdwg.mxu0
          %2715 = vmatpush.bf16.msra.mxu0 %v2004
          %2716 = vmatpush.bf16.msra.mxu0 %v1996
          %2717 = vmatpush.bf16.msra.mxu0 %v1988
          %2718 = vmatpush.bf16.msra.mxu0 %v1980
          %2719 = vmatpush.bf16.msra.mxu0 %v1972
          %2720 = vmatpush.bf16.msra.mxu0 %v1964
          %2721 = vmatpush.bf16.msra.mxu0 %v1956
          %2722 = vmatpush.bf16.msra.mxu0 %v1948
          %2723 = vmatmul.bf16.gmra.mxu0 %v1022
          %v2724 = vpop.f32.mrf.mxu0
          %v2725 = vadd.f32 %v2712, %v2724
          %v2726 = vpop.f32.mrf.mxu0
          %2727 = vdwg.mxu0
          %2728 = vmatpush.bf16.msra.mxu0 %v2068
          %2729 = vmatpush.bf16.msra.mxu0 %v2060
          %2730 = vmatpush.bf16.msra.mxu0 %v2052
          %2731 = vmatpush.bf16.msra.mxu0 %v2044
          %2732 = vmatpush.bf16.msra.mxu0 %v2036
          %2733 = vmatpush.bf16.msra.mxu0 %v2028
          %2734 = vmatpush.bf16.msra.mxu0 %v2020
          %2735 = vmatpush.bf16.msra.mxu0 %v2012
          %2736 = vmatmul.bf16.gmra.mxu0 %v1023
          %v2737 = vpop.f32.mrf.mxu0
          %v2738 = vadd.f32 %v2725, %v2737
          %v2739 = vpop.f32.mrf.mxu0
          %2740 = vdwg.mxu0
          %vm2741 = vcmp.ge.f32.partialorder %v2374, 0.0
          %vm2742 = vcmp.ge.f32.partialorder %v2426, 0.0
          %vm2743 = vcmp.ge.f32.partialorder %v2478, 0.0
          %vm2744 = vcmp.ge.f32.partialorder %v2530, 0.0
          %vm2745 = vcmp.ge.f32.partialorder %v2582, 0.0
          %vm2746 = vcmp.ge.f32.partialorder %v2634, 0.0
          %vm2747 = vcmp.ge.f32.partialorder %v2686, 0.0
          %vm2748 = vcmp.ge.f32.partialorder %v2738, 0.0
          %v2749 = vmul.f32 %v2374, 0.01
          %v2750 = vmul.f32 %v2426, 0.01
          %v2751 = vmul.f32 %v2478, 0.01
          %v2752 = vmul.f32 %v2530, 0.01
          %v2753 = vmul.f32 %v2582, 0.01
          %v2754 = vmul.f32 %v2634, 0.01
          %v2755 = vmul.f32 %v2686, 0.01
          %v2756 = vmul.f32 %v2738, 0.01
          %v2757 = vsel %vm2741, %v2374, %v2749
          %v2758 = vsel %vm2742, %v2426, %v2750
          %v2759 = vsel %vm2743, %v2478, %v2751
          %v2760 = vsel %vm2744, %v2530, %v2752
          %v2761 = vsel %vm2745, %v2582, %v2753
          %v2762 = vsel %vm2746, %v2634, %v2754
          %v2763 = vsel %vm2747, %v2686, %v2755
          %v2764 = vsel %vm2748, %v2738, %v2756
          %2765 = vst [vmem:[#allocation2] sm:$0xff] %v2757
          %2766 = vst [vmem:[#allocation2 + $0x8] sm:$0xff] %v2758
          %2767 = vst [vmem:[#allocation2 + $0x10] sm:$0xff] %v2759
          %2768 = vst [vmem:[#allocation2 + $0x18] sm:$0xff] %v2760
          %2769 = vst [vmem:[#allocation2 + $0x20] sm:$0xff] %v2761
          %2770 = vst [vmem:[#allocation2 + $0x28] sm:$0xff] %v2762
          %2771 = vst [vmem:[#allocation2 + $0x30] sm:$0xff] %v2763
          %2772 = vst [vmem:[#allocation2 + $0x38] sm:$0xff] %v2764
        $region140: #{_forward.1} parent=87 // pred_fallthru
          _
        %v2773 = vld [vmem:[#allocation2] sm:$0xff]
        %v2774 = vld [vmem:[#allocation2 + $0x8] sm:$0xff]
        %v2775 = vld [vmem:[#allocation2 + $0x10] sm:$0xff]
        %v2776 = vld [vmem:[#allocation2 + $0x18] sm:$0xff]
        %v2777 = vld [vmem:[#allocation2 + $0x20] sm:$0xff]
        %v2778 = vld [vmem:[#allocation2 + $0x28] sm:$0xff]
        %v2779 = vld [vmem:[#allocation2 + $0x30] sm:$0xff]
        %v2780 = vld [vmem:[#allocation2 + $0x38] sm:$0xff]
        %v2781 = vld [vmem:[%s668] sm:$0xff]
        %v2782 = vld [vmem:[%s668 + $0x8] sm:$0xff]
        %v2783 = vld [vmem:[%s668 + $0x10] sm:$0xff]
        %v2784 = vld [vmem:[%s668 + $0x18] sm:$0xff]
        %v2785 = vld [vmem:[%s668 + $0x20] sm:$0xff]
        %v2786 = vld [vmem:[%s668 + $0x28] sm:$0xff]
        %v2787 = vld [vmem:[%s668 + $0x30] sm:$0xff]
        %v2788 = vld [vmem:[%s668 + $0x38] sm:$0xff]
        %v2789 = vld [vmem:[%s668 + $0x40] sm:$0xff]
        %v2790 = vld [vmem:[%s668 + $0x48] sm:$0xff]
        %v2791 = vld [vmem:[%s668 + $0x50] sm:$0xff]
        %v2792 = vld [vmem:[%s668 + $0x58] sm:$0xff]
        %v2793 = vld [vmem:[%s668 + $0x60] sm:$0xff]
        %v2794 = vld [vmem:[%s668 + $0x68] sm:$0xff]
        %v2795 = vld [vmem:[%s668 + $0x70] sm:$0xff]
        %v2796 = vld [vmem:[%s668 + $0x78] sm:$0xff]
        %v2797 = vld [vmem:[%s668 + $0x80] sm:$0xff]
        %v2798 = vld [vmem:[%s668 + $0x88] sm:$0xff]
        %v2799 = vld [vmem:[%s668 + $0x90] sm:$0xff]
        %v2800 = vld [vmem:[%s668 + $0x98] sm:$0xff]
        %v2801 = vld [vmem:[%s668 + $0xa0] sm:$0xff]
        %v2802 = vld [vmem:[%s668 + $0xa8] sm:$0xff]
        %v2803 = vld [vmem:[%s668 + $0xb0] sm:$0xff]
        %v2804 = vld [vmem:[%s668 + $0xb8] sm:$0xff]
        %v2805 = vld [vmem:[%s668 + $0xc0] sm:$0xff]
        %v2806 = vld [vmem:[%s668 + $0xc8] sm:$0xff]
        %v2807 = vld [vmem:[%s668 + $0xd0] sm:$0xff]
        %v2808 = vld [vmem:[%s668 + $0xd8] sm:$0xff]
        %v2809 = vld [vmem:[%s668 + $0xe0] sm:$0xff]
        %v2810 = vld [vmem:[%s668 + $0xe8] sm:$0xff]
        %v2811 = vld [vmem:[%s668 + $0xf0] sm:$0xff]
        %v2812 = vld [vmem:[%s668 + $0xf8] sm:$0xff]
        %v2813 = vld [vmem:[%s668 + $0x100] sm:$0xff]
        %v2814 = vld [vmem:[%s668 + $0x108] sm:$0xff]
        %v2815 = vld [vmem:[%s668 + $0x110] sm:$0xff]
        %v2816 = vld [vmem:[%s668 + $0x118] sm:$0xff]
        %v2817 = vld [vmem:[%s668 + $0x120] sm:$0xff]
        %v2818 = vld [vmem:[%s668 + $0x128] sm:$0xff]
        %v2819 = vld [vmem:[%s668 + $0x130] sm:$0xff]
        %v2820 = vld [vmem:[%s668 + $0x138] sm:$0xff]
        %v2821 = vld [vmem:[%s668 + $0x140] sm:$0xff]
        %v2822 = vld [vmem:[%s668 + $0x148] sm:$0xff]
        %v2823 = vld [vmem:[%s668 + $0x150] sm:$0xff]
        %v2824 = vld [vmem:[%s668 + $0x158] sm:$0xff]
        %v2825 = vld [vmem:[%s668 + $0x160] sm:$0xff]
        %v2826 = vld [vmem:[%s668 + $0x168] sm:$0xff]
        %v2827 = vld [vmem:[%s668 + $0x170] sm:$0xff]
        %v2828 = vld [vmem:[%s668 + $0x178] sm:$0xff]
        %v2829 = vld [vmem:[%s668 + $0x180] sm:$0xff]
        %v2830 = vld [vmem:[%s668 + $0x188] sm:$0xff]
        %v2831 = vld [vmem:[%s668 + $0x190] sm:$0xff]
        %v2832 = vld [vmem:[%s668 + $0x198] sm:$0xff]
        %v2833 = vld [vmem:[%s668 + $0x1a0] sm:$0xff]
        %v2834 = vld [vmem:[%s668 + $0x1a8] sm:$0xff]
        %v2835 = vld [vmem:[%s668 + $0x1b0] sm:$0xff]
        %v2836 = vld [vmem:[%s668 + $0x1b8] sm:$0xff]
        %v2837 = vld [vmem:[%s668 + $0x1c0] sm:$0xff]
        %v2838 = vld [vmem:[%s668 + $0x1c8] sm:$0xff]
        %v2839 = vld [vmem:[%s668 + $0x1d0] sm:$0xff]
        %v2840 = vld [vmem:[%s668 + $0x1d8] sm:$0xff]
        %v2841 = vld [vmem:[%s668 + $0x1e0] sm:$0xff]
        %v2842 = vld [vmem:[%s668 + $0x1e8] sm:$0xff]
        %v2843 = vld [vmem:[%s668 + $0x1f0] sm:$0xff]
        %v2844 = vld [vmem:[%s668 + $0x1f8] sm:$0xff]
        %v2845 = vld [vmem:[%s668 + $0x200] sm:$0xff]
        %v2846 = vld [vmem:[%s668 + $0x208] sm:$0xff]
        %v2847 = vld [vmem:[%s668 + $0x210] sm:$0xff]
        %v2848 = vld [vmem:[%s668 + $0x218] sm:$0xff]
        %v2849 = vld [vmem:[%s668 + $0x220] sm:$0xff]
        %v2850 = vld [vmem:[%s668 + $0x228] sm:$0xff]
        %v2851 = vld [vmem:[%s668 + $0x230] sm:$0xff]
        %v2852 = vld [vmem:[%s668 + $0x238] sm:$0xff]
        %v2853 = vld [vmem:[%s668 + $0x240] sm:$0xff]
        %v2854 = vld [vmem:[%s668 + $0x248] sm:$0xff]
        %v2855 = vld [vmem:[%s668 + $0x250] sm:$0xff]
        %v2856 = vld [vmem:[%s668 + $0x258] sm:$0xff]
        %v2857 = vld [vmem:[%s668 + $0x260] sm:$0xff]
        %v2858 = vld [vmem:[%s668 + $0x268] sm:$0xff]
        %v2859 = vld [vmem:[%s668 + $0x270] sm:$0xff]
        %v2860 = vld [vmem:[%s668 + $0x278] sm:$0xff]
        %v2861 = vld [vmem:[%s668 + $0x280] sm:$0xff]
        %v2862 = vld [vmem:[%s668 + $0x288] sm:$0xff]
        %v2863 = vld [vmem:[%s668 + $0x290] sm:$0xff]
        %v2864 = vld [vmem:[%s668 + $0x298] sm:$0xff]
        %v2865 = vld [vmem:[%s668 + $0x2a0] sm:$0xff]
        %v2866 = vld [vmem:[%s668 + $0x2a8] sm:$0xff]
        %v2867 = vld [vmem:[%s668 + $0x2b0] sm:$0xff]
        %v2868 = vld [vmem:[%s668 + $0x2b8] sm:$0xff]
        %v2869 = vld [vmem:[%s668 + $0x2c0] sm:$0xff]
        %v2870 = vld [vmem:[%s668 + $0x2c8] sm:$0xff]
        %v2871 = vld [vmem:[%s668 + $0x2d0] sm:$0xff]
        %v2872 = vld [vmem:[%s668 + $0x2d8] sm:$0xff]
        %v2873 = vld [vmem:[%s668 + $0x2e0] sm:$0xff]
        %v2874 = vld [vmem:[%s668 + $0x2e8] sm:$0xff]
        %v2875 = vld [vmem:[%s668 + $0x2f0] sm:$0xff]
        %v2876 = vld [vmem:[%s668 + $0x2f8] sm:$0xff]
        %v2877 = vld [vmem:[%s668 + $0x300] sm:$0xff]
        %v2878 = vld [vmem:[%s668 + $0x308] sm:$0xff]
        %v2879 = vld [vmem:[%s668 + $0x310] sm:$0xff]
        %v2880 = vld [vmem:[%s668 + $0x318] sm:$0xff]
        %v2881 = vld [vmem:[%s668 + $0x320] sm:$0xff]
        %v2882 = vld [vmem:[%s668 + $0x328] sm:$0xff]
        %v2883 = vld [vmem:[%s668 + $0x330] sm:$0xff]
        %v2884 = vld [vmem:[%s668 + $0x338] sm:$0xff]
        %v2885 = vld [vmem:[%s668 + $0x340] sm:$0xff]
        %v2886 = vld [vmem:[%s668 + $0x348] sm:$0xff]
        %v2887 = vld [vmem:[%s668 + $0x350] sm:$0xff]
        %v2888 = vld [vmem:[%s668 + $0x358] sm:$0xff]
        %v2889 = vld [vmem:[%s668 + $0x360] sm:$0xff]
        %v2890 = vld [vmem:[%s668 + $0x368] sm:$0xff]
        %v2891 = vld [vmem:[%s668 + $0x370] sm:$0xff]
        %v2892 = vld [vmem:[%s668 + $0x378] sm:$0xff]
        %v2893 = vld [vmem:[%s668 + $0x380] sm:$0xff]
        %v2894 = vld [vmem:[%s668 + $0x388] sm:$0xff]
        %v2895 = vld [vmem:[%s668 + $0x390] sm:$0xff]
        %v2896 = vld [vmem:[%s668 + $0x398] sm:$0xff]
        %v2897 = vld [vmem:[%s668 + $0x3a0] sm:$0xff]
        %v2898 = vld [vmem:[%s668 + $0x3a8] sm:$0xff]
        %v2899 = vld [vmem:[%s668 + $0x3b0] sm:$0xff]
        %v2900 = vld [vmem:[%s668 + $0x3b8] sm:$0xff]
        %v2901 = vld [vmem:[%s668 + $0x3c0] sm:$0xff]
        %v2902 = vld [vmem:[%s668 + $0x3c8] sm:$0xff]
        %v2903 = vld [vmem:[%s668 + $0x3d0] sm:$0xff]
        %v2904 = vld [vmem:[%s668 + $0x3d8] sm:$0xff]
        %v2905 = vld [vmem:[%s668 + $0x3e0] sm:$0xff]
        %v2906 = vld [vmem:[%s668 + $0x3e8] sm:$0xff]
        %v2907 = vld [vmem:[%s668 + $0x3f0] sm:$0xff]
        %v2908 = vld [vmem:[%s668 + $0x3f8] sm:$0xff]
        %v2909 = vld [vmem:[%s668 + $0x400] sm:$0xff]
        %v2910 = vld [vmem:[%s668 + $0x408] sm:$0xff]
        %v2911 = vld [vmem:[%s668 + $0x410] sm:$0xff]
        %v2912 = vld [vmem:[%s668 + $0x418] sm:$0xff]
        %v2913 = vld [vmem:[%s668 + $0x420] sm:$0xff]
        %v2914 = vld [vmem:[%s668 + $0x428] sm:$0xff]
        %v2915 = vld [vmem:[%s668 + $0x430] sm:$0xff]
        %v2916 = vld [vmem:[%s668 + $0x438] sm:$0xff]
        %v2917 = vld [vmem:[%s668 + $0x440] sm:$0xff]
        %v2918 = vld [vmem:[%s668 + $0x448] sm:$0xff]
        %v2919 = vld [vmem:[%s668 + $0x450] sm:$0xff]
        %v2920 = vld [vmem:[%s668 + $0x458] sm:$0xff]
        %v2921 = vld [vmem:[%s668 + $0x460] sm:$0xff]
        %v2922 = vld [vmem:[%s668 + $0x468] sm:$0xff]
        %v2923 = vld [vmem:[%s668 + $0x470] sm:$0xff]
        %v2924 = vld [vmem:[%s668 + $0x478] sm:$0xff]
        %v2925 = vld [vmem:[%s668 + $0x480] sm:$0xff]
        %v2926 = vld [vmem:[%s668 + $0x488] sm:$0xff]
        %v2927 = vld [vmem:[%s668 + $0x490] sm:$0xff]
        %v2928 = vld [vmem:[%s668 + $0x498] sm:$0xff]
        %v2929 = vld [vmem:[%s668 + $0x4a0] sm:$0xff]
        %v2930 = vld [vmem:[%s668 + $0x4a8] sm:$0xff]
        %v2931 = vld [vmem:[%s668 + $0x4b0] sm:$0xff]
        %v2932 = vld [vmem:[%s668 + $0x4b8] sm:$0xff]
        %v2933 = vld [vmem:[%s668 + $0x4c0] sm:$0xff]
        %v2934 = vld [vmem:[%s668 + $0x4c8] sm:$0xff]
        %v2935 = vld [vmem:[%s668 + $0x4d0] sm:$0xff]
        %v2936 = vld [vmem:[%s668 + $0x4d8] sm:$0xff]
        %v2937 = vld [vmem:[%s668 + $0x4e0] sm:$0xff]
        %v2938 = vld [vmem:[%s668 + $0x4e8] sm:$0xff]
        %v2939 = vld [vmem:[%s668 + $0x4f0] sm:$0xff]
        %v2940 = vld [vmem:[%s668 + $0x4f8] sm:$0xff]
        %v2941 = vld [vmem:[%s668 + $0x500] sm:$0xff]
        %v2942 = vld [vmem:[%s668 + $0x508] sm:$0xff]
        %v2943 = vld [vmem:[%s668 + $0x510] sm:$0xff]
        %v2944 = vld [vmem:[%s668 + $0x518] sm:$0xff]
        %v2945 = vld [vmem:[%s668 + $0x520] sm:$0xff]
        %v2946 = vld [vmem:[%s668 + $0x528] sm:$0xff]
        %v2947 = vld [vmem:[%s668 + $0x530] sm:$0xff]
        %v2948 = vld [vmem:[%s668 + $0x538] sm:$0xff]
        %v2949 = vld [vmem:[%s668 + $0x540] sm:$0xff]
        %v2950 = vld [vmem:[%s668 + $0x548] sm:$0xff]
        %v2951 = vld [vmem:[%s668 + $0x550] sm:$0xff]
        %v2952 = vld [vmem:[%s668 + $0x558] sm:$0xff]
        %v2953 = vld [vmem:[%s668 + $0x560] sm:$0xff]
        %v2954 = vld [vmem:[%s668 + $0x568] sm:$0xff]
        %v2955 = vld [vmem:[%s668 + $0x570] sm:$0xff]
        %v2956 = vld [vmem:[%s668 + $0x578] sm:$0xff]
        %v2957 = vld [vmem:[%s668 + $0x580] sm:$0xff]
        %v2958 = vld [vmem:[%s668 + $0x588] sm:$0xff]
        %v2959 = vld [vmem:[%s668 + $0x590] sm:$0xff]
        %v2960 = vld [vmem:[%s668 + $0x598] sm:$0xff]
        %v2961 = vld [vmem:[%s668 + $0x5a0] sm:$0xff]
        %v2962 = vld [vmem:[%s668 + $0x5a8] sm:$0xff]
        %v2963 = vld [vmem:[%s668 + $0x5b0] sm:$0xff]
        %v2964 = vld [vmem:[%s668 + $0x5b8] sm:$0xff]
        %v2965 = vld [vmem:[%s668 + $0x5c0] sm:$0xff]
        %v2966 = vld [vmem:[%s668 + $0x5c8] sm:$0xff]
        %v2967 = vld [vmem:[%s668 + $0x5d0] sm:$0xff]
        %v2968 = vld [vmem:[%s668 + $0x5d8] sm:$0xff]
        %v2969 = vld [vmem:[%s668 + $0x5e0] sm:$0xff]
        %v2970 = vld [vmem:[%s668 + $0x5e8] sm:$0xff]
        %v2971 = vld [vmem:[%s668 + $0x5f0] sm:$0xff]
        %v2972 = vld [vmem:[%s668 + $0x5f8] sm:$0xff]
        %v2973 = vld [vmem:[%s668 + $0x600] sm:$0xff]
        %v2974 = vld [vmem:[%s668 + $0x608] sm:$0xff]
        %v2975 = vld [vmem:[%s668 + $0x610] sm:$0xff]
        %v2976 = vld [vmem:[%s668 + $0x618] sm:$0xff]
        %v2977 = vld [vmem:[%s668 + $0x620] sm:$0xff]
        %v2978 = vld [vmem:[%s668 + $0x628] sm:$0xff]
        %v2979 = vld [vmem:[%s668 + $0x630] sm:$0xff]
        %v2980 = vld [vmem:[%s668 + $0x638] sm:$0xff]
        %v2981 = vld [vmem:[%s668 + $0x640] sm:$0xff]
        %v2982 = vld [vmem:[%s668 + $0x648] sm:$0xff]
        %v2983 = vld [vmem:[%s668 + $0x650] sm:$0xff]
        %v2984 = vld [vmem:[%s668 + $0x658] sm:$0xff]
        %v2985 = vld [vmem:[%s668 + $0x660] sm:$0xff]
        %v2986 = vld [vmem:[%s668 + $0x668] sm:$0xff]
        %v2987 = vld [vmem:[%s668 + $0x670] sm:$0xff]
        %v2988 = vld [vmem:[%s668 + $0x678] sm:$0xff]
        %v2989 = vld [vmem:[%s668 + $0x680] sm:$0xff]
        %v2990 = vld [vmem:[%s668 + $0x688] sm:$0xff]
        %v2991 = vld [vmem:[%s668 + $0x690] sm:$0xff]
        %v2992 = vld [vmem:[%s668 + $0x698] sm:$0xff]
        %v2993 = vld [vmem:[%s668 + $0x6a0] sm:$0xff]
        %v2994 = vld [vmem:[%s668 + $0x6a8] sm:$0xff]
        %v2995 = vld [vmem:[%s668 + $0x6b0] sm:$0xff]
        %v2996 = vld [vmem:[%s668 + $0x6b8] sm:$0xff]
        %v2997 = vld [vmem:[%s668 + $0x6c0] sm:$0xff]
        %v2998 = vld [vmem:[%s668 + $0x6c8] sm:$0xff]
        %v2999 = vld [vmem:[%s668 + $0x6d0] sm:$0xff]
        %v3000 = vld [vmem:[%s668 + $0x6d8] sm:$0xff]
        %v3001 = vld [vmem:[%s668 + $0x6e0] sm:$0xff]
        %v3002 = vld [vmem:[%s668 + $0x6e8] sm:$0xff]
        %v3003 = vld [vmem:[%s668 + $0x6f0] sm:$0xff]
        %v3004 = vld [vmem:[%s668 + $0x6f8] sm:$0xff]
        %v3005 = vld [vmem:[%s668 + $0x700] sm:$0xff]
        %v3006 = vld [vmem:[%s668 + $0x708] sm:$0xff]
        %v3007 = vld [vmem:[%s668 + $0x710] sm:$0xff]
        %v3008 = vld [vmem:[%s668 + $0x718] sm:$0xff]
        %v3009 = vld [vmem:[%s668 + $0x720] sm:$0xff]
        %v3010 = vld [vmem:[%s668 + $0x728] sm:$0xff]
        %v3011 = vld [vmem:[%s668 + $0x730] sm:$0xff]
        %v3012 = vld [vmem:[%s668 + $0x738] sm:$0xff]
        %v3013 = vld [vmem:[%s668 + $0x740] sm:$0xff]
        %v3014 = vld [vmem:[%s668 + $0x748] sm:$0xff]
        %v3015 = vld [vmem:[%s668 + $0x750] sm:$0xff]
        %v3016 = vld [vmem:[%s668 + $0x758] sm:$0xff]
        %v3017 = vld [vmem:[%s668 + $0x760] sm:$0xff]
        %v3018 = vld [vmem:[%s668 + $0x768] sm:$0xff]
        %v3019 = vld [vmem:[%s668 + $0x770] sm:$0xff]
        %v3020 = vld [vmem:[%s668 + $0x778] sm:$0xff]
        %v3021 = vld [vmem:[%s668 + $0x780] sm:$0xff]
        %v3022 = vld [vmem:[%s668 + $0x788] sm:$0xff]
        %v3023 = vld [vmem:[%s668 + $0x790] sm:$0xff]
        %v3024 = vld [vmem:[%s668 + $0x798] sm:$0xff]
        %v3025 = vld [vmem:[%s668 + $0x7a0] sm:$0xff]
        %v3026 = vld [vmem:[%s668 + $0x7a8] sm:$0xff]
        %v3027 = vld [vmem:[%s668 + $0x7b0] sm:$0xff]
        %v3028 = vld [vmem:[%s668 + $0x7b8] sm:$0xff]
        %v3029 = vld [vmem:[%s668 + $0x7c0] sm:$0xff]
        %v3030 = vld [vmem:[%s668 + $0x7c8] sm:$0xff]
        %v3031 = vld [vmem:[%s668 + $0x7d0] sm:$0xff]
        %v3032 = vld [vmem:[%s668 + $0x7d8] sm:$0xff]
        %v3033 = vld [vmem:[%s668 + $0x7e0] sm:$0xff]
        %v3034 = vld [vmem:[%s668 + $0x7e8] sm:$0xff]
        %v3035 = vld [vmem:[%s668 + $0x7f0] sm:$0xff]
        %v3036 = vld [vmem:[%s668 + $0x7f8] sm:$0xff]
        %v3037 = vld [vmem:[%s668 + $0x800] sm:$0xff]
        %v3038 = vld [vmem:[%s668 + $0x808] sm:$0xff]
        %v3039 = vld [vmem:[%s668 + $0x810] sm:$0xff]
        %v3040 = vld [vmem:[%s668 + $0x818] sm:$0xff]
        %v3041 = vld [vmem:[%s668 + $0x820] sm:$0xff]
        %v3042 = vld [vmem:[%s668 + $0x828] sm:$0xff]
        %v3043 = vld [vmem:[%s668 + $0x830] sm:$0xff]
        %v3044 = vld [vmem:[%s668 + $0x838] sm:$0xff]
        %v3045 = vld [vmem:[%s668 + $0x840] sm:$0xff]
        %v3046 = vld [vmem:[%s668 + $0x848] sm:$0xff]
        %v3047 = vld [vmem:[%s668 + $0x850] sm:$0xff]
        %v3048 = vld [vmem:[%s668 + $0x858] sm:$0xff]
        %v3049 = vld [vmem:[%s668 + $0x860] sm:$0xff]
        %v3050 = vld [vmem:[%s668 + $0x868] sm:$0xff]
        %v3051 = vld [vmem:[%s668 + $0x870] sm:$0xff]
        %v3052 = vld [vmem:[%s668 + $0x878] sm:$0xff]
        %v3053 = vld [vmem:[%s668 + $0x880] sm:$0xff]
        %v3054 = vld [vmem:[%s668 + $0x888] sm:$0xff]
        %v3055 = vld [vmem:[%s668 + $0x890] sm:$0xff]
        %v3056 = vld [vmem:[%s668 + $0x898] sm:$0xff]
        %v3057 = vld [vmem:[%s668 + $0x8a0] sm:$0xff]
        %v3058 = vld [vmem:[%s668 + $0x8a8] sm:$0xff]
        %v3059 = vld [vmem:[%s668 + $0x8b0] sm:$0xff]
        %v3060 = vld [vmem:[%s668 + $0x8b8] sm:$0xff]
        %v3061 = vld [vmem:[%s668 + $0x8c0] sm:$0xff]
        %v3062 = vld [vmem:[%s668 + $0x8c8] sm:$0xff]
        %v3063 = vld [vmem:[%s668 + $0x8d0] sm:$0xff]
        %v3064 = vld [vmem:[%s668 + $0x8d8] sm:$0xff]
        %v3065 = vld [vmem:[%s668 + $0x8e0] sm:$0xff]
        %v3066 = vld [vmem:[%s668 + $0x8e8] sm:$0xff]
        %v3067 = vld [vmem:[%s668 + $0x8f0] sm:$0xff]
        %v3068 = vld [vmem:[%s668 + $0x8f8] sm:$0xff]
        %v3069 = vld [vmem:[%s668 + $0x900] sm:$0xff]
        %v3070 = vld [vmem:[%s668 + $0x908] sm:$0xff]
        %v3071 = vld [vmem:[%s668 + $0x910] sm:$0xff]
        %v3072 = vld [vmem:[%s668 + $0x918] sm:$0xff]
        %v3073 = vld [vmem:[%s668 + $0x920] sm:$0xff]
        %v3074 = vld [vmem:[%s668 + $0x928] sm:$0xff]
        %v3075 = vld [vmem:[%s668 + $0x930] sm:$0xff]
        %v3076 = vld [vmem:[%s668 + $0x938] sm:$0xff]
        %v3077 = vld [vmem:[%s668 + $0x940] sm:$0xff]
        %v3078 = vld [vmem:[%s668 + $0x948] sm:$0xff]
        %v3079 = vld [vmem:[%s668 + $0x950] sm:$0xff]
        %v3080 = vld [vmem:[%s668 + $0x958] sm:$0xff]
        %v3081 = vld [vmem:[%s668 + $0x960] sm:$0xff]
        %v3082 = vld [vmem:[%s668 + $0x968] sm:$0xff]
        %v3083 = vld [vmem:[%s668 + $0x970] sm:$0xff]
        %v3084 = vld [vmem:[%s668 + $0x978] sm:$0xff]
        %v3085 = vld [vmem:[%s668 + $0x980] sm:$0xff]
        %v3086 = vld [vmem:[%s668 + $0x988] sm:$0xff]
        %v3087 = vld [vmem:[%s668 + $0x990] sm:$0xff]
        %v3088 = vld [vmem:[%s668 + $0x998] sm:$0xff]
        %v3089 = vld [vmem:[%s668 + $0x9a0] sm:$0xff]
        %v3090 = vld [vmem:[%s668 + $0x9a8] sm:$0xff]
        %v3091 = vld [vmem:[%s668 + $0x9b0] sm:$0xff]
        %v3092 = vld [vmem:[%s668 + $0x9b8] sm:$0xff]
        %v3093 = vld [vmem:[%s668 + $0x9c0] sm:$0xff]
        %v3094 = vld [vmem:[%s668 + $0x9c8] sm:$0xff]
        %v3095 = vld [vmem:[%s668 + $0x9d0] sm:$0xff]
        %v3096 = vld [vmem:[%s668 + $0x9d8] sm:$0xff]
        %v3097 = vld [vmem:[%s668 + $0x9e0] sm:$0xff]
        %v3098 = vld [vmem:[%s668 + $0x9e8] sm:$0xff]
        %v3099 = vld [vmem:[%s668 + $0x9f0] sm:$0xff]
        %v3100 = vld [vmem:[%s668 + $0x9f8] sm:$0xff]
        %v3101 = vld [vmem:[%s668 + $0xa00] sm:$0xff]
        %v3102 = vld [vmem:[%s668 + $0xa08] sm:$0xff]
        %v3103 = vld [vmem:[%s668 + $0xa10] sm:$0xff]
        %v3104 = vld [vmem:[%s668 + $0xa18] sm:$0xff]
        %v3105 = vld [vmem:[%s668 + $0xa20] sm:$0xff]
        %v3106 = vld [vmem:[%s668 + $0xa28] sm:$0xff]
        %v3107 = vld [vmem:[%s668 + $0xa30] sm:$0xff]
        %v3108 = vld [vmem:[%s668 + $0xa38] sm:$0xff]
        %v3109 = vld [vmem:[%s668 + $0xa40] sm:$0xff]
        %v3110 = vld [vmem:[%s668 + $0xa48] sm:$0xff]
        %v3111 = vld [vmem:[%s668 + $0xa50] sm:$0xff]
        %v3112 = vld [vmem:[%s668 + $0xa58] sm:$0xff]
        %v3113 = vld [vmem:[%s668 + $0xa60] sm:$0xff]
        %v3114 = vld [vmem:[%s668 + $0xa68] sm:$0xff]
        %v3115 = vld [vmem:[%s668 + $0xa70] sm:$0xff]
        %v3116 = vld [vmem:[%s668 + $0xa78] sm:$0xff]
        %v3117 = vld [vmem:[%s668 + $0xa80] sm:$0xff]
        %v3118 = vld [vmem:[%s668 + $0xa88] sm:$0xff]
        %v3119 = vld [vmem:[%s668 + $0xa90] sm:$0xff]
        %v3120 = vld [vmem:[%s668 + $0xa98] sm:$0xff]
        %v3121 = vld [vmem:[%s668 + $0xaa0] sm:$0xff]
        %v3122 = vld [vmem:[%s668 + $0xaa8] sm:$0xff]
        %v3123 = vld [vmem:[%s668 + $0xab0] sm:$0xff]
        %v3124 = vld [vmem:[%s668 + $0xab8] sm:$0xff]
        %v3125 = vld [vmem:[%s668 + $0xac0] sm:$0xff]
        %v3126 = vld [vmem:[%s668 + $0xac8] sm:$0xff]
        %v3127 = vld [vmem:[%s668 + $0xad0] sm:$0xff]
        %v3128 = vld [vmem:[%s668 + $0xad8] sm:$0xff]
        %v3129 = vld [vmem:[%s668 + $0xae0] sm:$0xff]
        %v3130 = vld [vmem:[%s668 + $0xae8] sm:$0xff]
        %v3131 = vld [vmem:[%s668 + $0xaf0] sm:$0xff]
        %v3132 = vld [vmem:[%s668 + $0xaf8] sm:$0xff]
        %v3133 = vld [vmem:[%s668 + $0xb00] sm:$0xff]
        %v3134 = vld [vmem:[%s668 + $0xb08] sm:$0xff]
        %v3135 = vld [vmem:[%s668 + $0xb10] sm:$0xff]
        %v3136 = vld [vmem:[%s668 + $0xb18] sm:$0xff]
        %v3137 = vld [vmem:[%s668 + $0xb20] sm:$0xff]
        %v3138 = vld [vmem:[%s668 + $0xb28] sm:$0xff]
        %v3139 = vld [vmem:[%s668 + $0xb30] sm:$0xff]
        %v3140 = vld [vmem:[%s668 + $0xb38] sm:$0xff]
        %v3141 = vld [vmem:[%s668 + $0xb40] sm:$0xff]
        %v3142 = vld [vmem:[%s668 + $0xb48] sm:$0xff]
        %v3143 = vld [vmem:[%s668 + $0xb50] sm:$0xff]
        %v3144 = vld [vmem:[%s668 + $0xb58] sm:$0xff]
        %v3145 = vld [vmem:[%s668 + $0xb60] sm:$0xff]
        %v3146 = vld [vmem:[%s668 + $0xb68] sm:$0xff]
        %v3147 = vld [vmem:[%s668 + $0xb70] sm:$0xff]
        %v3148 = vld [vmem:[%s668 + $0xb78] sm:$0xff]
        %v3149 = vld [vmem:[%s668 + $0xb80] sm:$0xff]
        %v3150 = vld [vmem:[%s668 + $0xb88] sm:$0xff]
        %v3151 = vld [vmem:[%s668 + $0xb90] sm:$0xff]
        %v3152 = vld [vmem:[%s668 + $0xb98] sm:$0xff]
        %v3153 = vld [vmem:[%s668 + $0xba0] sm:$0xff]
        %v3154 = vld [vmem:[%s668 + $0xba8] sm:$0xff]
        %v3155 = vld [vmem:[%s668 + $0xbb0] sm:$0xff]
        %v3156 = vld [vmem:[%s668 + $0xbb8] sm:$0xff]
        %v3157 = vld [vmem:[%s668 + $0xbc0] sm:$0xff]
        %v3158 = vld [vmem:[%s668 + $0xbc8] sm:$0xff]
        %v3159 = vld [vmem:[%s668 + $0xbd0] sm:$0xff]
        %v3160 = vld [vmem:[%s668 + $0xbd8] sm:$0xff]
        %v3161 = vld [vmem:[%s668 + $0xbe0] sm:$0xff]
        %v3162 = vld [vmem:[%s668 + $0xbe8] sm:$0xff]
        %v3163 = vld [vmem:[%s668 + $0xbf0] sm:$0xff]
        %v3164 = vld [vmem:[%s668 + $0xbf8] sm:$0xff]
        %v3165 = vld [vmem:[%s668 + $0xc00] sm:$0xff]
        %v3166 = vld [vmem:[%s668 + $0xc08] sm:$0xff]
        %v3167 = vld [vmem:[%s668 + $0xc10] sm:$0xff]
        %v3168 = vld [vmem:[%s668 + $0xc18] sm:$0xff]
        %v3169 = vld [vmem:[%s668 + $0xc20] sm:$0xff]
        %v3170 = vld [vmem:[%s668 + $0xc28] sm:$0xff]
        %v3171 = vld [vmem:[%s668 + $0xc30] sm:$0xff]
        %v3172 = vld [vmem:[%s668 + $0xc38] sm:$0xff]
        %v3173 = vld [vmem:[%s668 + $0xc40] sm:$0xff]
        %v3174 = vld [vmem:[%s668 + $0xc48] sm:$0xff]
        %v3175 = vld [vmem:[%s668 + $0xc50] sm:$0xff]
        %v3176 = vld [vmem:[%s668 + $0xc58] sm:$0xff]
        %v3177 = vld [vmem:[%s668 + $0xc60] sm:$0xff]
        %v3178 = vld [vmem:[%s668 + $0xc68] sm:$0xff]
        %v3179 = vld [vmem:[%s668 + $0xc70] sm:$0xff]
        %v3180 = vld [vmem:[%s668 + $0xc78] sm:$0xff]
        %v3181 = vld [vmem:[%s668 + $0xc80] sm:$0xff]
        %v3182 = vld [vmem:[%s668 + $0xc88] sm:$0xff]
        %v3183 = vld [vmem:[%s668 + $0xc90] sm:$0xff]
        %v3184 = vld [vmem:[%s668 + $0xc98] sm:$0xff]
        %v3185 = vld [vmem:[%s668 + $0xca0] sm:$0xff]
        %v3186 = vld [vmem:[%s668 + $0xca8] sm:$0xff]
        %v3187 = vld [vmem:[%s668 + $0xcb0] sm:$0xff]
        %v3188 = vld [vmem:[%s668 + $0xcb8] sm:$0xff]
        %v3189 = vld [vmem:[%s668 + $0xcc0] sm:$0xff]
        %v3190 = vld [vmem:[%s668 + $0xcc8] sm:$0xff]
        %v3191 = vld [vmem:[%s668 + $0xcd0] sm:$0xff]
        %v3192 = vld [vmem:[%s668 + $0xcd8] sm:$0xff]
        %v3193 = vld [vmem:[%s668 + $0xce0] sm:$0xff]
        %v3194 = vld [vmem:[%s668 + $0xce8] sm:$0xff]
        %v3195 = vld [vmem:[%s668 + $0xcf0] sm:$0xff]
        %v3196 = vld [vmem:[%s668 + $0xcf8] sm:$0xff]
        %v3197 = vld [vmem:[%s668 + $0xd00] sm:$0xff]
        %v3198 = vld [vmem:[%s668 + $0xd08] sm:$0xff]
        %v3199 = vld [vmem:[%s668 + $0xd10] sm:$0xff]
        %v3200 = vld [vmem:[%s668 + $0xd18] sm:$0xff]
        %v3201 = vld [vmem:[%s668 + $0xd20] sm:$0xff]
        %v3202 = vld [vmem:[%s668 + $0xd28] sm:$0xff]
        %v3203 = vld [vmem:[%s668 + $0xd30] sm:$0xff]
        %v3204 = vld [vmem:[%s668 + $0xd38] sm:$0xff]
        %v3205 = vld [vmem:[%s668 + $0xd40] sm:$0xff]
        %v3206 = vld [vmem:[%s668 + $0xd48] sm:$0xff]
        %v3207 = vld [vmem:[%s668 + $0xd50] sm:$0xff]
        %v3208 = vld [vmem:[%s668 + $0xd58] sm:$0xff]
        %v3209 = vld [vmem:[%s668 + $0xd60] sm:$0xff]
        %v3210 = vld [vmem:[%s668 + $0xd68] sm:$0xff]
        %v3211 = vld [vmem:[%s668 + $0xd70] sm:$0xff]
        %v3212 = vld [vmem:[%s668 + $0xd78] sm:$0xff]
        %v3213 = vld [vmem:[%s668 + $0xd80] sm:$0xff]
        %v3214 = vld [vmem:[%s668 + $0xd88] sm:$0xff]
        %v3215 = vld [vmem:[%s668 + $0xd90] sm:$0xff]
        %v3216 = vld [vmem:[%s668 + $0xd98] sm:$0xff]
        %v3217 = vld [vmem:[%s668 + $0xda0] sm:$0xff]
        %v3218 = vld [vmem:[%s668 + $0xda8] sm:$0xff]
        %v3219 = vld [vmem:[%s668 + $0xdb0] sm:$0xff]
        %v3220 = vld [vmem:[%s668 + $0xdb8] sm:$0xff]
        %v3221 = vld [vmem:[%s668 + $0xdc0] sm:$0xff]
        %v3222 = vld [vmem:[%s668 + $0xdc8] sm:$0xff]
        %v3223 = vld [vmem:[%s668 + $0xdd0] sm:$0xff]
        %v3224 = vld [vmem:[%s668 + $0xdd8] sm:$0xff]
        %v3225 = vld [vmem:[%s668 + $0xde0] sm:$0xff]
        %v3226 = vld [vmem:[%s668 + $0xde8] sm:$0xff]
        %v3227 = vld [vmem:[%s668 + $0xdf0] sm:$0xff]
        %v3228 = vld [vmem:[%s668 + $0xdf8] sm:$0xff]
        %v3229 = vld [vmem:[%s668 + $0xe00] sm:$0xff]
        %v3230 = vld [vmem:[%s668 + $0xe08] sm:$0xff]
        %v3231 = vld [vmem:[%s668 + $0xe10] sm:$0xff]
        %v3232 = vld [vmem:[%s668 + $0xe18] sm:$0xff]
        %v3233 = vld [vmem:[%s668 + $0xe20] sm:$0xff]
        %v3234 = vld [vmem:[%s668 + $0xe28] sm:$0xff]
        %v3235 = vld [vmem:[%s668 + $0xe30] sm:$0xff]
        %v3236 = vld [vmem:[%s668 + $0xe38] sm:$0xff]
        %v3237 = vld [vmem:[%s668 + $0xe40] sm:$0xff]
        %v3238 = vld [vmem:[%s668 + $0xe48] sm:$0xff]
        %v3239 = vld [vmem:[%s668 + $0xe50] sm:$0xff]
        %v3240 = vld [vmem:[%s668 + $0xe58] sm:$0xff]
        %v3241 = vld [vmem:[%s668 + $0xe60] sm:$0xff]
        %v3242 = vld [vmem:[%s668 + $0xe68] sm:$0xff]
        %v3243 = vld [vmem:[%s668 + $0xe70] sm:$0xff]
        %v3244 = vld [vmem:[%s668 + $0xe78] sm:$0xff]
        %v3245 = vld [vmem:[%s668 + $0xe80] sm:$0xff]
        %v3246 = vld [vmem:[%s668 + $0xe88] sm:$0xff]
        %v3247 = vld [vmem:[%s668 + $0xe90] sm:$0xff]
        %v3248 = vld [vmem:[%s668 + $0xe98] sm:$0xff]
        %v3249 = vld [vmem:[%s668 + $0xea0] sm:$0xff]
        %v3250 = vld [vmem:[%s668 + $0xea8] sm:$0xff]
        %v3251 = vld [vmem:[%s668 + $0xeb0] sm:$0xff]
        %v3252 = vld [vmem:[%s668 + $0xeb8] sm:$0xff]
        %v3253 = vld [vmem:[%s668 + $0xec0] sm:$0xff]
        %v3254 = vld [vmem:[%s668 + $0xec8] sm:$0xff]
        %v3255 = vld [vmem:[%s668 + $0xed0] sm:$0xff]
        %v3256 = vld [vmem:[%s668 + $0xed8] sm:$0xff]
        %v3257 = vld [vmem:[%s668 + $0xee0] sm:$0xff]
        %v3258 = vld [vmem:[%s668 + $0xee8] sm:$0xff]
        %v3259 = vld [vmem:[%s668 + $0xef0] sm:$0xff]
        %v3260 = vld [vmem:[%s668 + $0xef8] sm:$0xff]
        %v3261 = vld [vmem:[%s668 + $0xf00] sm:$0xff]
        %v3262 = vld [vmem:[%s668 + $0xf08] sm:$0xff]
        %v3263 = vld [vmem:[%s668 + $0xf10] sm:$0xff]
        %v3264 = vld [vmem:[%s668 + $0xf18] sm:$0xff]
        %v3265 = vld [vmem:[%s668 + $0xf20] sm:$0xff]
        %v3266 = vld [vmem:[%s668 + $0xf28] sm:$0xff]
        %v3267 = vld [vmem:[%s668 + $0xf30] sm:$0xff]
        %v3268 = vld [vmem:[%s668 + $0xf38] sm:$0xff]
        %v3269 = vld [vmem:[%s668 + $0xf40] sm:$0xff]
        %v3270 = vld [vmem:[%s668 + $0xf48] sm:$0xff]
        %v3271 = vld [vmem:[%s668 + $0xf50] sm:$0xff]
        %v3272 = vld [vmem:[%s668 + $0xf58] sm:$0xff]
        %v3273 = vld [vmem:[%s668 + $0xf60] sm:$0xff]
        %v3274 = vld [vmem:[%s668 + $0xf68] sm:$0xff]
        %v3275 = vld [vmem:[%s668 + $0xf70] sm:$0xff]
        %v3276 = vld [vmem:[%s668 + $0xf78] sm:$0xff]
        %v3277 = vld [vmem:[%s668 + $0xf80] sm:$0xff]
        %v3278 = vld [vmem:[%s668 + $0xf88] sm:$0xff]
        %v3279 = vld [vmem:[%s668 + $0xf90] sm:$0xff]
        %v3280 = vld [vmem:[%s668 + $0xf98] sm:$0xff]
        %v3281 = vld [vmem:[%s668 + $0xfa0] sm:$0xff]
        %v3282 = vld [vmem:[%s668 + $0xfa8] sm:$0xff]
        %v3283 = vld [vmem:[%s668 + $0xfb0] sm:$0xff]
        %v3284 = vld [vmem:[%s668 + $0xfb8] sm:$0xff]
        %v3285 = vld [vmem:[%s668 + $0xfc0] sm:$0xff]
        %v3286 = vld [vmem:[%s668 + $0xfc8] sm:$0xff]
        %v3287 = vld [vmem:[%s668 + $0xfd0] sm:$0xff]
        %v3288 = vld [vmem:[%s668 + $0xfd8] sm:$0xff]
        %v3289 = vld [vmem:[%s668 + $0xfe0] sm:$0xff]
        %v3290 = vld [vmem:[%s668 + $0xfe8] sm:$0xff]
        %v3291 = vld [vmem:[%s668 + $0xff0] sm:$0xff]
        %v3292 = vld [vmem:[%s668 + $0xff8] sm:$0xff]
        %v3293 = vpack.c.bf16 %v2773, %v2773
        %v3294 = vpack.c.bf16 %v2774, %v2774
        %v3295 = vpack.c.bf16 %v2775, %v2775
        %v3296 = vpack.c.bf16 %v2776, %v2776
        %v3297 = vpack.c.bf16 %v2777, %v2777
        %v3298 = vpack.c.bf16 %v2778, %v2778
        %v3299 = vpack.c.bf16 %v2779, %v2779
        %v3300 = vpack.c.bf16 %v2780, %v2780
        %v3301 = vld [vmem:[%s678] sm:$0xff]
        %v3303 = vperm.slane %v3301, 0
        %v3304 = vperm.slane %v3301, 1
        %v3305 = vperm.slane %v3301, 2
        %v3306 = vperm.slane %v3301, 3
        %v3307 = vperm.slane %v3301, 4
        %v3308 = vperm.slane %v3301, 5
        %v3309 = vperm.slane %v3301, 6
        %v3310 = vperm.slane %v3301, 7
        %v3831 = vunpack.c.l.b16 %v2781
        %v3832 = vunpack.c.h.b16 %v2781
        %v3833 = vunpack.c.l.b16 %v2782
        %v3834 = vunpack.c.h.b16 %v2782
        %v3835 = vunpack.c.l.b16 %v2783
        %v3836 = vunpack.c.h.b16 %v2783
        %v3837 = vunpack.c.l.b16 %v2784
        %v3838 = vunpack.c.h.b16 %v2784
        %v3839 = vunpack.c.l.b16 %v2785
        %v3840 = vunpack.c.h.b16 %v2785
        %v3841 = vunpack.c.l.b16 %v2786
        %v3842 = vunpack.c.h.b16 %v2786
        %v3843 = vunpack.c.l.b16 %v2787
        %v3844 = vunpack.c.h.b16 %v2787
        %v3845 = vunpack.c.l.b16 %v2788
        %v3846 = vunpack.c.h.b16 %v2788
        %v3847 = vunpack.c.l.b16 %v2789
        %v3848 = vunpack.c.h.b16 %v2789
        %v3849 = vunpack.c.l.b16 %v2790
        %v3850 = vunpack.c.h.b16 %v2790
        %v3851 = vunpack.c.l.b16 %v2791
        %v3852 = vunpack.c.h.b16 %v2791
        %v3853 = vunpack.c.l.b16 %v2792
        %v3854 = vunpack.c.h.b16 %v2792
        %v3855 = vunpack.c.l.b16 %v2793
        %v3856 = vunpack.c.h.b16 %v2793
        %v3857 = vunpack.c.l.b16 %v2794
        %v3858 = vunpack.c.h.b16 %v2794
        %v3859 = vunpack.c.l.b16 %v2795
        %v3860 = vunpack.c.h.b16 %v2795
        %v3861 = vunpack.c.l.b16 %v2796
        %v3862 = vunpack.c.h.b16 %v2796
        %v3863 = vunpack.c.l.b16 %v2797
        %v3864 = vunpack.c.h.b16 %v2797
        %v3865 = vunpack.c.l.b16 %v2798
        %v3866 = vunpack.c.h.b16 %v2798
        %v3867 = vunpack.c.l.b16 %v2799
        %v3868 = vunpack.c.h.b16 %v2799
        %v3869 = vunpack.c.l.b16 %v2800
        %v3870 = vunpack.c.h.b16 %v2800
        %v3871 = vunpack.c.l.b16 %v2801
        %v3872 = vunpack.c.h.b16 %v2801
        %v3873 = vunpack.c.l.b16 %v2802
        %v3874 = vunpack.c.h.b16 %v2802
        %v3875 = vunpack.c.l.b16 %v2803
        %v3876 = vunpack.c.h.b16 %v2803
        %v3877 = vunpack.c.l.b16 %v2804
        %v3878 = vunpack.c.h.b16 %v2804
        %v3879 = vunpack.c.l.b16 %v2805
        %v3880 = vunpack.c.h.b16 %v2805
        %v3881 = vunpack.c.l.b16 %v2806
        %v3882 = vunpack.c.h.b16 %v2806
        %v3883 = vunpack.c.l.b16 %v2807
        %v3884 = vunpack.c.h.b16 %v2807
        %v3885 = vunpack.c.l.b16 %v2808
        %v3886 = vunpack.c.h.b16 %v2808
        %v3887 = vunpack.c.l.b16 %v2809
        %v3888 = vunpack.c.h.b16 %v2809
        %v3889 = vunpack.c.l.b16 %v2810
        %v3890 = vunpack.c.h.b16 %v2810
        %v3891 = vunpack.c.l.b16 %v2811
        %v3892 = vunpack.c.h.b16 %v2811
        %v3893 = vunpack.c.l.b16 %v2812
        %v3894 = vunpack.c.h.b16 %v2812
        %v3895 = vunpack.c.l.b16 %v2813
        %v3896 = vunpack.c.h.b16 %v2813
        %v3897 = vunpack.c.l.b16 %v2814
        %v3898 = vunpack.c.h.b16 %v2814
        %v3899 = vunpack.c.l.b16 %v2815
        %v3900 = vunpack.c.h.b16 %v2815
        %v3901 = vunpack.c.l.b16 %v2816
        %v3902 = vunpack.c.h.b16 %v2816
        %v3903 = vunpack.c.l.b16 %v2817
        %v3904 = vunpack.c.h.b16 %v2817
        %v3905 = vunpack.c.l.b16 %v2818
        %v3906 = vunpack.c.h.b16 %v2818
        %v3907 = vunpack.c.l.b16 %v2819
        %v3908 = vunpack.c.h.b16 %v2819
        %v3909 = vunpack.c.l.b16 %v2820
        %v3910 = vunpack.c.h.b16 %v2820
        %v3911 = vunpack.c.l.b16 %v2821
        %v3912 = vunpack.c.h.b16 %v2821
        %v3913 = vunpack.c.l.b16 %v2822
        %v3914 = vunpack.c.h.b16 %v2822
        %v3915 = vunpack.c.l.b16 %v2823
        %v3916 = vunpack.c.h.b16 %v2823
        %v3917 = vunpack.c.l.b16 %v2824
        %v3918 = vunpack.c.h.b16 %v2824
        %v3919 = vunpack.c.l.b16 %v2825
        %v3920 = vunpack.c.h.b16 %v2825
        %v3921 = vunpack.c.l.b16 %v2826
        %v3922 = vunpack.c.h.b16 %v2826
        %v3923 = vunpack.c.l.b16 %v2827
        %v3924 = vunpack.c.h.b16 %v2827
        %v3925 = vunpack.c.l.b16 %v2828
        %v3926 = vunpack.c.h.b16 %v2828
        %v3927 = vunpack.c.l.b16 %v2829
        %v3928 = vunpack.c.h.b16 %v2829
        %v3929 = vunpack.c.l.b16 %v2830
        %v3930 = vunpack.c.h.b16 %v2830
        %v3931 = vunpack.c.l.b16 %v2831
        %v3932 = vunpack.c.h.b16 %v2831
        %v3933 = vunpack.c.l.b16 %v2832
        %v3934 = vunpack.c.h.b16 %v2832
        %v3935 = vunpack.c.l.b16 %v2833
        %v3936 = vunpack.c.h.b16 %v2833
        %v3937 = vunpack.c.l.b16 %v2834
        %v3938 = vunpack.c.h.b16 %v2834
        %v3939 = vunpack.c.l.b16 %v2835
        %v3940 = vunpack.c.h.b16 %v2835
        %v3941 = vunpack.c.l.b16 %v2836
        %v3942 = vunpack.c.h.b16 %v2836
        %v3943 = vunpack.c.l.b16 %v2837
        %v3944 = vunpack.c.h.b16 %v2837
        %v3945 = vunpack.c.l.b16 %v2838
        %v3946 = vunpack.c.h.b16 %v2838
        %v3947 = vunpack.c.l.b16 %v2839
        %v3948 = vunpack.c.h.b16 %v2839
        %v3949 = vunpack.c.l.b16 %v2840
        %v3950 = vunpack.c.h.b16 %v2840
        %v3951 = vunpack.c.l.b16 %v2841
        %v3952 = vunpack.c.h.b16 %v2841
        %v3953 = vunpack.c.l.b16 %v2842
        %v3954 = vunpack.c.h.b16 %v2842
        %v3955 = vunpack.c.l.b16 %v2843
        %v3956 = vunpack.c.h.b16 %v2843
        %v3957 = vunpack.c.l.b16 %v2844
        %v3958 = vunpack.c.h.b16 %v2844
        %v3959 = vunpack.c.l.b16 %v2845
        %v3960 = vunpack.c.h.b16 %v2845
        %v3961 = vunpack.c.l.b16 %v2846
        %v3962 = vunpack.c.h.b16 %v2846
        %v3963 = vunpack.c.l.b16 %v2847
        %v3964 = vunpack.c.h.b16 %v2847
        %v3965 = vunpack.c.l.b16 %v2848
        %v3966 = vunpack.c.h.b16 %v2848
        %v3967 = vunpack.c.l.b16 %v2849
        %v3968 = vunpack.c.h.b16 %v2849
        %v3969 = vunpack.c.l.b16 %v2850
        %v3970 = vunpack.c.h.b16 %v2850
        %v3971 = vunpack.c.l.b16 %v2851
        %v3972 = vunpack.c.h.b16 %v2851
        %v3973 = vunpack.c.l.b16 %v2852
        %v3974 = vunpack.c.h.b16 %v2852
        %v3975 = vunpack.c.l.b16 %v2853
        %v3976 = vunpack.c.h.b16 %v2853
        %v3977 = vunpack.c.l.b16 %v2854
        %v3978 = vunpack.c.h.b16 %v2854
        %v3979 = vunpack.c.l.b16 %v2855
        %v3980 = vunpack.c.h.b16 %v2855
        %v3981 = vunpack.c.l.b16 %v2856
        %v3982 = vunpack.c.h.b16 %v2856
        %v3983 = vunpack.c.l.b16 %v2857
        %v3984 = vunpack.c.h.b16 %v2857
        %v3985 = vunpack.c.l.b16 %v2858
        %v3986 = vunpack.c.h.b16 %v2858
        %v3987 = vunpack.c.l.b16 %v2859
        %v3988 = vunpack.c.h.b16 %v2859
        %v3989 = vunpack.c.l.b16 %v2860
        %v3990 = vunpack.c.h.b16 %v2860
        %v3991 = vunpack.c.l.b16 %v2861
        %v3992 = vunpack.c.h.b16 %v2861
        %v3993 = vunpack.c.l.b16 %v2862
        %v3994 = vunpack.c.h.b16 %v2862
        %v3995 = vunpack.c.l.b16 %v2863
        %v3996 = vunpack.c.h.b16 %v2863
        %v3997 = vunpack.c.l.b16 %v2864
        %v3998 = vunpack.c.h.b16 %v2864
        %v3999 = vunpack.c.l.b16 %v2865
        %v4000 = vunpack.c.h.b16 %v2865
        %v4001 = vunpack.c.l.b16 %v2866
        %v4002 = vunpack.c.h.b16 %v2866
        %v4003 = vunpack.c.l.b16 %v2867
        %v4004 = vunpack.c.h.b16 %v2867
        %v4005 = vunpack.c.l.b16 %v2868
        %v4006 = vunpack.c.h.b16 %v2868
        %v4007 = vunpack.c.l.b16 %v2869
        %v4008 = vunpack.c.h.b16 %v2869
        %v4009 = vunpack.c.l.b16 %v2870
        %v4010 = vunpack.c.h.b16 %v2870
        %v4011 = vunpack.c.l.b16 %v2871
        %v4012 = vunpack.c.h.b16 %v2871
        %v4013 = vunpack.c.l.b16 %v2872
        %v4014 = vunpack.c.h.b16 %v2872
        %v4015 = vunpack.c.l.b16 %v2873
        %v4016 = vunpack.c.h.b16 %v2873
        %v4017 = vunpack.c.l.b16 %v2874
        %v4018 = vunpack.c.h.b16 %v2874
        %v4019 = vunpack.c.l.b16 %v2875
        %v4020 = vunpack.c.h.b16 %v2875
        %v4021 = vunpack.c.l.b16 %v2876
        %v4022 = vunpack.c.h.b16 %v2876
        %v4023 = vunpack.c.l.b16 %v2877
        %v4024 = vunpack.c.h.b16 %v2877
        %v4025 = vunpack.c.l.b16 %v2878
        %v4026 = vunpack.c.h.b16 %v2878
        %v4027 = vunpack.c.l.b16 %v2879
        %v4028 = vunpack.c.h.b16 %v2879
        %v4029 = vunpack.c.l.b16 %v2880
        %v4030 = vunpack.c.h.b16 %v2880
        %v4031 = vunpack.c.l.b16 %v2881
        %v4032 = vunpack.c.h.b16 %v2881
        %v4033 = vunpack.c.l.b16 %v2882
        %v4034 = vunpack.c.h.b16 %v2882
        %v4035 = vunpack.c.l.b16 %v2883
        %v4036 = vunpack.c.h.b16 %v2883
        %v4037 = vunpack.c.l.b16 %v2884
        %v4038 = vunpack.c.h.b16 %v2884
        %v4039 = vunpack.c.l.b16 %v2885
        %v4040 = vunpack.c.h.b16 %v2885
        %v4041 = vunpack.c.l.b16 %v2886
        %v4042 = vunpack.c.h.b16 %v2886
        %v4043 = vunpack.c.l.b16 %v2887
        %v4044 = vunpack.c.h.b16 %v2887
        %v4045 = vunpack.c.l.b16 %v2888
        %v4046 = vunpack.c.h.b16 %v2888
        %v4047 = vunpack.c.l.b16 %v2889
        %v4048 = vunpack.c.h.b16 %v2889
        %v4049 = vunpack.c.l.b16 %v2890
        %v4050 = vunpack.c.h.b16 %v2890
        %v4051 = vunpack.c.l.b16 %v2891
        %v4052 = vunpack.c.h.b16 %v2891
        %v4053 = vunpack.c.l.b16 %v2892
        %v4054 = vunpack.c.h.b16 %v2892
        %v4055 = vunpack.c.l.b16 %v2893
        %v4056 = vunpack.c.h.b16 %v2893
        %v4057 = vunpack.c.l.b16 %v2894
        %v4058 = vunpack.c.h.b16 %v2894
        %v4059 = vunpack.c.l.b16 %v2895
        %v4060 = vunpack.c.h.b16 %v2895
        %v4061 = vunpack.c.l.b16 %v2896
        %v4062 = vunpack.c.h.b16 %v2896
        %v4063 = vunpack.c.l.b16 %v2897
        %v4064 = vunpack.c.h.b16 %v2897
        %v4065 = vunpack.c.l.b16 %v2898
        %v4066 = vunpack.c.h.b16 %v2898
        %v4067 = vunpack.c.l.b16 %v2899
        %v4068 = vunpack.c.h.b16 %v2899
        %v4069 = vunpack.c.l.b16 %v2900
        %v4070 = vunpack.c.h.b16 %v2900
        %v4071 = vunpack.c.l.b16 %v2901
        %v4072 = vunpack.c.h.b16 %v2901
        %v4073 = vunpack.c.l.b16 %v2902
        %v4074 = vunpack.c.h.b16 %v2902
        %v4075 = vunpack.c.l.b16 %v2903
        %v4076 = vunpack.c.h.b16 %v2903
        %v4077 = vunpack.c.l.b16 %v2904
        %v4078 = vunpack.c.h.b16 %v2904
        %v4079 = vunpack.c.l.b16 %v2905
        %v4080 = vunpack.c.h.b16 %v2905
        %v4081 = vunpack.c.l.b16 %v2906
        %v4082 = vunpack.c.h.b16 %v2906
        %v4083 = vunpack.c.l.b16 %v2907
        %v4084 = vunpack.c.h.b16 %v2907
        %v4085 = vunpack.c.l.b16 %v2908
        %v4086 = vunpack.c.h.b16 %v2908
        %v4087 = vunpack.c.l.b16 %v2909
        %v4088 = vunpack.c.h.b16 %v2909
        %v4089 = vunpack.c.l.b16 %v2910
        %v4090 = vunpack.c.h.b16 %v2910
        %v4091 = vunpack.c.l.b16 %v2911
        %v4092 = vunpack.c.h.b16 %v2911
        %v4093 = vunpack.c.l.b16 %v2912
        %v4094 = vunpack.c.h.b16 %v2912
        %v4095 = vunpack.c.l.b16 %v2913
        %v4096 = vunpack.c.h.b16 %v2913
        %v4097 = vunpack.c.l.b16 %v2914
        %v4098 = vunpack.c.h.b16 %v2914
        %v4099 = vunpack.c.l.b16 %v2915
        %v4100 = vunpack.c.h.b16 %v2915
        %v4101 = vunpack.c.l.b16 %v2916
        %v4102 = vunpack.c.h.b16 %v2916
        %v4103 = vunpack.c.l.b16 %v2917
        %v4104 = vunpack.c.h.b16 %v2917
        %v4105 = vunpack.c.l.b16 %v2918
        %v4106 = vunpack.c.h.b16 %v2918
        %v4107 = vunpack.c.l.b16 %v2919
        %v4108 = vunpack.c.h.b16 %v2919
        %v4109 = vunpack.c.l.b16 %v2920
        %v4110 = vunpack.c.h.b16 %v2920
        %v4111 = vunpack.c.l.b16 %v2921
        %v4112 = vunpack.c.h.b16 %v2921
        %v4113 = vunpack.c.l.b16 %v2922
        %v4114 = vunpack.c.h.b16 %v2922
        %v4115 = vunpack.c.l.b16 %v2923
        %v4116 = vunpack.c.h.b16 %v2923
        %v4117 = vunpack.c.l.b16 %v2924
        %v4118 = vunpack.c.h.b16 %v2924
        %v4119 = vunpack.c.l.b16 %v2925
        %v4120 = vunpack.c.h.b16 %v2925
        %v4121 = vunpack.c.l.b16 %v2926
        %v4122 = vunpack.c.h.b16 %v2926
        %v4123 = vunpack.c.l.b16 %v2927
        %v4124 = vunpack.c.h.b16 %v2927
        %v4125 = vunpack.c.l.b16 %v2928
        %v4126 = vunpack.c.h.b16 %v2928
        %v4127 = vunpack.c.l.b16 %v2929
        %v4128 = vunpack.c.h.b16 %v2929
        %v4129 = vunpack.c.l.b16 %v2930
        %v4130 = vunpack.c.h.b16 %v2930
        %v4131 = vunpack.c.l.b16 %v2931
        %v4132 = vunpack.c.h.b16 %v2931
        %v4133 = vunpack.c.l.b16 %v2932
        %v4134 = vunpack.c.h.b16 %v2932
        %v4135 = vunpack.c.l.b16 %v2933
        %v4136 = vunpack.c.h.b16 %v2933
        %v4137 = vunpack.c.l.b16 %v2934
        %v4138 = vunpack.c.h.b16 %v2934
        %v4139 = vunpack.c.l.b16 %v2935
        %v4140 = vunpack.c.h.b16 %v2935
        %v4141 = vunpack.c.l.b16 %v2936
        %v4142 = vunpack.c.h.b16 %v2936
        %v4143 = vunpack.c.l.b16 %v2937
        %v4144 = vunpack.c.h.b16 %v2937
        %v4145 = vunpack.c.l.b16 %v2938
        %v4146 = vunpack.c.h.b16 %v2938
        %v4147 = vunpack.c.l.b16 %v2939
        %v4148 = vunpack.c.h.b16 %v2939
        %v4149 = vunpack.c.l.b16 %v2940
        %v4150 = vunpack.c.h.b16 %v2940
        %v4151 = vunpack.c.l.b16 %v2941
        %v4152 = vunpack.c.h.b16 %v2941
        %v4153 = vunpack.c.l.b16 %v2942
        %v4154 = vunpack.c.h.b16 %v2942
        %v4155 = vunpack.c.l.b16 %v2943
        %v4156 = vunpack.c.h.b16 %v2943
        %v4157 = vunpack.c.l.b16 %v2944
        %v4158 = vunpack.c.h.b16 %v2944
        %v4159 = vunpack.c.l.b16 %v2945
        %v4160 = vunpack.c.h.b16 %v2945
        %v4161 = vunpack.c.l.b16 %v2946
        %v4162 = vunpack.c.h.b16 %v2946
        %v4163 = vunpack.c.l.b16 %v2947
        %v4164 = vunpack.c.h.b16 %v2947
        %v4165 = vunpack.c.l.b16 %v2948
        %v4166 = vunpack.c.h.b16 %v2948
        %v4167 = vunpack.c.l.b16 %v2949
        %v4168 = vunpack.c.h.b16 %v2949
        %v4169 = vunpack.c.l.b16 %v2950
        %v4170 = vunpack.c.h.b16 %v2950
        %v4171 = vunpack.c.l.b16 %v2951
        %v4172 = vunpack.c.h.b16 %v2951
        %v4173 = vunpack.c.l.b16 %v2952
        %v4174 = vunpack.c.h.b16 %v2952
        %v4175 = vunpack.c.l.b16 %v2953
        %v4176 = vunpack.c.h.b16 %v2953
        %v4177 = vunpack.c.l.b16 %v2954
        %v4178 = vunpack.c.h.b16 %v2954
        %v4179 = vunpack.c.l.b16 %v2955
        %v4180 = vunpack.c.h.b16 %v2955
        %v4181 = vunpack.c.l.b16 %v2956
        %v4182 = vunpack.c.h.b16 %v2956
        %v4183 = vunpack.c.l.b16 %v2957
        %v4184 = vunpack.c.h.b16 %v2957
        %v4185 = vunpack.c.l.b16 %v2958
        %v4186 = vunpack.c.h.b16 %v2958
        %v4187 = vunpack.c.l.b16 %v2959
        %v4188 = vunpack.c.h.b16 %v2959
        %v4189 = vunpack.c.l.b16 %v2960
        %v4190 = vunpack.c.h.b16 %v2960
        %v4191 = vunpack.c.l.b16 %v2961
        %v4192 = vunpack.c.h.b16 %v2961
        %v4193 = vunpack.c.l.b16 %v2962
        %v4194 = vunpack.c.h.b16 %v2962
        %v4195 = vunpack.c.l.b16 %v2963
        %v4196 = vunpack.c.h.b16 %v2963
        %v4197 = vunpack.c.l.b16 %v2964
        %v4198 = vunpack.c.h.b16 %v2964
        %v4199 = vunpack.c.l.b16 %v2965
        %v4200 = vunpack.c.h.b16 %v2965
        %v4201 = vunpack.c.l.b16 %v2966
        %v4202 = vunpack.c.h.b16 %v2966
        %v4203 = vunpack.c.l.b16 %v2967
        %v4204 = vunpack.c.h.b16 %v2967
        %v4205 = vunpack.c.l.b16 %v2968
        %v4206 = vunpack.c.h.b16 %v2968
        %v4207 = vunpack.c.l.b16 %v2969
        %v4208 = vunpack.c.h.b16 %v2969
        %v4209 = vunpack.c.l.b16 %v2970
        %v4210 = vunpack.c.h.b16 %v2970
        %v4211 = vunpack.c.l.b16 %v2971
        %v4212 = vunpack.c.h.b16 %v2971
        %v4213 = vunpack.c.l.b16 %v2972
        %v4214 = vunpack.c.h.b16 %v2972
        %v4215 = vunpack.c.l.b16 %v2973
        %v4216 = vunpack.c.h.b16 %v2973
        %v4217 = vunpack.c.l.b16 %v2974
        %v4218 = vunpack.c.h.b16 %v2974
        %v4219 = vunpack.c.l.b16 %v2975
        %v4220 = vunpack.c.h.b16 %v2975
        %v4221 = vunpack.c.l.b16 %v2976
        %v4222 = vunpack.c.h.b16 %v2976
        %v4223 = vunpack.c.l.b16 %v2977
        %v4224 = vunpack.c.h.b16 %v2977
        %v4225 = vunpack.c.l.b16 %v2978
        %v4226 = vunpack.c.h.b16 %v2978
        %v4227 = vunpack.c.l.b16 %v2979
        %v4228 = vunpack.c.h.b16 %v2979
        %v4229 = vunpack.c.l.b16 %v2980
        %v4230 = vunpack.c.h.b16 %v2980
        %v4231 = vunpack.c.l.b16 %v2981
        %v4232 = vunpack.c.h.b16 %v2981
        %v4233 = vunpack.c.l.b16 %v2982
        %v4234 = vunpack.c.h.b16 %v2982
        %v4235 = vunpack.c.l.b16 %v2983
        %v4236 = vunpack.c.h.b16 %v2983
        %v4237 = vunpack.c.l.b16 %v2984
        %v4238 = vunpack.c.h.b16 %v2984
        %v4239 = vunpack.c.l.b16 %v2985
        %v4240 = vunpack.c.h.b16 %v2985
        %v4241 = vunpack.c.l.b16 %v2986
        %v4242 = vunpack.c.h.b16 %v2986
        %v4243 = vunpack.c.l.b16 %v2987
        %v4244 = vunpack.c.h.b16 %v2987
        %v4245 = vunpack.c.l.b16 %v2988
        %v4246 = vunpack.c.h.b16 %v2988
        %v4247 = vunpack.c.l.b16 %v2989
        %v4248 = vunpack.c.h.b16 %v2989
        %v4249 = vunpack.c.l.b16 %v2990
        %v4250 = vunpack.c.h.b16 %v2990
        %v4251 = vunpack.c.l.b16 %v2991
        %v4252 = vunpack.c.h.b16 %v2991
        %v4253 = vunpack.c.l.b16 %v2992
        %v4254 = vunpack.c.h.b16 %v2992
        %v4255 = vunpack.c.l.b16 %v2993
        %v4256 = vunpack.c.h.b16 %v2993
        %v4257 = vunpack.c.l.b16 %v2994
        %v4258 = vunpack.c.h.b16 %v2994
        %v4259 = vunpack.c.l.b16 %v2995
        %v4260 = vunpack.c.h.b16 %v2995
        %v4261 = vunpack.c.l.b16 %v2996
        %v4262 = vunpack.c.h.b16 %v2996
        %v4263 = vunpack.c.l.b16 %v2997
        %v4264 = vunpack.c.h.b16 %v2997
        %v4265 = vunpack.c.l.b16 %v2998
        %v4266 = vunpack.c.h.b16 %v2998
        %v4267 = vunpack.c.l.b16 %v2999
        %v4268 = vunpack.c.h.b16 %v2999
        %v4269 = vunpack.c.l.b16 %v3000
        %v4270 = vunpack.c.h.b16 %v3000
        %v4271 = vunpack.c.l.b16 %v3001
        %v4272 = vunpack.c.h.b16 %v3001
        %v4273 = vunpack.c.l.b16 %v3002
        %v4274 = vunpack.c.h.b16 %v3002
        %v4275 = vunpack.c.l.b16 %v3003
        %v4276 = vunpack.c.h.b16 %v3003
        %v4277 = vunpack.c.l.b16 %v3004
        %v4278 = vunpack.c.h.b16 %v3004
        %v4279 = vunpack.c.l.b16 %v3005
        %v4280 = vunpack.c.h.b16 %v3005
        %v4281 = vunpack.c.l.b16 %v3006
        %v4282 = vunpack.c.h.b16 %v3006
        %v4283 = vunpack.c.l.b16 %v3007
        %v4284 = vunpack.c.h.b16 %v3007
        %v4285 = vunpack.c.l.b16 %v3008
        %v4286 = vunpack.c.h.b16 %v3008
        %v4287 = vunpack.c.l.b16 %v3009
        %v4288 = vunpack.c.h.b16 %v3009
        %v4289 = vunpack.c.l.b16 %v3010
        %v4290 = vunpack.c.h.b16 %v3010
        %v4291 = vunpack.c.l.b16 %v3011
        %v4292 = vunpack.c.h.b16 %v3011
        %v4293 = vunpack.c.l.b16 %v3012
        %v4294 = vunpack.c.h.b16 %v3012
        %v4295 = vunpack.c.l.b16 %v3013
        %v4296 = vunpack.c.h.b16 %v3013
        %v4297 = vunpack.c.l.b16 %v3014
        %v4298 = vunpack.c.h.b16 %v3014
        %v4299 = vunpack.c.l.b16 %v3015
        %v4300 = vunpack.c.h.b16 %v3015
        %v4301 = vunpack.c.l.b16 %v3016
        %v4302 = vunpack.c.h.b16 %v3016
        %v4303 = vunpack.c.l.b16 %v3017
        %v4304 = vunpack.c.h.b16 %v3017
        %v4305 = vunpack.c.l.b16 %v3018
        %v4306 = vunpack.c.h.b16 %v3018
        %v4307 = vunpack.c.l.b16 %v3019
        %v4308 = vunpack.c.h.b16 %v3019
        %v4309 = vunpack.c.l.b16 %v3020
        %v4310 = vunpack.c.h.b16 %v3020
        %v4311 = vunpack.c.l.b16 %v3021
        %v4312 = vunpack.c.h.b16 %v3021
        %v4313 = vunpack.c.l.b16 %v3022
        %v4314 = vunpack.c.h.b16 %v3022
        %v4315 = vunpack.c.l.b16 %v3023
        %v4316 = vunpack.c.h.b16 %v3023
        %v4317 = vunpack.c.l.b16 %v3024
        %v4318 = vunpack.c.h.b16 %v3024
        %v4319 = vunpack.c.l.b16 %v3025
        %v4320 = vunpack.c.h.b16 %v3025
        %v4321 = vunpack.c.l.b16 %v3026
        %v4322 = vunpack.c.h.b16 %v3026
        %v4323 = vunpack.c.l.b16 %v3027
        %v4324 = vunpack.c.h.b16 %v3027
        %v4325 = vunpack.c.l.b16 %v3028
        %v4326 = vunpack.c.h.b16 %v3028
        %v4327 = vunpack.c.l.b16 %v3029
        %v4328 = vunpack.c.h.b16 %v3029
        %v4329 = vunpack.c.l.b16 %v3030
        %v4330 = vunpack.c.h.b16 %v3030
        %v4331 = vunpack.c.l.b16 %v3031
        %v4332 = vunpack.c.h.b16 %v3031
        %v4333 = vunpack.c.l.b16 %v3032
        %v4334 = vunpack.c.h.b16 %v3032
        %v4335 = vunpack.c.l.b16 %v3033
        %v4336 = vunpack.c.h.b16 %v3033
        %v4337 = vunpack.c.l.b16 %v3034
        %v4338 = vunpack.c.h.b16 %v3034
        %v4339 = vunpack.c.l.b16 %v3035
        %v4340 = vunpack.c.h.b16 %v3035
        %v4341 = vunpack.c.l.b16 %v3036
        %v4342 = vunpack.c.h.b16 %v3036
        %v4343 = vunpack.c.l.b16 %v3037
        %v4344 = vunpack.c.h.b16 %v3037
        %v4345 = vunpack.c.l.b16 %v3038
        %v4346 = vunpack.c.h.b16 %v3038
        %v4347 = vunpack.c.l.b16 %v3039
        %v4348 = vunpack.c.h.b16 %v3039
        %v4349 = vunpack.c.l.b16 %v3040
        %v4350 = vunpack.c.h.b16 %v3040
        %v4351 = vunpack.c.l.b16 %v3041
        %v4352 = vunpack.c.h.b16 %v3041
        %v4353 = vunpack.c.l.b16 %v3042
        %v4354 = vunpack.c.h.b16 %v3042
        %v4355 = vunpack.c.l.b16 %v3043
        %v4356 = vunpack.c.h.b16 %v3043
        %v4357 = vunpack.c.l.b16 %v3044
        %v4358 = vunpack.c.h.b16 %v3044
        %v4359 = vunpack.c.l.b16 %v3045
        %v4360 = vunpack.c.h.b16 %v3045
        %v4361 = vunpack.c.l.b16 %v3046
        %v4362 = vunpack.c.h.b16 %v3046
        %v4363 = vunpack.c.l.b16 %v3047
        %v4364 = vunpack.c.h.b16 %v3047
        %v4365 = vunpack.c.l.b16 %v3048
        %v4366 = vunpack.c.h.b16 %v3048
        %v4367 = vunpack.c.l.b16 %v3049
        %v4368 = vunpack.c.h.b16 %v3049
        %v4369 = vunpack.c.l.b16 %v3050
        %v4370 = vunpack.c.h.b16 %v3050
        %v4371 = vunpack.c.l.b16 %v3051
        %v4372 = vunpack.c.h.b16 %v3051
        %v4373 = vunpack.c.l.b16 %v3052
        %v4374 = vunpack.c.h.b16 %v3052
        %v4375 = vunpack.c.l.b16 %v3053
        %v4376 = vunpack.c.h.b16 %v3053
        %v4377 = vunpack.c.l.b16 %v3054
        %v4378 = vunpack.c.h.b16 %v3054
        %v4379 = vunpack.c.l.b16 %v3055
        %v4380 = vunpack.c.h.b16 %v3055
        %v4381 = vunpack.c.l.b16 %v3056
        %v4382 = vunpack.c.h.b16 %v3056
        %v4383 = vunpack.c.l.b16 %v3057
        %v4384 = vunpack.c.h.b16 %v3057
        %v4385 = vunpack.c.l.b16 %v3058
        %v4386 = vunpack.c.h.b16 %v3058
        %v4387 = vunpack.c.l.b16 %v3059
        %v4388 = vunpack.c.h.b16 %v3059
        %v4389 = vunpack.c.l.b16 %v3060
        %v4390 = vunpack.c.h.b16 %v3060
        %v4391 = vunpack.c.l.b16 %v3061
        %v4392 = vunpack.c.h.b16 %v3061
        %v4393 = vunpack.c.l.b16 %v3062
        %v4394 = vunpack.c.h.b16 %v3062
        %v4395 = vunpack.c.l.b16 %v3063
        %v4396 = vunpack.c.h.b16 %v3063
        %v4397 = vunpack.c.l.b16 %v3064
        %v4398 = vunpack.c.h.b16 %v3064
        %v4399 = vunpack.c.l.b16 %v3065
        %v4400 = vunpack.c.h.b16 %v3065
        %v4401 = vunpack.c.l.b16 %v3066
        %v4402 = vunpack.c.h.b16 %v3066
        %v4403 = vunpack.c.l.b16 %v3067
        %v4404 = vunpack.c.h.b16 %v3067
        %v4405 = vunpack.c.l.b16 %v3068
        %v4406 = vunpack.c.h.b16 %v3068
        %v4407 = vunpack.c.l.b16 %v3069
        %v4408 = vunpack.c.h.b16 %v3069
        %v4409 = vunpack.c.l.b16 %v3070
        %v4410 = vunpack.c.h.b16 %v3070
        %v4411 = vunpack.c.l.b16 %v3071
        %v4412 = vunpack.c.h.b16 %v3071
        %v4413 = vunpack.c.l.b16 %v3072
        %v4414 = vunpack.c.h.b16 %v3072
        %v4415 = vunpack.c.l.b16 %v3073
        %v4416 = vunpack.c.h.b16 %v3073
        %v4417 = vunpack.c.l.b16 %v3074
        %v4418 = vunpack.c.h.b16 %v3074
        %v4419 = vunpack.c.l.b16 %v3075
        %v4420 = vunpack.c.h.b16 %v3075
        %v4421 = vunpack.c.l.b16 %v3076
        %v4422 = vunpack.c.h.b16 %v3076
        %v4423 = vunpack.c.l.b16 %v3077
        %v4424 = vunpack.c.h.b16 %v3077
        %v4425 = vunpack.c.l.b16 %v3078
        %v4426 = vunpack.c.h.b16 %v3078
        %v4427 = vunpack.c.l.b16 %v3079
        %v4428 = vunpack.c.h.b16 %v3079
        %v4429 = vunpack.c.l.b16 %v3080
        %v4430 = vunpack.c.h.b16 %v3080
        %v4431 = vunpack.c.l.b16 %v3081
        %v4432 = vunpack.c.h.b16 %v3081
        %v4433 = vunpack.c.l.b16 %v3082
        %v4434 = vunpack.c.h.b16 %v3082
        %v4435 = vunpack.c.l.b16 %v3083
        %v4436 = vunpack.c.h.b16 %v3083
        %v4437 = vunpack.c.l.b16 %v3084
        %v4438 = vunpack.c.h.b16 %v3084
        %v4439 = vunpack.c.l.b16 %v3085
        %v4440 = vunpack.c.h.b16 %v3085
        %v4441 = vunpack.c.l.b16 %v3086
        %v4442 = vunpack.c.h.b16 %v3086
        %v4443 = vunpack.c.l.b16 %v3087
        %v4444 = vunpack.c.h.b16 %v3087
        %v4445 = vunpack.c.l.b16 %v3088
        %v4446 = vunpack.c.h.b16 %v3088
        %v4447 = vunpack.c.l.b16 %v3089
        %v4448 = vunpack.c.h.b16 %v3089
        %v4449 = vunpack.c.l.b16 %v3090
        %v4450 = vunpack.c.h.b16 %v3090
        %v4451 = vunpack.c.l.b16 %v3091
        %v4452 = vunpack.c.h.b16 %v3091
        %v4453 = vunpack.c.l.b16 %v3092
        %v4454 = vunpack.c.h.b16 %v3092
        %v4455 = vunpack.c.l.b16 %v3093
        %v4456 = vunpack.c.h.b16 %v3093
        %v4457 = vunpack.c.l.b16 %v3094
        %v4458 = vunpack.c.h.b16 %v3094
        %v4459 = vunpack.c.l.b16 %v3095
        %v4460 = vunpack.c.h.b16 %v3095
        %v4461 = vunpack.c.l.b16 %v3096
        %v4462 = vunpack.c.h.b16 %v3096
        %v4463 = vunpack.c.l.b16 %v3097
        %v4464 = vunpack.c.h.b16 %v3097
        %v4465 = vunpack.c.l.b16 %v3098
        %v4466 = vunpack.c.h.b16 %v3098
        %v4467 = vunpack.c.l.b16 %v3099
        %v4468 = vunpack.c.h.b16 %v3099
        %v4469 = vunpack.c.l.b16 %v3100
        %v4470 = vunpack.c.h.b16 %v3100
        %v4471 = vunpack.c.l.b16 %v3101
        %v4472 = vunpack.c.h.b16 %v3101
        %v4473 = vunpack.c.l.b16 %v3102
        %v4474 = vunpack.c.h.b16 %v3102
        %v4475 = vunpack.c.l.b16 %v3103
        %v4476 = vunpack.c.h.b16 %v3103
        %v4477 = vunpack.c.l.b16 %v3104
        %v4478 = vunpack.c.h.b16 %v3104
        %v4479 = vunpack.c.l.b16 %v3105
        %v4480 = vunpack.c.h.b16 %v3105
        %v4481 = vunpack.c.l.b16 %v3106
        %v4482 = vunpack.c.h.b16 %v3106
        %v4483 = vunpack.c.l.b16 %v3107
        %v4484 = vunpack.c.h.b16 %v3107
        %v4485 = vunpack.c.l.b16 %v3108
        %v4486 = vunpack.c.h.b16 %v3108
        %v4487 = vunpack.c.l.b16 %v3109
        %v4488 = vunpack.c.h.b16 %v3109
        %v4489 = vunpack.c.l.b16 %v3110
        %v4490 = vunpack.c.h.b16 %v3110
        %v4491 = vunpack.c.l.b16 %v3111
        %v4492 = vunpack.c.h.b16 %v3111
        %v4493 = vunpack.c.l.b16 %v3112
        %v4494 = vunpack.c.h.b16 %v3112
        %v4495 = vunpack.c.l.b16 %v3113
        %v4496 = vunpack.c.h.b16 %v3113
        %v4497 = vunpack.c.l.b16 %v3114
        %v4498 = vunpack.c.h.b16 %v3114
        %v4499 = vunpack.c.l.b16 %v3115
        %v4500 = vunpack.c.h.b16 %v3115
        %v4501 = vunpack.c.l.b16 %v3116
        %v4502 = vunpack.c.h.b16 %v3116
        %v4503 = vunpack.c.l.b16 %v3117
        %v4504 = vunpack.c.h.b16 %v3117
        %v4505 = vunpack.c.l.b16 %v3118
        %v4506 = vunpack.c.h.b16 %v3118
        %v4507 = vunpack.c.l.b16 %v3119
        %v4508 = vunpack.c.h.b16 %v3119
        %v4509 = vunpack.c.l.b16 %v3120
        %v4510 = vunpack.c.h.b16 %v3120
        %v4511 = vunpack.c.l.b16 %v3121
        %v4512 = vunpack.c.h.b16 %v3121
        %v4513 = vunpack.c.l.b16 %v3122
        %v4514 = vunpack.c.h.b16 %v3122
        %v4515 = vunpack.c.l.b16 %v3123
        %v4516 = vunpack.c.h.b16 %v3123
        %v4517 = vunpack.c.l.b16 %v3124
        %v4518 = vunpack.c.h.b16 %v3124
        %v4519 = vunpack.c.l.b16 %v3125
        %v4520 = vunpack.c.h.b16 %v3125
        %v4521 = vunpack.c.l.b16 %v3126
        %v4522 = vunpack.c.h.b16 %v3126
        %v4523 = vunpack.c.l.b16 %v3127
        %v4524 = vunpack.c.h.b16 %v3127
        %v4525 = vunpack.c.l.b16 %v3128
        %v4526 = vunpack.c.h.b16 %v3128
        %v4527 = vunpack.c.l.b16 %v3129
        %v4528 = vunpack.c.h.b16 %v3129
        %v4529 = vunpack.c.l.b16 %v3130
        %v4530 = vunpack.c.h.b16 %v3130
        %v4531 = vunpack.c.l.b16 %v3131
        %v4532 = vunpack.c.h.b16 %v3131
        %v4533 = vunpack.c.l.b16 %v3132
        %v4534 = vunpack.c.h.b16 %v3132
        %v4535 = vunpack.c.l.b16 %v3133
        %v4536 = vunpack.c.h.b16 %v3133
        %v4537 = vunpack.c.l.b16 %v3134
        %v4538 = vunpack.c.h.b16 %v3134
        %v4539 = vunpack.c.l.b16 %v3135
        %v4540 = vunpack.c.h.b16 %v3135
        %v4541 = vunpack.c.l.b16 %v3136
        %v4542 = vunpack.c.h.b16 %v3136
        %v4543 = vunpack.c.l.b16 %v3137
        %v4544 = vunpack.c.h.b16 %v3137
        %v4545 = vunpack.c.l.b16 %v3138
        %v4546 = vunpack.c.h.b16 %v3138
        %v4547 = vunpack.c.l.b16 %v3139
        %v4548 = vunpack.c.h.b16 %v3139
        %v4549 = vunpack.c.l.b16 %v3140
        %v4550 = vunpack.c.h.b16 %v3140
        %v4551 = vunpack.c.l.b16 %v3141
        %v4552 = vunpack.c.h.b16 %v3141
        %v4553 = vunpack.c.l.b16 %v3142
        %v4554 = vunpack.c.h.b16 %v3142
        %v4555 = vunpack.c.l.b16 %v3143
        %v4556 = vunpack.c.h.b16 %v3143
        %v4557 = vunpack.c.l.b16 %v3144
        %v4558 = vunpack.c.h.b16 %v3144
        %v4559 = vunpack.c.l.b16 %v3145
        %v4560 = vunpack.c.h.b16 %v3145
        %v4561 = vunpack.c.l.b16 %v3146
        %v4562 = vunpack.c.h.b16 %v3146
        %v4563 = vunpack.c.l.b16 %v3147
        %v4564 = vunpack.c.h.b16 %v3147
        %v4565 = vunpack.c.l.b16 %v3148
        %v4566 = vunpack.c.h.b16 %v3148
        %v4567 = vunpack.c.l.b16 %v3149
        %v4568 = vunpack.c.h.b16 %v3149
        %v4569 = vunpack.c.l.b16 %v3150
        %v4570 = vunpack.c.h.b16 %v3150
        %v4571 = vunpack.c.l.b16 %v3151
        %v4572 = vunpack.c.h.b16 %v3151
        %v4573 = vunpack.c.l.b16 %v3152
        %v4574 = vunpack.c.h.b16 %v3152
        %v4575 = vunpack.c.l.b16 %v3153
        %v4576 = vunpack.c.h.b16 %v3153
        %v4577 = vunpack.c.l.b16 %v3154
        %v4578 = vunpack.c.h.b16 %v3154
        %v4579 = vunpack.c.l.b16 %v3155
        %v4580 = vunpack.c.h.b16 %v3155
        %v4581 = vunpack.c.l.b16 %v3156
        %v4582 = vunpack.c.h.b16 %v3156
        %v4583 = vunpack.c.l.b16 %v3157
        %v4584 = vunpack.c.h.b16 %v3157
        %v4585 = vunpack.c.l.b16 %v3158
        %v4586 = vunpack.c.h.b16 %v3158
        %v4587 = vunpack.c.l.b16 %v3159
        %v4588 = vunpack.c.h.b16 %v3159
        %v4589 = vunpack.c.l.b16 %v3160
        %v4590 = vunpack.c.h.b16 %v3160
        %v4591 = vunpack.c.l.b16 %v3161
        %v4592 = vunpack.c.h.b16 %v3161
        %v4593 = vunpack.c.l.b16 %v3162
        %v4594 = vunpack.c.h.b16 %v3162
        %v4595 = vunpack.c.l.b16 %v3163
        %v4596 = vunpack.c.h.b16 %v3163
        %v4597 = vunpack.c.l.b16 %v3164
        %v4598 = vunpack.c.h.b16 %v3164
        %v4599 = vunpack.c.l.b16 %v3165
        %v4600 = vunpack.c.h.b16 %v3165
        %v4601 = vunpack.c.l.b16 %v3166
        %v4602 = vunpack.c.h.b16 %v3166
        %v4603 = vunpack.c.l.b16 %v3167
        %v4604 = vunpack.c.h.b16 %v3167
        %v4605 = vunpack.c.l.b16 %v3168
        %v4606 = vunpack.c.h.b16 %v3168
        %v4607 = vunpack.c.l.b16 %v3169
        %v4608 = vunpack.c.h.b16 %v3169
        %v4609 = vunpack.c.l.b16 %v3170
        %v4610 = vunpack.c.h.b16 %v3170
        %v4611 = vunpack.c.l.b16 %v3171
        %v4612 = vunpack.c.h.b16 %v3171
        %v4613 = vunpack.c.l.b16 %v3172
        %v4614 = vunpack.c.h.b16 %v3172
        %v4615 = vunpack.c.l.b16 %v3173
        %v4616 = vunpack.c.h.b16 %v3173
        %v4617 = vunpack.c.l.b16 %v3174
        %v4618 = vunpack.c.h.b16 %v3174
        %v4619 = vunpack.c.l.b16 %v3175
        %v4620 = vunpack.c.h.b16 %v3175
        %v4621 = vunpack.c.l.b16 %v3176
        %v4622 = vunpack.c.h.b16 %v3176
        %v4623 = vunpack.c.l.b16 %v3177
        %v4624 = vunpack.c.h.b16 %v3177
        %v4625 = vunpack.c.l.b16 %v3178
        %v4626 = vunpack.c.h.b16 %v3178
        %v4627 = vunpack.c.l.b16 %v3179
        %v4628 = vunpack.c.h.b16 %v3179
        %v4629 = vunpack.c.l.b16 %v3180
        %v4630 = vunpack.c.h.b16 %v3180
        %v4631 = vunpack.c.l.b16 %v3181
        %v4632 = vunpack.c.h.b16 %v3181
        %v4633 = vunpack.c.l.b16 %v3182
        %v4634 = vunpack.c.h.b16 %v3182
        %v4635 = vunpack.c.l.b16 %v3183
        %v4636 = vunpack.c.h.b16 %v3183
        %v4637 = vunpack.c.l.b16 %v3184
        %v4638 = vunpack.c.h.b16 %v3184
        %v4639 = vunpack.c.l.b16 %v3185
        %v4640 = vunpack.c.h.b16 %v3185
        %v4641 = vunpack.c.l.b16 %v3186
        %v4642 = vunpack.c.h.b16 %v3186
        %v4643 = vunpack.c.l.b16 %v3187
        %v4644 = vunpack.c.h.b16 %v3187
        %v4645 = vunpack.c.l.b16 %v3188
        %v4646 = vunpack.c.h.b16 %v3188
        %v4647 = vunpack.c.l.b16 %v3189
        %v4648 = vunpack.c.h.b16 %v3189
        %v4649 = vunpack.c.l.b16 %v3190
        %v4650 = vunpack.c.h.b16 %v3190
        %v4651 = vunpack.c.l.b16 %v3191
        %v4652 = vunpack.c.h.b16 %v3191
        %v4653 = vunpack.c.l.b16 %v3192
        %v4654 = vunpack.c.h.b16 %v3192
        %v4655 = vunpack.c.l.b16 %v3193
        %v4656 = vunpack.c.h.b16 %v3193
        %v4657 = vunpack.c.l.b16 %v3194
        %v4658 = vunpack.c.h.b16 %v3194
        %v4659 = vunpack.c.l.b16 %v3195
        %v4660 = vunpack.c.h.b16 %v3195
        %v4661 = vunpack.c.l.b16 %v3196
        %v4662 = vunpack.c.h.b16 %v3196
        %v4663 = vunpack.c.l.b16 %v3197
        %v4664 = vunpack.c.h.b16 %v3197
        %v4665 = vunpack.c.l.b16 %v3198
        %v4666 = vunpack.c.h.b16 %v3198
        %v4667 = vunpack.c.l.b16 %v3199
        %v4668 = vunpack.c.h.b16 %v3199
        %v4669 = vunpack.c.l.b16 %v3200
        %v4670 = vunpack.c.h.b16 %v3200
        %v4671 = vunpack.c.l.b16 %v3201
        %v4672 = vunpack.c.h.b16 %v3201
        %v4673 = vunpack.c.l.b16 %v3202
        %v4674 = vunpack.c.h.b16 %v3202
        %v4675 = vunpack.c.l.b16 %v3203
        %v4676 = vunpack.c.h.b16 %v3203
        %v4677 = vunpack.c.l.b16 %v3204
        %v4678 = vunpack.c.h.b16 %v3204
        %v4679 = vunpack.c.l.b16 %v3205
        %v4680 = vunpack.c.h.b16 %v3205
        %v4681 = vunpack.c.l.b16 %v3206
        %v4682 = vunpack.c.h.b16 %v3206
        %v4683 = vunpack.c.l.b16 %v3207
        %v4684 = vunpack.c.h.b16 %v3207
        %v4685 = vunpack.c.l.b16 %v3208
        %v4686 = vunpack.c.h.b16 %v3208
        %v4687 = vunpack.c.l.b16 %v3209
        %v4688 = vunpack.c.h.b16 %v3209
        %v4689 = vunpack.c.l.b16 %v3210
        %v4690 = vunpack.c.h.b16 %v3210
        %v4691 = vunpack.c.l.b16 %v3211
        %v4692 = vunpack.c.h.b16 %v3211
        %v4693 = vunpack.c.l.b16 %v3212
        %v4694 = vunpack.c.h.b16 %v3212
        %v4695 = vunpack.c.l.b16 %v3213
        %v4696 = vunpack.c.h.b16 %v3213
        %v4697 = vunpack.c.l.b16 %v3214
        %v4698 = vunpack.c.h.b16 %v3214
        %v4699 = vunpack.c.l.b16 %v3215
        %v4700 = vunpack.c.h.b16 %v3215
        %v4701 = vunpack.c.l.b16 %v3216
        %v4702 = vunpack.c.h.b16 %v3216
        %v4703 = vunpack.c.l.b16 %v3217
        %v4704 = vunpack.c.h.b16 %v3217
        %v4705 = vunpack.c.l.b16 %v3218
        %v4706 = vunpack.c.h.b16 %v3218
        %v4707 = vunpack.c.l.b16 %v3219
        %v4708 = vunpack.c.h.b16 %v3219
        %v4709 = vunpack.c.l.b16 %v3220
        %v4710 = vunpack.c.h.b16 %v3220
        %v4711 = vunpack.c.l.b16 %v3221
        %v4712 = vunpack.c.h.b16 %v3221
        %v4713 = vunpack.c.l.b16 %v3222
        %v4714 = vunpack.c.h.b16 %v3222
        %v4715 = vunpack.c.l.b16 %v3223
        %v4716 = vunpack.c.h.b16 %v3223
        %v4717 = vunpack.c.l.b16 %v3224
        %v4718 = vunpack.c.h.b16 %v3224
        %v4719 = vunpack.c.l.b16 %v3225
        %v4720 = vunpack.c.h.b16 %v3225
        %v4721 = vunpack.c.l.b16 %v3226
        %v4722 = vunpack.c.h.b16 %v3226
        %v4723 = vunpack.c.l.b16 %v3227
        %v4724 = vunpack.c.h.b16 %v3227
        %v4725 = vunpack.c.l.b16 %v3228
        %v4726 = vunpack.c.h.b16 %v3228
        %v4727 = vunpack.c.l.b16 %v3229
        %v4728 = vunpack.c.h.b16 %v3229
        %v4729 = vunpack.c.l.b16 %v3230
        %v4730 = vunpack.c.h.b16 %v3230
        %v4731 = vunpack.c.l.b16 %v3231
        %v4732 = vunpack.c.h.b16 %v3231
        %v4733 = vunpack.c.l.b16 %v3232
        %v4734 = vunpack.c.h.b16 %v3232
        %v4735 = vunpack.c.l.b16 %v3233
        %v4736 = vunpack.c.h.b16 %v3233
        %v4737 = vunpack.c.l.b16 %v3234
        %v4738 = vunpack.c.h.b16 %v3234
        %v4739 = vunpack.c.l.b16 %v3235
        %v4740 = vunpack.c.h.b16 %v3235
        %v4741 = vunpack.c.l.b16 %v3236
        %v4742 = vunpack.c.h.b16 %v3236
        %v4743 = vunpack.c.l.b16 %v3237
        %v4744 = vunpack.c.h.b16 %v3237
        %v4745 = vunpack.c.l.b16 %v3238
        %v4746 = vunpack.c.h.b16 %v3238
        %v4747 = vunpack.c.l.b16 %v3239
        %v4748 = vunpack.c.h.b16 %v3239
        %v4749 = vunpack.c.l.b16 %v3240
        %v4750 = vunpack.c.h.b16 %v3240
        %v4751 = vunpack.c.l.b16 %v3241
        %v4752 = vunpack.c.h.b16 %v3241
        %v4753 = vunpack.c.l.b16 %v3242
        %v4754 = vunpack.c.h.b16 %v3242
        %v4755 = vunpack.c.l.b16 %v3243
        %v4756 = vunpack.c.h.b16 %v3243
        %v4757 = vunpack.c.l.b16 %v3244
        %v4758 = vunpack.c.h.b16 %v3244
        %v4759 = vunpack.c.l.b16 %v3245
        %v4760 = vunpack.c.h.b16 %v3245
        %v4761 = vunpack.c.l.b16 %v3246
        %v4762 = vunpack.c.h.b16 %v3246
        %v4763 = vunpack.c.l.b16 %v3247
        %v4764 = vunpack.c.h.b16 %v3247
        %v4765 = vunpack.c.l.b16 %v3248
        %v4766 = vunpack.c.h.b16 %v3248
        %v4767 = vunpack.c.l.b16 %v3249
        %v4768 = vunpack.c.h.b16 %v3249
        %v4769 = vunpack.c.l.b16 %v3250
        %v4770 = vunpack.c.h.b16 %v3250
        %v4771 = vunpack.c.l.b16 %v3251
        %v4772 = vunpack.c.h.b16 %v3251
        %v4773 = vunpack.c.l.b16 %v3252
        %v4774 = vunpack.c.h.b16 %v3252
        %v4775 = vunpack.c.l.b16 %v3253
        %v4776 = vunpack.c.h.b16 %v3253
        %v4777 = vunpack.c.l.b16 %v3254
        %v4778 = vunpack.c.h.b16 %v3254
        %v4779 = vunpack.c.l.b16 %v3255
        %v4780 = vunpack.c.h.b16 %v3255
        %v4781 = vunpack.c.l.b16 %v3256
        %v4782 = vunpack.c.h.b16 %v3256
        %v4783 = vunpack.c.l.b16 %v3257
        %v4784 = vunpack.c.h.b16 %v3257
        %v4785 = vunpack.c.l.b16 %v3258
        %v4786 = vunpack.c.h.b16 %v3258
        %v4787 = vunpack.c.l.b16 %v3259
        %v4788 = vunpack.c.h.b16 %v3259
        %v4789 = vunpack.c.l.b16 %v3260
        %v4790 = vunpack.c.h.b16 %v3260
        %v4791 = vunpack.c.l.b16 %v3261
        %v4792 = vunpack.c.h.b16 %v3261
        %v4793 = vunpack.c.l.b16 %v3262
        %v4794 = vunpack.c.h.b16 %v3262
        %v4795 = vunpack.c.l.b16 %v3263
        %v4796 = vunpack.c.h.b16 %v3263
        %v4797 = vunpack.c.l.b16 %v3264
        %v4798 = vunpack.c.h.b16 %v3264
        %v4799 = vunpack.c.l.b16 %v3265
        %v4800 = vunpack.c.h.b16 %v3265
        %v4801 = vunpack.c.l.b16 %v3266
        %v4802 = vunpack.c.h.b16 %v3266
        %v4803 = vunpack.c.l.b16 %v3267
        %v4804 = vunpack.c.h.b16 %v3267
        %v4805 = vunpack.c.l.b16 %v3268
        %v4806 = vunpack.c.h.b16 %v3268
        %v4807 = vunpack.c.l.b16 %v3269
        %v4808 = vunpack.c.h.b16 %v3269
        %v4809 = vunpack.c.l.b16 %v3270
        %v4810 = vunpack.c.h.b16 %v3270
        %v4811 = vunpack.c.l.b16 %v3271
        %v4812 = vunpack.c.h.b16 %v3271
        %v4813 = vunpack.c.l.b16 %v3272
        %v4814 = vunpack.c.h.b16 %v3272
        %v4815 = vunpack.c.l.b16 %v3273
        %v4816 = vunpack.c.h.b16 %v3273
        %v4817 = vunpack.c.l.b16 %v3274
        %v4818 = vunpack.c.h.b16 %v3274
        %v4819 = vunpack.c.l.b16 %v3275
        %v4820 = vunpack.c.h.b16 %v3275
        %v4821 = vunpack.c.l.b16 %v3276
        %v4822 = vunpack.c.h.b16 %v3276
        %v4823 = vunpack.c.l.b16 %v3277
        %v4824 = vunpack.c.h.b16 %v3277
        %v4825 = vunpack.c.l.b16 %v3278
        %v4826 = vunpack.c.h.b16 %v3278
        %v4827 = vunpack.c.l.b16 %v3279
        %v4828 = vunpack.c.h.b16 %v3279
        %v4829 = vunpack.c.l.b16 %v3280
        %v4830 = vunpack.c.h.b16 %v3280
        %v4831 = vunpack.c.l.b16 %v3281
        %v4832 = vunpack.c.h.b16 %v3281
        %v4833 = vunpack.c.l.b16 %v3282
        %v4834 = vunpack.c.h.b16 %v3282
        %v4835 = vunpack.c.l.b16 %v3283
        %v4836 = vunpack.c.h.b16 %v3283
        %v4837 = vunpack.c.l.b16 %v3284
        %v4838 = vunpack.c.h.b16 %v3284
        %v4839 = vunpack.c.l.b16 %v3285
        %v4840 = vunpack.c.h.b16 %v3285
        %v4841 = vunpack.c.l.b16 %v3286
        %v4842 = vunpack.c.h.b16 %v3286
        %v4843 = vunpack.c.l.b16 %v3287
        %v4844 = vunpack.c.h.b16 %v3287
        %v4845 = vunpack.c.l.b16 %v3288
        %v4846 = vunpack.c.h.b16 %v3288
        %v4847 = vunpack.c.l.b16 %v3289
        %v4848 = vunpack.c.h.b16 %v3289
        %v4849 = vunpack.c.l.b16 %v3290
        %v4850 = vunpack.c.h.b16 %v3290
        %v4851 = vunpack.c.l.b16 %v3291
        %v4852 = vunpack.c.h.b16 %v3291
        %v4853 = vunpack.c.l.b16 %v3292
        %v4854 = vunpack.c.h.b16 %v3292
        %v4855 = vpack.c.b16 %v3839, %v3831
        %v4856 = vpack.c.b16 %v3840, %v3832
        %v4857 = vpack.c.b16 %v3841, %v3833
        %v4858 = vpack.c.b16 %v3842, %v3834
        %v4859 = vpack.c.b16 %v3843, %v3835
        %v4860 = vpack.c.b16 %v3844, %v3836
        %v4861 = vpack.c.b16 %v3845, %v3837
        %v4862 = vpack.c.b16 %v3846, %v3838
        %v4863 = vpack.c.b16 %v3855, %v3847
        %v4864 = vpack.c.b16 %v3856, %v3848
        %v4865 = vpack.c.b16 %v3857, %v3849
        %v4866 = vpack.c.b16 %v3858, %v3850
        %v4867 = vpack.c.b16 %v3859, %v3851
        %v4868 = vpack.c.b16 %v3860, %v3852
        %v4869 = vpack.c.b16 %v3861, %v3853
        %v4870 = vpack.c.b16 %v3862, %v3854
        %v4871 = vpack.c.b16 %v3871, %v3863
        %v4872 = vpack.c.b16 %v3872, %v3864
        %v4873 = vpack.c.b16 %v3873, %v3865
        %v4874 = vpack.c.b16 %v3874, %v3866
        %v4875 = vpack.c.b16 %v3875, %v3867
        %v4876 = vpack.c.b16 %v3876, %v3868
        %v4877 = vpack.c.b16 %v3877, %v3869
        %v4878 = vpack.c.b16 %v3878, %v3870
        %v4879 = vpack.c.b16 %v3887, %v3879
        %v4880 = vpack.c.b16 %v3888, %v3880
        %v4881 = vpack.c.b16 %v3889, %v3881
        %v4882 = vpack.c.b16 %v3890, %v3882
        %v4883 = vpack.c.b16 %v3891, %v3883
        %v4884 = vpack.c.b16 %v3892, %v3884
        %v4885 = vpack.c.b16 %v3893, %v3885
        %v4886 = vpack.c.b16 %v3894, %v3886
        %v4887 = vpack.c.b16 %v3903, %v3895
        %v4888 = vpack.c.b16 %v3904, %v3896
        %v4889 = vpack.c.b16 %v3905, %v3897
        %v4890 = vpack.c.b16 %v3906, %v3898
        %v4891 = vpack.c.b16 %v3907, %v3899
        %v4892 = vpack.c.b16 %v3908, %v3900
        %v4893 = vpack.c.b16 %v3909, %v3901
        %v4894 = vpack.c.b16 %v3910, %v3902
        %v4895 = vpack.c.b16 %v3919, %v3911
        %v4896 = vpack.c.b16 %v3920, %v3912
        %v4897 = vpack.c.b16 %v3921, %v3913
        %v4898 = vpack.c.b16 %v3922, %v3914
        %v4899 = vpack.c.b16 %v3923, %v3915
        %v4900 = vpack.c.b16 %v3924, %v3916
        %v4901 = vpack.c.b16 %v3925, %v3917
        %v4902 = vpack.c.b16 %v3926, %v3918
        %v4903 = vpack.c.b16 %v3935, %v3927
        %v4904 = vpack.c.b16 %v3936, %v3928
        %v4905 = vpack.c.b16 %v3937, %v3929
        %v4906 = vpack.c.b16 %v3938, %v3930
        %v4907 = vpack.c.b16 %v3939, %v3931
        %v4908 = vpack.c.b16 %v3940, %v3932
        %v4909 = vpack.c.b16 %v3941, %v3933
        %v4910 = vpack.c.b16 %v3942, %v3934
        %v4911 = vpack.c.b16 %v3951, %v3943
        %v4912 = vpack.c.b16 %v3952, %v3944
        %v4913 = vpack.c.b16 %v3953, %v3945
        %v4914 = vpack.c.b16 %v3954, %v3946
        %v4915 = vpack.c.b16 %v3955, %v3947
        %v4916 = vpack.c.b16 %v3956, %v3948
        %v4917 = vpack.c.b16 %v3957, %v3949
        %v4918 = vpack.c.b16 %v3958, %v3950
        %v4919 = vpack.c.b16 %v3967, %v3959
        %v4920 = vpack.c.b16 %v3968, %v3960
        %v4921 = vpack.c.b16 %v3969, %v3961
        %v4922 = vpack.c.b16 %v3970, %v3962
        %v4923 = vpack.c.b16 %v3971, %v3963
        %v4924 = vpack.c.b16 %v3972, %v3964
        %v4925 = vpack.c.b16 %v3973, %v3965
        %v4926 = vpack.c.b16 %v3974, %v3966
        %v4927 = vpack.c.b16 %v3983, %v3975
        %v4928 = vpack.c.b16 %v3984, %v3976
        %v4929 = vpack.c.b16 %v3985, %v3977
        %v4930 = vpack.c.b16 %v3986, %v3978
        %v4931 = vpack.c.b16 %v3987, %v3979
        %v4932 = vpack.c.b16 %v3988, %v3980
        %v4933 = vpack.c.b16 %v3989, %v3981
        %v4934 = vpack.c.b16 %v3990, %v3982
        %v4935 = vpack.c.b16 %v3999, %v3991
        %v4936 = vpack.c.b16 %v4000, %v3992
        %v4937 = vpack.c.b16 %v4001, %v3993
        %v4938 = vpack.c.b16 %v4002, %v3994
        %v4939 = vpack.c.b16 %v4003, %v3995
        %v4940 = vpack.c.b16 %v4004, %v3996
        %v4941 = vpack.c.b16 %v4005, %v3997
        %v4942 = vpack.c.b16 %v4006, %v3998
        %v4943 = vpack.c.b16 %v4015, %v4007
        %v4944 = vpack.c.b16 %v4016, %v4008
        %v4945 = vpack.c.b16 %v4017, %v4009
        %v4946 = vpack.c.b16 %v4018, %v4010
        %v4947 = vpack.c.b16 %v4019, %v4011
        %v4948 = vpack.c.b16 %v4020, %v4012
        %v4949 = vpack.c.b16 %v4021, %v4013
        %v4950 = vpack.c.b16 %v4022, %v4014
        %v4951 = vpack.c.b16 %v4031, %v4023
        %v4952 = vpack.c.b16 %v4032, %v4024
        %v4953 = vpack.c.b16 %v4033, %v4025
        %v4954 = vpack.c.b16 %v4034, %v4026
        %v4955 = vpack.c.b16 %v4035, %v4027
        %v4956 = vpack.c.b16 %v4036, %v4028
        %v4957 = vpack.c.b16 %v4037, %v4029
        %v4958 = vpack.c.b16 %v4038, %v4030
        %v4959 = vpack.c.b16 %v4047, %v4039
        %v4960 = vpack.c.b16 %v4048, %v4040
        %v4961 = vpack.c.b16 %v4049, %v4041
        %v4962 = vpack.c.b16 %v4050, %v4042
        %v4963 = vpack.c.b16 %v4051, %v4043
        %v4964 = vpack.c.b16 %v4052, %v4044
        %v4965 = vpack.c.b16 %v4053, %v4045
        %v4966 = vpack.c.b16 %v4054, %v4046
        %v4967 = vpack.c.b16 %v4063, %v4055
        %v4968 = vpack.c.b16 %v4064, %v4056
        %v4969 = vpack.c.b16 %v4065, %v4057
        %v4970 = vpack.c.b16 %v4066, %v4058
        %v4971 = vpack.c.b16 %v4067, %v4059
        %v4972 = vpack.c.b16 %v4068, %v4060
        %v4973 = vpack.c.b16 %v4069, %v4061
        %v4974 = vpack.c.b16 %v4070, %v4062
        %v4975 = vpack.c.b16 %v4079, %v4071
        %v4976 = vpack.c.b16 %v4080, %v4072
        %v4977 = vpack.c.b16 %v4081, %v4073
        %v4978 = vpack.c.b16 %v4082, %v4074
        %v4979 = vpack.c.b16 %v4083, %v4075
        %v4980 = vpack.c.b16 %v4084, %v4076
        %v4981 = vpack.c.b16 %v4085, %v4077
        %v4982 = vpack.c.b16 %v4086, %v4078
        %v4983 = vpack.c.b16 %v4095, %v4087
        %v4984 = vpack.c.b16 %v4096, %v4088
        %v4985 = vpack.c.b16 %v4097, %v4089
        %v4986 = vpack.c.b16 %v4098, %v4090
        %v4987 = vpack.c.b16 %v4099, %v4091
        %v4988 = vpack.c.b16 %v4100, %v4092
        %v4989 = vpack.c.b16 %v4101, %v4093
        %v4990 = vpack.c.b16 %v4102, %v4094
        %v4991 = vpack.c.b16 %v4111, %v4103
        %v4992 = vpack.c.b16 %v4112, %v4104
        %v4993 = vpack.c.b16 %v4113, %v4105
        %v4994 = vpack.c.b16 %v4114, %v4106
        %v4995 = vpack.c.b16 %v4115, %v4107
        %v4996 = vpack.c.b16 %v4116, %v4108
        %v4997 = vpack.c.b16 %v4117, %v4109
        %v4998 = vpack.c.b16 %v4118, %v4110
        %v4999 = vpack.c.b16 %v4127, %v4119
        %v5000 = vpack.c.b16 %v4128, %v4120
        %v5001 = vpack.c.b16 %v4129, %v4121
        %v5002 = vpack.c.b16 %v4130, %v4122
        %v5003 = vpack.c.b16 %v4131, %v4123
        %v5004 = vpack.c.b16 %v4132, %v4124
        %v5005 = vpack.c.b16 %v4133, %v4125
        %v5006 = vpack.c.b16 %v4134, %v4126
        %v5007 = vpack.c.b16 %v4143, %v4135
        %v5008 = vpack.c.b16 %v4144, %v4136
        %v5009 = vpack.c.b16 %v4145, %v4137
        %v5010 = vpack.c.b16 %v4146, %v4138
        %v5011 = vpack.c.b16 %v4147, %v4139
        %v5012 = vpack.c.b16 %v4148, %v4140
        %v5013 = vpack.c.b16 %v4149, %v4141
        %v5014 = vpack.c.b16 %v4150, %v4142
        %v5015 = vpack.c.b16 %v4159, %v4151
        %v5016 = vpack.c.b16 %v4160, %v4152
        %v5017 = vpack.c.b16 %v4161, %v4153
        %v5018 = vpack.c.b16 %v4162, %v4154
        %v5019 = vpack.c.b16 %v4163, %v4155
        %v5020 = vpack.c.b16 %v4164, %v4156
        %v5021 = vpack.c.b16 %v4165, %v4157
        %v5022 = vpack.c.b16 %v4166, %v4158
        %v5023 = vpack.c.b16 %v4175, %v4167
        %v5024 = vpack.c.b16 %v4176, %v4168
        %v5025 = vpack.c.b16 %v4177, %v4169
        %v5026 = vpack.c.b16 %v4178, %v4170
        %v5027 = vpack.c.b16 %v4179, %v4171
        %v5028 = vpack.c.b16 %v4180, %v4172
        %v5029 = vpack.c.b16 %v4181, %v4173
        %v5030 = vpack.c.b16 %v4182, %v4174
        %v5031 = vpack.c.b16 %v4191, %v4183
        %v5032 = vpack.c.b16 %v4192, %v4184
        %v5033 = vpack.c.b16 %v4193, %v4185
        %v5034 = vpack.c.b16 %v4194, %v4186
        %v5035 = vpack.c.b16 %v4195, %v4187
        %v5036 = vpack.c.b16 %v4196, %v4188
        %v5037 = vpack.c.b16 %v4197, %v4189
        %v5038 = vpack.c.b16 %v4198, %v4190
        %v5039 = vpack.c.b16 %v4207, %v4199
        %v5040 = vpack.c.b16 %v4208, %v4200
        %v5041 = vpack.c.b16 %v4209, %v4201
        %v5042 = vpack.c.b16 %v4210, %v4202
        %v5043 = vpack.c.b16 %v4211, %v4203
        %v5044 = vpack.c.b16 %v4212, %v4204
        %v5045 = vpack.c.b16 %v4213, %v4205
        %v5046 = vpack.c.b16 %v4214, %v4206
        %v5047 = vpack.c.b16 %v4223, %v4215
        %v5048 = vpack.c.b16 %v4224, %v4216
        %v5049 = vpack.c.b16 %v4225, %v4217
        %v5050 = vpack.c.b16 %v4226, %v4218
        %v5051 = vpack.c.b16 %v4227, %v4219
        %v5052 = vpack.c.b16 %v4228, %v4220
        %v5053 = vpack.c.b16 %v4229, %v4221
        %v5054 = vpack.c.b16 %v4230, %v4222
        %v5055 = vpack.c.b16 %v4239, %v4231
        %v5056 = vpack.c.b16 %v4240, %v4232
        %v5057 = vpack.c.b16 %v4241, %v4233
        %v5058 = vpack.c.b16 %v4242, %v4234
        %v5059 = vpack.c.b16 %v4243, %v4235
        %v5060 = vpack.c.b16 %v4244, %v4236
        %v5061 = vpack.c.b16 %v4245, %v4237
        %v5062 = vpack.c.b16 %v4246, %v4238
        %v5063 = vpack.c.b16 %v4255, %v4247
        %v5064 = vpack.c.b16 %v4256, %v4248
        %v5065 = vpack.c.b16 %v4257, %v4249
        %v5066 = vpack.c.b16 %v4258, %v4250
        %v5067 = vpack.c.b16 %v4259, %v4251
        %v5068 = vpack.c.b16 %v4260, %v4252
        %v5069 = vpack.c.b16 %v4261, %v4253
        %v5070 = vpack.c.b16 %v4262, %v4254
        %v5071 = vpack.c.b16 %v4271, %v4263
        %v5072 = vpack.c.b16 %v4272, %v4264
        %v5073 = vpack.c.b16 %v4273, %v4265
        %v5074 = vpack.c.b16 %v4274, %v4266
        %v5075 = vpack.c.b16 %v4275, %v4267
        %v5076 = vpack.c.b16 %v4276, %v4268
        %v5077 = vpack.c.b16 %v4277, %v4269
        %v5078 = vpack.c.b16 %v4278, %v4270
        %v5079 = vpack.c.b16 %v4287, %v4279
        %v5080 = vpack.c.b16 %v4288, %v4280
        %v5081 = vpack.c.b16 %v4289, %v4281
        %v5082 = vpack.c.b16 %v4290, %v4282
        %v5083 = vpack.c.b16 %v4291, %v4283
        %v5084 = vpack.c.b16 %v4292, %v4284
        %v5085 = vpack.c.b16 %v4293, %v4285
        %v5086 = vpack.c.b16 %v4294, %v4286
        %v5087 = vpack.c.b16 %v4303, %v4295
        %v5088 = vpack.c.b16 %v4304, %v4296
        %v5089 = vpack.c.b16 %v4305, %v4297
        %v5090 = vpack.c.b16 %v4306, %v4298
        %v5091 = vpack.c.b16 %v4307, %v4299
        %v5092 = vpack.c.b16 %v4308, %v4300
        %v5093 = vpack.c.b16 %v4309, %v4301
        %v5094 = vpack.c.b16 %v4310, %v4302
        %v5095 = vpack.c.b16 %v4319, %v4311
        %v5096 = vpack.c.b16 %v4320, %v4312
        %v5097 = vpack.c.b16 %v4321, %v4313
        %v5098 = vpack.c.b16 %v4322, %v4314
        %v5099 = vpack.c.b16 %v4323, %v4315
        %v5100 = vpack.c.b16 %v4324, %v4316
        %v5101 = vpack.c.b16 %v4325, %v4317
        %v5102 = vpack.c.b16 %v4326, %v4318
        %v5103 = vpack.c.b16 %v4335, %v4327
        %v5104 = vpack.c.b16 %v4336, %v4328
        %v5105 = vpack.c.b16 %v4337, %v4329
        %v5106 = vpack.c.b16 %v4338, %v4330
        %v5107 = vpack.c.b16 %v4339, %v4331
        %v5108 = vpack.c.b16 %v4340, %v4332
        %v5109 = vpack.c.b16 %v4341, %v4333
        %v5110 = vpack.c.b16 %v4342, %v4334
        %v5111 = vpack.c.b16 %v4351, %v4343
        %v5112 = vpack.c.b16 %v4352, %v4344
        %v5113 = vpack.c.b16 %v4353, %v4345
        %v5114 = vpack.c.b16 %v4354, %v4346
        %v5115 = vpack.c.b16 %v4355, %v4347
        %v5116 = vpack.c.b16 %v4356, %v4348
        %v5117 = vpack.c.b16 %v4357, %v4349
        %v5118 = vpack.c.b16 %v4358, %v4350
        %v5119 = vpack.c.b16 %v4367, %v4359
        %v5120 = vpack.c.b16 %v4368, %v4360
        %v5121 = vpack.c.b16 %v4369, %v4361
        %v5122 = vpack.c.b16 %v4370, %v4362
        %v5123 = vpack.c.b16 %v4371, %v4363
        %v5124 = vpack.c.b16 %v4372, %v4364
        %v5125 = vpack.c.b16 %v4373, %v4365
        %v5126 = vpack.c.b16 %v4374, %v4366
        %v5127 = vpack.c.b16 %v4383, %v4375
        %v5128 = vpack.c.b16 %v4384, %v4376
        %v5129 = vpack.c.b16 %v4385, %v4377
        %v5130 = vpack.c.b16 %v4386, %v4378
        %v5131 = vpack.c.b16 %v4387, %v4379
        %v5132 = vpack.c.b16 %v4388, %v4380
        %v5133 = vpack.c.b16 %v4389, %v4381
        %v5134 = vpack.c.b16 %v4390, %v4382
        %v5135 = vpack.c.b16 %v4399, %v4391
        %v5136 = vpack.c.b16 %v4400, %v4392
        %v5137 = vpack.c.b16 %v4401, %v4393
        %v5138 = vpack.c.b16 %v4402, %v4394
        %v5139 = vpack.c.b16 %v4403, %v4395
        %v5140 = vpack.c.b16 %v4404, %v4396
        %v5141 = vpack.c.b16 %v4405, %v4397
        %v5142 = vpack.c.b16 %v4406, %v4398
        %v5143 = vpack.c.b16 %v4415, %v4407
        %v5144 = vpack.c.b16 %v4416, %v4408
        %v5145 = vpack.c.b16 %v4417, %v4409
        %v5146 = vpack.c.b16 %v4418, %v4410
        %v5147 = vpack.c.b16 %v4419, %v4411
        %v5148 = vpack.c.b16 %v4420, %v4412
        %v5149 = vpack.c.b16 %v4421, %v4413
        %v5150 = vpack.c.b16 %v4422, %v4414
        %v5151 = vpack.c.b16 %v4431, %v4423
        %v5152 = vpack.c.b16 %v4432, %v4424
        %v5153 = vpack.c.b16 %v4433, %v4425
        %v5154 = vpack.c.b16 %v4434, %v4426
        %v5155 = vpack.c.b16 %v4435, %v4427
        %v5156 = vpack.c.b16 %v4436, %v4428
        %v5157 = vpack.c.b16 %v4437, %v4429
        %v5158 = vpack.c.b16 %v4438, %v4430
        %v5159 = vpack.c.b16 %v4447, %v4439
        %v5160 = vpack.c.b16 %v4448, %v4440
        %v5161 = vpack.c.b16 %v4449, %v4441
        %v5162 = vpack.c.b16 %v4450, %v4442
        %v5163 = vpack.c.b16 %v4451, %v4443
        %v5164 = vpack.c.b16 %v4452, %v4444
        %v5165 = vpack.c.b16 %v4453, %v4445
        %v5166 = vpack.c.b16 %v4454, %v4446
        %v5167 = vpack.c.b16 %v4463, %v4455
        %v5168 = vpack.c.b16 %v4464, %v4456
        %v5169 = vpack.c.b16 %v4465, %v4457
        %v5170 = vpack.c.b16 %v4466, %v4458
        %v5171 = vpack.c.b16 %v4467, %v4459
        %v5172 = vpack.c.b16 %v4468, %v4460
        %v5173 = vpack.c.b16 %v4469, %v4461
        %v5174 = vpack.c.b16 %v4470, %v4462
        %v5175 = vpack.c.b16 %v4479, %v4471
        %v5176 = vpack.c.b16 %v4480, %v4472
        %v5177 = vpack.c.b16 %v4481, %v4473
        %v5178 = vpack.c.b16 %v4482, %v4474
        %v5179 = vpack.c.b16 %v4483, %v4475
        %v5180 = vpack.c.b16 %v4484, %v4476
        %v5181 = vpack.c.b16 %v4485, %v4477
        %v5182 = vpack.c.b16 %v4486, %v4478
        %v5183 = vpack.c.b16 %v4495, %v4487
        %v5184 = vpack.c.b16 %v4496, %v4488
        %v5185 = vpack.c.b16 %v4497, %v4489
        %v5186 = vpack.c.b16 %v4498, %v4490
        %v5187 = vpack.c.b16 %v4499, %v4491
        %v5188 = vpack.c.b16 %v4500, %v4492
        %v5189 = vpack.c.b16 %v4501, %v4493
        %v5190 = vpack.c.b16 %v4502, %v4494
        %v5191 = vpack.c.b16 %v4511, %v4503
        %v5192 = vpack.c.b16 %v4512, %v4504
        %v5193 = vpack.c.b16 %v4513, %v4505
        %v5194 = vpack.c.b16 %v4514, %v4506
        %v5195 = vpack.c.b16 %v4515, %v4507
        %v5196 = vpack.c.b16 %v4516, %v4508
        %v5197 = vpack.c.b16 %v4517, %v4509
        %v5198 = vpack.c.b16 %v4518, %v4510
        %v5199 = vpack.c.b16 %v4527, %v4519
        %v5200 = vpack.c.b16 %v4528, %v4520
        %v5201 = vpack.c.b16 %v4529, %v4521
        %v5202 = vpack.c.b16 %v4530, %v4522
        %v5203 = vpack.c.b16 %v4531, %v4523
        %v5204 = vpack.c.b16 %v4532, %v4524
        %v5205 = vpack.c.b16 %v4533, %v4525
        %v5206 = vpack.c.b16 %v4534, %v4526
        %v5207 = vpack.c.b16 %v4543, %v4535
        %v5208 = vpack.c.b16 %v4544, %v4536
        %v5209 = vpack.c.b16 %v4545, %v4537
        %v5210 = vpack.c.b16 %v4546, %v4538
        %v5211 = vpack.c.b16 %v4547, %v4539
        %v5212 = vpack.c.b16 %v4548, %v4540
        %v5213 = vpack.c.b16 %v4549, %v4541
        %v5214 = vpack.c.b16 %v4550, %v4542
        %v5215 = vpack.c.b16 %v4559, %v4551
        %v5216 = vpack.c.b16 %v4560, %v4552
        %v5217 = vpack.c.b16 %v4561, %v4553
        %v5218 = vpack.c.b16 %v4562, %v4554
        %v5219 = vpack.c.b16 %v4563, %v4555
        %v5220 = vpack.c.b16 %v4564, %v4556
        %v5221 = vpack.c.b16 %v4565, %v4557
        %v5222 = vpack.c.b16 %v4566, %v4558
        %v5223 = vpack.c.b16 %v4575, %v4567
        %v5224 = vpack.c.b16 %v4576, %v4568
        %v5225 = vpack.c.b16 %v4577, %v4569
        %v5226 = vpack.c.b16 %v4578, %v4570
        %v5227 = vpack.c.b16 %v4579, %v4571
        %v5228 = vpack.c.b16 %v4580, %v4572
        %v5229 = vpack.c.b16 %v4581, %v4573
        %v5230 = vpack.c.b16 %v4582, %v4574
        %v5231 = vpack.c.b16 %v4591, %v4583
        %v5232 = vpack.c.b16 %v4592, %v4584
        %v5233 = vpack.c.b16 %v4593, %v4585
        %v5234 = vpack.c.b16 %v4594, %v4586
        %v5235 = vpack.c.b16 %v4595, %v4587
        %v5236 = vpack.c.b16 %v4596, %v4588
        %v5237 = vpack.c.b16 %v4597, %v4589
        %v5238 = vpack.c.b16 %v4598, %v4590
        %v5239 = vpack.c.b16 %v4607, %v4599
        %v5240 = vpack.c.b16 %v4608, %v4600
        %v5241 = vpack.c.b16 %v4609, %v4601
        %v5242 = vpack.c.b16 %v4610, %v4602
        %v5243 = vpack.c.b16 %v4611, %v4603
        %v5244 = vpack.c.b16 %v4612, %v4604
        %v5245 = vpack.c.b16 %v4613, %v4605
        %v5246 = vpack.c.b16 %v4614, %v4606
        %v5247 = vpack.c.b16 %v4623, %v4615
        %v5248 = vpack.c.b16 %v4624, %v4616
        %v5249 = vpack.c.b16 %v4625, %v4617
        %v5250 = vpack.c.b16 %v4626, %v4618
        %v5251 = vpack.c.b16 %v4627, %v4619
        %v5252 = vpack.c.b16 %v4628, %v4620
        %v5253 = vpack.c.b16 %v4629, %v4621
        %v5254 = vpack.c.b16 %v4630, %v4622
        %v5255 = vpack.c.b16 %v4639, %v4631
        %v5256 = vpack.c.b16 %v4640, %v4632
        %v5257 = vpack.c.b16 %v4641, %v4633
        %v5258 = vpack.c.b16 %v4642, %v4634
        %v5259 = vpack.c.b16 %v4643, %v4635
        %v5260 = vpack.c.b16 %v4644, %v4636
        %v5261 = vpack.c.b16 %v4645, %v4637
        %v5262 = vpack.c.b16 %v4646, %v4638
        %v5263 = vpack.c.b16 %v4655, %v4647
        %v5264 = vpack.c.b16 %v4656, %v4648
        %v5265 = vpack.c.b16 %v4657, %v4649
        %v5266 = vpack.c.b16 %v4658, %v4650
        %v5267 = vpack.c.b16 %v4659, %v4651
        %v5268 = vpack.c.b16 %v4660, %v4652
        %v5269 = vpack.c.b16 %v4661, %v4653
        %v5270 = vpack.c.b16 %v4662, %v4654
        %v5271 = vpack.c.b16 %v4671, %v4663
        %v5272 = vpack.c.b16 %v4672, %v4664
        %v5273 = vpack.c.b16 %v4673, %v4665
        %v5274 = vpack.c.b16 %v4674, %v4666
        %v5275 = vpack.c.b16 %v4675, %v4667
        %v5276 = vpack.c.b16 %v4676, %v4668
        %v5277 = vpack.c.b16 %v4677, %v4669
        %v5278 = vpack.c.b16 %v4678, %v4670
        %v5279 = vpack.c.b16 %v4687, %v4679
        %v5280 = vpack.c.b16 %v4688, %v4680
        %v5281 = vpack.c.b16 %v4689, %v4681
        %v5282 = vpack.c.b16 %v4690, %v4682
        %v5283 = vpack.c.b16 %v4691, %v4683
        %v5284 = vpack.c.b16 %v4692, %v4684
        %v5285 = vpack.c.b16 %v4693, %v4685
        %v5286 = vpack.c.b16 %v4694, %v4686
        %v5287 = vpack.c.b16 %v4703, %v4695
        %v5288 = vpack.c.b16 %v4704, %v4696
        %v5289 = vpack.c.b16 %v4705, %v4697
        %v5290 = vpack.c.b16 %v4706, %v4698
        %v5291 = vpack.c.b16 %v4707, %v4699
        %v5292 = vpack.c.b16 %v4708, %v4700
        %v5293 = vpack.c.b16 %v4709, %v4701
        %v5294 = vpack.c.b16 %v4710, %v4702
        %v5295 = vpack.c.b16 %v4719, %v4711
        %v5296 = vpack.c.b16 %v4720, %v4712
        %v5297 = vpack.c.b16 %v4721, %v4713
        %v5298 = vpack.c.b16 %v4722, %v4714
        %v5299 = vpack.c.b16 %v4723, %v4715
        %v5300 = vpack.c.b16 %v4724, %v4716
        %v5301 = vpack.c.b16 %v4725, %v4717
        %v5302 = vpack.c.b16 %v4726, %v4718
        %v5303 = vpack.c.b16 %v4735, %v4727
        %v5304 = vpack.c.b16 %v4736, %v4728
        %v5305 = vpack.c.b16 %v4737, %v4729
        %v5306 = vpack.c.b16 %v4738, %v4730
        %v5307 = vpack.c.b16 %v4739, %v4731
        %v5308 = vpack.c.b16 %v4740, %v4732
        %v5309 = vpack.c.b16 %v4741, %v4733
        %v5310 = vpack.c.b16 %v4742, %v4734
        %v5311 = vpack.c.b16 %v4751, %v4743
        %v5312 = vpack.c.b16 %v4752, %v4744
        %v5313 = vpack.c.b16 %v4753, %v4745
        %v5314 = vpack.c.b16 %v4754, %v4746
        %v5315 = vpack.c.b16 %v4755, %v4747
        %v5316 = vpack.c.b16 %v4756, %v4748
        %v5317 = vpack.c.b16 %v4757, %v4749
        %v5318 = vpack.c.b16 %v4758, %v4750
        %v5319 = vpack.c.b16 %v4767, %v4759
        %v5320 = vpack.c.b16 %v4768, %v4760
        %v5321 = vpack.c.b16 %v4769, %v4761
        %v5322 = vpack.c.b16 %v4770, %v4762
        %v5323 = vpack.c.b16 %v4771, %v4763
        %v5324 = vpack.c.b16 %v4772, %v4764
        %v5325 = vpack.c.b16 %v4773, %v4765
        %v5326 = vpack.c.b16 %v4774, %v4766
        %v5327 = vpack.c.b16 %v4783, %v4775
        %v5328 = vpack.c.b16 %v4784, %v4776
        %v5329 = vpack.c.b16 %v4785, %v4777
        %v5330 = vpack.c.b16 %v4786, %v4778
        %v5331 = vpack.c.b16 %v4787, %v4779
        %v5332 = vpack.c.b16 %v4788, %v4780
        %v5333 = vpack.c.b16 %v4789, %v4781
        %v5334 = vpack.c.b16 %v4790, %v4782
        %v5335 = vpack.c.b16 %v4799, %v4791
        %v5336 = vpack.c.b16 %v4800, %v4792
        %v5337 = vpack.c.b16 %v4801, %v4793
        %v5338 = vpack.c.b16 %v4802, %v4794
        %v5339 = vpack.c.b16 %v4803, %v4795
        %v5340 = vpack.c.b16 %v4804, %v4796
        %v5341 = vpack.c.b16 %v4805, %v4797
        %v5342 = vpack.c.b16 %v4806, %v4798
        %v5343 = vpack.c.b16 %v4815, %v4807
        %v5344 = vpack.c.b16 %v4816, %v4808
        %v5345 = vpack.c.b16 %v4817, %v4809
        %v5346 = vpack.c.b16 %v4818, %v4810
        %v5347 = vpack.c.b16 %v4819, %v4811
        %v5348 = vpack.c.b16 %v4820, %v4812
        %v5349 = vpack.c.b16 %v4821, %v4813
        %v5350 = vpack.c.b16 %v4822, %v4814
        %v5351 = vpack.c.b16 %v4831, %v4823
        %v5352 = vpack.c.b16 %v4832, %v4824
        %v5353 = vpack.c.b16 %v4833, %v4825
        %v5354 = vpack.c.b16 %v4834, %v4826
        %v5355 = vpack.c.b16 %v4835, %v4827
        %v5356 = vpack.c.b16 %v4836, %v4828
        %v5357 = vpack.c.b16 %v4837, %v4829
        %v5358 = vpack.c.b16 %v4838, %v4830
        %v5359 = vpack.c.b16 %v4847, %v4839
        %v5360 = vpack.c.b16 %v4848, %v4840
        %v5361 = vpack.c.b16 %v4849, %v4841
        %v5362 = vpack.c.b16 %v4850, %v4842
        %v5363 = vpack.c.b16 %v4851, %v4843
        %v5364 = vpack.c.b16 %v4852, %v4844
        %v5365 = vpack.c.b16 %v4853, %v4845
        %v5366 = vpack.c.b16 %v4854, %v4846
        %5879 = vmatpush.bf16.msra.mxu0 %v4911
        %5880 = vmatpush.bf16.msra.mxu0 %v4903
        %5881 = vmatpush.bf16.msra.mxu0 %v4895
        %5882 = vmatpush.bf16.msra.mxu0 %v4887
        %5883 = vmatpush.bf16.msra.mxu0 %v4879
        %5884 = vmatpush.bf16.msra.mxu0 %v4871
        %5885 = vmatpush.bf16.msra.mxu0 %v4863
        %5886 = vmatpush.bf16.msra.mxu0 %v4855
        %5887 = vmatmul.bf16.gmra.mxu0 %v3293
        %v5888 = vpop.f32.mrf.mxu0
        %v5889 = vadd.f32 %v3303, %v5888
        %v5890 = vpop.f32.mrf.mxu0
        %5891 = vdwg.mxu0
        %5892 = vmatpush.bf16.msra.mxu0 %v4975
        %5893 = vmatpush.bf16.msra.mxu0 %v4967
        %5894 = vmatpush.bf16.msra.mxu0 %v4959
        %5895 = vmatpush.bf16.msra.mxu0 %v4951
        %5896 = vmatpush.bf16.msra.mxu0 %v4943
        %5897 = vmatpush.bf16.msra.mxu0 %v4935
        %5898 = vmatpush.bf16.msra.mxu0 %v4927
        %5899 = vmatpush.bf16.msra.mxu0 %v4919
        %5900 = vmatmul.bf16.gmra.mxu0 %v3294
        %v5901 = vpop.f32.mrf.mxu0
        %v5902 = vadd.f32 %v5889, %v5901
        %v5903 = vpop.f32.mrf.mxu0
        %5904 = vdwg.mxu0
        %5905 = vmatpush.bf16.msra.mxu0 %v5039
        %5906 = vmatpush.bf16.msra.mxu0 %v5031
        %5907 = vmatpush.bf16.msra.mxu0 %v5023
        %5908 = vmatpush.bf16.msra.mxu0 %v5015
        %5909 = vmatpush.bf16.msra.mxu0 %v5007
        %5910 = vmatpush.bf16.msra.mxu0 %v4999
        %5911 = vmatpush.bf16.msra.mxu0 %v4991
        %5912 = vmatpush.bf16.msra.mxu0 %v4983
        %5913 = vmatmul.bf16.gmra.mxu0 %v3295
        %v5914 = vpop.f32.mrf.mxu0
        %v5915 = vadd.f32 %v5902, %v5914
        %v5916 = vpop.f32.mrf.mxu0
        %5917 = vdwg.mxu0
        %5918 = vmatpush.bf16.msra.mxu0 %v5103
        %5919 = vmatpush.bf16.msra.mxu0 %v5095
        %5920 = vmatpush.bf16.msra.mxu0 %v5087
        %5921 = vmatpush.bf16.msra.mxu0 %v5079
        %5922 = vmatpush.bf16.msra.mxu0 %v5071
        %5923 = vmatpush.bf16.msra.mxu0 %v5063
        %5924 = vmatpush.bf16.msra.mxu0 %v5055
        %5925 = vmatpush.bf16.msra.mxu0 %v5047
        %5926 = vmatmul.bf16.gmra.mxu0 %v3296
        %v5927 = vpop.f32.mrf.mxu0
        %v5928 = vadd.f32 %v5915, %v5927
        %v5929 = vpop.f32.mrf.mxu0
        %5930 = vdwg.mxu0
        %5931 = vmatpush.bf16.msra.mxu0 %v5167
        %5932 = vmatpush.bf16.msra.mxu0 %v5159
        %5933 = vmatpush.bf16.msra.mxu0 %v5151
        %5934 = vmatpush.bf16.msra.mxu0 %v5143
        %5935 = vmatpush.bf16.msra.mxu0 %v5135
        %5936 = vmatpush.bf16.msra.mxu0 %v5127
        %5937 = vmatpush.bf16.msra.mxu0 %v5119
        %5938 = vmatpush.bf16.msra.mxu0 %v5111
        %5939 = vmatmul.bf16.gmra.mxu0 %v3297
        %v5940 = vpop.f32.mrf.mxu0
        %v5941 = vadd.f32 %v5928, %v5940
        %v5942 = vpop.f32.mrf.mxu0
        %5943 = vdwg.mxu0
        %5944 = vmatpush.bf16.msra.mxu0 %v5231
        %5945 = vmatpush.bf16.msra.mxu0 %v5223
        %5946 = vmatpush.bf16.msra.mxu0 %v5215
        %5947 = vmatpush.bf16.msra.mxu0 %v5207
        %5948 = vmatpush.bf16.msra.mxu0 %v5199
        %5949 = vmatpush.bf16.msra.mxu0 %v5191
        %5950 = vmatpush.bf16.msra.mxu0 %v5183
        %5951 = vmatpush.bf16.msra.mxu0 %v5175
        %5952 = vmatmul.bf16.gmra.mxu0 %v3298
        %v5953 = vpop.f32.mrf.mxu0
        %v5954 = vadd.f32 %v5941, %v5953
        %v5955 = vpop.f32.mrf.mxu0
        %5956 = vdwg.mxu0
        %5957 = vmatpush.bf16.msra.mxu0 %v5295
        %5958 = vmatpush.bf16.msra.mxu0 %v5287
        %5959 = vmatpush.bf16.msra.mxu0 %v5279
        %5960 = vmatpush.bf16.msra.mxu0 %v5271
        %5961 = vmatpush.bf16.msra.mxu0 %v5263
        %5962 = vmatpush.bf16.msra.mxu0 %v5255
        %5963 = vmatpush.bf16.msra.mxu0 %v5247
        %5964 = vmatpush.bf16.msra.mxu0 %v5239
        %5965 = vmatmul.bf16.gmra.mxu0 %v3299
        %v5966 = vpop.f32.mrf.mxu0
        %v5967 = vadd.f32 %v5954, %v5966
        %v5968 = vpop.f32.mrf.mxu0
        %5969 = vdwg.mxu0
        %5970 = vmatpush.bf16.msra.mxu0 %v5359
        %5971 = vmatpush.bf16.msra.mxu0 %v5351
        %5972 = vmatpush.bf16.msra.mxu0 %v5343
        %5973 = vmatpush.bf16.msra.mxu0 %v5335
        %5974 = vmatpush.bf16.msra.mxu0 %v5327
        %5975 = vmatpush.bf16.msra.mxu0 %v5319
        %5976 = vmatpush.bf16.msra.mxu0 %v5311
        %5977 = vmatpush.bf16.msra.mxu0 %v5303
        %5978 = vmatmul.bf16.gmra.mxu0 %v3300
        %v5979 = vpop.f32.mrf.mxu0
        %v5980 = vadd.f32 %v5967, %v5979
        %v5981 = vpop.f32.mrf.mxu0
        %5982 = vdwg.mxu0
        %5983 = vmatpush.bf16.msra.mxu0 %v4912
        %5984 = vmatpush.bf16.msra.mxu0 %v4904
        %5985 = vmatpush.bf16.msra.mxu0 %v4896
        %5986 = vmatpush.bf16.msra.mxu0 %v4888
        %5987 = vmatpush.bf16.msra.mxu0 %v4880
        %5988 = vmatpush.bf16.msra.mxu0 %v4872
        %5989 = vmatpush.bf16.msra.mxu0 %v4864
        %5990 = vmatpush.bf16.msra.mxu0 %v4856
        %5991 = vmatmul.bf16.gmra.mxu0 %v3293
        %v5992 = vpop.f32.mrf.mxu0
        %v5993 = vadd.f32 %v3304, %v5992
        %v5994 = vpop.f32.mrf.mxu0
        %5995 = vdwg.mxu0
        %5996 = vmatpush.bf16.msra.mxu0 %v4976
        %5997 = vmatpush.bf16.msra.mxu0 %v4968
        %5998 = vmatpush.bf16.msra.mxu0 %v4960
        %5999 = vmatpush.bf16.msra.mxu0 %v4952
        %6000 = vmatpush.bf16.msra.mxu0 %v4944
        %6001 = vmatpush.bf16.msra.mxu0 %v4936
        %6002 = vmatpush.bf16.msra.mxu0 %v4928
        %6003 = vmatpush.bf16.msra.mxu0 %v4920
        %6004 = vmatmul.bf16.gmra.mxu0 %v3294
        %v6005 = vpop.f32.mrf.mxu0
        %v6006 = vadd.f32 %v5993, %v6005
        %v6007 = vpop.f32.mrf.mxu0
        %6008 = vdwg.mxu0
        %6009 = vmatpush.bf16.msra.mxu0 %v5040
        %6010 = vmatpush.bf16.msra.mxu0 %v5032
        %6011 = vmatpush.bf16.msra.mxu0 %v5024
        %6012 = vmatpush.bf16.msra.mxu0 %v5016
        %6013 = vmatpush.bf16.msra.mxu0 %v5008
        %6014 = vmatpush.bf16.msra.mxu0 %v5000
        %6015 = vmatpush.bf16.msra.mxu0 %v4992
        %6016 = vmatpush.bf16.msra.mxu0 %v4984
        %6017 = vmatmul.bf16.gmra.mxu0 %v3295
        %v6018 = vpop.f32.mrf.mxu0
        %v6019 = vadd.f32 %v6006, %v6018
        %v6020 = vpop.f32.mrf.mxu0
        %6021 = vdwg.mxu0
        %6022 = vmatpush.bf16.msra.mxu0 %v5104
        %6023 = vmatpush.bf16.msra.mxu0 %v5096
        %6024 = vmatpush.bf16.msra.mxu0 %v5088
        %6025 = vmatpush.bf16.msra.mxu0 %v5080
        %6026 = vmatpush.bf16.msra.mxu0 %v5072
        %6027 = vmatpush.bf16.msra.mxu0 %v5064
        %6028 = vmatpush.bf16.msra.mxu0 %v5056
        %6029 = vmatpush.bf16.msra.mxu0 %v5048
        %6030 = vmatmul.bf16.gmra.mxu0 %v3296
        %v6031 = vpop.f32.mrf.mxu0
        %v6032 = vadd.f32 %v6019, %v6031
        %v6033 = vpop.f32.mrf.mxu0
        %6034 = vdwg.mxu0
        %6035 = vmatpush.bf16.msra.mxu0 %v5168
        %6036 = vmatpush.bf16.msra.mxu0 %v5160
        %6037 = vmatpush.bf16.msra.mxu0 %v5152
        %6038 = vmatpush.bf16.msra.mxu0 %v5144
        %6039 = vmatpush.bf16.msra.mxu0 %v5136
        %6040 = vmatpush.bf16.msra.mxu0 %v5128
        %6041 = vmatpush.bf16.msra.mxu0 %v5120
        %6042 = vmatpush.bf16.msra.mxu0 %v5112
        %6043 = vmatmul.bf16.gmra.mxu0 %v3297
        %v6044 = vpop.f32.mrf.mxu0
        %v6045 = vadd.f32 %v6032, %v6044
        %v6046 = vpop.f32.mrf.mxu0
        %6047 = vdwg.mxu0
        %6048 = vmatpush.bf16.msra.mxu0 %v5232
        %6049 = vmatpush.bf16.msra.mxu0 %v5224
        %6050 = vmatpush.bf16.msra.mxu0 %v5216
        %6051 = vmatpush.bf16.msra.mxu0 %v5208
        %6052 = vmatpush.bf16.msra.mxu0 %v5200
        %6053 = vmatpush.bf16.msra.mxu0 %v5192
        %6054 = vmatpush.bf16.msra.mxu0 %v5184
        %6055 = vmatpush.bf16.msra.mxu0 %v5176
        %6056 = vmatmul.bf16.gmra.mxu0 %v3298
        %v6057 = vpop.f32.mrf.mxu0
        %v6058 = vadd.f32 %v6045, %v6057
        %v6059 = vpop.f32.mrf.mxu0
        %6060 = vdwg.mxu0
        %6061 = vmatpush.bf16.msra.mxu0 %v5296
        %6062 = vmatpush.bf16.msra.mxu0 %v5288
        %6063 = vmatpush.bf16.msra.mxu0 %v5280
        %6064 = vmatpush.bf16.msra.mxu0 %v5272
        %6065 = vmatpush.bf16.msra.mxu0 %v5264
        %6066 = vmatpush.bf16.msra.mxu0 %v5256
        %6067 = vmatpush.bf16.msra.mxu0 %v5248
        %6068 = vmatpush.bf16.msra.mxu0 %v5240
        %6069 = vmatmul.bf16.gmra.mxu0 %v3299
        %v6070 = vpop.f32.mrf.mxu0
        %v6071 = vadd.f32 %v6058, %v6070
        %v6072 = vpop.f32.mrf.mxu0
        %6073 = vdwg.mxu0
        %6074 = vmatpush.bf16.msra.mxu0 %v5360
        %6075 = vmatpush.bf16.msra.mxu0 %v5352
        %6076 = vmatpush.bf16.msra.mxu0 %v5344
        %6077 = vmatpush.bf16.msra.mxu0 %v5336
        %6078 = vmatpush.bf16.msra.mxu0 %v5328
        %6079 = vmatpush.bf16.msra.mxu0 %v5320
        %6080 = vmatpush.bf16.msra.mxu0 %v5312
        %6081 = vmatpush.bf16.msra.mxu0 %v5304
        %6082 = vmatmul.bf16.gmra.mxu0 %v3300
        %v6083 = vpop.f32.mrf.mxu0
        %v6084 = vadd.f32 %v6071, %v6083
        %v6085 = vpop.f32.mrf.mxu0
        %6086 = vdwg.mxu0
        %6087 = vmatpush.bf16.msra.mxu0 %v4913
        %6088 = vmatpush.bf16.msra.mxu0 %v4905
        %6089 = vmatpush.bf16.msra.mxu0 %v4897
        %6090 = vmatpush.bf16.msra.mxu0 %v4889
        %6091 = vmatpush.bf16.msra.mxu0 %v4881
        %6092 = vmatpush.bf16.msra.mxu0 %v4873
        %6093 = vmatpush.bf16.msra.mxu0 %v4865
        %6094 = vmatpush.bf16.msra.mxu0 %v4857
        %6095 = vmatmul.bf16.gmra.mxu0 %v3293
        %v6096 = vpop.f32.mrf.mxu0
        %v6097 = vadd.f32 %v3305, %v6096
        %v6098 = vpop.f32.mrf.mxu0
        %6099 = vdwg.mxu0
        %6100 = vmatpush.bf16.msra.mxu0 %v4977
        %6101 = vmatpush.bf16.msra.mxu0 %v4969
        %6102 = vmatpush.bf16.msra.mxu0 %v4961
        %6103 = vmatpush.bf16.msra.mxu0 %v4953
        %6104 = vmatpush.bf16.msra.mxu0 %v4945
        %6105 = vmatpush.bf16.msra.mxu0 %v4937
        %6106 = vmatpush.bf16.msra.mxu0 %v4929
        %6107 = vmatpush.bf16.msra.mxu0 %v4921
        %6108 = vmatmul.bf16.gmra.mxu0 %v3294
        %v6109 = vpop.f32.mrf.mxu0
        %v6110 = vadd.f32 %v6097, %v6109
        %v6111 = vpop.f32.mrf.mxu0
        %6112 = vdwg.mxu0
        %6113 = vmatpush.bf16.msra.mxu0 %v5041
        %6114 = vmatpush.bf16.msra.mxu0 %v5033
        %6115 = vmatpush.bf16.msra.mxu0 %v5025
        %6116 = vmatpush.bf16.msra.mxu0 %v5017
        %6117 = vmatpush.bf16.msra.mxu0 %v5009
        %6118 = vmatpush.bf16.msra.mxu0 %v5001
        %6119 = vmatpush.bf16.msra.mxu0 %v4993
        %6120 = vmatpush.bf16.msra.mxu0 %v4985
        %6121 = vmatmul.bf16.gmra.mxu0 %v3295
        %v6122 = vpop.f32.mrf.mxu0
        %v6123 = vadd.f32 %v6110, %v6122
        %v6124 = vpop.f32.mrf.mxu0
        %6125 = vdwg.mxu0
        %6126 = vmatpush.bf16.msra.mxu0 %v5105
        %6127 = vmatpush.bf16.msra.mxu0 %v5097
        %6128 = vmatpush.bf16.msra.mxu0 %v5089
        %6129 = vmatpush.bf16.msra.mxu0 %v5081
        %6130 = vmatpush.bf16.msra.mxu0 %v5073
        %6131 = vmatpush.bf16.msra.mxu0 %v5065
        %6132 = vmatpush.bf16.msra.mxu0 %v5057
        %6133 = vmatpush.bf16.msra.mxu0 %v5049
        %6134 = vmatmul.bf16.gmra.mxu0 %v3296
        %v6135 = vpop.f32.mrf.mxu0
        %v6136 = vadd.f32 %v6123, %v6135
        %v6137 = vpop.f32.mrf.mxu0
        %6138 = vdwg.mxu0
        %6139 = vmatpush.bf16.msra.mxu0 %v5169
        %6140 = vmatpush.bf16.msra.mxu0 %v5161
        %6141 = vmatpush.bf16.msra.mxu0 %v5153
        %6142 = vmatpush.bf16.msra.mxu0 %v5145
        %6143 = vmatpush.bf16.msra.mxu0 %v5137
        %6144 = vmatpush.bf16.msra.mxu0 %v5129
        %6145 = vmatpush.bf16.msra.mxu0 %v5121
        %6146 = vmatpush.bf16.msra.mxu0 %v5113
        %6147 = vmatmul.bf16.gmra.mxu0 %v3297
        %v6148 = vpop.f32.mrf.mxu0
        %v6149 = vadd.f32 %v6136, %v6148
        %v6150 = vpop.f32.mrf.mxu0
        %6151 = vdwg.mxu0
        %6152 = vmatpush.bf16.msra.mxu0 %v5233
        %6153 = vmatpush.bf16.msra.mxu0 %v5225
        %6154 = vmatpush.bf16.msra.mxu0 %v5217
        %6155 = vmatpush.bf16.msra.mxu0 %v5209
        %6156 = vmatpush.bf16.msra.mxu0 %v5201
        %6157 = vmatpush.bf16.msra.mxu0 %v5193
        %6158 = vmatpush.bf16.msra.mxu0 %v5185
        %6159 = vmatpush.bf16.msra.mxu0 %v5177
        %6160 = vmatmul.bf16.gmra.mxu0 %v3298
        %v6161 = vpop.f32.mrf.mxu0
        %v6162 = vadd.f32 %v6149, %v6161
        %v6163 = vpop.f32.mrf.mxu0
        %6164 = vdwg.mxu0
        %6165 = vmatpush.bf16.msra.mxu0 %v5297
        %6166 = vmatpush.bf16.msra.mxu0 %v5289
        %6167 = vmatpush.bf16.msra.mxu0 %v5281
        %6168 = vmatpush.bf16.msra.mxu0 %v5273
        %6169 = vmatpush.bf16.msra.mxu0 %v5265
        %6170 = vmatpush.bf16.msra.mxu0 %v5257
        %6171 = vmatpush.bf16.msra.mxu0 %v5249
        %6172 = vmatpush.bf16.msra.mxu0 %v5241
        %6173 = vmatmul.bf16.gmra.mxu0 %v3299
        %v6174 = vpop.f32.mrf.mxu0
        %v6175 = vadd.f32 %v6162, %v6174
        %v6176 = vpop.f32.mrf.mxu0
        %6177 = vdwg.mxu0
        %6178 = vmatpush.bf16.msra.mxu0 %v5361
        %6179 = vmatpush.bf16.msra.mxu0 %v5353
        %6180 = vmatpush.bf16.msra.mxu0 %v5345
        %6181 = vmatpush.bf16.msra.mxu0 %v5337
        %6182 = vmatpush.bf16.msra.mxu0 %v5329
        %6183 = vmatpush.bf16.msra.mxu0 %v5321
        %6184 = vmatpush.bf16.msra.mxu0 %v5313
        %6185 = vmatpush.bf16.msra.mxu0 %v5305
        %6186 = vmatmul.bf16.gmra.mxu0 %v3300
        %v6187 = vpop.f32.mrf.mxu0
        %v6188 = vadd.f32 %v6175, %v6187
        %v6189 = vpop.f32.mrf.mxu0
        %6190 = vdwg.mxu0
        %6191 = vmatpush.bf16.msra.mxu0 %v4914
        %6192 = vmatpush.bf16.msra.mxu0 %v4906
        %6193 = vmatpush.bf16.msra.mxu0 %v4898
        %6194 = vmatpush.bf16.msra.mxu0 %v4890
        %6195 = vmatpush.bf16.msra.mxu0 %v4882
        %6196 = vmatpush.bf16.msra.mxu0 %v4874
        %6197 = vmatpush.bf16.msra.mxu0 %v4866
        %6198 = vmatpush.bf16.msra.mxu0 %v4858
        %6199 = vmatmul.bf16.gmra.mxu0 %v3293
        %v6200 = vpop.f32.mrf.mxu0
        %v6201 = vadd.f32 %v3306, %v6200
        %v6202 = vpop.f32.mrf.mxu0
        %6203 = vdwg.mxu0
        %6204 = vmatpush.bf16.msra.mxu0 %v4978
        %6205 = vmatpush.bf16.msra.mxu0 %v4970
        %6206 = vmatpush.bf16.msra.mxu0 %v4962
        %6207 = vmatpush.bf16.msra.mxu0 %v4954
        %6208 = vmatpush.bf16.msra.mxu0 %v4946
        %6209 = vmatpush.bf16.msra.mxu0 %v4938
        %6210 = vmatpush.bf16.msra.mxu0 %v4930
        %6211 = vmatpush.bf16.msra.mxu0 %v4922
        %6212 = vmatmul.bf16.gmra.mxu0 %v3294
        %v6213 = vpop.f32.mrf.mxu0
        %v6214 = vadd.f32 %v6201, %v6213
        %v6215 = vpop.f32.mrf.mxu0
        %6216 = vdwg.mxu0
        %6217 = vmatpush.bf16.msra.mxu0 %v5042
        %6218 = vmatpush.bf16.msra.mxu0 %v5034
        %6219 = vmatpush.bf16.msra.mxu0 %v5026
        %6220 = vmatpush.bf16.msra.mxu0 %v5018
        %6221 = vmatpush.bf16.msra.mxu0 %v5010
        %6222 = vmatpush.bf16.msra.mxu0 %v5002
        %6223 = vmatpush.bf16.msra.mxu0 %v4994
        %6224 = vmatpush.bf16.msra.mxu0 %v4986
        %6225 = vmatmul.bf16.gmra.mxu0 %v3295
        %v6226 = vpop.f32.mrf.mxu0
        %v6227 = vadd.f32 %v6214, %v6226
        %v6228 = vpop.f32.mrf.mxu0
        %6229 = vdwg.mxu0
        %6230 = vmatpush.bf16.msra.mxu0 %v5106
        %6231 = vmatpush.bf16.msra.mxu0 %v5098
        %6232 = vmatpush.bf16.msra.mxu0 %v5090
        %6233 = vmatpush.bf16.msra.mxu0 %v5082
        %6234 = vmatpush.bf16.msra.mxu0 %v5074
        %6235 = vmatpush.bf16.msra.mxu0 %v5066
        %6236 = vmatpush.bf16.msra.mxu0 %v5058
        %6237 = vmatpush.bf16.msra.mxu0 %v5050
        %6238 = vmatmul.bf16.gmra.mxu0 %v3296
        %v6239 = vpop.f32.mrf.mxu0
        %v6240 = vadd.f32 %v6227, %v6239
        %v6241 = vpop.f32.mrf.mxu0
        %6242 = vdwg.mxu0
        %6243 = vmatpush.bf16.msra.mxu0 %v5170
        %6244 = vmatpush.bf16.msra.mxu0 %v5162
        %6245 = vmatpush.bf16.msra.mxu0 %v5154
        %6246 = vmatpush.bf16.msra.mxu0 %v5146
        %6247 = vmatpush.bf16.msra.mxu0 %v5138
        %6248 = vmatpush.bf16.msra.mxu0 %v5130
        %6249 = vmatpush.bf16.msra.mxu0 %v5122
        %6250 = vmatpush.bf16.msra.mxu0 %v5114
        %6251 = vmatmul.bf16.gmra.mxu0 %v3297
        %v6252 = vpop.f32.mrf.mxu0
        %v6253 = vadd.f32 %v6240, %v6252
        %v6254 = vpop.f32.mrf.mxu0
        %6255 = vdwg.mxu0
        %6256 = vmatpush.bf16.msra.mxu0 %v5234
        %6257 = vmatpush.bf16.msra.mxu0 %v5226
        %6258 = vmatpush.bf16.msra.mxu0 %v5218
        %6259 = vmatpush.bf16.msra.mxu0 %v5210
        %6260 = vmatpush.bf16.msra.mxu0 %v5202
        %6261 = vmatpush.bf16.msra.mxu0 %v5194
        %6262 = vmatpush.bf16.msra.mxu0 %v5186
        %6263 = vmatpush.bf16.msra.mxu0 %v5178
        %6264 = vmatmul.bf16.gmra.mxu0 %v3298
        %v6265 = vpop.f32.mrf.mxu0
        %v6266 = vadd.f32 %v6253, %v6265
        %v6267 = vpop.f32.mrf.mxu0
        %6268 = vdwg.mxu0
        %6269 = vmatpush.bf16.msra.mxu0 %v5298
        %6270 = vmatpush.bf16.msra.mxu0 %v5290
        %6271 = vmatpush.bf16.msra.mxu0 %v5282
        %6272 = vmatpush.bf16.msra.mxu0 %v5274
        %6273 = vmatpush.bf16.msra.mxu0 %v5266
        %6274 = vmatpush.bf16.msra.mxu0 %v5258
        %6275 = vmatpush.bf16.msra.mxu0 %v5250
        %6276 = vmatpush.bf16.msra.mxu0 %v5242
        %6277 = vmatmul.bf16.gmra.mxu0 %v3299
        %v6278 = vpop.f32.mrf.mxu0
        %v6279 = vadd.f32 %v6266, %v6278
        %v6280 = vpop.f32.mrf.mxu0
        %6281 = vdwg.mxu0
        %6282 = vmatpush.bf16.msra.mxu0 %v5362
        %6283 = vmatpush.bf16.msra.mxu0 %v5354
        %6284 = vmatpush.bf16.msra.mxu0 %v5346
        %6285 = vmatpush.bf16.msra.mxu0 %v5338
        %6286 = vmatpush.bf16.msra.mxu0 %v5330
        %6287 = vmatpush.bf16.msra.mxu0 %v5322
        %6288 = vmatpush.bf16.msra.mxu0 %v5314
        %6289 = vmatpush.bf16.msra.mxu0 %v5306
        %6290 = vmatmul.bf16.gmra.mxu0 %v3300
        %v6291 = vpop.f32.mrf.mxu0
        %v6292 = vadd.f32 %v6279, %v6291
        %v6293 = vpop.f32.mrf.mxu0
        %6294 = vdwg.mxu0
        %6295 = vmatpush.bf16.msra.mxu0 %v4915
        %6296 = vmatpush.bf16.msra.mxu0 %v4907
        %6297 = vmatpush.bf16.msra.mxu0 %v4899
        %6298 = vmatpush.bf16.msra.mxu0 %v4891
        %6299 = vmatpush.bf16.msra.mxu0 %v4883
        %6300 = vmatpush.bf16.msra.mxu0 %v4875
        %6301 = vmatpush.bf16.msra.mxu0 %v4867
        %6302 = vmatpush.bf16.msra.mxu0 %v4859
        %6303 = vmatmul.bf16.gmra.mxu0 %v3293
        %v6304 = vpop.f32.mrf.mxu0
        %v6305 = vadd.f32 %v3307, %v6304
        %v6306 = vpop.f32.mrf.mxu0
        %6307 = vdwg.mxu0
        %6308 = vmatpush.bf16.msra.mxu0 %v4979
        %6309 = vmatpush.bf16.msra.mxu0 %v4971
        %6310 = vmatpush.bf16.msra.mxu0 %v4963
        %6311 = vmatpush.bf16.msra.mxu0 %v4955
        %6312 = vmatpush.bf16.msra.mxu0 %v4947
        %6313 = vmatpush.bf16.msra.mxu0 %v4939
        %6314 = vmatpush.bf16.msra.mxu0 %v4931
        %6315 = vmatpush.bf16.msra.mxu0 %v4923
        %6316 = vmatmul.bf16.gmra.mxu0 %v3294
        %v6317 = vpop.f32.mrf.mxu0
        %v6318 = vadd.f32 %v6305, %v6317
        %v6319 = vpop.f32.mrf.mxu0
        %6320 = vdwg.mxu0
        %6321 = vmatpush.bf16.msra.mxu0 %v5043
        %6322 = vmatpush.bf16.msra.mxu0 %v5035
        %6323 = vmatpush.bf16.msra.mxu0 %v5027
        %6324 = vmatpush.bf16.msra.mxu0 %v5019
        %6325 = vmatpush.bf16.msra.mxu0 %v5011
        %6326 = vmatpush.bf16.msra.mxu0 %v5003
        %6327 = vmatpush.bf16.msra.mxu0 %v4995
        %6328 = vmatpush.bf16.msra.mxu0 %v4987
        %6329 = vmatmul.bf16.gmra.mxu0 %v3295
        %v6330 = vpop.f32.mrf.mxu0
        %v6331 = vadd.f32 %v6318, %v6330
        %v6332 = vpop.f32.mrf.mxu0
        %6333 = vdwg.mxu0
        %6334 = vmatpush.bf16.msra.mxu0 %v5107
        %6335 = vmatpush.bf16.msra.mxu0 %v5099
        %6336 = vmatpush.bf16.msra.mxu0 %v5091
        %6337 = vmatpush.bf16.msra.mxu0 %v5083
        %6338 = vmatpush.bf16.msra.mxu0 %v5075
        %6339 = vmatpush.bf16.msra.mxu0 %v5067
        %6340 = vmatpush.bf16.msra.mxu0 %v5059
        %6341 = vmatpush.bf16.msra.mxu0 %v5051
        %6342 = vmatmul.bf16.gmra.mxu0 %v3296
        %v6343 = vpop.f32.mrf.mxu0
        %v6344 = vadd.f32 %v6331, %v6343
        %v6345 = vpop.f32.mrf.mxu0
        %6346 = vdwg.mxu0
        %6347 = vmatpush.bf16.msra.mxu0 %v5171
        %6348 = vmatpush.bf16.msra.mxu0 %v5163
        %6349 = vmatpush.bf16.msra.mxu0 %v5155
        %6350 = vmatpush.bf16.msra.mxu0 %v5147
        %6351 = vmatpush.bf16.msra.mxu0 %v5139
        %6352 = vmatpush.bf16.msra.mxu0 %v5131
        %6353 = vmatpush.bf16.msra.mxu0 %v5123
        %6354 = vmatpush.bf16.msra.mxu0 %v5115
        %6355 = vmatmul.bf16.gmra.mxu0 %v3297
        %v6356 = vpop.f32.mrf.mxu0
        %v6357 = vadd.f32 %v6344, %v6356
        %v6358 = vpop.f32.mrf.mxu0
        %6359 = vdwg.mxu0
        %6360 = vmatpush.bf16.msra.mxu0 %v5235
        %6361 = vmatpush.bf16.msra.mxu0 %v5227
        %6362 = vmatpush.bf16.msra.mxu0 %v5219
        %6363 = vmatpush.bf16.msra.mxu0 %v5211
        %6364 = vmatpush.bf16.msra.mxu0 %v5203
        %6365 = vmatpush.bf16.msra.mxu0 %v5195
        %6366 = vmatpush.bf16.msra.mxu0 %v5187
        %6367 = vmatpush.bf16.msra.mxu0 %v5179
        %6368 = vmatmul.bf16.gmra.mxu0 %v3298
        %v6369 = vpop.f32.mrf.mxu0
        %v6370 = vadd.f32 %v6357, %v6369
        %v6371 = vpop.f32.mrf.mxu0
        %6372 = vdwg.mxu0
        %6373 = vmatpush.bf16.msra.mxu0 %v5299
        %6374 = vmatpush.bf16.msra.mxu0 %v5291
        %6375 = vmatpush.bf16.msra.mxu0 %v5283
        %6376 = vmatpush.bf16.msra.mxu0 %v5275
        %6377 = vmatpush.bf16.msra.mxu0 %v5267
        %6378 = vmatpush.bf16.msra.mxu0 %v5259
        %6379 = vmatpush.bf16.msra.mxu0 %v5251
        %6380 = vmatpush.bf16.msra.mxu0 %v5243
        %6381 = vmatmul.bf16.gmra.mxu0 %v3299
        %v6382 = vpop.f32.mrf.mxu0
        %v6383 = vadd.f32 %v6370, %v6382
        %v6384 = vpop.f32.mrf.mxu0
        %6385 = vdwg.mxu0
        %6386 = vmatpush.bf16.msra.mxu0 %v5363
        %6387 = vmatpush.bf16.msra.mxu0 %v5355
        %6388 = vmatpush.bf16.msra.mxu0 %v5347
        %6389 = vmatpush.bf16.msra.mxu0 %v5339
        %6390 = vmatpush.bf16.msra.mxu0 %v5331
        %6391 = vmatpush.bf16.msra.mxu0 %v5323
        %6392 = vmatpush.bf16.msra.mxu0 %v5315
        %6393 = vmatpush.bf16.msra.mxu0 %v5307
        %6394 = vmatmul.bf16.gmra.mxu0 %v3300
        %v6395 = vpop.f32.mrf.mxu0
        %v6396 = vadd.f32 %v6383, %v6395
        %v6397 = vpop.f32.mrf.mxu0
        %6398 = vdwg.mxu0
        %6399 = vmatpush.bf16.msra.mxu0 %v4916
        %6400 = vmatpush.bf16.msra.mxu0 %v4908
        %6401 = vmatpush.bf16.msra.mxu0 %v4900
        %6402 = vmatpush.bf16.msra.mxu0 %v4892
        %6403 = vmatpush.bf16.msra.mxu0 %v4884
        %6404 = vmatpush.bf16.msra.mxu0 %v4876
        %6405 = vmatpush.bf16.msra.mxu0 %v4868
        %6406 = vmatpush.bf16.msra.mxu0 %v4860
        %6407 = vmatmul.bf16.gmra.mxu0 %v3293
        %v6408 = vpop.f32.mrf.mxu0
        %v6409 = vadd.f32 %v3308, %v6408
        %v6410 = vpop.f32.mrf.mxu0
        %6411 = vdwg.mxu0
        %6412 = vmatpush.bf16.msra.mxu0 %v4980
        %6413 = vmatpush.bf16.msra.mxu0 %v4972
        %6414 = vmatpush.bf16.msra.mxu0 %v4964
        %6415 = vmatpush.bf16.msra.mxu0 %v4956
        %6416 = vmatpush.bf16.msra.mxu0 %v4948
        %6417 = vmatpush.bf16.msra.mxu0 %v4940
        %6418 = vmatpush.bf16.msra.mxu0 %v4932
        %6419 = vmatpush.bf16.msra.mxu0 %v4924
        %6420 = vmatmul.bf16.gmra.mxu0 %v3294
        %v6421 = vpop.f32.mrf.mxu0
        %v6422 = vadd.f32 %v6409, %v6421
        %v6423 = vpop.f32.mrf.mxu0
        %6424 = vdwg.mxu0
        %6425 = vmatpush.bf16.msra.mxu0 %v5044
        %6426 = vmatpush.bf16.msra.mxu0 %v5036
        %6427 = vmatpush.bf16.msra.mxu0 %v5028
        %6428 = vmatpush.bf16.msra.mxu0 %v5020
        %6429 = vmatpush.bf16.msra.mxu0 %v5012
        %6430 = vmatpush.bf16.msra.mxu0 %v5004
        %6431 = vmatpush.bf16.msra.mxu0 %v4996
        %6432 = vmatpush.bf16.msra.mxu0 %v4988
        %6433 = vmatmul.bf16.gmra.mxu0 %v3295
        %v6434 = vpop.f32.mrf.mxu0
        %v6435 = vadd.f32 %v6422, %v6434
        %v6436 = vpop.f32.mrf.mxu0
        %6437 = vdwg.mxu0
        %6438 = vmatpush.bf16.msra.mxu0 %v5108
        %6439 = vmatpush.bf16.msra.mxu0 %v5100
        %6440 = vmatpush.bf16.msra.mxu0 %v5092
        %6441 = vmatpush.bf16.msra.mxu0 %v5084
        %6442 = vmatpush.bf16.msra.mxu0 %v5076
        %6443 = vmatpush.bf16.msra.mxu0 %v5068
        %6444 = vmatpush.bf16.msra.mxu0 %v5060
        %6445 = vmatpush.bf16.msra.mxu0 %v5052
        %6446 = vmatmul.bf16.gmra.mxu0 %v3296
        %v6447 = vpop.f32.mrf.mxu0
        %v6448 = vadd.f32 %v6435, %v6447
        %v6449 = vpop.f32.mrf.mxu0
        %6450 = vdwg.mxu0
        %6451 = vmatpush.bf16.msra.mxu0 %v5172
        %6452 = vmatpush.bf16.msra.mxu0 %v5164
        %6453 = vmatpush.bf16.msra.mxu0 %v5156
        %6454 = vmatpush.bf16.msra.mxu0 %v5148
        %6455 = vmatpush.bf16.msra.mxu0 %v5140
        %6456 = vmatpush.bf16.msra.mxu0 %v5132
        %6457 = vmatpush.bf16.msra.mxu0 %v5124
        %6458 = vmatpush.bf16.msra.mxu0 %v5116
        %6459 = vmatmul.bf16.gmra.mxu0 %v3297
        %v6460 = vpop.f32.mrf.mxu0
        %v6461 = vadd.f32 %v6448, %v6460
        %v6462 = vpop.f32.mrf.mxu0
        %6463 = vdwg.mxu0
        %6464 = vmatpush.bf16.msra.mxu0 %v5236
        %6465 = vmatpush.bf16.msra.mxu0 %v5228
        %6466 = vmatpush.bf16.msra.mxu0 %v5220
        %6467 = vmatpush.bf16.msra.mxu0 %v5212
        %6468 = vmatpush.bf16.msra.mxu0 %v5204
        %6469 = vmatpush.bf16.msra.mxu0 %v5196
        %6470 = vmatpush.bf16.msra.mxu0 %v5188
        %6471 = vmatpush.bf16.msra.mxu0 %v5180
        %6472 = vmatmul.bf16.gmra.mxu0 %v3298
        %v6473 = vpop.f32.mrf.mxu0
        %v6474 = vadd.f32 %v6461, %v6473
        %v6475 = vpop.f32.mrf.mxu0
        %6476 = vdwg.mxu0
        %6477 = vmatpush.bf16.msra.mxu0 %v5300
        %6478 = vmatpush.bf16.msra.mxu0 %v5292
        %6479 = vmatpush.bf16.msra.mxu0 %v5284
        %6480 = vmatpush.bf16.msra.mxu0 %v5276
        %6481 = vmatpush.bf16.msra.mxu0 %v5268
        %6482 = vmatpush.bf16.msra.mxu0 %v5260
        %6483 = vmatpush.bf16.msra.mxu0 %v5252
        %6484 = vmatpush.bf16.msra.mxu0 %v5244
        %6485 = vmatmul.bf16.gmra.mxu0 %v3299
        %v6486 = vpop.f32.mrf.mxu0
        %v6487 = vadd.f32 %v6474, %v6486
        %v6488 = vpop.f32.mrf.mxu0
        %6489 = vdwg.mxu0
        %6490 = vmatpush.bf16.msra.mxu0 %v5364
        %6491 = vmatpush.bf16.msra.mxu0 %v5356
        %6492 = vmatpush.bf16.msra.mxu0 %v5348
        %6493 = vmatpush.bf16.msra.mxu0 %v5340
        %6494 = vmatpush.bf16.msra.mxu0 %v5332
        %6495 = vmatpush.bf16.msra.mxu0 %v5324
        %6496 = vmatpush.bf16.msra.mxu0 %v5316
        %6497 = vmatpush.bf16.msra.mxu0 %v5308
        %6498 = vmatmul.bf16.gmra.mxu0 %v3300
        %v6499 = vpop.f32.mrf.mxu0
        %v6500 = vadd.f32 %v6487, %v6499
        %v6501 = vpop.f32.mrf.mxu0
        %6502 = vdwg.mxu0
        %6503 = vmatpush.bf16.msra.mxu0 %v4917
        %6504 = vmatpush.bf16.msra.mxu0 %v4909
        %6505 = vmatpush.bf16.msra.mxu0 %v4901
        %6506 = vmatpush.bf16.msra.mxu0 %v4893
        %6507 = vmatpush.bf16.msra.mxu0 %v4885
        %6508 = vmatpush.bf16.msra.mxu0 %v4877
        %6509 = vmatpush.bf16.msra.mxu0 %v4869
        %6510 = vmatpush.bf16.msra.mxu0 %v4861
        %6511 = vmatmul.bf16.gmra.mxu0 %v3293
        %v6512 = vpop.f32.mrf.mxu0
        %v6513 = vadd.f32 %v3309, %v6512
        %v6514 = vpop.f32.mrf.mxu0
        %6515 = vdwg.mxu0
        %6516 = vmatpush.bf16.msra.mxu0 %v4981
        %6517 = vmatpush.bf16.msra.mxu0 %v4973
        %6518 = vmatpush.bf16.msra.mxu0 %v4965
        %6519 = vmatpush.bf16.msra.mxu0 %v4957
        %6520 = vmatpush.bf16.msra.mxu0 %v4949
        %6521 = vmatpush.bf16.msra.mxu0 %v4941
        %6522 = vmatpush.bf16.msra.mxu0 %v4933
        %6523 = vmatpush.bf16.msra.mxu0 %v4925
        %6524 = vmatmul.bf16.gmra.mxu0 %v3294
        %v6525 = vpop.f32.mrf.mxu0
        %v6526 = vadd.f32 %v6513, %v6525
        %v6527 = vpop.f32.mrf.mxu0
        %6528 = vdwg.mxu0
        %6529 = vmatpush.bf16.msra.mxu0 %v5045
        %6530 = vmatpush.bf16.msra.mxu0 %v5037
        %6531 = vmatpush.bf16.msra.mxu0 %v5029
        %6532 = vmatpush.bf16.msra.mxu0 %v5021
        %6533 = vmatpush.bf16.msra.mxu0 %v5013
        %6534 = vmatpush.bf16.msra.mxu0 %v5005
        %6535 = vmatpush.bf16.msra.mxu0 %v4997
        %6536 = vmatpush.bf16.msra.mxu0 %v4989
        %6537 = vmatmul.bf16.gmra.mxu0 %v3295
        %v6538 = vpop.f32.mrf.mxu0
        %v6539 = vadd.f32 %v6526, %v6538
        %v6540 = vpop.f32.mrf.mxu0
        %6541 = vdwg.mxu0
        %6542 = vmatpush.bf16.msra.mxu0 %v5109
        %6543 = vmatpush.bf16.msra.mxu0 %v5101
        %6544 = vmatpush.bf16.msra.mxu0 %v5093
        %6545 = vmatpush.bf16.msra.mxu0 %v5085
        %6546 = vmatpush.bf16.msra.mxu0 %v5077
        %6547 = vmatpush.bf16.msra.mxu0 %v5069
        %6548 = vmatpush.bf16.msra.mxu0 %v5061
        %6549 = vmatpush.bf16.msra.mxu0 %v5053
        %6550 = vmatmul.bf16.gmra.mxu0 %v3296
        %v6551 = vpop.f32.mrf.mxu0
        %v6552 = vadd.f32 %v6539, %v6551
        %v6553 = vpop.f32.mrf.mxu0
        %6554 = vdwg.mxu0
        %6555 = vmatpush.bf16.msra.mxu0 %v5173
        %6556 = vmatpush.bf16.msra.mxu0 %v5165
        %6557 = vmatpush.bf16.msra.mxu0 %v5157
        %6558 = vmatpush.bf16.msra.mxu0 %v5149
        %6559 = vmatpush.bf16.msra.mxu0 %v5141
        %6560 = vmatpush.bf16.msra.mxu0 %v5133
        %6561 = vmatpush.bf16.msra.mxu0 %v5125
        %6562 = vmatpush.bf16.msra.mxu0 %v5117
        %6563 = vmatmul.bf16.gmra.mxu0 %v3297
        %v6564 = vpop.f32.mrf.mxu0
        %v6565 = vadd.f32 %v6552, %v6564
        %v6566 = vpop.f32.mrf.mxu0
        %6567 = vdwg.mxu0
        %6568 = vmatpush.bf16.msra.mxu0 %v5237
        %6569 = vmatpush.bf16.msra.mxu0 %v5229
        %6570 = vmatpush.bf16.msra.mxu0 %v5221
        %6571 = vmatpush.bf16.msra.mxu0 %v5213
        %6572 = vmatpush.bf16.msra.mxu0 %v5205
        %6573 = vmatpush.bf16.msra.mxu0 %v5197
        %6574 = vmatpush.bf16.msra.mxu0 %v5189
        %6575 = vmatpush.bf16.msra.mxu0 %v5181
        %6576 = vmatmul.bf16.gmra.mxu0 %v3298
        %v6577 = vpop.f32.mrf.mxu0
        %v6578 = vadd.f32 %v6565, %v6577
        %v6579 = vpop.f32.mrf.mxu0
        %6580 = vdwg.mxu0
        %6581 = vmatpush.bf16.msra.mxu0 %v5301
        %6582 = vmatpush.bf16.msra.mxu0 %v5293
        %6583 = vmatpush.bf16.msra.mxu0 %v5285
        %6584 = vmatpush.bf16.msra.mxu0 %v5277
        %6585 = vmatpush.bf16.msra.mxu0 %v5269
        %6586 = vmatpush.bf16.msra.mxu0 %v5261
        %6587 = vmatpush.bf16.msra.mxu0 %v5253
        %6588 = vmatpush.bf16.msra.mxu0 %v5245
        %6589 = vmatmul.bf16.gmra.mxu0 %v3299
        %v6590 = vpop.f32.mrf.mxu0
        %v6591 = vadd.f32 %v6578, %v6590
        %v6592 = vpop.f32.mrf.mxu0
        %6593 = vdwg.mxu0
        %6594 = vmatpush.bf16.msra.mxu0 %v5365
        %6595 = vmatpush.bf16.msra.mxu0 %v5357
        %6596 = vmatpush.bf16.msra.mxu0 %v5349
        %6597 = vmatpush.bf16.msra.mxu0 %v5341
        %6598 = vmatpush.bf16.msra.mxu0 %v5333
        %6599 = vmatpush.bf16.msra.mxu0 %v5325
        %6600 = vmatpush.bf16.msra.mxu0 %v5317
        %6601 = vmatpush.bf16.msra.mxu0 %v5309
        %6602 = vmatmul.bf16.gmra.mxu0 %v3300
        %v6603 = vpop.f32.mrf.mxu0
        %v6604 = vadd.f32 %v6591, %v6603
        %v6605 = vpop.f32.mrf.mxu0
        %6606 = vdwg.mxu0
        %6607 = vmatpush.bf16.msra.mxu0 %v4918
        %6608 = vmatpush.bf16.msra.mxu0 %v4910
        %6609 = vmatpush.bf16.msra.mxu0 %v4902
        %6610 = vmatpush.bf16.msra.mxu0 %v4894
        %6611 = vmatpush.bf16.msra.mxu0 %v4886
        %6612 = vmatpush.bf16.msra.mxu0 %v4878
        %6613 = vmatpush.bf16.msra.mxu0 %v4870
        %6614 = vmatpush.bf16.msra.mxu0 %v4862
        %6615 = vmatmul.bf16.gmra.mxu0 %v3293
        %v6616 = vpop.f32.mrf.mxu0
        %v6617 = vadd.f32 %v3310, %v6616
        %v6618 = vpop.f32.mrf.mxu0
        %6619 = vdwg.mxu0
        %6620 = vmatpush.bf16.msra.mxu0 %v4982
        %6621 = vmatpush.bf16.msra.mxu0 %v4974
        %6622 = vmatpush.bf16.msra.mxu0 %v4966
        %6623 = vmatpush.bf16.msra.mxu0 %v4958
        %6624 = vmatpush.bf16.msra.mxu0 %v4950
        %6625 = vmatpush.bf16.msra.mxu0 %v4942
        %6626 = vmatpush.bf16.msra.mxu0 %v4934
        %6627 = vmatpush.bf16.msra.mxu0 %v4926
        %6628 = vmatmul.bf16.gmra.mxu0 %v3294
        %v6629 = vpop.f32.mrf.mxu0
        %v6630 = vadd.f32 %v6617, %v6629
        %v6631 = vpop.f32.mrf.mxu0
        %6632 = vdwg.mxu0
        %6633 = vmatpush.bf16.msra.mxu0 %v5046
        %6634 = vmatpush.bf16.msra.mxu0 %v5038
        %6635 = vmatpush.bf16.msra.mxu0 %v5030
        %6636 = vmatpush.bf16.msra.mxu0 %v5022
        %6637 = vmatpush.bf16.msra.mxu0 %v5014
        %6638 = vmatpush.bf16.msra.mxu0 %v5006
        %6639 = vmatpush.bf16.msra.mxu0 %v4998
        %6640 = vmatpush.bf16.msra.mxu0 %v4990
        %6641 = vmatmul.bf16.gmra.mxu0 %v3295
        %v6642 = vpop.f32.mrf.mxu0
        %v6643 = vadd.f32 %v6630, %v6642
        %v6644 = vpop.f32.mrf.mxu0
        %6645 = vdwg.mxu0
        %6646 = vmatpush.bf16.msra.mxu0 %v5110
        %6647 = vmatpush.bf16.msra.mxu0 %v5102
        %6648 = vmatpush.bf16.msra.mxu0 %v5094
        %6649 = vmatpush.bf16.msra.mxu0 %v5086
        %6650 = vmatpush.bf16.msra.mxu0 %v5078
        %6651 = vmatpush.bf16.msra.mxu0 %v5070
        %6652 = vmatpush.bf16.msra.mxu0 %v5062
        %6653 = vmatpush.bf16.msra.mxu0 %v5054
        %6654 = vmatmul.bf16.gmra.mxu0 %v3296
        %v6655 = vpop.f32.mrf.mxu0
        %v6656 = vadd.f32 %v6643, %v6655
        %v6657 = vpop.f32.mrf.mxu0
        %6658 = vdwg.mxu0
        %6659 = vmatpush.bf16.msra.mxu0 %v5174
        %6660 = vmatpush.bf16.msra.mxu0 %v5166
        %6661 = vmatpush.bf16.msra.mxu0 %v5158
        %6662 = vmatpush.bf16.msra.mxu0 %v5150
        %6663 = vmatpush.bf16.msra.mxu0 %v5142
        %6664 = vmatpush.bf16.msra.mxu0 %v5134
        %6665 = vmatpush.bf16.msra.mxu0 %v5126
        %6666 = vmatpush.bf16.msra.mxu0 %v5118
        %6667 = vmatmul.bf16.gmra.mxu0 %v3297
        %v6668 = vpop.f32.mrf.mxu0
        %v6669 = vadd.f32 %v6656, %v6668
        %v6670 = vpop.f32.mrf.mxu0
        %6671 = vdwg.mxu0
        %6672 = vmatpush.bf16.msra.mxu0 %v5238
        %6673 = vmatpush.bf16.msra.mxu0 %v5230
        %6674 = vmatpush.bf16.msra.mxu0 %v5222
        %6675 = vmatpush.bf16.msra.mxu0 %v5214
        %6676 = vmatpush.bf16.msra.mxu0 %v5206
        %6677 = vmatpush.bf16.msra.mxu0 %v5198
        %6678 = vmatpush.bf16.msra.mxu0 %v5190
        %6679 = vmatpush.bf16.msra.mxu0 %v5182
        %6680 = vmatmul.bf16.gmra.mxu0 %v3298
        %v6681 = vpop.f32.mrf.mxu0
        %v6682 = vadd.f32 %v6669, %v6681
        %v6683 = vpop.f32.mrf.mxu0
        %6684 = vdwg.mxu0
        %6685 = vmatpush.bf16.msra.mxu0 %v5302
        %6686 = vmatpush.bf16.msra.mxu0 %v5294
        %6687 = vmatpush.bf16.msra.mxu0 %v5286
        %6688 = vmatpush.bf16.msra.mxu0 %v5278
        %6689 = vmatpush.bf16.msra.mxu0 %v5270
        %6690 = vmatpush.bf16.msra.mxu0 %v5262
        %6691 = vmatpush.bf16.msra.mxu0 %v5254
        %6692 = vmatpush.bf16.msra.mxu0 %v5246
        %6693 = vmatmul.bf16.gmra.mxu0 %v3299
        %v6694 = vpop.f32.mrf.mxu0
        %v6695 = vadd.f32 %v6682, %v6694
        %v6696 = vpop.f32.mrf.mxu0
        %6697 = vdwg.mxu0
        %6698 = vmatpush.bf16.msra.mxu0 %v5366
        %6699 = vmatpush.bf16.msra.mxu0 %v5358
        %6700 = vmatpush.bf16.msra.mxu0 %v5350
        %6701 = vmatpush.bf16.msra.mxu0 %v5342
        %6702 = vmatpush.bf16.msra.mxu0 %v5334
        %6703 = vmatpush.bf16.msra.mxu0 %v5326
        %6704 = vmatpush.bf16.msra.mxu0 %v5318
        %6705 = vmatpush.bf16.msra.mxu0 %v5310
        %6706 = vmatmul.bf16.gmra.mxu0 %v3300
        %v6707 = vpop.f32.mrf.mxu0
        %v6708 = vadd.f32 %v6695, %v6707
        %v6709 = vpop.f32.mrf.mxu0
        %6710 = vdwg.mxu0
        %vm6711 = vcmp.ge.f32.partialorder %v5980, 0.0
        %vm6712 = vcmp.ge.f32.partialorder %v6084, 0.0
        %vm6713 = vcmp.ge.f32.partialorder %v6188, 0.0
        %vm6714 = vcmp.ge.f32.partialorder %v6292, 0.0
        %vm6715 = vcmp.ge.f32.partialorder %v6396, 0.0
        %vm6716 = vcmp.ge.f32.partialorder %v6500, 0.0
        %vm6717 = vcmp.ge.f32.partialorder %v6604, 0.0
        %vm6718 = vcmp.ge.f32.partialorder %v6708, 0.0
        %v6719 = vmul.f32 %v5980, 0.01
        %v6720 = vmul.f32 %v6084, 0.01
        %v6721 = vmul.f32 %v6188, 0.01
        %v6722 = vmul.f32 %v6292, 0.01
        %v6723 = vmul.f32 %v6396, 0.01
        %v6724 = vmul.f32 %v6500, 0.01
        %v6725 = vmul.f32 %v6604, 0.01
        %v6726 = vmul.f32 %v6708, 0.01
        %v6727 = vsel %vm6711, %v5980, %v6719
        %v6728 = vsel %vm6712, %v6084, %v6720
        %v6729 = vsel %vm6713, %v6188, %v6721
        %v6730 = vsel %vm6714, %v6292, %v6722
        %v6731 = vsel %vm6715, %v6396, %v6723
        %v6732 = vsel %vm6716, %v6500, %v6724
        %v6733 = vsel %vm6717, %v6604, %v6725
        %v6734 = vsel %vm6718, %v6708, %v6726
        %6735 = vst [vmem:[#allocation2] sm:$0xff] %v6727
        %6736 = vst [vmem:[#allocation2 + $0x8] sm:$0xff] %v6728
        %6737 = vst [vmem:[#allocation2 + $0x10] sm:$0xff] %v6729
        %6738 = vst [vmem:[#allocation2 + $0x18] sm:$0xff] %v6730
        %6739 = vst [vmem:[#allocation2 + $0x20] sm:$0xff] %v6731
        %6740 = vst [vmem:[#allocation2 + $0x28] sm:$0xff] %v6732
        %6741 = vst [vmem:[#allocation2 + $0x30] sm:$0xff] %v6733
        %6742 = vst [vmem:[#allocation2 + $0x38] sm:$0xff] %v6734
        %p6743 = scmp.eq.s32.totalorder %s38, 3
        // Predicated region
        $region141: #{_forward.1} parent=87 // pred_check
          %p6744 = pneg %p6743
        $region142: #{_forward.1} parent=87 // pred_check_branch
          %6746 = sbr.rel (%p6744) target = $region144
        $region143: #{_forward.1} parent=87 // pred_region
          %v6747 = vld [vmem:[#allocation2] sm:$0xff]
          %v6748 = vld [vmem:[#allocation2 + $0x8] sm:$0xff]
          %v6749 = vld [vmem:[#allocation2 + $0x10] sm:$0xff]
          %v6750 = vld [vmem:[#allocation2 + $0x18] sm:$0xff]
          %v6751 = vld [vmem:[#allocation2 + $0x20] sm:$0xff]
          %v6752 = vld [vmem:[#allocation2 + $0x28] sm:$0xff]
          %v6753 = vld [vmem:[#allocation2 + $0x30] sm:$0xff]
          %v6754 = vld [vmem:[#allocation2 + $0x38] sm:$0xff]
          %v6755 = vld [vmem:[#allocation15] sm:$0xff]
          %v6756 = vld [vmem:[#allocation15 + $0x8] sm:$0xff]
          %v6757 = vld [vmem:[#allocation15 + $0x10] sm:$0xff]
          %v6758 = vld [vmem:[#allocation15 + $0x18] sm:$0xff]
          %v6759 = vld [vmem:[#allocation15 + $0x20] sm:$0xff]
          %v6760 = vld [vmem:[#allocation15 + $0x28] sm:$0xff]
          %v6761 = vld [vmem:[#allocation15 + $0x30] sm:$0xff]
          %v6762 = vld [vmem:[#allocation15 + $0x38] sm:$0xff]
          %v6763 = vld [vmem:[#allocation15 + $0x40] sm:$0xff]
          %v6764 = vld [vmem:[#allocation15 + $0x48] sm:$0xff]
          %v6765 = vld [vmem:[#allocation15 + $0x50] sm:$0xff]
          %v6766 = vld [vmem:[#allocation15 + $0x58] sm:$0xff]
          %v6767 = vld [vmem:[#allocation15 + $0x60] sm:$0xff]
          %v6768 = vld [vmem:[#allocation15 + $0x68] sm:$0xff]
          %v6769 = vld [vmem:[#allocation15 + $0x70] sm:$0xff]
          %v6770 = vld [vmem:[#allocation15 + $0x78] sm:$0xff]
          %v6771 = vld [vmem:[#allocation15 + $0x80] sm:$0xff]
          %v6772 = vld [vmem:[#allocation15 + $0x88] sm:$0xff]
          %v6773 = vld [vmem:[#allocation15 + $0x90] sm:$0xff]
          %v6774 = vld [vmem:[#allocation15 + $0x98] sm:$0xff]
          %v6775 = vld [vmem:[#allocation15 + $0xa0] sm:$0xff]
          %v6776 = vld [vmem:[#allocation15 + $0xa8] sm:$0xff]
          %v6777 = vld [vmem:[#allocation15 + $0xb0] sm:$0xff]
          %v6778 = vld [vmem:[#allocation15 + $0xb8] sm:$0xff]
          %v6779 = vld [vmem:[#allocation15 + $0xc0] sm:$0xff]
          %v6780 = vld [vmem:[#allocation15 + $0xc8] sm:$0xff]
          %v6781 = vld [vmem:[#allocation15 + $0xd0] sm:$0xff]
          %v6782 = vld [vmem:[#allocation15 + $0xd8] sm:$0xff]
          %v6783 = vld [vmem:[#allocation15 + $0xe0] sm:$0xff]
          %v6784 = vld [vmem:[#allocation15 + $0xe8] sm:$0xff]
          %v6785 = vld [vmem:[#allocation15 + $0xf0] sm:$0xff]
          %v6786 = vld [vmem:[#allocation15 + $0xf8] sm:$0xff]
          %v6787 = vld [vmem:[#allocation15 + $0x100] sm:$0xff]
          %v6788 = vld [vmem:[#allocation15 + $0x108] sm:$0xff]
          %v6789 = vld [vmem:[#allocation15 + $0x110] sm:$0xff]
          %v6790 = vld [vmem:[#allocation15 + $0x118] sm:$0xff]
          %v6791 = vld [vmem:[#allocation15 + $0x120] sm:$0xff]
          %v6792 = vld [vmem:[#allocation15 + $0x128] sm:$0xff]
          %v6793 = vld [vmem:[#allocation15 + $0x130] sm:$0xff]
          %v6794 = vld [vmem:[#allocation15 + $0x138] sm:$0xff]
          %v6795 = vld [vmem:[#allocation15 + $0x140] sm:$0xff]
          %v6796 = vld [vmem:[#allocation15 + $0x148] sm:$0xff]
          %v6797 = vld [vmem:[#allocation15 + $0x150] sm:$0xff]
          %v6798 = vld [vmem:[#allocation15 + $0x158] sm:$0xff]
          %v6799 = vld [vmem:[#allocation15 + $0x160] sm:$0xff]
          %v6800 = vld [vmem:[#allocation15 + $0x168] sm:$0xff]
          %v6801 = vld [vmem:[#allocation15 + $0x170] sm:$0xff]
          %v6802 = vld [vmem:[#allocation15 + $0x178] sm:$0xff]
          %v6803 = vld [vmem:[#allocation15 + $0x180] sm:$0xff]
          %v6804 = vld [vmem:[#allocation15 + $0x188] sm:$0xff]
          %v6805 = vld [vmem:[#allocation15 + $0x190] sm:$0xff]
          %v6806 = vld [vmem:[#allocation15 + $0x198] sm:$0xff]
          %v6807 = vld [vmem:[#allocation15 + $0x1a0] sm:$0xff]
          %v6808 = vld [vmem:[#allocation15 + $0x1a8] sm:$0xff]
          %v6809 = vld [vmem:[#allocation15 + $0x1b0] sm:$0xff]
          %v6810 = vld [vmem:[#allocation15 + $0x1b8] sm:$0xff]
          %v6811 = vld [vmem:[#allocation15 + $0x1c0] sm:$0xff]
          %v6812 = vld [vmem:[#allocation15 + $0x1c8] sm:$0xff]
          %v6813 = vld [vmem:[#allocation15 + $0x1d0] sm:$0xff]
          %v6814 = vld [vmem:[#allocation15 + $0x1d8] sm:$0xff]
          %v6815 = vld [vmem:[#allocation15 + $0x1e0] sm:$0xff]
          %v6816 = vld [vmem:[#allocation15 + $0x1e8] sm:$0xff]
          %v6817 = vld [vmem:[#allocation15 + $0x1f0] sm:$0xff]
          %v6818 = vld [vmem:[#allocation15 + $0x1f8] sm:$0xff]
          %v6819 = vld [vmem:[#allocation15 + $0x200] sm:$0xff]
          %v6820 = vld [vmem:[#allocation15 + $0x208] sm:$0xff]
          %v6821 = vld [vmem:[#allocation15 + $0x210] sm:$0xff]
          %v6822 = vld [vmem:[#allocation15 + $0x218] sm:$0xff]
          %v6823 = vld [vmem:[#allocation15 + $0x220] sm:$0xff]
          %v6824 = vld [vmem:[#allocation15 + $0x228] sm:$0xff]
          %v6825 = vld [vmem:[#allocation15 + $0x230] sm:$0xff]
          %v6826 = vld [vmem:[#allocation15 + $0x238] sm:$0xff]
          %v6827 = vld [vmem:[#allocation15 + $0x240] sm:$0xff]
          %v6828 = vld [vmem:[#allocation15 + $0x248] sm:$0xff]
          %v6829 = vld [vmem:[#allocation15 + $0x250] sm:$0xff]
          %v6830 = vld [vmem:[#allocation15 + $0x258] sm:$0xff]
          %v6831 = vld [vmem:[#allocation15 + $0x260] sm:$0xff]
          %v6832 = vld [vmem:[#allocation15 + $0x268] sm:$0xff]
          %v6833 = vld [vmem:[#allocation15 + $0x270] sm:$0xff]
          %v6834 = vld [vmem:[#allocation15 + $0x278] sm:$0xff]
          %v6835 = vld [vmem:[#allocation15 + $0x280] sm:$0xff]
          %v6836 = vld [vmem:[#allocation15 + $0x288] sm:$0xff]
          %v6837 = vld [vmem:[#allocation15 + $0x290] sm:$0xff]
          %v6838 = vld [vmem:[#allocation15 + $0x298] sm:$0xff]
          %v6839 = vld [vmem:[#allocation15 + $0x2a0] sm:$0xff]
          %v6840 = vld [vmem:[#allocation15 + $0x2a8] sm:$0xff]
          %v6841 = vld [vmem:[#allocation15 + $0x2b0] sm:$0xff]
          %v6842 = vld [vmem:[#allocation15 + $0x2b8] sm:$0xff]
          %v6843 = vld [vmem:[#allocation15 + $0x2c0] sm:$0xff]
          %v6844 = vld [vmem:[#allocation15 + $0x2c8] sm:$0xff]
          %v6845 = vld [vmem:[#allocation15 + $0x2d0] sm:$0xff]
          %v6846 = vld [vmem:[#allocation15 + $0x2d8] sm:$0xff]
          %v6847 = vld [vmem:[#allocation15 + $0x2e0] sm:$0xff]
          %v6848 = vld [vmem:[#allocation15 + $0x2e8] sm:$0xff]
          %v6849 = vld [vmem:[#allocation15 + $0x2f0] sm:$0xff]
          %v6850 = vld [vmem:[#allocation15 + $0x2f8] sm:$0xff]
          %v6851 = vld [vmem:[#allocation15 + $0x300] sm:$0xff]
          %v6852 = vld [vmem:[#allocation15 + $0x308] sm:$0xff]
          %v6853 = vld [vmem:[#allocation15 + $0x310] sm:$0xff]
          %v6854 = vld [vmem:[#allocation15 + $0x318] sm:$0xff]
          %v6855 = vld [vmem:[#allocation15 + $0x320] sm:$0xff]
          %v6856 = vld [vmem:[#allocation15 + $0x328] sm:$0xff]
          %v6857 = vld [vmem:[#allocation15 + $0x330] sm:$0xff]
          %v6858 = vld [vmem:[#allocation15 + $0x338] sm:$0xff]
          %v6859 = vld [vmem:[#allocation15 + $0x340] sm:$0xff]
          %v6860 = vld [vmem:[#allocation15 + $0x348] sm:$0xff]
          %v6861 = vld [vmem:[#allocation15 + $0x350] sm:$0xff]
          %v6862 = vld [vmem:[#allocation15 + $0x358] sm:$0xff]
          %v6863 = vld [vmem:[#allocation15 + $0x360] sm:$0xff]
          %v6864 = vld [vmem:[#allocation15 + $0x368] sm:$0xff]
          %v6865 = vld [vmem:[#allocation15 + $0x370] sm:$0xff]
          %v6866 = vld [vmem:[#allocation15 + $0x378] sm:$0xff]
          %v6867 = vld [vmem:[#allocation15 + $0x380] sm:$0xff]
          %v6868 = vld [vmem:[#allocation15 + $0x388] sm:$0xff]
          %v6869 = vld [vmem:[#allocation15 + $0x390] sm:$0xff]
          %v6870 = vld [vmem:[#allocation15 + $0x398] sm:$0xff]
          %v6871 = vld [vmem:[#allocation15 + $0x3a0] sm:$0xff]
          %v6872 = vld [vmem:[#allocation15 + $0x3a8] sm:$0xff]
          %v6873 = vld [vmem:[#allocation15 + $0x3b0] sm:$0xff]
          %v6874 = vld [vmem:[#allocation15 + $0x3b8] sm:$0xff]
          %v6875 = vld [vmem:[#allocation15 + $0x3c0] sm:$0xff]
          %v6876 = vld [vmem:[#allocation15 + $0x3c8] sm:$0xff]
          %v6877 = vld [vmem:[#allocation15 + $0x3d0] sm:$0xff]
          %v6878 = vld [vmem:[#allocation15 + $0x3d8] sm:$0xff]
          %v6879 = vld [vmem:[#allocation15 + $0x3e0] sm:$0xff]
          %v6880 = vld [vmem:[#allocation15 + $0x3e8] sm:$0xff]
          %v6881 = vld [vmem:[#allocation15 + $0x3f0] sm:$0xff]
          %v6882 = vld [vmem:[#allocation15 + $0x3f8] sm:$0xff]
          %v6883 = vld [vmem:[#allocation15 + $0x400] sm:$0xff]
          %v6884 = vld [vmem:[#allocation15 + $0x408] sm:$0xff]
          %v6885 = vld [vmem:[#allocation15 + $0x410] sm:$0xff]
          %v6886 = vld [vmem:[#allocation15 + $0x418] sm:$0xff]
          %v6887 = vld [vmem:[#allocation15 + $0x420] sm:$0xff]
          %v6888 = vld [vmem:[#allocation15 + $0x428] sm:$0xff]
          %v6889 = vld [vmem:[#allocation15 + $0x430] sm:$0xff]
          %v6890 = vld [vmem:[#allocation15 + $0x438] sm:$0xff]
          %v6891 = vld [vmem:[#allocation15 + $0x440] sm:$0xff]
          %v6892 = vld [vmem:[#allocation15 + $0x448] sm:$0xff]
          %v6893 = vld [vmem:[#allocation15 + $0x450] sm:$0xff]
          %v6894 = vld [vmem:[#allocation15 + $0x458] sm:$0xff]
          %v6895 = vld [vmem:[#allocation15 + $0x460] sm:$0xff]
          %v6896 = vld [vmem:[#allocation15 + $0x468] sm:$0xff]
          %v6897 = vld [vmem:[#allocation15 + $0x470] sm:$0xff]
          %v6898 = vld [vmem:[#allocation15 + $0x478] sm:$0xff]
          %v6899 = vld [vmem:[#allocation15 + $0x480] sm:$0xff]
          %v6900 = vld [vmem:[#allocation15 + $0x488] sm:$0xff]
          %v6901 = vld [vmem:[#allocation15 + $0x490] sm:$0xff]
          %v6902 = vld [vmem:[#allocation15 + $0x498] sm:$0xff]
          %v6903 = vld [vmem:[#allocation15 + $0x4a0] sm:$0xff]
          %v6904 = vld [vmem:[#allocation15 + $0x4a8] sm:$0xff]
          %v6905 = vld [vmem:[#allocation15 + $0x4b0] sm:$0xff]
          %v6906 = vld [vmem:[#allocation15 + $0x4b8] sm:$0xff]
          %v6907 = vld [vmem:[#allocation15 + $0x4c0] sm:$0xff]
          %v6908 = vld [vmem:[#allocation15 + $0x4c8] sm:$0xff]
          %v6909 = vld [vmem:[#allocation15 + $0x4d0] sm:$0xff]
          %v6910 = vld [vmem:[#allocation15 + $0x4d8] sm:$0xff]
          %v6911 = vld [vmem:[#allocation15 + $0x4e0] sm:$0xff]
          %v6912 = vld [vmem:[#allocation15 + $0x4e8] sm:$0xff]
          %v6913 = vld [vmem:[#allocation15 + $0x4f0] sm:$0xff]
          %v6914 = vld [vmem:[#allocation15 + $0x4f8] sm:$0xff]
          %v6915 = vld [vmem:[#allocation15 + $0x500] sm:$0xff]
          %v6916 = vld [vmem:[#allocation15 + $0x508] sm:$0xff]
          %v6917 = vld [vmem:[#allocation15 + $0x510] sm:$0xff]
          %v6918 = vld [vmem:[#allocation15 + $0x518] sm:$0xff]
          %v6919 = vld [vmem:[#allocation15 + $0x520] sm:$0xff]
          %v6920 = vld [vmem:[#allocation15 + $0x528] sm:$0xff]
          %v6921 = vld [vmem:[#allocation15 + $0x530] sm:$0xff]
          %v6922 = vld [vmem:[#allocation15 + $0x538] sm:$0xff]
          %v6923 = vld [vmem:[#allocation15 + $0x540] sm:$0xff]
          %v6924 = vld [vmem:[#allocation15 + $0x548] sm:$0xff]
          %v6925 = vld [vmem:[#allocation15 + $0x550] sm:$0xff]
          %v6926 = vld [vmem:[#allocation15 + $0x558] sm:$0xff]
          %v6927 = vld [vmem:[#allocation15 + $0x560] sm:$0xff]
          %v6928 = vld [vmem:[#allocation15 + $0x568] sm:$0xff]
          %v6929 = vld [vmem:[#allocation15 + $0x570] sm:$0xff]
          %v6930 = vld [vmem:[#allocation15 + $0x578] sm:$0xff]
          %v6931 = vld [vmem:[#allocation15 + $0x580] sm:$0xff]
          %v6932 = vld [vmem:[#allocation15 + $0x588] sm:$0xff]
          %v6933 = vld [vmem:[#allocation15 + $0x590] sm:$0xff]
          %v6934 = vld [vmem:[#allocation15 + $0x598] sm:$0xff]
          %v6935 = vld [vmem:[#allocation15 + $0x5a0] sm:$0xff]
          %v6936 = vld [vmem:[#allocation15 + $0x5a8] sm:$0xff]
          %v6937 = vld [vmem:[#allocation15 + $0x5b0] sm:$0xff]
          %v6938 = vld [vmem:[#allocation15 + $0x5b8] sm:$0xff]
          %v6939 = vld [vmem:[#allocation15 + $0x5c0] sm:$0xff]
          %v6940 = vld [vmem:[#allocation15 + $0x5c8] sm:$0xff]
          %v6941 = vld [vmem:[#allocation15 + $0x5d0] sm:$0xff]
          %v6942 = vld [vmem:[#allocation15 + $0x5d8] sm:$0xff]
          %v6943 = vld [vmem:[#allocation15 + $0x5e0] sm:$0xff]
          %v6944 = vld [vmem:[#allocation15 + $0x5e8] sm:$0xff]
          %v6945 = vld [vmem:[#allocation15 + $0x5f0] sm:$0xff]
          %v6946 = vld [vmem:[#allocation15 + $0x5f8] sm:$0xff]
          %v6947 = vld [vmem:[#allocation15 + $0x600] sm:$0xff]
          %v6948 = vld [vmem:[#allocation15 + $0x608] sm:$0xff]
          %v6949 = vld [vmem:[#allocation15 + $0x610] sm:$0xff]
          %v6950 = vld [vmem:[#allocation15 + $0x618] sm:$0xff]
          %v6951 = vld [vmem:[#allocation15 + $0x620] sm:$0xff]
          %v6952 = vld [vmem:[#allocation15 + $0x628] sm:$0xff]
          %v6953 = vld [vmem:[#allocation15 + $0x630] sm:$0xff]
          %v6954 = vld [vmem:[#allocation15 + $0x638] sm:$0xff]
          %v6955 = vld [vmem:[#allocation15 + $0x640] sm:$0xff]
          %v6956 = vld [vmem:[#allocation15 + $0x648] sm:$0xff]
          %v6957 = vld [vmem:[#allocation15 + $0x650] sm:$0xff]
          %v6958 = vld [vmem:[#allocation15 + $0x658] sm:$0xff]
          %v6959 = vld [vmem:[#allocation15 + $0x660] sm:$0xff]
          %v6960 = vld [vmem:[#allocation15 + $0x668] sm:$0xff]
          %v6961 = vld [vmem:[#allocation15 + $0x670] sm:$0xff]
          %v6962 = vld [vmem:[#allocation15 + $0x678] sm:$0xff]
          %v6963 = vld [vmem:[#allocation15 + $0x680] sm:$0xff]
          %v6964 = vld [vmem:[#allocation15 + $0x688] sm:$0xff]
          %v6965 = vld [vmem:[#allocation15 + $0x690] sm:$0xff]
          %v6966 = vld [vmem:[#allocation15 + $0x698] sm:$0xff]
          %v6967 = vld [vmem:[#allocation15 + $0x6a0] sm:$0xff]
          %v6968 = vld [vmem:[#allocation15 + $0x6a8] sm:$0xff]
          %v6969 = vld [vmem:[#allocation15 + $0x6b0] sm:$0xff]
          %v6970 = vld [vmem:[#allocation15 + $0x6b8] sm:$0xff]
          %v6971 = vld [vmem:[#allocation15 + $0x6c0] sm:$0xff]
          %v6972 = vld [vmem:[#allocation15 + $0x6c8] sm:$0xff]
          %v6973 = vld [vmem:[#allocation15 + $0x6d0] sm:$0xff]
          %v6974 = vld [vmem:[#allocation15 + $0x6d8] sm:$0xff]
          %v6975 = vld [vmem:[#allocation15 + $0x6e0] sm:$0xff]
          %v6976 = vld [vmem:[#allocation15 + $0x6e8] sm:$0xff]
          %v6977 = vld [vmem:[#allocation15 + $0x6f0] sm:$0xff]
          %v6978 = vld [vmem:[#allocation15 + $0x6f8] sm:$0xff]
          %v6979 = vld [vmem:[#allocation15 + $0x700] sm:$0xff]
          %v6980 = vld [vmem:[#allocation15 + $0x708] sm:$0xff]
          %v6981 = vld [vmem:[#allocation15 + $0x710] sm:$0xff]
          %v6982 = vld [vmem:[#allocation15 + $0x718] sm:$0xff]
          %v6983 = vld [vmem:[#allocation15 + $0x720] sm:$0xff]
          %v6984 = vld [vmem:[#allocation15 + $0x728] sm:$0xff]
          %v6985 = vld [vmem:[#allocation15 + $0x730] sm:$0xff]
          %v6986 = vld [vmem:[#allocation15 + $0x738] sm:$0xff]
          %v6987 = vld [vmem:[#allocation15 + $0x740] sm:$0xff]
          %v6988 = vld [vmem:[#allocation15 + $0x748] sm:$0xff]
          %v6989 = vld [vmem:[#allocation15 + $0x750] sm:$0xff]
          %v6990 = vld [vmem:[#allocation15 + $0x758] sm:$0xff]
          %v6991 = vld [vmem:[#allocation15 + $0x760] sm:$0xff]
          %v6992 = vld [vmem:[#allocation15 + $0x768] sm:$0xff]
          %v6993 = vld [vmem:[#allocation15 + $0x770] sm:$0xff]
          %v6994 = vld [vmem:[#allocation15 + $0x778] sm:$0xff]
          %v6995 = vld [vmem:[#allocation15 + $0x780] sm:$0xff]
          %v6996 = vld [vmem:[#allocation15 + $0x788] sm:$0xff]
          %v6997 = vld [vmem:[#allocation15 + $0x790] sm:$0xff]
          %v6998 = vld [vmem:[#allocation15 + $0x798] sm:$0xff]
          %v6999 = vld [vmem:[#allocation15 + $0x7a0] sm:$0xff]
          %v7000 = vld [vmem:[#allocation15 + $0x7a8] sm:$0xff]
          %v7001 = vld [vmem:[#allocation15 + $0x7b0] sm:$0xff]
          %v7002 = vld [vmem:[#allocation15 + $0x7b8] sm:$0xff]
          %v7003 = vld [vmem:[#allocation15 + $0x7c0] sm:$0xff]
          %v7004 = vld [vmem:[#allocation15 + $0x7c8] sm:$0xff]
          %v7005 = vld [vmem:[#allocation15 + $0x7d0] sm:$0xff]
          %v7006 = vld [vmem:[#allocation15 + $0x7d8] sm:$0xff]
          %v7007 = vld [vmem:[#allocation15 + $0x7e0] sm:$0xff]
          %v7008 = vld [vmem:[#allocation15 + $0x7e8] sm:$0xff]
          %v7009 = vld [vmem:[#allocation15 + $0x7f0] sm:$0xff]
          %v7010 = vld [vmem:[#allocation15 + $0x7f8] sm:$0xff]
          %v7011 = vpack.c.bf16 %v6747, %v6747
          %v7012 = vpack.c.bf16 %v6748, %v6748
          %v7013 = vpack.c.bf16 %v6749, %v6749
          %v7014 = vpack.c.bf16 %v6750, %v6750
          %v7015 = vpack.c.bf16 %v6751, %v6751
          %v7016 = vpack.c.bf16 %v6752, %v6752
          %v7017 = vpack.c.bf16 %v6753, %v6753
          %v7018 = vpack.c.bf16 %v6754, %v6754
          %s7019 = scalar_lea.vmem [#allocation21], 5
          %v7020 = vld [vmem:[%s7019] ss:$8 sm:$0xf]
          %v7022 = vperm.slane %v7020, 0
          %v7023 = vperm.slane %v7020, 1
          %v7024 = vperm.slane %v7020, 2
          %v7025 = vperm.slane %v7020, 3
          %v7286 = vunpack.c.l.b16 %v6755
          %v7287 = vunpack.c.h.b16 %v6755
          %v7288 = vunpack.c.l.b16 %v6756
          %v7289 = vunpack.c.h.b16 %v6756
          %v7290 = vunpack.c.l.b16 %v6757
          %v7291 = vunpack.c.h.b16 %v6757
          %v7292 = vunpack.c.l.b16 %v6758
          %v7293 = vunpack.c.h.b16 %v6758
          %v7294 = vunpack.c.l.b16 %v6759
          %v7295 = vunpack.c.h.b16 %v6759
          %v7296 = vunpack.c.l.b16 %v6760
          %v7297 = vunpack.c.h.b16 %v6760
          %v7298 = vunpack.c.l.b16 %v6761
          %v7299 = vunpack.c.h.b16 %v6761
          %v7300 = vunpack.c.l.b16 %v6762
          %v7301 = vunpack.c.h.b16 %v6762
          %v7302 = vunpack.c.l.b16 %v6763
          %v7303 = vunpack.c.h.b16 %v6763
          %v7304 = vunpack.c.l.b16 %v6764
          %v7305 = vunpack.c.h.b16 %v6764
          %v7306 = vunpack.c.l.b16 %v6765
          %v7307 = vunpack.c.h.b16 %v6765
          %v7308 = vunpack.c.l.b16 %v6766
          %v7309 = vunpack.c.h.b16 %v6766
          %v7310 = vunpack.c.l.b16 %v6767
          %v7311 = vunpack.c.h.b16 %v6767
          %v7312 = vunpack.c.l.b16 %v6768
          %v7313 = vunpack.c.h.b16 %v6768
          %v7314 = vunpack.c.l.b16 %v6769
          %v7315 = vunpack.c.h.b16 %v6769
          %v7316 = vunpack.c.l.b16 %v6770
          %v7317 = vunpack.c.h.b16 %v6770
          %v7318 = vunpack.c.l.b16 %v6771
          %v7319 = vunpack.c.h.b16 %v6771
          %v7320 = vunpack.c.l.b16 %v6772
          %v7321 = vunpack.c.h.b16 %v6772
          %v7322 = vunpack.c.l.b16 %v6773
          %v7323 = vunpack.c.h.b16 %v6773
          %v7324 = vunpack.c.l.b16 %v6774
          %v7325 = vunpack.c.h.b16 %v6774
          %v7326 = vunpack.c.l.b16 %v6775
          %v7327 = vunpack.c.h.b16 %v6775
          %v7328 = vunpack.c.l.b16 %v6776
          %v7329 = vunpack.c.h.b16 %v6776
          %v7330 = vunpack.c.l.b16 %v6777
          %v7331 = vunpack.c.h.b16 %v6777
          %v7332 = vunpack.c.l.b16 %v6778
          %v7333 = vunpack.c.h.b16 %v6778
          %v7334 = vunpack.c.l.b16 %v6779
          %v7335 = vunpack.c.h.b16 %v6779
          %v7336 = vunpack.c.l.b16 %v6780
          %v7337 = vunpack.c.h.b16 %v6780
          %v7338 = vunpack.c.l.b16 %v6781
          %v7339 = vunpack.c.h.b16 %v6781
          %v7340 = vunpack.c.l.b16 %v6782
          %v7341 = vunpack.c.h.b16 %v6782
          %v7342 = vunpack.c.l.b16 %v6783
          %v7343 = vunpack.c.h.b16 %v6783
          %v7344 = vunpack.c.l.b16 %v6784
          %v7345 = vunpack.c.h.b16 %v6784
          %v7346 = vunpack.c.l.b16 %v6785
          %v7347 = vunpack.c.h.b16 %v6785
          %v7348 = vunpack.c.l.b16 %v6786
          %v7349 = vunpack.c.h.b16 %v6786
          %v7350 = vunpack.c.l.b16 %v6787
          %v7351 = vunpack.c.h.b16 %v6787
          %v7352 = vunpack.c.l.b16 %v6788
          %v7353 = vunpack.c.h.b16 %v6788
          %v7354 = vunpack.c.l.b16 %v6789
          %v7355 = vunpack.c.h.b16 %v6789
          %v7356 = vunpack.c.l.b16 %v6790
          %v7357 = vunpack.c.h.b16 %v6790
          %v7358 = vunpack.c.l.b16 %v6791
          %v7359 = vunpack.c.h.b16 %v6791
          %v7360 = vunpack.c.l.b16 %v6792
          %v7361 = vunpack.c.h.b16 %v6792
          %v7362 = vunpack.c.l.b16 %v6793
          %v7363 = vunpack.c.h.b16 %v6793
          %v7364 = vunpack.c.l.b16 %v6794
          %v7365 = vunpack.c.h.b16 %v6794
          %v7366 = vunpack.c.l.b16 %v6795
          %v7367 = vunpack.c.h.b16 %v6795
          %v7368 = vunpack.c.l.b16 %v6796
          %v7369 = vunpack.c.h.b16 %v6796
          %v7370 = vunpack.c.l.b16 %v6797
          %v7371 = vunpack.c.h.b16 %v6797
          %v7372 = vunpack.c.l.b16 %v6798
          %v7373 = vunpack.c.h.b16 %v6798
          %v7374 = vunpack.c.l.b16 %v6799
          %v7375 = vunpack.c.h.b16 %v6799
          %v7376 = vunpack.c.l.b16 %v6800
          %v7377 = vunpack.c.h.b16 %v6800
          %v7378 = vunpack.c.l.b16 %v6801
          %v7379 = vunpack.c.h.b16 %v6801
          %v7380 = vunpack.c.l.b16 %v6802
          %v7381 = vunpack.c.h.b16 %v6802
          %v7382 = vunpack.c.l.b16 %v6803
          %v7383 = vunpack.c.h.b16 %v6803
          %v7384 = vunpack.c.l.b16 %v6804
          %v7385 = vunpack.c.h.b16 %v6804
          %v7386 = vunpack.c.l.b16 %v6805
          %v7387 = vunpack.c.h.b16 %v6805
          %v7388 = vunpack.c.l.b16 %v6806
          %v7389 = vunpack.c.h.b16 %v6806
          %v7390 = vunpack.c.l.b16 %v6807
          %v7391 = vunpack.c.h.b16 %v6807
          %v7392 = vunpack.c.l.b16 %v6808
          %v7393 = vunpack.c.h.b16 %v6808
          %v7394 = vunpack.c.l.b16 %v6809
          %v7395 = vunpack.c.h.b16 %v6809
          %v7396 = vunpack.c.l.b16 %v6810
          %v7397 = vunpack.c.h.b16 %v6810
          %v7398 = vunpack.c.l.b16 %v6811
          %v7399 = vunpack.c.h.b16 %v6811
          %v7400 = vunpack.c.l.b16 %v6812
          %v7401 = vunpack.c.h.b16 %v6812
          %v7402 = vunpack.c.l.b16 %v6813
          %v7403 = vunpack.c.h.b16 %v6813
          %v7404 = vunpack.c.l.b16 %v6814
          %v7405 = vunpack.c.h.b16 %v6814
          %v7406 = vunpack.c.l.b16 %v6815
          %v7407 = vunpack.c.h.b16 %v6815
          %v7408 = vunpack.c.l.b16 %v6816
          %v7409 = vunpack.c.h.b16 %v6816
          %v7410 = vunpack.c.l.b16 %v6817
          %v7411 = vunpack.c.h.b16 %v6817
          %v7412 = vunpack.c.l.b16 %v6818
          %v7413 = vunpack.c.h.b16 %v6818
          %v7414 = vunpack.c.l.b16 %v6819
          %v7415 = vunpack.c.h.b16 %v6819
          %v7416 = vunpack.c.l.b16 %v6820
          %v7417 = vunpack.c.h.b16 %v6820
          %v7418 = vunpack.c.l.b16 %v6821
          %v7419 = vunpack.c.h.b16 %v6821
          %v7420 = vunpack.c.l.b16 %v6822
          %v7421 = vunpack.c.h.b16 %v6822
          %v7422 = vunpack.c.l.b16 %v6823
          %v7423 = vunpack.c.h.b16 %v6823
          %v7424 = vunpack.c.l.b16 %v6824
          %v7425 = vunpack.c.h.b16 %v6824
          %v7426 = vunpack.c.l.b16 %v6825
          %v7427 = vunpack.c.h.b16 %v6825
          %v7428 = vunpack.c.l.b16 %v6826
          %v7429 = vunpack.c.h.b16 %v6826
          %v7430 = vunpack.c.l.b16 %v6827
          %v7431 = vunpack.c.h.b16 %v6827
          %v7432 = vunpack.c.l.b16 %v6828
          %v7433 = vunpack.c.h.b16 %v6828
          %v7434 = vunpack.c.l.b16 %v6829
          %v7435 = vunpack.c.h.b16 %v6829
          %v7436 = vunpack.c.l.b16 %v6830
          %v7437 = vunpack.c.h.b16 %v6830
          %v7438 = vunpack.c.l.b16 %v6831
          %v7439 = vunpack.c.h.b16 %v6831
          %v7440 = vunpack.c.l.b16 %v6832
          %v7441 = vunpack.c.h.b16 %v6832
          %v7442 = vunpack.c.l.b16 %v6833
          %v7443 = vunpack.c.h.b16 %v6833
          %v7444 = vunpack.c.l.b16 %v6834
          %v7445 = vunpack.c.h.b16 %v6834
          %v7446 = vunpack.c.l.b16 %v6835
          %v7447 = vunpack.c.h.b16 %v6835
          %v7448 = vunpack.c.l.b16 %v6836
          %v7449 = vunpack.c.h.b16 %v6836
          %v7450 = vunpack.c.l.b16 %v6837
          %v7451 = vunpack.c.h.b16 %v6837
          %v7452 = vunpack.c.l.b16 %v6838
          %v7453 = vunpack.c.h.b16 %v6838
          %v7454 = vunpack.c.l.b16 %v6839
          %v7455 = vunpack.c.h.b16 %v6839
          %v7456 = vunpack.c.l.b16 %v6840
          %v7457 = vunpack.c.h.b16 %v6840
          %v7458 = vunpack.c.l.b16 %v6841
          %v7459 = vunpack.c.h.b16 %v6841
          %v7460 = vunpack.c.l.b16 %v6842
          %v7461 = vunpack.c.h.b16 %v6842
          %v7462 = vunpack.c.l.b16 %v6843
          %v7463 = vunpack.c.h.b16 %v6843
          %v7464 = vunpack.c.l.b16 %v6844
          %v7465 = vunpack.c.h.b16 %v6844
          %v7466 = vunpack.c.l.b16 %v6845
          %v7467 = vunpack.c.h.b16 %v6845
          %v7468 = vunpack.c.l.b16 %v6846
          %v7469 = vunpack.c.h.b16 %v6846
          %v7470 = vunpack.c.l.b16 %v6847
          %v7471 = vunpack.c.h.b16 %v6847
          %v7472 = vunpack.c.l.b16 %v6848
          %v7473 = vunpack.c.h.b16 %v6848
          %v7474 = vunpack.c.l.b16 %v6849
          %v7475 = vunpack.c.h.b16 %v6849
          %v7476 = vunpack.c.l.b16 %v6850
          %v7477 = vunpack.c.h.b16 %v6850
          %v7478 = vunpack.c.l.b16 %v6851
          %v7479 = vunpack.c.h.b16 %v6851
          %v7480 = vunpack.c.l.b16 %v6852
          %v7481 = vunpack.c.h.b16 %v6852
          %v7482 = vunpack.c.l.b16 %v6853
          %v7483 = vunpack.c.h.b16 %v6853
          %v7484 = vunpack.c.l.b16 %v6854
          %v7485 = vunpack.c.h.b16 %v6854
          %v7486 = vunpack.c.l.b16 %v6855
          %v7487 = vunpack.c.h.b16 %v6855
          %v7488 = vunpack.c.l.b16 %v6856
          %v7489 = vunpack.c.h.b16 %v6856
          %v7490 = vunpack.c.l.b16 %v6857
          %v7491 = vunpack.c.h.b16 %v6857
          %v7492 = vunpack.c.l.b16 %v6858
          %v7493 = vunpack.c.h.b16 %v6858
          %v7494 = vunpack.c.l.b16 %v6859
          %v7495 = vunpack.c.h.b16 %v6859
          %v7496 = vunpack.c.l.b16 %v6860
          %v7497 = vunpack.c.h.b16 %v6860
          %v7498 = vunpack.c.l.b16 %v6861
          %v7499 = vunpack.c.h.b16 %v6861
          %v7500 = vunpack.c.l.b16 %v6862
          %v7501 = vunpack.c.h.b16 %v6862
          %v7502 = vunpack.c.l.b16 %v6863
          %v7503 = vunpack.c.h.b16 %v6863
          %v7504 = vunpack.c.l.b16 %v6864
          %v7505 = vunpack.c.h.b16 %v6864
          %v7506 = vunpack.c.l.b16 %v6865
          %v7507 = vunpack.c.h.b16 %v6865
          %v7508 = vunpack.c.l.b16 %v6866
          %v7509 = vunpack.c.h.b16 %v6866
          %v7510 = vunpack.c.l.b16 %v6867
          %v7511 = vunpack.c.h.b16 %v6867
          %v7512 = vunpack.c.l.b16 %v6868
          %v7513 = vunpack.c.h.b16 %v6868
          %v7514 = vunpack.c.l.b16 %v6869
          %v7515 = vunpack.c.h.b16 %v6869
          %v7516 = vunpack.c.l.b16 %v6870
          %v7517 = vunpack.c.h.b16 %v6870
          %v7518 = vunpack.c.l.b16 %v6871
          %v7519 = vunpack.c.h.b16 %v6871
          %v7520 = vunpack.c.l.b16 %v6872
          %v7521 = vunpack.c.h.b16 %v6872
          %v7522 = vunpack.c.l.b16 %v6873
          %v7523 = vunpack.c.h.b16 %v6873
          %v7524 = vunpack.c.l.b16 %v6874
          %v7525 = vunpack.c.h.b16 %v6874
          %v7526 = vunpack.c.l.b16 %v6875
          %v7527 = vunpack.c.h.b16 %v6875
          %v7528 = vunpack.c.l.b16 %v6876
          %v7529 = vunpack.c.h.b16 %v6876
          %v7530 = vunpack.c.l.b16 %v6877
          %v7531 = vunpack.c.h.b16 %v6877
          %v7532 = vunpack.c.l.b16 %v6878
          %v7533 = vunpack.c.h.b16 %v6878
          %v7534 = vunpack.c.l.b16 %v6879
          %v7535 = vunpack.c.h.b16 %v6879
          %v7536 = vunpack.c.l.b16 %v6880
          %v7537 = vunpack.c.h.b16 %v6880
          %v7538 = vunpack.c.l.b16 %v6881
          %v7539 = vunpack.c.h.b16 %v6881
          %v7540 = vunpack.c.l.b16 %v6882
          %v7541 = vunpack.c.h.b16 %v6882
          %v7542 = vunpack.c.l.b16 %v6883
          %v7543 = vunpack.c.h.b16 %v6883
          %v7544 = vunpack.c.l.b16 %v6884
          %v7545 = vunpack.c.h.b16 %v6884
          %v7546 = vunpack.c.l.b16 %v6885
          %v7547 = vunpack.c.h.b16 %v6885
          %v7548 = vunpack.c.l.b16 %v6886
          %v7549 = vunpack.c.h.b16 %v6886
          %v7550 = vunpack.c.l.b16 %v6887
          %v7551 = vunpack.c.h.b16 %v6887
          %v7552 = vunpack.c.l.b16 %v6888
          %v7553 = vunpack.c.h.b16 %v6888
          %v7554 = vunpack.c.l.b16 %v6889
          %v7555 = vunpack.c.h.b16 %v6889
          %v7556 = vunpack.c.l.b16 %v6890
          %v7557 = vunpack.c.h.b16 %v6890
          %v7558 = vunpack.c.l.b16 %v6891
          %v7559 = vunpack.c.h.b16 %v6891
          %v7560 = vunpack.c.l.b16 %v6892
          %v7561 = vunpack.c.h.b16 %v6892
          %v7562 = vunpack.c.l.b16 %v6893
          %v7563 = vunpack.c.h.b16 %v6893
          %v7564 = vunpack.c.l.b16 %v6894
          %v7565 = vunpack.c.h.b16 %v6894
          %v7566 = vunpack.c.l.b16 %v6895
          %v7567 = vunpack.c.h.b16 %v6895
          %v7568 = vunpack.c.l.b16 %v6896
          %v7569 = vunpack.c.h.b16 %v6896
          %v7570 = vunpack.c.l.b16 %v6897
          %v7571 = vunpack.c.h.b16 %v6897
          %v7572 = vunpack.c.l.b16 %v6898
          %v7573 = vunpack.c.h.b16 %v6898
          %v7574 = vunpack.c.l.b16 %v6899
          %v7575 = vunpack.c.h.b16 %v6899
          %v7576 = vunpack.c.l.b16 %v6900
          %v7577 = vunpack.c.h.b16 %v6900
          %v7578 = vunpack.c.l.b16 %v6901
          %v7579 = vunpack.c.h.b16 %v6901
          %v7580 = vunpack.c.l.b16 %v6902
          %v7581 = vunpack.c.h.b16 %v6902
          %v7582 = vunpack.c.l.b16 %v6903
          %v7583 = vunpack.c.h.b16 %v6903
          %v7584 = vunpack.c.l.b16 %v6904
          %v7585 = vunpack.c.h.b16 %v6904
          %v7586 = vunpack.c.l.b16 %v6905
          %v7587 = vunpack.c.h.b16 %v6905
          %v7588 = vunpack.c.l.b16 %v6906
          %v7589 = vunpack.c.h.b16 %v6906
          %v7590 = vunpack.c.l.b16 %v6907
          %v7591 = vunpack.c.h.b16 %v6907
          %v7592 = vunpack.c.l.b16 %v6908
          %v7593 = vunpack.c.h.b16 %v6908
          %v7594 = vunpack.c.l.b16 %v6909
          %v7595 = vunpack.c.h.b16 %v6909
          %v7596 = vunpack.c.l.b16 %v6910
          %v7597 = vunpack.c.h.b16 %v6910
          %v7598 = vunpack.c.l.b16 %v6911
          %v7599 = vunpack.c.h.b16 %v6911
          %v7600 = vunpack.c.l.b16 %v6912
          %v7601 = vunpack.c.h.b16 %v6912
          %v7602 = vunpack.c.l.b16 %v6913
          %v7603 = vunpack.c.h.b16 %v6913
          %v7604 = vunpack.c.l.b16 %v6914
          %v7605 = vunpack.c.h.b16 %v6914
          %v7606 = vunpack.c.l.b16 %v6915
          %v7607 = vunpack.c.h.b16 %v6915
          %v7608 = vunpack.c.l.b16 %v6916
          %v7609 = vunpack.c.h.b16 %v6916
          %v7610 = vunpack.c.l.b16 %v6917
          %v7611 = vunpack.c.h.b16 %v6917
          %v7612 = vunpack.c.l.b16 %v6918
          %v7613 = vunpack.c.h.b16 %v6918
          %v7614 = vunpack.c.l.b16 %v6919
          %v7615 = vunpack.c.h.b16 %v6919
          %v7616 = vunpack.c.l.b16 %v6920
          %v7617 = vunpack.c.h.b16 %v6920
          %v7618 = vunpack.c.l.b16 %v6921
          %v7619 = vunpack.c.h.b16 %v6921
          %v7620 = vunpack.c.l.b16 %v6922
          %v7621 = vunpack.c.h.b16 %v6922
          %v7622 = vunpack.c.l.b16 %v6923
          %v7623 = vunpack.c.h.b16 %v6923
          %v7624 = vunpack.c.l.b16 %v6924
          %v7625 = vunpack.c.h.b16 %v6924
          %v7626 = vunpack.c.l.b16 %v6925
          %v7627 = vunpack.c.h.b16 %v6925
          %v7628 = vunpack.c.l.b16 %v6926
          %v7629 = vunpack.c.h.b16 %v6926
          %v7630 = vunpack.c.l.b16 %v6927
          %v7631 = vunpack.c.h.b16 %v6927
          %v7632 = vunpack.c.l.b16 %v6928
          %v7633 = vunpack.c.h.b16 %v6928
          %v7634 = vunpack.c.l.b16 %v6929
          %v7635 = vunpack.c.h.b16 %v6929
          %v7636 = vunpack.c.l.b16 %v6930
          %v7637 = vunpack.c.h.b16 %v6930
          %v7638 = vunpack.c.l.b16 %v6931
          %v7639 = vunpack.c.h.b16 %v6931
          %v7640 = vunpack.c.l.b16 %v6932
          %v7641 = vunpack.c.h.b16 %v6932
          %v7642 = vunpack.c.l.b16 %v6933
          %v7643 = vunpack.c.h.b16 %v6933
          %v7644 = vunpack.c.l.b16 %v6934
          %v7645 = vunpack.c.h.b16 %v6934
          %v7646 = vunpack.c.l.b16 %v6935
          %v7647 = vunpack.c.h.b16 %v6935
          %v7648 = vunpack.c.l.b16 %v6936
          %v7649 = vunpack.c.h.b16 %v6936
          %v7650 = vunpack.c.l.b16 %v6937
          %v7651 = vunpack.c.h.b16 %v6937
          %v7652 = vunpack.c.l.b16 %v6938
          %v7653 = vunpack.c.h.b16 %v6938
          %v7654 = vunpack.c.l.b16 %v6939
          %v7655 = vunpack.c.h.b16 %v6939
          %v7656 = vunpack.c.l.b16 %v6940
          %v7657 = vunpack.c.h.b16 %v6940
          %v7658 = vunpack.c.l.b16 %v6941
          %v7659 = vunpack.c.h.b16 %v6941
          %v7660 = vunpack.c.l.b16 %v6942
          %v7661 = vunpack.c.h.b16 %v6942
          %v7662 = vunpack.c.l.b16 %v6943
          %v7663 = vunpack.c.h.b16 %v6943
          %v7664 = vunpack.c.l.b16 %v6944
          %v7665 = vunpack.c.h.b16 %v6944
          %v7666 = vunpack.c.l.b16 %v6945
          %v7667 = vunpack.c.h.b16 %v6945
          %v7668 = vunpack.c.l.b16 %v6946
          %v7669 = vunpack.c.h.b16 %v6946
          %v7670 = vunpack.c.l.b16 %v6947
          %v7671 = vunpack.c.h.b16 %v6947
          %v7672 = vunpack.c.l.b16 %v6948
          %v7673 = vunpack.c.h.b16 %v6948
          %v7674 = vunpack.c.l.b16 %v6949
          %v7675 = vunpack.c.h.b16 %v6949
          %v7676 = vunpack.c.l.b16 %v6950
          %v7677 = vunpack.c.h.b16 %v6950
          %v7678 = vunpack.c.l.b16 %v6951
          %v7679 = vunpack.c.h.b16 %v6951
          %v7680 = vunpack.c.l.b16 %v6952
          %v7681 = vunpack.c.h.b16 %v6952
          %v7682 = vunpack.c.l.b16 %v6953
          %v7683 = vunpack.c.h.b16 %v6953
          %v7684 = vunpack.c.l.b16 %v6954
          %v7685 = vunpack.c.h.b16 %v6954
          %v7686 = vunpack.c.l.b16 %v6955
          %v7687 = vunpack.c.h.b16 %v6955
          %v7688 = vunpack.c.l.b16 %v6956
          %v7689 = vunpack.c.h.b16 %v6956
          %v7690 = vunpack.c.l.b16 %v6957
          %v7691 = vunpack.c.h.b16 %v6957
          %v7692 = vunpack.c.l.b16 %v6958
          %v7693 = vunpack.c.h.b16 %v6958
          %v7694 = vunpack.c.l.b16 %v6959
          %v7695 = vunpack.c.h.b16 %v6959
          %v7696 = vunpack.c.l.b16 %v6960
          %v7697 = vunpack.c.h.b16 %v6960
          %v7698 = vunpack.c.l.b16 %v6961
          %v7699 = vunpack.c.h.b16 %v6961
          %v7700 = vunpack.c.l.b16 %v6962
          %v7701 = vunpack.c.h.b16 %v6962
          %v7702 = vunpack.c.l.b16 %v6963
          %v7703 = vunpack.c.h.b16 %v6963
          %v7704 = vunpack.c.l.b16 %v6964
          %v7705 = vunpack.c.h.b16 %v6964
          %v7706 = vunpack.c.l.b16 %v6965
          %v7707 = vunpack.c.h.b16 %v6965
          %v7708 = vunpack.c.l.b16 %v6966
          %v7709 = vunpack.c.h.b16 %v6966
          %v7710 = vunpack.c.l.b16 %v6967
          %v7711 = vunpack.c.h.b16 %v6967
          %v7712 = vunpack.c.l.b16 %v6968
          %v7713 = vunpack.c.h.b16 %v6968
          %v7714 = vunpack.c.l.b16 %v6969
          %v7715 = vunpack.c.h.b16 %v6969
          %v7716 = vunpack.c.l.b16 %v6970
          %v7717 = vunpack.c.h.b16 %v6970
          %v7718 = vunpack.c.l.b16 %v6971
          %v7719 = vunpack.c.h.b16 %v6971
          %v7720 = vunpack.c.l.b16 %v6972
          %v7721 = vunpack.c.h.b16 %v6972
          %v7722 = vunpack.c.l.b16 %v6973
          %v7723 = vunpack.c.h.b16 %v6973
          %v7724 = vunpack.c.l.b16 %v6974
          %v7725 = vunpack.c.h.b16 %v6974
          %v7726 = vunpack.c.l.b16 %v6975
          %v7727 = vunpack.c.h.b16 %v6975
          %v7728 = vunpack.c.l.b16 %v6976
          %v7729 = vunpack.c.h.b16 %v6976
          %v7730 = vunpack.c.l.b16 %v6977
          %v7731 = vunpack.c.h.b16 %v6977
          %v7732 = vunpack.c.l.b16 %v6978
          %v7733 = vunpack.c.h.b16 %v6978
          %v7734 = vunpack.c.l.b16 %v6979
          %v7735 = vunpack.c.h.b16 %v6979
          %v7736 = vunpack.c.l.b16 %v6980
          %v7737 = vunpack.c.h.b16 %v6980
          %v7738 = vunpack.c.l.b16 %v6981
          %v7739 = vunpack.c.h.b16 %v6981
          %v7740 = vunpack.c.l.b16 %v6982
          %v7741 = vunpack.c.h.b16 %v6982
          %v7742 = vunpack.c.l.b16 %v6983
          %v7743 = vunpack.c.h.b16 %v6983
          %v7744 = vunpack.c.l.b16 %v6984
          %v7745 = vunpack.c.h.b16 %v6984
          %v7746 = vunpack.c.l.b16 %v6985
          %v7747 = vunpack.c.h.b16 %v6985
          %v7748 = vunpack.c.l.b16 %v6986
          %v7749 = vunpack.c.h.b16 %v6986
          %v7750 = vunpack.c.l.b16 %v6987
          %v7751 = vunpack.c.h.b16 %v6987
          %v7752 = vunpack.c.l.b16 %v6988
          %v7753 = vunpack.c.h.b16 %v6988
          %v7754 = vunpack.c.l.b16 %v6989
          %v7755 = vunpack.c.h.b16 %v6989
          %v7756 = vunpack.c.l.b16 %v6990
          %v7757 = vunpack.c.h.b16 %v6990
          %v7758 = vunpack.c.l.b16 %v6991
          %v7759 = vunpack.c.h.b16 %v6991
          %v7760 = vunpack.c.l.b16 %v6992
          %v7761 = vunpack.c.h.b16 %v6992
          %v7762 = vunpack.c.l.b16 %v6993
          %v7763 = vunpack.c.h.b16 %v6993
          %v7764 = vunpack.c.l.b16 %v6994
          %v7765 = vunpack.c.h.b16 %v6994
          %v7766 = vunpack.c.l.b16 %v6995
          %v7767 = vunpack.c.h.b16 %v6995
          %v7768 = vunpack.c.l.b16 %v6996
          %v7769 = vunpack.c.h.b16 %v6996
          %v7770 = vunpack.c.l.b16 %v6997
          %v7771 = vunpack.c.h.b16 %v6997
          %v7772 = vunpack.c.l.b16 %v6998
          %v7773 = vunpack.c.h.b16 %v6998
          %v7774 = vunpack.c.l.b16 %v6999
          %v7775 = vunpack.c.h.b16 %v6999
          %v7776 = vunpack.c.l.b16 %v7000
          %v7777 = vunpack.c.h.b16 %v7000
          %v7778 = vunpack.c.l.b16 %v7001
          %v7779 = vunpack.c.h.b16 %v7001
          %v7780 = vunpack.c.l.b16 %v7002
          %v7781 = vunpack.c.h.b16 %v7002
          %v7782 = vunpack.c.l.b16 %v7003
          %v7783 = vunpack.c.h.b16 %v7003
          %v7784 = vunpack.c.l.b16 %v7004
          %v7785 = vunpack.c.h.b16 %v7004
          %v7786 = vunpack.c.l.b16 %v7005
          %v7787 = vunpack.c.h.b16 %v7005
          %v7788 = vunpack.c.l.b16 %v7006
          %v7789 = vunpack.c.h.b16 %v7006
          %v7790 = vunpack.c.l.b16 %v7007
          %v7791 = vunpack.c.h.b16 %v7007
          %v7792 = vunpack.c.l.b16 %v7008
          %v7793 = vunpack.c.h.b16 %v7008
          %v7794 = vunpack.c.l.b16 %v7009
          %v7795 = vunpack.c.h.b16 %v7009
          %v7796 = vunpack.c.l.b16 %v7010
          %v7797 = vunpack.c.h.b16 %v7010
          %v7798 = vpack.c.b16 %v7290, %v7286
          %v7799 = vpack.c.b16 %v7291, %v7287
          %v7800 = vpack.c.b16 %v7292, %v7288
          %v7801 = vpack.c.b16 %v7293, %v7289
          %v7802 = vpack.c.b16 %v7298, %v7294
          %v7803 = vpack.c.b16 %v7299, %v7295
          %v7804 = vpack.c.b16 %v7300, %v7296
          %v7805 = vpack.c.b16 %v7301, %v7297
          %v7806 = vpack.c.b16 %v7306, %v7302
          %v7807 = vpack.c.b16 %v7307, %v7303
          %v7808 = vpack.c.b16 %v7308, %v7304
          %v7809 = vpack.c.b16 %v7309, %v7305
          %v7810 = vpack.c.b16 %v7314, %v7310
          %v7811 = vpack.c.b16 %v7315, %v7311
          %v7812 = vpack.c.b16 %v7316, %v7312
          %v7813 = vpack.c.b16 %v7317, %v7313
          %v7814 = vpack.c.b16 %v7322, %v7318
          %v7815 = vpack.c.b16 %v7323, %v7319
          %v7816 = vpack.c.b16 %v7324, %v7320
          %v7817 = vpack.c.b16 %v7325, %v7321
          %v7818 = vpack.c.b16 %v7330, %v7326
          %v7819 = vpack.c.b16 %v7331, %v7327
          %v7820 = vpack.c.b16 %v7332, %v7328
          %v7821 = vpack.c.b16 %v7333, %v7329
          %v7822 = vpack.c.b16 %v7338, %v7334
          %v7823 = vpack.c.b16 %v7339, %v7335
          %v7824 = vpack.c.b16 %v7340, %v7336
          %v7825 = vpack.c.b16 %v7341, %v7337
          %v7826 = vpack.c.b16 %v7346, %v7342
          %v7827 = vpack.c.b16 %v7347, %v7343
          %v7828 = vpack.c.b16 %v7348, %v7344
          %v7829 = vpack.c.b16 %v7349, %v7345
          %v7830 = vpack.c.b16 %v7354, %v7350
          %v7831 = vpack.c.b16 %v7355, %v7351
          %v7832 = vpack.c.b16 %v7356, %v7352
          %v7833 = vpack.c.b16 %v7357, %v7353
          %v7834 = vpack.c.b16 %v7362, %v7358
          %v7835 = vpack.c.b16 %v7363, %v7359
          %v7836 = vpack.c.b16 %v7364, %v7360
          %v7837 = vpack.c.b16 %v7365, %v7361
          %v7838 = vpack.c.b16 %v7370, %v7366
          %v7839 = vpack.c.b16 %v7371, %v7367
          %v7840 = vpack.c.b16 %v7372, %v7368
          %v7841 = vpack.c.b16 %v7373, %v7369
          %v7842 = vpack.c.b16 %v7378, %v7374
          %v7843 = vpack.c.b16 %v7379, %v7375
          %v7844 = vpack.c.b16 %v7380, %v7376
          %v7845 = vpack.c.b16 %v7381, %v7377
          %v7846 = vpack.c.b16 %v7386, %v7382
          %v7847 = vpack.c.b16 %v7387, %v7383
          %v7848 = vpack.c.b16 %v7388, %v7384
          %v7849 = vpack.c.b16 %v7389, %v7385
          %v7850 = vpack.c.b16 %v7394, %v7390
          %v7851 = vpack.c.b16 %v7395, %v7391
          %v7852 = vpack.c.b16 %v7396, %v7392
          %v7853 = vpack.c.b16 %v7397, %v7393
          %v7854 = vpack.c.b16 %v7402, %v7398
          %v7855 = vpack.c.b16 %v7403, %v7399
          %v7856 = vpack.c.b16 %v7404, %v7400
          %v7857 = vpack.c.b16 %v7405, %v7401
          %v7858 = vpack.c.b16 %v7410, %v7406
          %v7859 = vpack.c.b16 %v7411, %v7407
          %v7860 = vpack.c.b16 %v7412, %v7408
          %v7861 = vpack.c.b16 %v7413, %v7409
          %v7862 = vpack.c.b16 %v7418, %v7414
          %v7863 = vpack.c.b16 %v7419, %v7415
          %v7864 = vpack.c.b16 %v7420, %v7416
          %v7865 = vpack.c.b16 %v7421, %v7417
          %v7866 = vpack.c.b16 %v7426, %v7422
          %v7867 = vpack.c.b16 %v7427, %v7423
          %v7868 = vpack.c.b16 %v7428, %v7424
          %v7869 = vpack.c.b16 %v7429, %v7425
          %v7870 = vpack.c.b16 %v7434, %v7430
          %v7871 = vpack.c.b16 %v7435, %v7431
          %v7872 = vpack.c.b16 %v7436, %v7432
          %v7873 = vpack.c.b16 %v7437, %v7433
          %v7874 = vpack.c.b16 %v7442, %v7438
          %v7875 = vpack.c.b16 %v7443, %v7439
          %v7876 = vpack.c.b16 %v7444, %v7440
          %v7877 = vpack.c.b16 %v7445, %v7441
          %v7878 = vpack.c.b16 %v7450, %v7446
          %v7879 = vpack.c.b16 %v7451, %v7447
          %v7880 = vpack.c.b16 %v7452, %v7448
          %v7881 = vpack.c.b16 %v7453, %v7449
          %v7882 = vpack.c.b16 %v7458, %v7454
          %v7883 = vpack.c.b16 %v7459, %v7455
          %v7884 = vpack.c.b16 %v7460, %v7456
          %v7885 = vpack.c.b16 %v7461, %v7457
          %v7886 = vpack.c.b16 %v7466, %v7462
          %v7887 = vpack.c.b16 %v7467, %v7463
          %v7888 = vpack.c.b16 %v7468, %v7464
          %v7889 = vpack.c.b16 %v7469, %v7465
          %v7890 = vpack.c.b16 %v7474, %v7470
          %v7891 = vpack.c.b16 %v7475, %v7471
          %v7892 = vpack.c.b16 %v7476, %v7472
          %v7893 = vpack.c.b16 %v7477, %v7473
          %v7894 = vpack.c.b16 %v7482, %v7478
          %v7895 = vpack.c.b16 %v7483, %v7479
          %v7896 = vpack.c.b16 %v7484, %v7480
          %v7897 = vpack.c.b16 %v7485, %v7481
          %v7898 = vpack.c.b16 %v7490, %v7486
          %v7899 = vpack.c.b16 %v7491, %v7487
          %v7900 = vpack.c.b16 %v7492, %v7488
          %v7901 = vpack.c.b16 %v7493, %v7489
          %v7902 = vpack.c.b16 %v7498, %v7494
          %v7903 = vpack.c.b16 %v7499, %v7495
          %v7904 = vpack.c.b16 %v7500, %v7496
          %v7905 = vpack.c.b16 %v7501, %v7497
          %v7906 = vpack.c.b16 %v7506, %v7502
          %v7907 = vpack.c.b16 %v7507, %v7503
          %v7908 = vpack.c.b16 %v7508, %v7504
          %v7909 = vpack.c.b16 %v7509, %v7505
          %v7910 = vpack.c.b16 %v7514, %v7510
          %v7911 = vpack.c.b16 %v7515, %v7511
          %v7912 = vpack.c.b16 %v7516, %v7512
          %v7913 = vpack.c.b16 %v7517, %v7513
          %v7914 = vpack.c.b16 %v7522, %v7518
          %v7915 = vpack.c.b16 %v7523, %v7519
          %v7916 = vpack.c.b16 %v7524, %v7520
          %v7917 = vpack.c.b16 %v7525, %v7521
          %v7918 = vpack.c.b16 %v7530, %v7526
          %v7919 = vpack.c.b16 %v7531, %v7527
          %v7920 = vpack.c.b16 %v7532, %v7528
          %v7921 = vpack.c.b16 %v7533, %v7529
          %v7922 = vpack.c.b16 %v7538, %v7534
          %v7923 = vpack.c.b16 %v7539, %v7535
          %v7924 = vpack.c.b16 %v7540, %v7536
          %v7925 = vpack.c.b16 %v7541, %v7537
          %v7926 = vpack.c.b16 %v7546, %v7542
          %v7927 = vpack.c.b16 %v7547, %v7543
          %v7928 = vpack.c.b16 %v7548, %v7544
          %v7929 = vpack.c.b16 %v7549, %v7545
          %v7930 = vpack.c.b16 %v7554, %v7550
          %v7931 = vpack.c.b16 %v7555, %v7551
          %v7932 = vpack.c.b16 %v7556, %v7552
          %v7933 = vpack.c.b16 %v7557, %v7553
          %v7934 = vpack.c.b16 %v7562, %v7558
          %v7935 = vpack.c.b16 %v7563, %v7559
          %v7936 = vpack.c.b16 %v7564, %v7560
          %v7937 = vpack.c.b16 %v7565, %v7561
          %v7938 = vpack.c.b16 %v7570, %v7566
          %v7939 = vpack.c.b16 %v7571, %v7567
          %v7940 = vpack.c.b16 %v7572, %v7568
          %v7941 = vpack.c.b16 %v7573, %v7569
          %v7942 = vpack.c.b16 %v7578, %v7574
          %v7943 = vpack.c.b16 %v7579, %v7575
          %v7944 = vpack.c.b16 %v7580, %v7576
          %v7945 = vpack.c.b16 %v7581, %v7577
          %v7946 = vpack.c.b16 %v7586, %v7582
          %v7947 = vpack.c.b16 %v7587, %v7583
          %v7948 = vpack.c.b16 %v7588, %v7584
          %v7949 = vpack.c.b16 %v7589, %v7585
          %v7950 = vpack.c.b16 %v7594, %v7590
          %v7951 = vpack.c.b16 %v7595, %v7591
          %v7952 = vpack.c.b16 %v7596, %v7592
          %v7953 = vpack.c.b16 %v7597, %v7593
          %v7954 = vpack.c.b16 %v7602, %v7598
          %v7955 = vpack.c.b16 %v7603, %v7599
          %v7956 = vpack.c.b16 %v7604, %v7600
          %v7957 = vpack.c.b16 %v7605, %v7601
          %v7958 = vpack.c.b16 %v7610, %v7606
          %v7959 = vpack.c.b16 %v7611, %v7607
          %v7960 = vpack.c.b16 %v7612, %v7608
          %v7961 = vpack.c.b16 %v7613, %v7609
          %v7962 = vpack.c.b16 %v7618, %v7614
          %v7963 = vpack.c.b16 %v7619, %v7615
          %v7964 = vpack.c.b16 %v7620, %v7616
          %v7965 = vpack.c.b16 %v7621, %v7617
          %v7966 = vpack.c.b16 %v7626, %v7622
          %v7967 = vpack.c.b16 %v7627, %v7623
          %v7968 = vpack.c.b16 %v7628, %v7624
          %v7969 = vpack.c.b16 %v7629, %v7625
          %v7970 = vpack.c.b16 %v7634, %v7630
          %v7971 = vpack.c.b16 %v7635, %v7631
          %v7972 = vpack.c.b16 %v7636, %v7632
          %v7973 = vpack.c.b16 %v7637, %v7633
          %v7974 = vpack.c.b16 %v7642, %v7638
          %v7975 = vpack.c.b16 %v7643, %v7639
          %v7976 = vpack.c.b16 %v7644, %v7640
          %v7977 = vpack.c.b16 %v7645, %v7641
          %v7978 = vpack.c.b16 %v7650, %v7646
          %v7979 = vpack.c.b16 %v7651, %v7647
          %v7980 = vpack.c.b16 %v7652, %v7648
          %v7981 = vpack.c.b16 %v7653, %v7649
          %v7982 = vpack.c.b16 %v7658, %v7654
          %v7983 = vpack.c.b16 %v7659, %v7655
          %v7984 = vpack.c.b16 %v7660, %v7656
          %v7985 = vpack.c.b16 %v7661, %v7657
          %v7986 = vpack.c.b16 %v7666, %v7662
          %v7987 = vpack.c.b16 %v7667, %v7663
          %v7988 = vpack.c.b16 %v7668, %v7664
          %v7989 = vpack.c.b16 %v7669, %v7665
          %v7990 = vpack.c.b16 %v7674, %v7670
          %v7991 = vpack.c.b16 %v7675, %v7671
          %v7992 = vpack.c.b16 %v7676, %v7672
          %v7993 = vpack.c.b16 %v7677, %v7673
          %v7994 = vpack.c.b16 %v7682, %v7678
          %v7995 = vpack.c.b16 %v7683, %v7679
          %v7996 = vpack.c.b16 %v7684, %v7680
          %v7997 = vpack.c.b16 %v7685, %v7681
          %v7998 = vpack.c.b16 %v7690, %v7686
          %v7999 = vpack.c.b16 %v7691, %v7687
          %v8000 = vpack.c.b16 %v7692, %v7688
          %v8001 = vpack.c.b16 %v7693, %v7689
          %v8002 = vpack.c.b16 %v7698, %v7694
          %v8003 = vpack.c.b16 %v7699, %v7695
          %v8004 = vpack.c.b16 %v7700, %v7696
          %v8005 = vpack.c.b16 %v7701, %v7697
          %v8006 = vpack.c.b16 %v7706, %v7702
          %v8007 = vpack.c.b16 %v7707, %v7703
          %v8008 = vpack.c.b16 %v7708, %v7704
          %v8009 = vpack.c.b16 %v7709, %v7705
          %v8010 = vpack.c.b16 %v7714, %v7710
          %v8011 = vpack.c.b16 %v7715, %v7711
          %v8012 = vpack.c.b16 %v7716, %v7712
          %v8013 = vpack.c.b16 %v7717, %v7713
          %v8014 = vpack.c.b16 %v7722, %v7718
          %v8015 = vpack.c.b16 %v7723, %v7719
          %v8016 = vpack.c.b16 %v7724, %v7720
          %v8017 = vpack.c.b16 %v7725, %v7721
          %v8018 = vpack.c.b16 %v7730, %v7726
          %v8019 = vpack.c.b16 %v7731, %v7727
          %v8020 = vpack.c.b16 %v7732, %v7728
          %v8021 = vpack.c.b16 %v7733, %v7729
          %v8022 = vpack.c.b16 %v7738, %v7734
          %v8023 = vpack.c.b16 %v7739, %v7735
          %v8024 = vpack.c.b16 %v7740, %v7736
          %v8025 = vpack.c.b16 %v7741, %v7737
          %v8026 = vpack.c.b16 %v7746, %v7742
          %v8027 = vpack.c.b16 %v7747, %v7743
          %v8028 = vpack.c.b16 %v7748, %v7744
          %v8029 = vpack.c.b16 %v7749, %v7745
          %v8030 = vpack.c.b16 %v7754, %v7750
          %v8031 = vpack.c.b16 %v7755, %v7751
          %v8032 = vpack.c.b16 %v7756, %v7752
          %v8033 = vpack.c.b16 %v7757, %v7753
          %v8034 = vpack.c.b16 %v7762, %v7758
          %v8035 = vpack.c.b16 %v7763, %v7759
          %v8036 = vpack.c.b16 %v7764, %v7760
          %v8037 = vpack.c.b16 %v7765, %v7761
          %v8038 = vpack.c.b16 %v7770, %v7766
          %v8039 = vpack.c.b16 %v7771, %v7767
          %v8040 = vpack.c.b16 %v7772, %v7768
          %v8041 = vpack.c.b16 %v7773, %v7769
          %v8042 = vpack.c.b16 %v7778, %v7774
          %v8043 = vpack.c.b16 %v7779, %v7775
          %v8044 = vpack.c.b16 %v7780, %v7776
          %v8045 = vpack.c.b16 %v7781, %v7777
          %v8046 = vpack.c.b16 %v7786, %v7782
          %v8047 = vpack.c.b16 %v7787, %v7783
          %v8048 = vpack.c.b16 %v7788, %v7784
          %v8049 = vpack.c.b16 %v7789, %v7785
          %v8050 = vpack.c.b16 %v7794, %v7790
          %v8051 = vpack.c.b16 %v7795, %v7791
          %v8052 = vpack.c.b16 %v7796, %v7792
          %v8053 = vpack.c.b16 %v7797, %v7793
          %8310 = vmatpush.bf16.msra.mxu0 %v7826
          %8311 = vmatpush.bf16.msra.mxu0 %v7822
          %8312 = vmatpush.bf16.msra.mxu0 %v7818
          %8313 = vmatpush.bf16.msra.mxu0 %v7814
          %8314 = vmatpush.bf16.msra.mxu0 %v7810
          %8315 = vmatpush.bf16.msra.mxu0 %v7806
          %8316 = vmatpush.bf16.msra.mxu0 %v7802
          %8317 = vmatpush.bf16.msra.mxu0 %v7798
          %8318 = vmatmul.bf16.gmra.mxu0 %v7011
          %v8319 = vpop.f32.mrf.mxu0
          %v8320 = vadd.f32 %v7022, %v8319
          %v8321 = vpop.f32.mrf.mxu0
          %8322 = vdwg.mxu0
          %8323 = vmatpush.bf16.msra.mxu0 %v7858
          %8324 = vmatpush.bf16.msra.mxu0 %v7854
          %8325 = vmatpush.bf16.msra.mxu0 %v7850
          %8326 = vmatpush.bf16.msra.mxu0 %v7846
          %8327 = vmatpush.bf16.msra.mxu0 %v7842
          %8328 = vmatpush.bf16.msra.mxu0 %v7838
          %8329 = vmatpush.bf16.msra.mxu0 %v7834
          %8330 = vmatpush.bf16.msra.mxu0 %v7830
          %8331 = vmatmul.bf16.gmra.mxu0 %v7012
          %v8332 = vpop.f32.mrf.mxu0
          %v8333 = vadd.f32 %v8320, %v8332
          %v8334 = vpop.f32.mrf.mxu0
          %8335 = vdwg.mxu0
          %8336 = vmatpush.bf16.msra.mxu0 %v7890
          %8337 = vmatpush.bf16.msra.mxu0 %v7886
          %8338 = vmatpush.bf16.msra.mxu0 %v7882
          %8339 = vmatpush.bf16.msra.mxu0 %v7878
          %8340 = vmatpush.bf16.msra.mxu0 %v7874
          %8341 = vmatpush.bf16.msra.mxu0 %v7870
          %8342 = vmatpush.bf16.msra.mxu0 %v7866
          %8343 = vmatpush.bf16.msra.mxu0 %v7862
          %8344 = vmatmul.bf16.gmra.mxu0 %v7013
          %v8345 = vpop.f32.mrf.mxu0
          %v8346 = vadd.f32 %v8333, %v8345
          %v8347 = vpop.f32.mrf.mxu0
          %8348 = vdwg.mxu0
          %8349 = vmatpush.bf16.msra.mxu0 %v7922
          %8350 = vmatpush.bf16.msra.mxu0 %v7918
          %8351 = vmatpush.bf16.msra.mxu0 %v7914
          %8352 = vmatpush.bf16.msra.mxu0 %v7910
          %8353 = vmatpush.bf16.msra.mxu0 %v7906
          %8354 = vmatpush.bf16.msra.mxu0 %v7902
          %8355 = vmatpush.bf16.msra.mxu0 %v7898
          %8356 = vmatpush.bf16.msra.mxu0 %v7894
          %8357 = vmatmul.bf16.gmra.mxu0 %v7014
          %v8358 = vpop.f32.mrf.mxu0
          %v8359 = vadd.f32 %v8346, %v8358
          %v8360 = vpop.f32.mrf.mxu0
          %8361 = vdwg.mxu0
          %8362 = vmatpush.bf16.msra.mxu0 %v7954
          %8363 = vmatpush.bf16.msra.mxu0 %v7950
          %8364 = vmatpush.bf16.msra.mxu0 %v7946
          %8365 = vmatpush.bf16.msra.mxu0 %v7942
          %8366 = vmatpush.bf16.msra.mxu0 %v7938
          %8367 = vmatpush.bf16.msra.mxu0 %v7934
          %8368 = vmatpush.bf16.msra.mxu0 %v7930
          %8369 = vmatpush.bf16.msra.mxu0 %v7926
          %8370 = vmatmul.bf16.gmra.mxu0 %v7015
          %v8371 = vpop.f32.mrf.mxu0
          %v8372 = vadd.f32 %v8359, %v8371
          %v8373 = vpop.f32.mrf.mxu0
          %8374 = vdwg.mxu0
          %8375 = vmatpush.bf16.msra.mxu0 %v7986
          %8376 = vmatpush.bf16.msra.mxu0 %v7982
          %8377 = vmatpush.bf16.msra.mxu0 %v7978
          %8378 = vmatpush.bf16.msra.mxu0 %v7974
          %8379 = vmatpush.bf16.msra.mxu0 %v7970
          %8380 = vmatpush.bf16.msra.mxu0 %v7966
          %8381 = vmatpush.bf16.msra.mxu0 %v7962
          %8382 = vmatpush.bf16.msra.mxu0 %v7958
          %8383 = vmatmul.bf16.gmra.mxu0 %v7016
          %v8384 = vpop.f32.mrf.mxu0
          %v8385 = vadd.f32 %v8372, %v8384
          %v8386 = vpop.f32.mrf.mxu0
          %8387 = vdwg.mxu0
          %8388 = vmatpush.bf16.msra.mxu0 %v8018
          %8389 = vmatpush.bf16.msra.mxu0 %v8014
          %8390 = vmatpush.bf16.msra.mxu0 %v8010
          %8391 = vmatpush.bf16.msra.mxu0 %v8006
          %8392 = vmatpush.bf16.msra.mxu0 %v8002
          %8393 = vmatpush.bf16.msra.mxu0 %v7998
          %8394 = vmatpush.bf16.msra.mxu0 %v7994
          %8395 = vmatpush.bf16.msra.mxu0 %v7990
          %8396 = vmatmul.bf16.gmra.mxu0 %v7017
          %v8397 = vpop.f32.mrf.mxu0
          %v8398 = vadd.f32 %v8385, %v8397
          %v8399 = vpop.f32.mrf.mxu0
          %8400 = vdwg.mxu0
          %8401 = vmatpush.bf16.msra.mxu0 %v8050
          %8402 = vmatpush.bf16.msra.mxu0 %v8046
          %8403 = vmatpush.bf16.msra.mxu0 %v8042
          %8404 = vmatpush.bf16.msra.mxu0 %v8038
          %8405 = vmatpush.bf16.msra.mxu0 %v8034
          %8406 = vmatpush.bf16.msra.mxu0 %v8030
          %8407 = vmatpush.bf16.msra.mxu0 %v8026
          %8408 = vmatpush.bf16.msra.mxu0 %v8022
          %8409 = vmatmul.bf16.gmra.mxu0 %v7018
          %v8410 = vpop.f32.mrf.mxu0
          %v8411 = vadd.f32 %v8398, %v8410
          %v8412 = vpop.f32.mrf.mxu0
          %8413 = vdwg.mxu0
          %8414 = vmatpush.bf16.msra.mxu0 %v7827
          %8415 = vmatpush.bf16.msra.mxu0 %v7823
          %8416 = vmatpush.bf16.msra.mxu0 %v7819
          %8417 = vmatpush.bf16.msra.mxu0 %v7815
          %8418 = vmatpush.bf16.msra.mxu0 %v7811
          %8419 = vmatpush.bf16.msra.mxu0 %v7807
          %8420 = vmatpush.bf16.msra.mxu0 %v7803
          %8421 = vmatpush.bf16.msra.mxu0 %v7799
          %8422 = vmatmul.bf16.gmra.mxu0 %v7011
          %v8423 = vpop.f32.mrf.mxu0
          %v8424 = vadd.f32 %v7023, %v8423
          %v8425 = vpop.f32.mrf.mxu0
          %8426 = vdwg.mxu0
          %8427 = vmatpush.bf16.msra.mxu0 %v7859
          %8428 = vmatpush.bf16.msra.mxu0 %v7855
          %8429 = vmatpush.bf16.msra.mxu0 %v7851
          %8430 = vmatpush.bf16.msra.mxu0 %v7847
          %8431 = vmatpush.bf16.msra.mxu0 %v7843
          %8432 = vmatpush.bf16.msra.mxu0 %v7839
          %8433 = vmatpush.bf16.msra.mxu0 %v7835
          %8434 = vmatpush.bf16.msra.mxu0 %v7831
          %8435 = vmatmul.bf16.gmra.mxu0 %v7012
          %v8436 = vpop.f32.mrf.mxu0
          %v8437 = vadd.f32 %v8424, %v8436
          %v8438 = vpop.f32.mrf.mxu0
          %8439 = vdwg.mxu0
          %8440 = vmatpush.bf16.msra.mxu0 %v7891
          %8441 = vmatpush.bf16.msra.mxu0 %v7887
          %8442 = vmatpush.bf16.msra.mxu0 %v7883
          %8443 = vmatpush.bf16.msra.mxu0 %v7879
          %8444 = vmatpush.bf16.msra.mxu0 %v7875
          %8445 = vmatpush.bf16.msra.mxu0 %v7871
          %8446 = vmatpush.bf16.msra.mxu0 %v7867
          %8447 = vmatpush.bf16.msra.mxu0 %v7863
          %8448 = vmatmul.bf16.gmra.mxu0 %v7013
          %v8449 = vpop.f32.mrf.mxu0
          %v8450 = vadd.f32 %v8437, %v8449
          %v8451 = vpop.f32.mrf.mxu0
          %8452 = vdwg.mxu0
          %8453 = vmatpush.bf16.msra.mxu0 %v7923
          %8454 = vmatpush.bf16.msra.mxu0 %v7919
          %8455 = vmatpush.bf16.msra.mxu0 %v7915
          %8456 = vmatpush.bf16.msra.mxu0 %v7911
          %8457 = vmatpush.bf16.msra.mxu0 %v7907
          %8458 = vmatpush.bf16.msra.mxu0 %v7903
          %8459 = vmatpush.bf16.msra.mxu0 %v7899
          %8460 = vmatpush.bf16.msra.mxu0 %v7895
          %8461 = vmatmul.bf16.gmra.mxu0 %v7014
          %v8462 = vpop.f32.mrf.mxu0
          %v8463 = vadd.f32 %v8450, %v8462
          %v8464 = vpop.f32.mrf.mxu0
          %8465 = vdwg.mxu0
          %8466 = vmatpush.bf16.msra.mxu0 %v7955
          %8467 = vmatpush.bf16.msra.mxu0 %v7951
          %8468 = vmatpush.bf16.msra.mxu0 %v7947
          %8469 = vmatpush.bf16.msra.mxu0 %v7943
          %8470 = vmatpush.bf16.msra.mxu0 %v7939
          %8471 = vmatpush.bf16.msra.mxu0 %v7935
          %8472 = vmatpush.bf16.msra.mxu0 %v7931
          %8473 = vmatpush.bf16.msra.mxu0 %v7927
          %8474 = vmatmul.bf16.gmra.mxu0 %v7015
          %v8475 = vpop.f32.mrf.mxu0
          %v8476 = vadd.f32 %v8463, %v8475
          %v8477 = vpop.f32.mrf.mxu0
          %8478 = vdwg.mxu0
          %8479 = vmatpush.bf16.msra.mxu0 %v7987
          %8480 = vmatpush.bf16.msra.mxu0 %v7983
          %8481 = vmatpush.bf16.msra.mxu0 %v7979
          %8482 = vmatpush.bf16.msra.mxu0 %v7975
          %8483 = vmatpush.bf16.msra.mxu0 %v7971
          %8484 = vmatpush.bf16.msra.mxu0 %v7967
          %8485 = vmatpush.bf16.msra.mxu0 %v7963
          %8486 = vmatpush.bf16.msra.mxu0 %v7959
          %8487 = vmatmul.bf16.gmra.mxu0 %v7016
          %v8488 = vpop.f32.mrf.mxu0
          %v8489 = vadd.f32 %v8476, %v8488
          %v8490 = vpop.f32.mrf.mxu0
          %8491 = vdwg.mxu0
          %8492 = vmatpush.bf16.msra.mxu0 %v8019
          %8493 = vmatpush.bf16.msra.mxu0 %v8015
          %8494 = vmatpush.bf16.msra.mxu0 %v8011
          %8495 = vmatpush.bf16.msra.mxu0 %v8007
          %8496 = vmatpush.bf16.msra.mxu0 %v8003
          %8497 = vmatpush.bf16.msra.mxu0 %v7999
          %8498 = vmatpush.bf16.msra.mxu0 %v7995
          %8499 = vmatpush.bf16.msra.mxu0 %v7991
          %8500 = vmatmul.bf16.gmra.mxu0 %v7017
          %v8501 = vpop.f32.mrf.mxu0
          %v8502 = vadd.f32 %v8489, %v8501
          %v8503 = vpop.f32.mrf.mxu0
          %8504 = vdwg.mxu0
          %8505 = vmatpush.bf16.msra.mxu0 %v8051
          %8506 = vmatpush.bf16.msra.mxu0 %v8047
          %8507 = vmatpush.bf16.msra.mxu0 %v8043
          %8508 = vmatpush.bf16.msra.mxu0 %v8039
          %8509 = vmatpush.bf16.msra.mxu0 %v8035
          %8510 = vmatpush.bf16.msra.mxu0 %v8031
          %8511 = vmatpush.bf16.msra.mxu0 %v8027
          %8512 = vmatpush.bf16.msra.mxu0 %v8023
          %8513 = vmatmul.bf16.gmra.mxu0 %v7018
          %v8514 = vpop.f32.mrf.mxu0
          %v8515 = vadd.f32 %v8502, %v8514
          %v8516 = vpop.f32.mrf.mxu0
          %8517 = vdwg.mxu0
          %8518 = vmatpush.bf16.msra.mxu0 %v7828
          %8519 = vmatpush.bf16.msra.mxu0 %v7824
          %8520 = vmatpush.bf16.msra.mxu0 %v7820
          %8521 = vmatpush.bf16.msra.mxu0 %v7816
          %8522 = vmatpush.bf16.msra.mxu0 %v7812
          %8523 = vmatpush.bf16.msra.mxu0 %v7808
          %8524 = vmatpush.bf16.msra.mxu0 %v7804
          %8525 = vmatpush.bf16.msra.mxu0 %v7800
          %8526 = vmatmul.bf16.gmra.mxu0 %v7011
          %v8527 = vpop.f32.mrf.mxu0
          %v8528 = vadd.f32 %v7024, %v8527
          %v8529 = vpop.f32.mrf.mxu0
          %8530 = vdwg.mxu0
          %8531 = vmatpush.bf16.msra.mxu0 %v7860
          %8532 = vmatpush.bf16.msra.mxu0 %v7856
          %8533 = vmatpush.bf16.msra.mxu0 %v7852
          %8534 = vmatpush.bf16.msra.mxu0 %v7848
          %8535 = vmatpush.bf16.msra.mxu0 %v7844
          %8536 = vmatpush.bf16.msra.mxu0 %v7840
          %8537 = vmatpush.bf16.msra.mxu0 %v7836
          %8538 = vmatpush.bf16.msra.mxu0 %v7832
          %8539 = vmatmul.bf16.gmra.mxu0 %v7012
          %v8540 = vpop.f32.mrf.mxu0
          %v8541 = vadd.f32 %v8528, %v8540
          %v8542 = vpop.f32.mrf.mxu0
          %8543 = vdwg.mxu0
          %8544 = vmatpush.bf16.msra.mxu0 %v7892
          %8545 = vmatpush.bf16.msra.mxu0 %v7888
          %8546 = vmatpush.bf16.msra.mxu0 %v7884
          %8547 = vmatpush.bf16.msra.mxu0 %v7880
          %8548 = vmatpush.bf16.msra.mxu0 %v7876
          %8549 = vmatpush.bf16.msra.mxu0 %v7872
          %8550 = vmatpush.bf16.msra.mxu0 %v7868
          %8551 = vmatpush.bf16.msra.mxu0 %v7864
          %8552 = vmatmul.bf16.gmra.mxu0 %v7013
          %v8553 = vpop.f32.mrf.mxu0
          %v8554 = vadd.f32 %v8541, %v8553
          %v8555 = vpop.f32.mrf.mxu0
          %8556 = vdwg.mxu0
          %8557 = vmatpush.bf16.msra.mxu0 %v7924
          %8558 = vmatpush.bf16.msra.mxu0 %v7920
          %8559 = vmatpush.bf16.msra.mxu0 %v7916
          %8560 = vmatpush.bf16.msra.mxu0 %v7912
          %8561 = vmatpush.bf16.msra.mxu0 %v7908
          %8562 = vmatpush.bf16.msra.mxu0 %v7904
          %8563 = vmatpush.bf16.msra.mxu0 %v7900
          %8564 = vmatpush.bf16.msra.mxu0 %v7896
          %8565 = vmatmul.bf16.gmra.mxu0 %v7014
          %v8566 = vpop.f32.mrf.mxu0
          %v8567 = vadd.f32 %v8554, %v8566
          %v8568 = vpop.f32.mrf.mxu0
          %8569 = vdwg.mxu0
          %8570 = vmatpush.bf16.msra.mxu0 %v7956
          %8571 = vmatpush.bf16.msra.mxu0 %v7952
          %8572 = vmatpush.bf16.msra.mxu0 %v7948
          %8573 = vmatpush.bf16.msra.mxu0 %v7944
          %8574 = vmatpush.bf16.msra.mxu0 %v7940
          %8575 = vmatpush.bf16.msra.mxu0 %v7936
          %8576 = vmatpush.bf16.msra.mxu0 %v7932
          %8577 = vmatpush.bf16.msra.mxu0 %v7928
          %8578 = vmatmul.bf16.gmra.mxu0 %v7015
          %v8579 = vpop.f32.mrf.mxu0
          %v8580 = vadd.f32 %v8567, %v8579
          %v8581 = vpop.f32.mrf.mxu0
          %8582 = vdwg.mxu0
          %8583 = vmatpush.bf16.msra.mxu0 %v7988
          %8584 = vmatpush.bf16.msra.mxu0 %v7984
          %8585 = vmatpush.bf16.msra.mxu0 %v7980
          %8586 = vmatpush.bf16.msra.mxu0 %v7976
          %8587 = vmatpush.bf16.msra.mxu0 %v7972
          %8588 = vmatpush.bf16.msra.mxu0 %v7968
          %8589 = vmatpush.bf16.msra.mxu0 %v7964
          %8590 = vmatpush.bf16.msra.mxu0 %v7960
          %8591 = vmatmul.bf16.gmra.mxu0 %v7016
          %v8592 = vpop.f32.mrf.mxu0
          %v8593 = vadd.f32 %v8580, %v8592
          %v8594 = vpop.f32.mrf.mxu0
          %8595 = vdwg.mxu0
          %8596 = vmatpush.bf16.msra.mxu0 %v8020
          %8597 = vmatpush.bf16.msra.mxu0 %v8016
          %8598 = vmatpush.bf16.msra.mxu0 %v8012
          %8599 = vmatpush.bf16.msra.mxu0 %v8008
          %8600 = vmatpush.bf16.msra.mxu0 %v8004
          %8601 = vmatpush.bf16.msra.mxu0 %v8000
          %8602 = vmatpush.bf16.msra.mxu0 %v7996
          %8603 = vmatpush.bf16.msra.mxu0 %v7992
          %8604 = vmatmul.bf16.gmra.mxu0 %v7017
          %v8605 = vpop.f32.mrf.mxu0
          %v8606 = vadd.f32 %v8593, %v8605
          %v8607 = vpop.f32.mrf.mxu0
          %8608 = vdwg.mxu0
          %8609 = vmatpush.bf16.msra.mxu0 %v8052
          %8610 = vmatpush.bf16.msra.mxu0 %v8048
          %8611 = vmatpush.bf16.msra.mxu0 %v8044
          %8612 = vmatpush.bf16.msra.mxu0 %v8040
          %8613 = vmatpush.bf16.msra.mxu0 %v8036
          %8614 = vmatpush.bf16.msra.mxu0 %v8032
          %8615 = vmatpush.bf16.msra.mxu0 %v8028
          %8616 = vmatpush.bf16.msra.mxu0 %v8024
          %8617 = vmatmul.bf16.gmra.mxu0 %v7018
          %v8618 = vpop.f32.mrf.mxu0
          %v8619 = vadd.f32 %v8606, %v8618
          %v8620 = vpop.f32.mrf.mxu0
          %8621 = vdwg.mxu0
          %8622 = vmatpush.bf16.msra.mxu0 %v7829
          %8623 = vmatpush.bf16.msra.mxu0 %v7825
          %8624 = vmatpush.bf16.msra.mxu0 %v7821
          %8625 = vmatpush.bf16.msra.mxu0 %v7817
          %8626 = vmatpush.bf16.msra.mxu0 %v7813
          %8627 = vmatpush.bf16.msra.mxu0 %v7809
          %8628 = vmatpush.bf16.msra.mxu0 %v7805
          %8629 = vmatpush.bf16.msra.mxu0 %v7801
          %8630 = vmatmul.bf16.gmra.mxu0 %v7011
          %v8631 = vpop.f32.mrf.mxu0
          %v8632 = vadd.f32 %v7025, %v8631
          %v8633 = vpop.f32.mrf.mxu0
          %8634 = vdwg.mxu0
          %8635 = vmatpush.bf16.msra.mxu0 %v7861
          %8636 = vmatpush.bf16.msra.mxu0 %v7857
          %8637 = vmatpush.bf16.msra.mxu0 %v7853
          %8638 = vmatpush.bf16.msra.mxu0 %v7849
          %8639 = vmatpush.bf16.msra.mxu0 %v7845
          %8640 = vmatpush.bf16.msra.mxu0 %v7841
          %8641 = vmatpush.bf16.msra.mxu0 %v7837
          %8642 = vmatpush.bf16.msra.mxu0 %v7833
          %8643 = vmatmul.bf16.gmra.mxu0 %v7012
          %v8644 = vpop.f32.mrf.mxu0
          %v8645 = vadd.f32 %v8632, %v8644
          %v8646 = vpop.f32.mrf.mxu0
          %8647 = vdwg.mxu0
          %8648 = vmatpush.bf16.msra.mxu0 %v7893
          %8649 = vmatpush.bf16.msra.mxu0 %v7889
          %8650 = vmatpush.bf16.msra.mxu0 %v7885
          %8651 = vmatpush.bf16.msra.mxu0 %v7881
          %8652 = vmatpush.bf16.msra.mxu0 %v7877
          %8653 = vmatpush.bf16.msra.mxu0 %v7873
          %8654 = vmatpush.bf16.msra.mxu0 %v7869
          %8655 = vmatpush.bf16.msra.mxu0 %v7865
          %8656 = vmatmul.bf16.gmra.mxu0 %v7013
          %v8657 = vpop.f32.mrf.mxu0
          %v8658 = vadd.f32 %v8645, %v8657
          %v8659 = vpop.f32.mrf.mxu0
          %8660 = vdwg.mxu0
          %8661 = vmatpush.bf16.msra.mxu0 %v7925
          %8662 = vmatpush.bf16.msra.mxu0 %v7921
          %8663 = vmatpush.bf16.msra.mxu0 %v7917
          %8664 = vmatpush.bf16.msra.mxu0 %v7913
          %8665 = vmatpush.bf16.msra.mxu0 %v7909
          %8666 = vmatpush.bf16.msra.mxu0 %v7905
          %8667 = vmatpush.bf16.msra.mxu0 %v7901
          %8668 = vmatpush.bf16.msra.mxu0 %v7897
          %8669 = vmatmul.bf16.gmra.mxu0 %v7014
          %v8670 = vpop.f32.mrf.mxu0
          %v8671 = vadd.f32 %v8658, %v8670
          %v8672 = vpop.f32.mrf.mxu0
          %8673 = vdwg.mxu0
          %8674 = vmatpush.bf16.msra.mxu0 %v7957
          %8675 = vmatpush.bf16.msra.mxu0 %v7953
          %8676 = vmatpush.bf16.msra.mxu0 %v7949
          %8677 = vmatpush.bf16.msra.mxu0 %v7945
          %8678 = vmatpush.bf16.msra.mxu0 %v7941
          %8679 = vmatpush.bf16.msra.mxu0 %v7937
          %8680 = vmatpush.bf16.msra.mxu0 %v7933
          %8681 = vmatpush.bf16.msra.mxu0 %v7929
          %8682 = vmatmul.bf16.gmra.mxu0 %v7015
          %v8683 = vpop.f32.mrf.mxu0
          %v8684 = vadd.f32 %v8671, %v8683
          %v8685 = vpop.f32.mrf.mxu0
          %8686 = vdwg.mxu0
          %8687 = vmatpush.bf16.msra.mxu0 %v7989
          %8688 = vmatpush.bf16.msra.mxu0 %v7985
          %8689 = vmatpush.bf16.msra.mxu0 %v7981
          %8690 = vmatpush.bf16.msra.mxu0 %v7977
          %8691 = vmatpush.bf16.msra.mxu0 %v7973
          %8692 = vmatpush.bf16.msra.mxu0 %v7969
          %8693 = vmatpush.bf16.msra.mxu0 %v7965
          %8694 = vmatpush.bf16.msra.mxu0 %v7961
          %8695 = vmatmul.bf16.gmra.mxu0 %v7016
          %v8696 = vpop.f32.mrf.mxu0
          %v8697 = vadd.f32 %v8684, %v8696
          %v8698 = vpop.f32.mrf.mxu0
          %8699 = vdwg.mxu0
          %8700 = vmatpush.bf16.msra.mxu0 %v8021
          %8701 = vmatpush.bf16.msra.mxu0 %v8017
          %8702 = vmatpush.bf16.msra.mxu0 %v8013
          %8703 = vmatpush.bf16.msra.mxu0 %v8009
          %8704 = vmatpush.bf16.msra.mxu0 %v8005
          %8705 = vmatpush.bf16.msra.mxu0 %v8001
          %8706 = vmatpush.bf16.msra.mxu0 %v7997
          %8707 = vmatpush.bf16.msra.mxu0 %v7993
          %8708 = vmatmul.bf16.gmra.mxu0 %v7017
          %v8709 = vpop.f32.mrf.mxu0
          %v8710 = vadd.f32 %v8697, %v8709
          %v8711 = vpop.f32.mrf.mxu0
          %8712 = vdwg.mxu0
          %8713 = vmatpush.bf16.msra.mxu0 %v8053
          %8714 = vmatpush.bf16.msra.mxu0 %v8049
          %8715 = vmatpush.bf16.msra.mxu0 %v8045
          %8716 = vmatpush.bf16.msra.mxu0 %v8041
          %8717 = vmatpush.bf16.msra.mxu0 %v8037
          %8718 = vmatpush.bf16.msra.mxu0 %v8033
          %8719 = vmatpush.bf16.msra.mxu0 %v8029
          %8720 = vmatpush.bf16.msra.mxu0 %v8025
          %8721 = vmatmul.bf16.gmra.mxu0 %v7018
          %v8722 = vpop.f32.mrf.mxu0
          %v8723 = vadd.f32 %v8710, %v8722
          %v8724 = vpop.f32.mrf.mxu0
          %8725 = vdwg.mxu0
          %v8726 = vld [vmem:[%s0] sm:$0xff]
          %v8727 = vld [vmem:[#allocation8] sm:$0xf]
          %v8728 = vld [vmem:[#allocation8 + $0x4] sm:$0xf]
          %v8729 = vld [vmem:[#allocation8 + $0x8] sm:$0xf]
          %v8730 = vld [vmem:[#allocation8 + $0xc] sm:$0xf]
          %v8731 = vld [vmem:[#allocation8 + $0x10] sm:$0xf]
          %v8732 = vld [vmem:[#allocation8 + $0x14] sm:$0xf]
          %v8733 = vld [vmem:[#allocation8 + $0x18] sm:$0xf]
          %v8734 = vld [vmem:[#allocation8 + $0x1c] sm:$0xf]
          %v8735 = vpack.c.bf16 %v8726, %v8726
          %v8736 = vld [vmem:[#allocation21] ss:$0 sm:$0xff]
          %v8745 = vunpack.c.l.b16 %v8727
          %v8746 = vunpack.c.l.b16 %v8728
          %v8747 = vunpack.c.l.b16 %v8729
          %v8748 = vunpack.c.l.b16 %v8730
          %v8749 = vunpack.c.l.b16 %v8731
          %v8750 = vunpack.c.l.b16 %v8732
          %v8751 = vunpack.c.l.b16 %v8733
          %v8752 = vunpack.c.l.b16 %v8734
          %v8753 = vpack.c.b16 %v8746, %v8745
          %v8754 = vpack.c.b16 %v8748, %v8747
          %v8755 = vpack.c.b16 %v8750, %v8749
          %v8756 = vpack.c.b16 %v8752, %v8751
          %vm8761 = vcmask 523264
          %v8763 = vsel %vm8761, %v8735, 0
          %8765 = vmatpush.bf16.msra.mxu0 0
          %8766 = vmatpush.bf16.msra.mxu0 0
          %8767 = vmatpush.bf16.msra.mxu0 0
          %8768 = vmatpush.bf16.msra.mxu0 0
          %8769 = vmatpush.bf16.msra.mxu0 %v8756
          %8770 = vmatpush.bf16.msra.mxu0 %v8755
          %8771 = vmatpush.bf16.msra.mxu0 %v8754
          %8772 = vmatpush.bf16.msra.mxu0 %v8753
          %8773 = vmatmul.bf16.gmra.mxu0 %v8763
          %v8774 = vpop.f32.mrf.mxu0
          %v8775 = vadd.f32 %v8736, %v8774
          %v8776 = vpop.f32.mrf.mxu0
          %8777 = vdwg.mxu0
          %v8778 = vxor.u32 %v8775, 2147483648
          %v8779 = vmul.f32 %v8778, 1.442695
          %v8780 = vpow.pop %v8779
          %v8781 = vadd.f32 %v8780, 1.0
          %v8782 = vrcp.pop %v8781
          %v8783 = vmul.f32 %v8781, %v8782
          %v8784 = vsub.f32 1.0, %v8783
          %v8785 = vmul.f32 %v8782, %v8784
          %v8786 = vadd.f32 %v8782, %v8785
          %vm8787 = vweird.f32 %v8781
          %vm8788 = vweird.f32 %v8782
          %vm8789 = vmor %vm8787, %vm8788
          %v8790 = vsel %vm8789, %v8782, %v8786
          %v8791 = vand.u32 2147483647, %v8781
          %vm8792 = vcmp.eq.f32.partialorder %v8791, 8.507059e+37
          %v8793 = vand.u32 %v8781, 2147483648
          %v8794 = vor.u32 1.1754944e-38, %v8793
          %v8795 = vsel %vm8792, %v8794, %v8790
          %v8796 = vmul.f32 1.0, %v8795
          %v8797 = vmul.f32 %v8775, %v8796
          %v8798 = vld [vmem:[%s4] sm:$0xf]
          %v8799 = vld [vmem:[%s4 + $0x4] sm:$0xf]
          %v8800 = vld [vmem:[%s4 + $0x8] sm:$0xf]
          %v8801 = vld [vmem:[%s4 + $0xc] sm:$0xf]
          %v8802 = vld [vmem:[%s4 + $0x10] sm:$0xf]
          %v8803 = vld [vmem:[%s4 + $0x14] sm:$0xf]
          %v8804 = vld [vmem:[%s4 + $0x18] sm:$0xf]
          %v8805 = vld [vmem:[%s4 + $0x1c] sm:$0xf]
          %v8806 = vld [vmem:[%s4 + $0x20] sm:$0xf]
          %v8807 = vld [vmem:[%s4 + $0x24] sm:$0xf]
          %v8808 = vld [vmem:[%s4 + $0x28] sm:$0xf]
          %v8809 = vld [vmem:[%s4 + $0x2c] sm:$0xf]
          %v8810 = vld [vmem:[%s4 + $0x30] sm:$0xf]
          %v8811 = vld [vmem:[%s4 + $0x34] sm:$0xf]
          %v8812 = vld [vmem:[%s4 + $0x38] sm:$0xf]
          %v8813 = vld [vmem:[%s4 + $0x3c] sm:$0xf]
          %v8814 = vpack.c.bf16 %v8797, %v8797
          %v8815 = vld [vmem:[#allocation21 + $0x1] ss:$0 sm:$0xff]
          %v8832 = vunpack.c.l.b16 %v8798
          %v8833 = vunpack.c.l.b16 %v8799
          %v8834 = vunpack.c.l.b16 %v8800
          %v8835 = vunpack.c.l.b16 %v8801
          %v8836 = vunpack.c.l.b16 %v8802
          %v8837 = vunpack.c.l.b16 %v8803
          %v8838 = vunpack.c.l.b16 %v8804
          %v8839 = vunpack.c.l.b16 %v8805
          %v8840 = vunpack.c.l.b16 %v8806
          %v8841 = vunpack.c.l.b16 %v8807
          %v8842 = vunpack.c.l.b16 %v8808
          %v8843 = vunpack.c.l.b16 %v8809
          %v8844 = vunpack.c.l.b16 %v8810
          %v8845 = vunpack.c.l.b16 %v8811
          %v8846 = vunpack.c.l.b16 %v8812
          %v8847 = vunpack.c.l.b16 %v8813
          %v8848 = vpack.c.b16 %v8833, %v8832
          %v8849 = vpack.c.b16 %v8835, %v8834
          %v8850 = vpack.c.b16 %v8837, %v8836
          %v8851 = vpack.c.b16 %v8839, %v8838
          %v8852 = vpack.c.b16 %v8841, %v8840
          %v8853 = vpack.c.b16 %v8843, %v8842
          %v8854 = vpack.c.b16 %v8845, %v8844
          %v8855 = vpack.c.b16 %v8847, %v8846
          %8864 = vmatpush.bf16.msra.mxu0 %v8855
          %8865 = vmatpush.bf16.msra.mxu0 %v8854
          %8866 = vmatpush.bf16.msra.mxu0 %v8853
          %8867 = vmatpush.bf16.msra.mxu0 %v8852
          %8868 = vmatpush.bf16.msra.mxu0 %v8851
          %8869 = vmatpush.bf16.msra.mxu0 %v8850
          %8870 = vmatpush.bf16.msra.mxu0 %v8849
          %8871 = vmatpush.bf16.msra.mxu0 %v8848
          %8872 = vmatmul.bf16.gmra.mxu0 %v8814
          %v8873 = vpop.f32.mrf.mxu0
          %v8874 = vadd.f32 %v8815, %v8873
          %v8875 = vpop.f32.mrf.mxu0
          %8876 = vdwg.mxu0
          %v8877 = vld [vmem:[#allocation3] sm:$0xff]
          %v8878 = vld [vmem:[#allocation9] sm:$0xf]
          %v8879 = vld [vmem:[#allocation9 + $0x4] sm:$0xf]
          %v8880 = vld [vmem:[#allocation9 + $0x8] sm:$0xf]
          %v8881 = vld [vmem:[#allocation9 + $0xc] sm:$0xf]
          %v8882 = vpack.c.bf16 %v8877, %v8877
          %v8883 = vld [vmem:[#allocation21 + $0x2] ss:$0 sm:$0xff]
          %v8888 = vunpack.c.l.b16 %v8878
          %v8889 = vunpack.c.l.b16 %v8879
          %v8890 = vunpack.c.l.b16 %v8880
          %v8891 = vunpack.c.l.b16 %v8881
          %v8892 = vpack.c.b16 %v8889, %v8888
          %v8893 = vpack.c.b16 %v8891, %v8890
          %vm8896 = vcmask 261120
          %v8898 = vsel %vm8896, %v8882, 0
          %8900 = vmatpush.bf16.msra.mxu0 0
          %8901 = vmatpush.bf16.msra.mxu0 0
          %8902 = vmatpush.bf16.msra.mxu0 0
          %8903 = vmatpush.bf16.msra.mxu0 0
          %8904 = vmatpush.bf16.msra.mxu0 0
          %8905 = vmatpush.bf16.msra.mxu0 0
          %8906 = vmatpush.bf16.msra.mxu0 %v8893
          %8907 = vmatpush.bf16.msra.mxu0 %v8892
          %8908 = vmatmul.bf16.gmra.mxu0 %v8898
          %v8909 = vpop.f32.mrf.mxu0
          %v8910 = vadd.f32 %v8883, %v8909
          %v8911 = vpop.f32.mrf.mxu0
          %8912 = vdwg.mxu0
          %vm8913 = vcmp.ge.f32.partialorder %v8910, 0.0
          %v8914 = vmul.f32 %v8910, 0.01
          %v8915 = vsel %vm8913, %v8910, %v8914
          %v8916 = vld [vmem:[%s6] sm:$0xf]
          %v8917 = vld [vmem:[%s6 + $0x4] sm:$0xf]
          %v8918 = vld [vmem:[%s6 + $0x8] sm:$0xf]
          %v8919 = vld [vmem:[%s6 + $0xc] sm:$0xf]
          %v8920 = vld [vmem:[%s6 + $0x10] sm:$0xf]
          %v8921 = vld [vmem:[%s6 + $0x14] sm:$0xf]
          %v8922 = vld [vmem:[%s6 + $0x18] sm:$0xf]
          %v8923 = vld [vmem:[%s6 + $0x1c] sm:$0xf]
          %v8924 = vpack.c.bf16 %v8915, %v8915
          %v8925 = vld [vmem:[#allocation21 + $0x3] ss:$0 sm:$0xff]
          %v8934 = vunpack.c.l.b16 %v8916
          %v8935 = vunpack.c.l.b16 %v8917
          %v8936 = vunpack.c.l.b16 %v8918
          %v8937 = vunpack.c.l.b16 %v8919
          %v8938 = vunpack.c.l.b16 %v8920
          %v8939 = vunpack.c.l.b16 %v8921
          %v8940 = vunpack.c.l.b16 %v8922
          %v8941 = vunpack.c.l.b16 %v8923
          %v8942 = vpack.c.b16 %v8935, %v8934
          %v8943 = vpack.c.b16 %v8937, %v8936
          %v8944 = vpack.c.b16 %v8939, %v8938
          %v8945 = vpack.c.b16 %v8941, %v8940
          %v8951 = vsel %vm8761, %v8924, 0
          %8953 = vmatpush.bf16.msra.mxu0 0
          %8954 = vmatpush.bf16.msra.mxu0 0
          %8955 = vmatpush.bf16.msra.mxu0 0
          %8956 = vmatpush.bf16.msra.mxu0 0
          %8957 = vmatpush.bf16.msra.mxu0 %v8945
          %8958 = vmatpush.bf16.msra.mxu0 %v8944
          %8959 = vmatpush.bf16.msra.mxu0 %v8943
          %8960 = vmatpush.bf16.msra.mxu0 %v8942
          %8961 = vmatmul.bf16.gmra.mxu0 %v8951
          %v8962 = vpop.f32.mrf.mxu0
          %v8963 = vadd.f32 %v8925, %v8962
          %v8964 = vpop.f32.mrf.mxu0
          %8965 = vdwg.mxu0
          %v8966 = vld [vmem:[#allocation17] sm:$0xf]
          %v8967 = vld [vmem:[#allocation17 + $0x4] sm:$0xf]
          %v8968 = vld [vmem:[#allocation17 + $0x8] sm:$0xf]
          %v8969 = vld [vmem:[#allocation17 + $0xc] sm:$0xf]
          %v8970 = vpack.c.bf16 %v8963, %v8963
          %v8971 = vld [vmem:[%s12] sm:$0xf]
          %v8972 = vld [vmem:[%s12 + $0x4] sm:$0xf]
          %v8973 = vld [vmem:[%s12 + $0x8] sm:$0xf]
          %v8974 = vld [vmem:[%s12 + $0xc] sm:$0xf]
          %v8975 = vld [vmem:[%s12 + $0x10] sm:$0xf]
          %v8976 = vld [vmem:[%s12 + $0x14] sm:$0xf]
          %v8977 = vld [vmem:[%s12 + $0x18] sm:$0xf]
          %v8978 = vld [vmem:[%s12 + $0x1c] sm:$0xf]
          %v8979 = vld [vmem:[%s12 + $0x20] sm:$0xf]
          %v8980 = vld [vmem:[%s12 + $0x24] sm:$0xf]
          %v8981 = vld [vmem:[%s12 + $0x28] sm:$0xf]
          %v8982 = vld [vmem:[%s12 + $0x2c] sm:$0xf]
          %v8983 = vld [vmem:[%s12 + $0x30] sm:$0xf]
          %v8984 = vld [vmem:[%s12 + $0x34] sm:$0xf]
          %v8985 = vld [vmem:[%s12 + $0x38] sm:$0xf]
          %v8986 = vld [vmem:[%s12 + $0x3c] sm:$0xf]
          %v8987 = vld [vmem:[%s12 + $0x40] sm:$0xf]
          %v8988 = vld [vmem:[%s12 + $0x44] sm:$0xf]
          %v8989 = vld [vmem:[%s12 + $0x48] sm:$0xf]
          %v8990 = vld [vmem:[%s12 + $0x4c] sm:$0xf]
          %v8991 = vld [vmem:[%s12 + $0x50] sm:$0xf]
          %v8992 = vld [vmem:[%s12 + $0x54] sm:$0xf]
          %v8993 = vld [vmem:[%s12 + $0x58] sm:$0xf]
          %v8994 = vld [vmem:[%s12 + $0x5c] sm:$0xf]
          %v8995 = vld [vmem:[%s12 + $0x60] sm:$0xf]
          %v8996 = vld [vmem:[%s12 + $0x64] sm:$0xf]
          %v8997 = vld [vmem:[%s12 + $0x68] sm:$0xf]
          %v8998 = vld [vmem:[%s12 + $0x6c] sm:$0xf]
          %v8999 = vld [vmem:[%s12 + $0x70] sm:$0xf]
          %v9000 = vld [vmem:[%s12 + $0x74] sm:$0xf]
          %v9001 = vld [vmem:[%s12 + $0x78] sm:$0xf]
          %v9002 = vld [vmem:[%s12 + $0x7c] sm:$0xf]
          %v9003 = vld [vmem:[%s12 + $0x80] sm:$0xf]
          %v9004 = vld [vmem:[%s12 + $0x84] sm:$0xf]
          %v9005 = vld [vmem:[%s12 + $0x88] sm:$0xf]
          %v9006 = vld [vmem:[%s12 + $0x8c] sm:$0xf]
          %v9007 = vld [vmem:[%s12 + $0x90] sm:$0xf]
          %v9008 = vld [vmem:[%s12 + $0x94] sm:$0xf]
          %v9009 = vld [vmem:[%s12 + $0x98] sm:$0xf]
          %v9010 = vld [vmem:[%s12 + $0x9c] sm:$0xf]
          %v9011 = vld [vmem:[%s12 + $0xa0] sm:$0xf]
          %v9012 = vld [vmem:[%s12 + $0xa4] sm:$0xf]
          %v9013 = vld [vmem:[%s12 + $0xa8] sm:$0xf]
          %v9014 = vld [vmem:[%s12 + $0xac] sm:$0xf]
          %v9015 = vld [vmem:[%s12 + $0xb0] sm:$0xf]
          %v9016 = vld [vmem:[%s12 + $0xb4] sm:$0xf]
          %v9017 = vld [vmem:[%s12 + $0xb8] sm:$0xf]
          %v9018 = vld [vmem:[%s12 + $0xbc] sm:$0xf]
          %v9019 = vld [vmem:[%s12 + $0xc0] sm:$0xf]
          %v9020 = vld [vmem:[%s12 + $0xc4] sm:$0xf]
          %v9021 = vld [vmem:[%s12 + $0xc8] sm:$0xf]
          %v9022 = vld [vmem:[%s12 + $0xcc] sm:$0xf]
          %v9023 = vld [vmem:[%s12 + $0xd0] sm:$0xf]
          %v9024 = vld [vmem:[%s12 + $0xd4] sm:$0xf]
          %v9025 = vld [vmem:[%s12 + $0xd8] sm:$0xf]
          %v9026 = vld [vmem:[%s12 + $0xdc] sm:$0xf]
          %v9027 = vld [vmem:[%s12 + $0xe0] sm:$0xf]
          %v9028 = vld [vmem:[%s12 + $0xe4] sm:$0xf]
          %v9029 = vld [vmem:[%s12 + $0xe8] sm:$0xf]
          %v9030 = vld [vmem:[%s12 + $0xec] sm:$0xf]
          %v9031 = vld [vmem:[%s12 + $0xf0] sm:$0xf]
          %v9032 = vld [vmem:[%s12 + $0xf4] sm:$0xf]
          %v9033 = vld [vmem:[%s12 + $0xf8] sm:$0xf]
          %v9034 = vld [vmem:[%s12 + $0xfc] sm:$0xf]
          %v9035 = vpack.c.bf16 %v8411, %v8411
          %v9036 = vpack.c.bf16 %v8515, %v8515
          %v9037 = vpack.c.bf16 %v8619, %v8619
          %v9038 = vpack.c.bf16 %v8723, %v8723
          %v9103 = vunpack.c.l.b16 %v8971
          %v9104 = vunpack.c.l.b16 %v8972
          %v9105 = vunpack.c.l.b16 %v8973
          %v9106 = vunpack.c.l.b16 %v8974
          %v9107 = vunpack.c.l.b16 %v8975
          %v9108 = vunpack.c.l.b16 %v8976
          %v9109 = vunpack.c.l.b16 %v8977
          %v9110 = vunpack.c.l.b16 %v8978
          %v9111 = vunpack.c.l.b16 %v8979
          %v9112 = vunpack.c.l.b16 %v8980
          %v9113 = vunpack.c.l.b16 %v8981
          %v9114 = vunpack.c.l.b16 %v8982
          %v9115 = vunpack.c.l.b16 %v8983
          %v9116 = vunpack.c.l.b16 %v8984
          %v9117 = vunpack.c.l.b16 %v8985
          %v9118 = vunpack.c.l.b16 %v8986
          %v9119 = vunpack.c.l.b16 %v8987
          %v9120 = vunpack.c.l.b16 %v8988
          %v9121 = vunpack.c.l.b16 %v8989
          %v9122 = vunpack.c.l.b16 %v8990
          %v9123 = vunpack.c.l.b16 %v8991
          %v9124 = vunpack.c.l.b16 %v8992
          %v9125 = vunpack.c.l.b16 %v8993
          %v9126 = vunpack.c.l.b16 %v8994
          %v9127 = vunpack.c.l.b16 %v8995
          %v9128 = vunpack.c.l.b16 %v8996
          %v9129 = vunpack.c.l.b16 %v8997
          %v9130 = vunpack.c.l.b16 %v8998
          %v9131 = vunpack.c.l.b16 %v8999
          %v9132 = vunpack.c.l.b16 %v9000
          %v9133 = vunpack.c.l.b16 %v9001
          %v9134 = vunpack.c.l.b16 %v9002
          %v9135 = vunpack.c.l.b16 %v9003
          %v9136 = vunpack.c.l.b16 %v9004
          %v9137 = vunpack.c.l.b16 %v9005
          %v9138 = vunpack.c.l.b16 %v9006
          %v9139 = vunpack.c.l.b16 %v9007
          %v9140 = vunpack.c.l.b16 %v9008
          %v9141 = vunpack.c.l.b16 %v9009
          %v9142 = vunpack.c.l.b16 %v9010
          %v9143 = vunpack.c.l.b16 %v9011
          %v9144 = vunpack.c.l.b16 %v9012
          %v9145 = vunpack.c.l.b16 %v9013
          %v9146 = vunpack.c.l.b16 %v9014
          %v9147 = vunpack.c.l.b16 %v9015
          %v9148 = vunpack.c.l.b16 %v9016
          %v9149 = vunpack.c.l.b16 %v9017
          %v9150 = vunpack.c.l.b16 %v9018
          %v9151 = vunpack.c.l.b16 %v9019
          %v9152 = vunpack.c.l.b16 %v9020
          %v9153 = vunpack.c.l.b16 %v9021
          %v9154 = vunpack.c.l.b16 %v9022
          %v9155 = vunpack.c.l.b16 %v9023
          %v9156 = vunpack.c.l.b16 %v9024
          %v9157 = vunpack.c.l.b16 %v9025
          %v9158 = vunpack.c.l.b16 %v9026
          %v9159 = vunpack.c.l.b16 %v9027
          %v9160 = vunpack.c.l.b16 %v9028
          %v9161 = vunpack.c.l.b16 %v9029
          %v9162 = vunpack.c.l.b16 %v9030
          %v9163 = vunpack.c.l.b16 %v9031
          %v9164 = vunpack.c.l.b16 %v9032
          %v9165 = vunpack.c.l.b16 %v9033
          %v9166 = vunpack.c.l.b16 %v9034
          %v9167 = vpack.c.b16 %v9104, %v9103
          %v9168 = vpack.c.b16 %v9106, %v9105
          %v9169 = vpack.c.b16 %v9108, %v9107
          %v9170 = vpack.c.b16 %v9110, %v9109
          %v9171 = vpack.c.b16 %v9112, %v9111
          %v9172 = vpack.c.b16 %v9114, %v9113
          %v9173 = vpack.c.b16 %v9116, %v9115
          %v9174 = vpack.c.b16 %v9118, %v9117
          %v9175 = vpack.c.b16 %v9120, %v9119
          %v9176 = vpack.c.b16 %v9122, %v9121
          %v9177 = vpack.c.b16 %v9124, %v9123
          %v9178 = vpack.c.b16 %v9126, %v9125
          %v9179 = vpack.c.b16 %v9128, %v9127
          %v9180 = vpack.c.b16 %v9130, %v9129
          %v9181 = vpack.c.b16 %v9132, %v9131
          %v9182 = vpack.c.b16 %v9134, %v9133
          %v9183 = vpack.c.b16 %v9136, %v9135
          %v9184 = vpack.c.b16 %v9138, %v9137
          %v9185 = vpack.c.b16 %v9140, %v9139
          %v9186 = vpack.c.b16 %v9142, %v9141
          %v9187 = vpack.c.b16 %v9144, %v9143
          %v9188 = vpack.c.b16 %v9146, %v9145
          %v9189 = vpack.c.b16 %v9148, %v9147
          %v9190 = vpack.c.b16 %v9150, %v9149
          %v9191 = vpack.c.b16 %v9152, %v9151
          %v9192 = vpack.c.b16 %v9154, %v9153
          %v9193 = vpack.c.b16 %v9156, %v9155
          %v9194 = vpack.c.b16 %v9158, %v9157
          %v9195 = vpack.c.b16 %v9160, %v9159
          %v9196 = vpack.c.b16 %v9162, %v9161
          %v9197 = vpack.c.b16 %v9164, %v9163
          %v9198 = vpack.c.b16 %v9166, %v9165
          %9231 = vmatpush.bf16.msra.mxu0 %v9174
          %9232 = vmatpush.bf16.msra.mxu0 %v9173
          %9233 = vmatpush.bf16.msra.mxu0 %v9172
          %9234 = vmatpush.bf16.msra.mxu0 %v9171
          %9235 = vmatpush.bf16.msra.mxu0 %v9170
          %9236 = vmatpush.bf16.msra.mxu0 %v9169
          %9237 = vmatpush.bf16.msra.mxu0 %v9168
          %9238 = vmatpush.bf16.msra.mxu0 %v9167
          %9239 = vmatmul.bf16.gmra.mxu0 %v9035
          %v9240 = vpop.f32.mrf.mxu0
          %v9241 = vadd.f32 0.0, %v9240
          %v9242 = vpop.f32.mrf.mxu0
          %9243 = vdwg.mxu0
          %9244 = vmatpush.bf16.msra.mxu0 %v9182
          %9245 = vmatpush.bf16.msra.mxu0 %v9181
          %9246 = vmatpush.bf16.msra.mxu0 %v9180
          %9247 = vmatpush.bf16.msra.mxu0 %v9179
          %9248 = vmatpush.bf16.msra.mxu0 %v9178
          %9249 = vmatpush.bf16.msra.mxu0 %v9177
          %9250 = vmatpush.bf16.msra.mxu0 %v9176
          %9251 = vmatpush.bf16.msra.mxu0 %v9175
          %9252 = vmatmul.bf16.gmra.mxu0 %v9036
          %v9253 = vpop.f32.mrf.mxu0
          %v9254 = vadd.f32 %v9241, %v9253
          %v9255 = vpop.f32.mrf.mxu0
          %9256 = vdwg.mxu0
          %9257 = vmatpush.bf16.msra.mxu0 %v9190
          %9258 = vmatpush.bf16.msra.mxu0 %v9189
          %9259 = vmatpush.bf16.msra.mxu0 %v9188
          %9260 = vmatpush.bf16.msra.mxu0 %v9187
          %9261 = vmatpush.bf16.msra.mxu0 %v9186
          %9262 = vmatpush.bf16.msra.mxu0 %v9185
          %9263 = vmatpush.bf16.msra.mxu0 %v9184
          %9264 = vmatpush.bf16.msra.mxu0 %v9183
          %9265 = vmatmul.bf16.gmra.mxu0 %v9037
          %v9266 = vpop.f32.mrf.mxu0
          %v9267 = vadd.f32 %v9254, %v9266
          %v9268 = vpop.f32.mrf.mxu0
          %9269 = vdwg.mxu0
          %9270 = vmatpush.bf16.msra.mxu0 %v9198
          %9271 = vmatpush.bf16.msra.mxu0 %v9197
          %9272 = vmatpush.bf16.msra.mxu0 %v9196
          %9273 = vmatpush.bf16.msra.mxu0 %v9195
          %9274 = vmatpush.bf16.msra.mxu0 %v9194
          %9275 = vmatpush.bf16.msra.mxu0 %v9193
          %9276 = vmatpush.bf16.msra.mxu0 %v9192
          %9277 = vmatpush.bf16.msra.mxu0 %v9191
          %9278 = vmatmul.bf16.gmra.mxu0 %v9038
          %v9279 = vpop.f32.mrf.mxu0
          %v9280 = vadd.f32 %v9267, %v9279
          %v9281 = vpop.f32.mrf.mxu0
          %9282 = vdwg.mxu0
          %v9287 = vunpack.c.l.b16 %v8966
          %v9288 = vunpack.c.l.b16 %v8967
          %v9289 = vunpack.c.l.b16 %v8968
          %v9290 = vunpack.c.l.b16 %v8969
          %v9291 = vpack.c.b16 %v9288, %v9287
          %v9292 = vpack.c.b16 %v9290, %v9289
          %v9296 = vsel %vm8896, %v8970, 0
          %9298 = vmatpush.bf16.msra.mxu0 0
          %9299 = vmatpush.bf16.msra.mxu0 0
          %9300 = vmatpush.bf16.msra.mxu0 0
          %9301 = vmatpush.bf16.msra.mxu0 0
          %9302 = vmatpush.bf16.msra.mxu0 0
          %9303 = vmatpush.bf16.msra.mxu0 0
          %9304 = vmatpush.bf16.msra.mxu0 %v9292
          %9305 = vmatpush.bf16.msra.mxu0 %v9291
          %9306 = vmatmul.bf16.gmra.mxu0 %v9296
          %v9307 = vpop.f32.mrf.mxu0
          %v9308 = vadd.f32 %v9280, %v9307
          %v9309 = vpop.f32.mrf.mxu0
          %9310 = vdwg.mxu0
          %v9311 = vld [vmem:[#allocation18] sm:$0xf]
          %v9312 = vld [vmem:[#allocation18 + $0x4] sm:$0xf]
          %v9313 = vld [vmem:[#allocation18 + $0x8] sm:$0xf]
          %v9314 = vld [vmem:[#allocation18 + $0xc] sm:$0xf]
          %v9315 = vld [vmem:[#allocation18 + $0x10] sm:$0xf]
          %v9316 = vld [vmem:[#allocation18 + $0x14] sm:$0xf]
          %v9317 = vld [vmem:[#allocation18 + $0x18] sm:$0xf]
          %v9318 = vld [vmem:[#allocation18 + $0x1c] sm:$0xf]
          %v9319 = vpack.c.bf16 %v8874, %v8874
          %v9328 = vunpack.c.l.b16 %v9311
          %v9329 = vunpack.c.l.b16 %v9312
          %v9330 = vunpack.c.l.b16 %v9313
          %v9331 = vunpack.c.l.b16 %v9314
          %v9332 = vunpack.c.l.b16 %v9315
          %v9333 = vunpack.c.l.b16 %v9316
          %v9334 = vunpack.c.l.b16 %v9317
          %v9335 = vunpack.c.l.b16 %v9318
          %v9336 = vpack.c.b16 %v9329, %v9328
          %v9337 = vpack.c.b16 %v9331, %v9330
          %v9338 = vpack.c.b16 %v9333, %v9332
          %v9339 = vpack.c.b16 %v9335, %v9334
          %v9345 = vsel %vm8761, %v9319, 0
          %9347 = vmatpush.bf16.msra.mxu0 0
          %9348 = vmatpush.bf16.msra.mxu0 0
          %9349 = vmatpush.bf16.msra.mxu0 0
          %9350 = vmatpush.bf16.msra.mxu0 0
          %9351 = vmatpush.bf16.msra.mxu0 %v9339
          %9352 = vmatpush.bf16.msra.mxu0 %v9338
          %9353 = vmatpush.bf16.msra.mxu0 %v9337
          %9354 = vmatpush.bf16.msra.mxu0 %v9336
          %9355 = vmatmul.bf16.gmra.mxu0 %v9345
          %v9356 = vpop.f32.mrf.mxu0
          %v9357 = vadd.f32 0.0, %v9356
          %v9358 = vpop.f32.mrf.mxu0
          %9359 = vdwg.mxu0
          %v9360 = vadd.f32 %v9308, %v9357
          %v9361 = vld [vmem:[#allocation21 + $0x6] ss:$0 sm:$0xff]
          %v9362 = vadd.f32 %v9360, %v9361
          %vm9363 = vcmp.ge.f32.partialorder %v9362, 0.0
          %v9364 = vmul.f32 %v9362, 0.01
          %v9365 = vsel %vm9363, %v9362, %v9364
          %v9366 = vld [vmem:[#allocation20] sm:$0xf]
          %v9367 = vld [vmem:[#allocation20 + $0x4] sm:$0xf]
          %v9368 = vld [vmem:[#allocation20 + $0x8] sm:$0xf]
          %v9369 = vld [vmem:[#allocation20 + $0xc] sm:$0xf]
          %v9370 = vld [vmem:[#allocation20 + $0x10] sm:$0xf]
          %v9371 = vld [vmem:[#allocation20 + $0x14] sm:$0xf]
          %v9372 = vld [vmem:[#allocation20 + $0x18] sm:$0xf]
          %v9373 = vld [vmem:[#allocation20 + $0x1c] sm:$0xf]
          %v9374 = vpack.c.bf16 %v9365, %v9365
          %v9375 = vld [vmem:[#allocation21 + $0x7] ss:$0 sm:$0xff]
          %v9384 = vunpack.c.l.b16 %v9366
          %v9385 = vunpack.c.l.b16 %v9367
          %v9386 = vunpack.c.l.b16 %v9368
          %v9387 = vunpack.c.l.b16 %v9369
          %v9388 = vunpack.c.l.b16 %v9370
          %v9389 = vunpack.c.l.b16 %v9371
          %v9390 = vunpack.c.l.b16 %v9372
          %v9391 = vunpack.c.l.b16 %v9373
          %v9392 = vpack.c.b16 %v9385, %v9384
          %v9393 = vpack.c.b16 %v9387, %v9386
          %v9394 = vpack.c.b16 %v9389, %v9388
          %v9395 = vpack.c.b16 %v9391, %v9390
          %v9401 = vsel %vm8761, %v9374, 0
          %9403 = vmatpush.bf16.msra.mxu0 0
          %9404 = vmatpush.bf16.msra.mxu0 0
          %9405 = vmatpush.bf16.msra.mxu0 0
          %9406 = vmatpush.bf16.msra.mxu0 0
          %9407 = vmatpush.bf16.msra.mxu0 %v9395
          %9408 = vmatpush.bf16.msra.mxu0 %v9394
          %9409 = vmatpush.bf16.msra.mxu0 %v9393
          %9410 = vmatpush.bf16.msra.mxu0 %v9392
          %9411 = vmatmul.bf16.gmra.mxu0 %v9401
          %v9412 = vpop.f32.mrf.mxu0
          %v9413 = vadd.f32 %v9375, %v9412
          %v9414 = vpop.f32.mrf.mxu0
          %9415 = vdwg.mxu0
          %vm9416 = vcmp.ge.f32.partialorder %v9413, 0.0
          %v9417 = vmul.f32 %v9413, 0.01
          %v9418 = vsel %vm9416, %v9413, %v9417
          %s9419 = scalar_lea.vmem [#allocation20], 32
          %v9420 = vld [vmem:[%s9419] sm:$0xf]
          %v9421 = vld [vmem:[%s9419 + $0x4] sm:$0xf]
          %v9422 = vld [vmem:[%s9419 + $0x8] sm:$0xf]
          %v9423 = vld [vmem:[%s9419 + $0xc] sm:$0xf]
          %v9424 = vld [vmem:[%s9419 + $0x10] sm:$0xf]
          %v9425 = vld [vmem:[%s9419 + $0x14] sm:$0xf]
          %v9426 = vld [vmem:[%s9419 + $0x18] sm:$0xf]
          %v9427 = vld [vmem:[%s9419 + $0x1c] sm:$0xf]
          %v9428 = vpack.c.bf16 %v9418, %v9418
          %v9429 = vld [vmem:[#allocation21 + $0x40] ss:$0 sm:$0xff]
          %v9438 = vunpack.c.l.b16 %v9420
          %v9439 = vunpack.c.l.b16 %v9421
          %v9440 = vunpack.c.l.b16 %v9422
          %v9441 = vunpack.c.l.b16 %v9423
          %v9442 = vunpack.c.l.b16 %v9424
          %v9443 = vunpack.c.l.b16 %v9425
          %v9444 = vunpack.c.l.b16 %v9426
          %v9445 = vunpack.c.l.b16 %v9427
          %v9446 = vpack.c.b16 %v9439, %v9438
          %v9447 = vpack.c.b16 %v9441, %v9440
          %v9448 = vpack.c.b16 %v9443, %v9442
          %v9449 = vpack.c.b16 %v9445, %v9444
          %v9455 = vsel %vm8761, %v9428, 0
          %9457 = vmatpush.bf16.msra.mxu0 0
          %9458 = vmatpush.bf16.msra.mxu0 0
          %9459 = vmatpush.bf16.msra.mxu0 0
          %9460 = vmatpush.bf16.msra.mxu0 0
          %9461 = vmatpush.bf16.msra.mxu0 %v9449
          %9462 = vmatpush.bf16.msra.mxu0 %v9448
          %9463 = vmatpush.bf16.msra.mxu0 %v9447
          %9464 = vmatpush.bf16.msra.mxu0 %v9446
          %9465 = vmatmul.bf16.gmra.mxu0 %v9455
          %v9466 = vpop.f32.mrf.mxu0
          %v9467 = vadd.f32 %v9429, %v9466
          %v9468 = vpop.f32.mrf.mxu0
          %9469 = vdwg.mxu0
          %vm9470 = vcmp.ge.f32.partialorder %v9467, 0.0
          %v9471 = vmul.f32 %v9467, 0.01
          %v9472 = vsel %vm9470, %v9467, %v9471
          %s9473 = scalar_lea.vmem [#allocation20], 64
          %v9474 = vld [vmem:[%s9473] sm:$0xf]
          %v9475 = vld [vmem:[%s9473 + $0x4] sm:$0xf]
          %v9476 = vld [vmem:[%s9473 + $0x8] sm:$0xf]
          %v9477 = vld [vmem:[%s9473 + $0xc] sm:$0xf]
          %v9478 = vld [vmem:[%s9473 + $0x10] sm:$0xf]
          %v9479 = vld [vmem:[%s9473 + $0x14] sm:$0xf]
          %v9480 = vld [vmem:[%s9473 + $0x18] sm:$0xf]
          %v9481 = vld [vmem:[%s9473 + $0x1c] sm:$0xf]
          %v9482 = vpack.c.bf16 %v9472, %v9472
          %v9483 = vld [vmem:[#allocation21 + $0x41] ss:$0 sm:$0xff]
          %v9492 = vunpack.c.l.b16 %v9474
          %v9493 = vunpack.c.l.b16 %v9475
          %v9494 = vunpack.c.l.b16 %v9476
          %v9495 = vunpack.c.l.b16 %v9477
          %v9496 = vunpack.c.l.b16 %v9478
          %v9497 = vunpack.c.l.b16 %v9479
          %v9498 = vunpack.c.l.b16 %v9480
          %v9499 = vunpack.c.l.b16 %v9481
          %v9500 = vpack.c.b16 %v9493, %v9492
          %v9501 = vpack.c.b16 %v9495, %v9494
          %v9502 = vpack.c.b16 %v9497, %v9496
          %v9503 = vpack.c.b16 %v9499, %v9498
          %v9509 = vsel %vm8761, %v9482, 0
          %9511 = vmatpush.bf16.msra.mxu0 0
          %9512 = vmatpush.bf16.msra.mxu0 0
          %9513 = vmatpush.bf16.msra.mxu0 0
          %9514 = vmatpush.bf16.msra.mxu0 0
          %9515 = vmatpush.bf16.msra.mxu0 %v9503
          %9516 = vmatpush.bf16.msra.mxu0 %v9502
          %9517 = vmatpush.bf16.msra.mxu0 %v9501
          %9518 = vmatpush.bf16.msra.mxu0 %v9500
          %9519 = vmatmul.bf16.gmra.mxu0 %v9509
          %v9520 = vpop.f32.mrf.mxu0
          %v9521 = vadd.f32 %v9483, %v9520
          %v9522 = vpop.f32.mrf.mxu0
          %9523 = vdwg.mxu0
          %vm9524 = vcmp.ge.f32.partialorder %v9521, 0.0
          %v9525 = vmul.f32 %v9521, 0.01
          %v9526 = vsel %vm9524, %v9521, %v9525
          %s9527 = scalar_lea.vmem [#allocation20], 96
          %v9528 = vld [vmem:[%s9527] sm:$0xf]
          %v9529 = vld [vmem:[%s9527 + $0x4] sm:$0xf]
          %v9530 = vld [vmem:[%s9527 + $0x8] sm:$0xf]
          %v9531 = vld [vmem:[%s9527 + $0xc] sm:$0xf]
          %v9532 = vld [vmem:[%s9527 + $0x10] sm:$0xf]
          %v9533 = vld [vmem:[%s9527 + $0x14] sm:$0xf]
          %v9534 = vld [vmem:[%s9527 + $0x18] sm:$0xf]
          %v9535 = vld [vmem:[%s9527 + $0x1c] sm:$0xf]
          %v9536 = vpack.c.bf16 %v9526, %v9526
          %v9537 = vld [vmem:[#allocation21 + $0x42] ss:$0 sm:$0xff]
          %v9546 = vunpack.c.l.b16 %v9528
          %v9547 = vunpack.c.l.b16 %v9529
          %v9548 = vunpack.c.l.b16 %v9530
          %v9549 = vunpack.c.l.b16 %v9531
          %v9550 = vunpack.c.l.b16 %v9532
          %v9551 = vunpack.c.l.b16 %v9533
          %v9552 = vunpack.c.l.b16 %v9534
          %v9553 = vunpack.c.l.b16 %v9535
          %v9554 = vpack.c.b16 %v9547, %v9546
          %v9555 = vpack.c.b16 %v9549, %v9548
          %v9556 = vpack.c.b16 %v9551, %v9550
          %v9557 = vpack.c.b16 %v9553, %v9552
          %v9563 = vsel %vm8761, %v9536, 0
          %9565 = vmatpush.bf16.msra.mxu0 0
          %9566 = vmatpush.bf16.msra.mxu0 0
          %9567 = vmatpush.bf16.msra.mxu0 0
          %9568 = vmatpush.bf16.msra.mxu0 0
          %9569 = vmatpush.bf16.msra.mxu0 %v9557
          %9570 = vmatpush.bf16.msra.mxu0 %v9556
          %9571 = vmatpush.bf16.msra.mxu0 %v9555
          %9572 = vmatpush.bf16.msra.mxu0 %v9554
          %9573 = vmatmul.bf16.gmra.mxu0 %v9563
          %v9574 = vpop.f32.mrf.mxu0
          %v9575 = vadd.f32 %v9537, %v9574
          %v9576 = vpop.f32.mrf.mxu0
          %9577 = vdwg.mxu0
          %vm9578 = vcmp.ge.f32.partialorder %v9575, 0.0
          %v9579 = vmul.f32 %v9575, 0.01
          %v9580 = vsel %vm9578, %v9575, %v9579
          %v9581 = vld [vmem:[%s15] sm:$0xf]
          %v9582 = vld [vmem:[%s15 + $0x4] sm:$0xf]
          %v9583 = vld [vmem:[%s15 + $0x8] sm:$0xf]
          %v9584 = vld [vmem:[%s15 + $0xc] sm:$0xf]
          %v9585 = vld [vmem:[%s15 + $0x10] sm:$0xf]
          %v9586 = vld [vmem:[%s15 + $0x14] sm:$0xf]
          %v9587 = vld [vmem:[%s15 + $0x18] sm:$0xf]
          %v9588 = vld [vmem:[%s15 + $0x1c] sm:$0xf]
          %v9589 = vpack.c.bf16 %v9580, %v9580
          %v9590 = vld [vmem:[#allocation21 + $0x43] ss:$0 sm:$0xff]
          %v9599 = vunpack.c.l.b16 %v9581
          %v9600 = vunpack.c.l.b16 %v9582
          %v9601 = vunpack.c.l.b16 %v9583
          %v9602 = vunpack.c.l.b16 %v9584
          %v9603 = vunpack.c.l.b16 %v9585
          %v9604 = vunpack.c.l.b16 %v9586
          %v9605 = vunpack.c.l.b16 %v9587
          %v9606 = vunpack.c.l.b16 %v9588
          %v9607 = vpack.c.b16 %v9600, %v9599
          %v9608 = vpack.c.b16 %v9602, %v9601
          %v9609 = vpack.c.b16 %v9604, %v9603
          %v9610 = vpack.c.b16 %v9606, %v9605
          %v9616 = vsel %vm8761, %v9589, 0
          %9618 = vmatpush.bf16.msra.mxu0 0
          %9619 = vmatpush.bf16.msra.mxu0 0
          %9620 = vmatpush.bf16.msra.mxu0 0
          %9621 = vmatpush.bf16.msra.mxu0 0
          %9622 = vmatpush.bf16.msra.mxu0 %v9610
          %9623 = vmatpush.bf16.msra.mxu0 %v9609
          %9624 = vmatpush.bf16.msra.mxu0 %v9608
          %9625 = vmatpush.bf16.msra.mxu0 %v9607
          %9626 = vmatmul.bf16.gmra.mxu0 %v9616
          %v9627 = vpop.f32.mrf.mxu0
          %v9628 = vadd.f32 %v9590, %v9627
          %v9629 = vpop.f32.mrf.mxu0
          %9630 = vdwg.mxu0
          %9631 = vst.msk [vmem:[#allocation23] sm:$0xff] %vm8896, %v9628
        $region144: #{_forward.1} parent=87 // pred_fallthru
          _
        // Predicated region
        $region145: #{_forward.1} parent=87 // pred_check
          %p9632 = pneg %p418
        $region146: #{_forward.1} parent=87 // pred_check_branch
          %9634 = sbr.rel (%p9632) target = $region148
        $region147: #{_forward.1} parent=87 // pred_region
          %9636 = vsyncadd [#allocation5], 0
          %s9638 = sshll.u32 [#allocation23], 4
          %s9639 = int_to_ptr.vmem [resolvable:$true] %s9638
          %s9640 = sshll.u32 %s17, 4
          %s9641 = int_to_ptr.hbm [resolvable:$true] %s9640
          %9643 = dma.vmem_to_hbm [thread:$0]  %s9639, 128, %s9641, [#allocation5]
        $region148: #{_forward.1} parent=87 // pred_fallthru
          _
        // Predicated region
        $region149: #{_forward.1} parent=87 // pred_check
          %p9644 = pneg %p418
        $region150: #{_forward.1} parent=87 // pred_check_branch
          %9646 = sbr.rel (%p9644) target = $region152
        $region151: #{_forward.1} parent=87 // pred_region
          %9648 = dma.done [#allocation5], 128
        $region152: #{_forward.1} parent=87 // pred_fallthru
          _
      $region88: #{_forward.1} parent=5 // pred_fallthru
        _
      %p9649 = scmp.le.s32.totalorder 2, %s33
      // Predicated region
      $region153: #{_forward.1} parent=5 // pred_check
        %p9650 = pneg %p9649
      $region154: #{_forward.1} parent=5 // pred_check_branch
        %9652 = sbr.rel (%p9650) target = $region156
      $region155: #{_forward.1} parent=5 // pred_region
        %s9653 = ssub.s32 %s33, 2
      $region156: #{_forward.1} parent=5 // pred_fallthru
        _
    $region6: #{_forward.1} parent=1 // loop_footer
      %s37 = sadd.s32 1, %s33
    $region7: #{_forward.1} parent=1 // loop_footer_branch
      %32 = sbr.rel target = $region3
    $region8: #{_forward.1} parent=1 // loop_exit
      _
    %9654 = vsyncpa [#allocation4], 1
    %s9655 = scalar_lea.sflag [#allocation4], 1
    %9656 = vsyncpa %s9655, 1
    %9657 = vsyncpa [#allocation7], 1
    %9658 = vsyncpa [#allocation10], 1
    %9659 = vsyncpa [#allocation13], 1
    %s9660 = scalar_lea.sflag [#allocation13], 1
    %9661 = vsyncpa %s9660, 1
    %9662 = vsyncpa [#allocation16], 1
    %9663 = vsyncpa [#allocation19], 1
    %9664 = vsyncpa [#allocation22], 1
    %9665 = vsyncpa [#allocation5], 1
    %s9666 = scalar_lea.sflag [#allocation5], 1
    %9667 = vsyncpa %s9666, 1

</llo_original>
